<compile_context>
chip_gen: v7x
topology: tpu7x:2x2x1
jax: 0.10.0
libtpu: 0.0.40
codegen_flags: <defaults>
</compile_context>

<pallas_src>
import functools

import numpy as np

import jax
import jax.numpy as jnp
from jax import lax
from jax.experimental import pallas as pl
from jax.experimental.pallas import tpu as pltpu


# For output row parity r of the 3x3 conv (and identically for columns), tap
# ky=0,1,2 reads the stage-1 parity plane `rho` shifted by `dr` rows (zero
# outside [0, H)):
#   r=0: y1 rows 2q-1, 2q,   2q+1 -> (rho=1, dr=-1), (rho=0, dr=0), (rho=1, dr=0)
#   r=1: y1 rows 2q,   2q+1, 2q+2 -> (rho=0, dr=0),  (rho=1, dr=0), (rho=0, dr=+1)
_STAGE2_TAPS = (
    ((1, -1), (0, 0), (1, 0)),   # output parity 0
    ((0, 0), (1, 0), (0, 1)),    # output parity 1
)


def _shift_flat(a, s):
    """result[..., i] = a[..., i + s], zero-filled where i + s is out of range."""
    if s == 0:
        return a
    n = a.shape[-1]
    z = jnp.zeros(a.shape[:-1] + (abs(s),), a.dtype)
    if s > 0:
        return jnp.concatenate([a[..., s:], z], axis=-1)
    return jnp.concatenate([z, a[..., : n + s]], axis=-1)


def _seg_head_kernel(x_ref, mask_ref, wt_ref, bt_ref, wc_ref, bc_ref, o_ref,
                     *, C, C1, M, H, W, NB):
    """Fused SegmentationHead forward for one batch block (flattened spatial).

    x_ref:    (NB, C, H*W)    VMEM  input images, row-major flattened spatial
    mask_ref: (9, H*W)        VMEM  border masks for (dr, dc) in {-1,0,1}^2
    wt_ref:   (C*C1*16,)      SMEM  ConvTranspose2d weight, flat [ci, co, ky, kx]
    bt_ref:   (C1,)           SMEM
    wc_ref:   (M*C1*9,)       SMEM  Conv2d weight, flat [m, co, ky, kx]
    bc_ref:   (M,)            SMEM
    o_ref:    (NB, 4*M, H*W)  VMEM  output parity planes:
                              o[n, (r*2+s)*M+m, q*W+p] = out[n, m, 2q+r, 2p+s]
    """
    S = H * W
    x = x_ref[...]                                   # (NB, C, S)

    # Preload the (tiny) scalar weights from SMEM once.
    wt = [wt_ref[i] for i in range(C * C1 * 16)]
    bt = [bt_ref[i] for i in range(C1)]
    wc = [wc_ref[i] for i in range(M * C1 * 9)]
    bc = [bc_ref[i] for i in range(M)]

    def window(a, dr, dc):
        """a flat over (H, W): b[..., q*W+p] = a[..., (q+dr)*W+(p+dc)], 0 outside."""
        if (dr, dc) == (0, 0):
            return a
        b = _shift_flat(a, dr * W + dc)
        return b * mask_ref[(dr + 1) * 3 + (dc + 1)]   # (S,) broadcasts over leading dims

    # ---- stage 1: ConvTranspose2d(k=4, s=2, p=1) as four sub-pixel 2x2 convs ----
    # plane[(rho, sig, co)][n, q*W+p] = y1[n, co, 2q+rho, 2p+sig]
    xwin = {}

    def x_window(dr, dc):
        if (dr, dc) not in xwin:
            xw = window(x, dr, dc)                    # (NB, C, S), lane-dense
            xwin[(dr, dc)] = [xw[:, ci, :] for ci in range(C)]
        return xwin[(dr, dc)]

    planes = {}
    for rho in range(2):
        for sig in range(2):
            for co in range(C1):
                acc = jnp.zeros((NB, S), jnp.float32)
                for dy in range(2):
                    ky = 3 - 2 * dy - rho
                    dr = rho + dy - 1
                    for dx in range(2):
                        kx = 3 - 2 * dx - sig
                        dc = sig + dx - 1
                        xw = x_window(dr, dc)
                        for ci in range(C):
                            w = wt[((ci * C1 + co) * 4 + ky) * 4 + kx]
                            acc = acc + w * xw[ci]
                planes[(rho, sig, co)] = acc + bt[co]

    # ---- stage 2: Conv2d(k=3, p=1) on the (virtually) interleaved stage-1 output ----
    pwin = {}

    def p_window(rho, sig, co, dr, dc):
        key = (rho, sig, co, dr, dc)
        if key not in pwin:
            pwin[key] = window(planes[(rho, sig, co)], dr, dc)   # (NB, S)
        return pwin[key]

    for r in range(2):
        for s in range(2):
            for m in range(M):
                acc = jnp.zeros((NB, S), jnp.float32)
                for ky in range(3):
                    rho, dr = _STAGE2_TAPS[r][ky]
                    for kx in range(3):
                        sig, dc = _STAGE2_TAPS[s][kx]
                        for co in range(C1):
                            w = wc[((m * C1 + co) * 3 + ky) * 3 + kx]
                            acc = acc + w * p_window(rho, sig, co, dr, dc)
                # Lane-dense (full H*W lanes) store of one output parity plane.
                o_ref[:, (r * 2 + s) * M + m, :] = acc + bc[m]


def _make_shift_masks(H, W):
    """(9, H*W) f32: masks[(dr+1)*3+(dc+1), q*W+p] = 1 iff (q+dr, p+dc) in-bounds."""
    q = np.arange(H)[:, None]
    p = np.arange(W)[None, :]
    rows = []
    for dr in (-1, 0, 1):
        for dc in (-1, 0, 1):
            valid = (q + dr >= 0) & (q + dr < H) & (p + dc >= 0) & (p + dc < W)
            rows.append(valid.reshape(-1))
    return jnp.asarray(np.stack(rows).astype(np.float32))


def segmentation_head_forward(x_nchw, wt, bt, wc, bc, *, block_n=None):
    """Forward pass of SegmentationHead.

    x_nchw: (N, C, H, W)
    wt: ConvTranspose2d weight, PyTorch layout (C, C//2, 4, 4);  bt: (C//2,)
    wc: Conv2d weight,          PyTorch layout (num_classes, C//2, 3, 3); bc: (num_classes,)
    Returns: (N, num_classes, 2H, 2W)
    """
    N, C, H, W = x_nchw.shape
    C1 = wt.shape[1]      # C // 2
    M = wc.shape[0]       # num_classes
    S = H * W
    NB = N if block_n is None else block_n
    assert N % NB == 0

    # Free metadata reshape (merges trailing dims) -- no jnp.pad, no HBM round trip.
    x_flat = x_nchw.astype(jnp.float32).reshape(N, C, S)
    masks = _make_shift_masks(H, W)                          # trace-time constant
    wt_flat = wt.astype(jnp.float32).reshape(-1)             # [ci, co, ky, kx]
    wc_flat = wc.astype(jnp.float32).reshape(-1)             # [m, co, ky, kx]

    kernel = functools.partial(_seg_head_kernel, C=C, C1=C1, M=M, H=H, W=W, NB=NB)

    planes = pl.pallas_call(
        kernel,
        out_shape=jax.ShapeDtypeStruct((N, 4 * M, S), jnp.float32),
        grid=(N // NB,),
        in_specs=[
            pl.BlockSpec((NB, C, S), lambda n: (n, 0, 0)),
            pl.BlockSpec((9, S), lambda n: (0, 0)),
            pl.BlockSpec(memory_space=pltpu.MemorySpace.SMEM),
            pl.BlockSpec(memory_space=pltpu.MemorySpace.SMEM),
            pl.BlockSpec(memory_space=pltpu.MemorySpace.SMEM),
            pl.BlockSpec(memory_space=pltpu.MemorySpace.SMEM),
        ],
        out_specs=pl.BlockSpec((NB, 4 * M, S), lambda n: (n, 0, 0)),
        compiler_params=pltpu.CompilerParams(
            dimension_semantics=("parallel",),
            vmem_limit_bytes=32 * 1024 * 1024),
    )(x_flat, masks, wt_flat, bt.astype(jnp.float32), wc_flat, bc.astype(jnp.float32))

    # parity planes -> interleaved NCHW: out[n, m, 2q+r, 2p+s] = planes[n, (r,s,m), q*W+p].
    # Single XLA transpose; the surrounding reshapes are free metadata ops.
    out = planes.reshape(N, 2, 2, M, H, W).transpose(0, 3, 4, 1, 5, 2)
    return out.reshape(N, M, 2 * H, 2 * W)


def _reference_forward(x_nchw, wt, bt, wc, bc):
    """Pure-JAX reference using lax.conv_general_dilated (for validation)."""
    x = jnp.transpose(x_nchw, (0, 2, 3, 1))
    w1 = jnp.transpose(jnp.flip(wt, axis=(2, 3)), (2, 3, 0, 1))
    y1 = lax.conv_general_dilated(
        x, w1, window_strides=(1, 1), padding=[(2, 2), (2, 2)],
        lhs_dilation=(2, 2),
        dimension_numbers=("NHWC", "HWIO", "NHWC")) + bt[None, None, None, :]
    w2 = jnp.transpose(wc, (2, 3, 1, 0))
    y2 = lax.conv_general_dilated(
        y1, w2, window_strides=(1, 1), padding=[(1, 1), (1, 1)],
        dimension_numbers=("NHWC", "HWIO", "NHWC")) + bc[None, None, None, :]
    return jnp.transpose(y2, (0, 3, 1, 2))


if __name__ == "__main__":
    # Small deterministic setup: batch=2, in_channels=4, num_classes=3, spatial=16
    N, C, H, W = 2, 4, 16, 16
    num_classes = 3

    key = jax.random.PRNGKey(0)
    kx, k1, k2, k3, k4 = jax.random.split(key, 5)

    x = jax.random.normal(kx, (N, C, H, W), dtype=jnp.float32)
    # ConvTranspose2d(in_channels, in_channels//2, 4): weight (C, C//2, 4, 4)
    wt = 0.1 * jax.random.normal(k1, (C, C // 2, 4, 4), dtype=jnp.float32)
    bt = 0.1 * jax.random.normal(k2, (C // 2,), dtype=jnp.float32)
    # Conv2d(C//2, num_classes, 3): weight (num_classes, C//2, 3, 3)
    wc = 0.1 * jax.random.normal(k3, (num_classes, C // 2, 3, 3), dtype=jnp.float32)
    bc = 0.1 * jax.random.normal(k4, (num_classes,), dtype=jnp.float32)

    fwd = jax.jit(segmentation_head_forward)
    out = jax.block_until_ready(fwd(x, wt, bt, wc, bc))

    assert out.shape == (N, num_classes, 2 * H, 2 * W), out.shape

    ref = _reference_forward(x, wt, bt, wc, bc)
    assert jnp.allclose(out, ref, atol=1e-4, rtol=1e-4), float(jnp.max(jnp.abs(out - ref)))

    print("KERNEL_OK")
</pallas_src>

<mosaic_0001>
module attributes {stable_mosaic.version = 11 : i64} {
  func.func @_seg_head_kernel(%arg0: i32, %arg1: memref<2x4x256xf32, #tpu.memory_space<vmem>>, %arg2: memref<9x256xf32, #tpu.memory_space<vmem>>, %arg3: memref<128xf32, #tpu.memory_space<smem>>, %arg4: memref<2xf32, #tpu.memory_space<smem>>, %arg5: memref<54xf32, #tpu.memory_space<smem>>, %arg6: memref<3xf32, #tpu.memory_space<smem>>, %arg7: memref<2x12x256xf32, #tpu.memory_space<vmem>>) attributes {dimension_semantics = [#tpu.dimension_semantics<parallel>], iteration_bounds = array<i64: 1>, scalar_prefetch = 0 : i64, scratch_operands = 0 : i64, tpu.core_type = #tpu.core_type<tc>, window_params = [{transform_indices = @transform_0, window_bounds = array<i64: 2, 4, 256>}, {pipeline_mode = #tpu.pipeline_mode<synchronous>, transform_indices = @transform_1, window_bounds = array<i64: 9, 256>}, {transform_indices = @transform_2, window_bounds = array<i64: 128>}, {transform_indices = @transform_3, window_bounds = array<i64: 2>}, {transform_indices = @transform_4, window_bounds = array<i64: 54>}, {transform_indices = @transform_5, window_bounds = array<i64: 3>}, {transform_indices = @transform_6, window_bounds = array<i64: 2, 12, 256>}]} {
    %c0 = arith.constant 0 : index
    %c0_0 = arith.constant 0 : index
    %c0_1 = arith.constant 0 : index
    %0 = vector.load %arg1[%c0, %c0_0, %c0_1] : memref<2x4x256xf32, #tpu.memory_space<vmem>>, vector<2x4x256xf32>
    %c0_2 = arith.constant 0 : index
    %1 = memref.load %arg3[%c0_2] : memref<128xf32, #tpu.memory_space<smem>>
    %c1 = arith.constant 1 : index
    %2 = memref.load %arg3[%c1] : memref<128xf32, #tpu.memory_space<smem>>
    %c2 = arith.constant 2 : index
    %3 = memref.load %arg3[%c2] : memref<128xf32, #tpu.memory_space<smem>>
    %c3 = arith.constant 3 : index
    %4 = memref.load %arg3[%c3] : memref<128xf32, #tpu.memory_space<smem>>
    %c4 = arith.constant 4 : index
    %5 = memref.load %arg3[%c4] : memref<128xf32, #tpu.memory_space<smem>>
    %c5 = arith.constant 5 : index
    %6 = memref.load %arg3[%c5] : memref<128xf32, #tpu.memory_space<smem>>
    %c6 = arith.constant 6 : index
    %7 = memref.load %arg3[%c6] : memref<128xf32, #tpu.memory_space<smem>>
    %c7 = arith.constant 7 : index
    %8 = memref.load %arg3[%c7] : memref<128xf32, #tpu.memory_space<smem>>
    %c8 = arith.constant 8 : index
    %9 = memref.load %arg3[%c8] : memref<128xf32, #tpu.memory_space<smem>>
    %c9 = arith.constant 9 : index
    %10 = memref.load %arg3[%c9] : memref<128xf32, #tpu.memory_space<smem>>
    %c10 = arith.constant 10 : index
    %11 = memref.load %arg3[%c10] : memref<128xf32, #tpu.memory_space<smem>>
    %c11 = arith.constant 11 : index
    %12 = memref.load %arg3[%c11] : memref<128xf32, #tpu.memory_space<smem>>
    %c12 = arith.constant 12 : index
    %13 = memref.load %arg3[%c12] : memref<128xf32, #tpu.memory_space<smem>>
    %c13 = arith.constant 13 : index
    %14 = memref.load %arg3[%c13] : memref<128xf32, #tpu.memory_space<smem>>
    %c14 = arith.constant 14 : index
    %15 = memref.load %arg3[%c14] : memref<128xf32, #tpu.memory_space<smem>>
    %c15 = arith.constant 15 : index
    %16 = memref.load %arg3[%c15] : memref<128xf32, #tpu.memory_space<smem>>
    %c16 = arith.constant 16 : index
    %17 = memref.load %arg3[%c16] : memref<128xf32, #tpu.memory_space<smem>>
    %c17 = arith.constant 17 : index
    %18 = memref.load %arg3[%c17] : memref<128xf32, #tpu.memory_space<smem>>
    %c18 = arith.constant 18 : index
    %19 = memref.load %arg3[%c18] : memref<128xf32, #tpu.memory_space<smem>>
    %c19 = arith.constant 19 : index
    %20 = memref.load %arg3[%c19] : memref<128xf32, #tpu.memory_space<smem>>
    %c20 = arith.constant 20 : index
    %21 = memref.load %arg3[%c20] : memref<128xf32, #tpu.memory_space<smem>>
    %c21 = arith.constant 21 : index
    %22 = memref.load %arg3[%c21] : memref<128xf32, #tpu.memory_space<smem>>
    %c22 = arith.constant 22 : index
    %23 = memref.load %arg3[%c22] : memref<128xf32, #tpu.memory_space<smem>>
    %c23 = arith.constant 23 : index
    %24 = memref.load %arg3[%c23] : memref<128xf32, #tpu.memory_space<smem>>
    %c24 = arith.constant 24 : index
    %25 = memref.load %arg3[%c24] : memref<128xf32, #tpu.memory_space<smem>>
    %c25 = arith.constant 25 : index
    %26 = memref.load %arg3[%c25] : memref<128xf32, #tpu.memory_space<smem>>
    %c26 = arith.constant 26 : index
    %27 = memref.load %arg3[%c26] : memref<128xf32, #tpu.memory_space<smem>>
    %c27 = arith.constant 27 : index
    %28 = memref.load %arg3[%c27] : memref<128xf32, #tpu.memory_space<smem>>
    %c28 = arith.constant 28 : index
    %29 = memref.load %arg3[%c28] : memref<128xf32, #tpu.memory_space<smem>>
    %c29 = arith.constant 29 : index
    %30 = memref.load %arg3[%c29] : memref<128xf32, #tpu.memory_space<smem>>
    %c30 = arith.constant 30 : index
    %31 = memref.load %arg3[%c30] : memref<128xf32, #tpu.memory_space<smem>>
    %c31 = arith.constant 31 : index
    %32 = memref.load %arg3[%c31] : memref<128xf32, #tpu.memory_space<smem>>
    %c32 = arith.constant 32 : index
    %33 = memref.load %arg3[%c32] : memref<128xf32, #tpu.memory_space<smem>>
    %c33 = arith.constant 33 : index
    %34 = memref.load %arg3[%c33] : memref<128xf32, #tpu.memory_space<smem>>
    %c34 = arith.constant 34 : index
    %35 = memref.load %arg3[%c34] : memref<128xf32, #tpu.memory_space<smem>>
    %c35 = arith.constant 35 : index
    %36 = memref.load %arg3[%c35] : memref<128xf32, #tpu.memory_space<smem>>
    %c36 = arith.constant 36 : index
    %37 = memref.load %arg3[%c36] : memref<128xf32, #tpu.memory_space<smem>>
    %c37 = arith.constant 37 : index
    %38 = memref.load %arg3[%c37] : memref<128xf32, #tpu.memory_space<smem>>
    %c38 = arith.constant 38 : index
    %39 = memref.load %arg3[%c38] : memref<128xf32, #tpu.memory_space<smem>>
    %c39 = arith.constant 39 : index
    %40 = memref.load %arg3[%c39] : memref<128xf32, #tpu.memory_space<smem>>
    %c40 = arith.constant 40 : index
    %41 = memref.load %arg3[%c40] : memref<128xf32, #tpu.memory_space<smem>>
    %c41 = arith.constant 41 : index
    %42 = memref.load %arg3[%c41] : memref<128xf32, #tpu.memory_space<smem>>
    %c42 = arith.constant 42 : index
    %43 = memref.load %arg3[%c42] : memref<128xf32, #tpu.memory_space<smem>>
    %c43 = arith.constant 43 : index
    %44 = memref.load %arg3[%c43] : memref<128xf32, #tpu.memory_space<smem>>
    %c44 = arith.constant 44 : index
    %45 = memref.load %arg3[%c44] : memref<128xf32, #tpu.memory_space<smem>>
    %c45 = arith.constant 45 : index
    %46 = memref.load %arg3[%c45] : memref<128xf32, #tpu.memory_space<smem>>
    %c46 = arith.constant 46 : index
    %47 = memref.load %arg3[%c46] : memref<128xf32, #tpu.memory_space<smem>>
    %c47 = arith.constant 47 : index
    %48 = memref.load %arg3[%c47] : memref<128xf32, #tpu.memory_space<smem>>
    %c48 = arith.constant 48 : index
    %49 = memref.load %arg3[%c48] : memref<128xf32, #tpu.memory_space<smem>>
    %c49 = arith.constant 49 : index
    %50 = memref.load %arg3[%c49] : memref<128xf32, #tpu.memory_space<smem>>
    %c50 = arith.constant 50 : index
    %51 = memref.load %arg3[%c50] : memref<128xf32, #tpu.memory_space<smem>>
    %c51 = arith.constant 51 : index
    %52 = memref.load %arg3[%c51] : memref<128xf32, #tpu.memory_space<smem>>
    %c52 = arith.constant 52 : index
    %53 = memref.load %arg3[%c52] : memref<128xf32, #tpu.memory_space<smem>>
    %c53 = arith.constant 53 : index
    %54 = memref.load %arg3[%c53] : memref<128xf32, #tpu.memory_space<smem>>
    %c54 = arith.constant 54 : index
    %55 = memref.load %arg3[%c54] : memref<128xf32, #tpu.memory_space<smem>>
    %c55 = arith.constant 55 : index
    %56 = memref.load %arg3[%c55] : memref<128xf32, #tpu.memory_space<smem>>
    %c56 = arith.constant 56 : index
    %57 = memref.load %arg3[%c56] : memref<128xf32, #tpu.memory_space<smem>>
    %c57 = arith.constant 57 : index
    %58 = memref.load %arg3[%c57] : memref<128xf32, #tpu.memory_space<smem>>
    %c58 = arith.constant 58 : index
    %59 = memref.load %arg3[%c58] : memref<128xf32, #tpu.memory_space<smem>>
    %c59 = arith.constant 59 : index
    %60 = memref.load %arg3[%c59] : memref<128xf32, #tpu.memory_space<smem>>
    %c60 = arith.constant 60 : index
    %61 = memref.load %arg3[%c60] : memref<128xf32, #tpu.memory_space<smem>>
    %c61 = arith.constant 61 : index
    %62 = memref.load %arg3[%c61] : memref<128xf32, #tpu.memory_space<smem>>
    %c62 = arith.constant 62 : index
    %63 = memref.load %arg3[%c62] : memref<128xf32, #tpu.memory_space<smem>>
    %c63 = arith.constant 63 : index
    %64 = memref.load %arg3[%c63] : memref<128xf32, #tpu.memory_space<smem>>
    %c64 = arith.constant 64 : index
    %65 = memref.load %arg3[%c64] : memref<128xf32, #tpu.memory_space<smem>>
    %c65 = arith.constant 65 : index
    %66 = memref.load %arg3[%c65] : memref<128xf32, #tpu.memory_space<smem>>
    %c66 = arith.constant 66 : index
    %67 = memref.load %arg3[%c66] : memref<128xf32, #tpu.memory_space<smem>>
    %c67 = arith.constant 67 : index
    %68 = memref.load %arg3[%c67] : memref<128xf32, #tpu.memory_space<smem>>
    %c68 = arith.constant 68 : index
    %69 = memref.load %arg3[%c68] : memref<128xf32, #tpu.memory_space<smem>>
    %c69 = arith.constant 69 : index
    %70 = memref.load %arg3[%c69] : memref<128xf32, #tpu.memory_space<smem>>
    %c70 = arith.constant 70 : index
    %71 = memref.load %arg3[%c70] : memref<128xf32, #tpu.memory_space<smem>>
    %c71 = arith.constant 71 : index
    %72 = memref.load %arg3[%c71] : memref<128xf32, #tpu.memory_space<smem>>
    %c72 = arith.constant 72 : index
    %73 = memref.load %arg3[%c72] : memref<128xf32, #tpu.memory_space<smem>>
    %c73 = arith.constant 73 : index
    %74 = memref.load %arg3[%c73] : memref<128xf32, #tpu.memory_space<smem>>
    %c74 = arith.constant 74 : index
    %75 = memref.load %arg3[%c74] : memref<128xf32, #tpu.memory_space<smem>>
    %c75 = arith.constant 75 : index
    %76 = memref.load %arg3[%c75] : memref<128xf32, #tpu.memory_space<smem>>
    %c76 = arith.constant 76 : index
    %77 = memref.load %arg3[%c76] : memref<128xf32, #tpu.memory_space<smem>>
    %c77 = arith.constant 77 : index
    %78 = memref.load %arg3[%c77] : memref<128xf32, #tpu.memory_space<smem>>
    %c78 = arith.constant 78 : index
    %79 = memref.load %arg3[%c78] : memref<128xf32, #tpu.memory_space<smem>>
    %c79 = arith.constant 79 : index
    %80 = memref.load %arg3[%c79] : memref<128xf32, #tpu.memory_space<smem>>
    %c80 = arith.constant 80 : index
    %81 = memref.load %arg3[%c80] : memref<128xf32, #tpu.memory_space<smem>>
    %c81 = arith.constant 81 : index
    %82 = memref.load %arg3[%c81] : memref<128xf32, #tpu.memory_space<smem>>
    %c82 = arith.constant 82 : index
    %83 = memref.load %arg3[%c82] : memref<128xf32, #tpu.memory_space<smem>>
    %c83 = arith.constant 83 : index
    %84 = memref.load %arg3[%c83] : memref<128xf32, #tpu.memory_space<smem>>
    %c84 = arith.constant 84 : index
    %85 = memref.load %arg3[%c84] : memref<128xf32, #tpu.memory_space<smem>>
    %c85 = arith.constant 85 : index
    %86 = memref.load %arg3[%c85] : memref<128xf32, #tpu.memory_space<smem>>
    %c86 = arith.constant 86 : index
    %87 = memref.load %arg3[%c86] : memref<128xf32, #tpu.memory_space<smem>>
    %c87 = arith.constant 87 : index
    %88 = memref.load %arg3[%c87] : memref<128xf32, #tpu.memory_space<smem>>
    %c88 = arith.constant 88 : index
    %89 = memref.load %arg3[%c88] : memref<128xf32, #tpu.memory_space<smem>>
    %c89 = arith.constant 89 : index
    %90 = memref.load %arg3[%c89] : memref<128xf32, #tpu.memory_space<smem>>
    %c90 = arith.constant 90 : index
    %91 = memref.load %arg3[%c90] : memref<128xf32, #tpu.memory_space<smem>>
    %c91 = arith.constant 91 : index
    %92 = memref.load %arg3[%c91] : memref<128xf32, #tpu.memory_space<smem>>
    %c92 = arith.constant 92 : index
    %93 = memref.load %arg3[%c92] : memref<128xf32, #tpu.memory_space<smem>>
    %c93 = arith.constant 93 : index
    %94 = memref.load %arg3[%c93] : memref<128xf32, #tpu.memory_space<smem>>
    %c94 = arith.constant 94 : index
    %95 = memref.load %arg3[%c94] : memref<128xf32, #tpu.memory_space<smem>>
    %c95 = arith.constant 95 : index
    %96 = memref.load %arg3[%c95] : memref<128xf32, #tpu.memory_space<smem>>
    %c96 = arith.constant 96 : index
    %97 = memref.load %arg3[%c96] : memref<128xf32, #tpu.memory_space<smem>>
    %c97 = arith.constant 97 : index
    %98 = memref.load %arg3[%c97] : memref<128xf32, #tpu.memory_space<smem>>
    %c98 = arith.constant 98 : index
    %99 = memref.load %arg3[%c98] : memref<128xf32, #tpu.memory_space<smem>>
    %c99 = arith.constant 99 : index
    %100 = memref.load %arg3[%c99] : memref<128xf32, #tpu.memory_space<smem>>
    %c100 = arith.constant 100 : index
    %101 = memref.load %arg3[%c100] : memref<128xf32, #tpu.memory_space<smem>>
    %c101 = arith.constant 101 : index
    %102 = memref.load %arg3[%c101] : memref<128xf32, #tpu.memory_space<smem>>
    %c102 = arith.constant 102 : index
    %103 = memref.load %arg3[%c102] : memref<128xf32, #tpu.memory_space<smem>>
    %c103 = arith.constant 103 : index
    %104 = memref.load %arg3[%c103] : memref<128xf32, #tpu.memory_space<smem>>
    %c104 = arith.constant 104 : index
    %105 = memref.load %arg3[%c104] : memref<128xf32, #tpu.memory_space<smem>>
    %c105 = arith.constant 105 : index
    %106 = memref.load %arg3[%c105] : memref<128xf32, #tpu.memory_space<smem>>
    %c106 = arith.constant 106 : index
    %107 = memref.load %arg3[%c106] : memref<128xf32, #tpu.memory_space<smem>>
    %c107 = arith.constant 107 : index
    %108 = memref.load %arg3[%c107] : memref<128xf32, #tpu.memory_space<smem>>
    %c108 = arith.constant 108 : index
    %109 = memref.load %arg3[%c108] : memref<128xf32, #tpu.memory_space<smem>>
    %c109 = arith.constant 109 : index
    %110 = memref.load %arg3[%c109] : memref<128xf32, #tpu.memory_space<smem>>
    %c110 = arith.constant 110 : index
    %111 = memref.load %arg3[%c110] : memref<128xf32, #tpu.memory_space<smem>>
    %c111 = arith.constant 111 : index
    %112 = memref.load %arg3[%c111] : memref<128xf32, #tpu.memory_space<smem>>
    %c112 = arith.constant 112 : index
    %113 = memref.load %arg3[%c112] : memref<128xf32, #tpu.memory_space<smem>>
    %c113 = arith.constant 113 : index
    %114 = memref.load %arg3[%c113] : memref<128xf32, #tpu.memory_space<smem>>
    %c114 = arith.constant 114 : index
    %115 = memref.load %arg3[%c114] : memref<128xf32, #tpu.memory_space<smem>>
    %c115 = arith.constant 115 : index
    %116 = memref.load %arg3[%c115] : memref<128xf32, #tpu.memory_space<smem>>
    %c116 = arith.constant 116 : index
    %117 = memref.load %arg3[%c116] : memref<128xf32, #tpu.memory_space<smem>>
    %c117 = arith.constant 117 : index
    %118 = memref.load %arg3[%c117] : memref<128xf32, #tpu.memory_space<smem>>
    %c118 = arith.constant 118 : index
    %119 = memref.load %arg3[%c118] : memref<128xf32, #tpu.memory_space<smem>>
    %c119 = arith.constant 119 : index
    %120 = memref.load %arg3[%c119] : memref<128xf32, #tpu.memory_space<smem>>
    %c120 = arith.constant 120 : index
    %121 = memref.load %arg3[%c120] : memref<128xf32, #tpu.memory_space<smem>>
    %c121 = arith.constant 121 : index
    %122 = memref.load %arg3[%c121] : memref<128xf32, #tpu.memory_space<smem>>
    %c122 = arith.constant 122 : index
    %123 = memref.load %arg3[%c122] : memref<128xf32, #tpu.memory_space<smem>>
    %c123 = arith.constant 123 : index
    %124 = memref.load %arg3[%c123] : memref<128xf32, #tpu.memory_space<smem>>
    %c124 = arith.constant 124 : index
    %125 = memref.load %arg3[%c124] : memref<128xf32, #tpu.memory_space<smem>>
    %c125 = arith.constant 125 : index
    %126 = memref.load %arg3[%c125] : memref<128xf32, #tpu.memory_space<smem>>
    %c126 = arith.constant 126 : index
    %127 = memref.load %arg3[%c126] : memref<128xf32, #tpu.memory_space<smem>>
    %c127 = arith.constant 127 : index
    %128 = memref.load %arg3[%c127] : memref<128xf32, #tpu.memory_space<smem>>
    %c0_3 = arith.constant 0 : index
    %129 = memref.load %arg4[%c0_3] : memref<2xf32, #tpu.memory_space<smem>>
    %c1_4 = arith.constant 1 : index
    %130 = memref.load %arg4[%c1_4] : memref<2xf32, #tpu.memory_space<smem>>
    %c0_5 = arith.constant 0 : index
    %131 = memref.load %arg5[%c0_5] : memref<54xf32, #tpu.memory_space<smem>>
    %c1_6 = arith.constant 1 : index
    %132 = memref.load %arg5[%c1_6] : memref<54xf32, #tpu.memory_space<smem>>
    %c2_7 = arith.constant 2 : index
    %133 = memref.load %arg5[%c2_7] : memref<54xf32, #tpu.memory_space<smem>>
    %c3_8 = arith.constant 3 : index
    %134 = memref.load %arg5[%c3_8] : memref<54xf32, #tpu.memory_space<smem>>
    %c4_9 = arith.constant 4 : index
    %135 = memref.load %arg5[%c4_9] : memref<54xf32, #tpu.memory_space<smem>>
    %c5_10 = arith.constant 5 : index
    %136 = memref.load %arg5[%c5_10] : memref<54xf32, #tpu.memory_space<smem>>
    %c6_11 = arith.constant 6 : index
    %137 = memref.load %arg5[%c6_11] : memref<54xf32, #tpu.memory_space<smem>>
    %c7_12 = arith.constant 7 : index
    %138 = memref.load %arg5[%c7_12] : memref<54xf32, #tpu.memory_space<smem>>
    %c8_13 = arith.constant 8 : index
    %139 = memref.load %arg5[%c8_13] : memref<54xf32, #tpu.memory_space<smem>>
    %c9_14 = arith.constant 9 : index
    %140 = memref.load %arg5[%c9_14] : memref<54xf32, #tpu.memory_space<smem>>
    %c10_15 = arith.constant 10 : index
    %141 = memref.load %arg5[%c10_15] : memref<54xf32, #tpu.memory_space<smem>>
    %c11_16 = arith.constant 11 : index
    %142 = memref.load %arg5[%c11_16] : memref<54xf32, #tpu.memory_space<smem>>
    %c12_17 = arith.constant 12 : index
    %143 = memref.load %arg5[%c12_17] : memref<54xf32, #tpu.memory_space<smem>>
    %c13_18 = arith.constant 13 : index
    %144 = memref.load %arg5[%c13_18] : memref<54xf32, #tpu.memory_space<smem>>
    %c14_19 = arith.constant 14 : index
    %145 = memref.load %arg5[%c14_19] : memref<54xf32, #tpu.memory_space<smem>>
    %c15_20 = arith.constant 15 : index
    %146 = memref.load %arg5[%c15_20] : memref<54xf32, #tpu.memory_space<smem>>
    %c16_21 = arith.constant 16 : index
    %147 = memref.load %arg5[%c16_21] : memref<54xf32, #tpu.memory_space<smem>>
    %c17_22 = arith.constant 17 : index
    %148 = memref.load %arg5[%c17_22] : memref<54xf32, #tpu.memory_space<smem>>
    %c18_23 = arith.constant 18 : index
    %149 = memref.load %arg5[%c18_23] : memref<54xf32, #tpu.memory_space<smem>>
    %c19_24 = arith.constant 19 : index
    %150 = memref.load %arg5[%c19_24] : memref<54xf32, #tpu.memory_space<smem>>
    %c20_25 = arith.constant 20 : index
    %151 = memref.load %arg5[%c20_25] : memref<54xf32, #tpu.memory_space<smem>>
    %c21_26 = arith.constant 21 : index
    %152 = memref.load %arg5[%c21_26] : memref<54xf32, #tpu.memory_space<smem>>
    %c22_27 = arith.constant 22 : index
    %153 = memref.load %arg5[%c22_27] : memref<54xf32, #tpu.memory_space<smem>>
    %c23_28 = arith.constant 23 : index
    %154 = memref.load %arg5[%c23_28] : memref<54xf32, #tpu.memory_space<smem>>
    %c24_29 = arith.constant 24 : index
    %155 = memref.load %arg5[%c24_29] : memref<54xf32, #tpu.memory_space<smem>>
    %c25_30 = arith.constant 25 : index
    %156 = memref.load %arg5[%c25_30] : memref<54xf32, #tpu.memory_space<smem>>
    %c26_31 = arith.constant 26 : index
    %157 = memref.load %arg5[%c26_31] : memref<54xf32, #tpu.memory_space<smem>>
    %c27_32 = arith.constant 27 : index
    %158 = memref.load %arg5[%c27_32] : memref<54xf32, #tpu.memory_space<smem>>
    %c28_33 = arith.constant 28 : index
    %159 = memref.load %arg5[%c28_33] : memref<54xf32, #tpu.memory_space<smem>>
    %c29_34 = arith.constant 29 : index
    %160 = memref.load %arg5[%c29_34] : memref<54xf32, #tpu.memory_space<smem>>
    %c30_35 = arith.constant 30 : index
    %161 = memref.load %arg5[%c30_35] : memref<54xf32, #tpu.memory_space<smem>>
    %c31_36 = arith.constant 31 : index
    %162 = memref.load %arg5[%c31_36] : memref<54xf32, #tpu.memory_space<smem>>
    %c32_37 = arith.constant 32 : index
    %163 = memref.load %arg5[%c32_37] : memref<54xf32, #tpu.memory_space<smem>>
    %c33_38 = arith.constant 33 : index
    %164 = memref.load %arg5[%c33_38] : memref<54xf32, #tpu.memory_space<smem>>
    %c34_39 = arith.constant 34 : index
    %165 = memref.load %arg5[%c34_39] : memref<54xf32, #tpu.memory_space<smem>>
    %c35_40 = arith.constant 35 : index
    %166 = memref.load %arg5[%c35_40] : memref<54xf32, #tpu.memory_space<smem>>
    %c36_41 = arith.constant 36 : index
    %167 = memref.load %arg5[%c36_41] : memref<54xf32, #tpu.memory_space<smem>>
    %c37_42 = arith.constant 37 : index
    %168 = memref.load %arg5[%c37_42] : memref<54xf32, #tpu.memory_space<smem>>
    %c38_43 = arith.constant 38 : index
    %169 = memref.load %arg5[%c38_43] : memref<54xf32, #tpu.memory_space<smem>>
    %c39_44 = arith.constant 39 : index
    %170 = memref.load %arg5[%c39_44] : memref<54xf32, #tpu.memory_space<smem>>
    %c40_45 = arith.constant 40 : index
    %171 = memref.load %arg5[%c40_45] : memref<54xf32, #tpu.memory_space<smem>>
    %c41_46 = arith.constant 41 : index
    %172 = memref.load %arg5[%c41_46] : memref<54xf32, #tpu.memory_space<smem>>
    %c42_47 = arith.constant 42 : index
    %173 = memref.load %arg5[%c42_47] : memref<54xf32, #tpu.memory_space<smem>>
    %c43_48 = arith.constant 43 : index
    %174 = memref.load %arg5[%c43_48] : memref<54xf32, #tpu.memory_space<smem>>
    %c44_49 = arith.constant 44 : index
    %175 = memref.load %arg5[%c44_49] : memref<54xf32, #tpu.memory_space<smem>>
    %c45_50 = arith.constant 45 : index
    %176 = memref.load %arg5[%c45_50] : memref<54xf32, #tpu.memory_space<smem>>
    %c46_51 = arith.constant 46 : index
    %177 = memref.load %arg5[%c46_51] : memref<54xf32, #tpu.memory_space<smem>>
    %c47_52 = arith.constant 47 : index
    %178 = memref.load %arg5[%c47_52] : memref<54xf32, #tpu.memory_space<smem>>
    %c48_53 = arith.constant 48 : index
    %179 = memref.load %arg5[%c48_53] : memref<54xf32, #tpu.memory_space<smem>>
    %c49_54 = arith.constant 49 : index
    %180 = memref.load %arg5[%c49_54] : memref<54xf32, #tpu.memory_space<smem>>
    %c50_55 = arith.constant 50 : index
    %181 = memref.load %arg5[%c50_55] : memref<54xf32, #tpu.memory_space<smem>>
    %c51_56 = arith.constant 51 : index
    %182 = memref.load %arg5[%c51_56] : memref<54xf32, #tpu.memory_space<smem>>
    %c52_57 = arith.constant 52 : index
    %183 = memref.load %arg5[%c52_57] : memref<54xf32, #tpu.memory_space<smem>>
    %c53_58 = arith.constant 53 : index
    %184 = memref.load %arg5[%c53_58] : memref<54xf32, #tpu.memory_space<smem>>
    %c0_59 = arith.constant 0 : index
    %185 = memref.load %arg6[%c0_59] : memref<3xf32, #tpu.memory_space<smem>>
    %c1_60 = arith.constant 1 : index
    %186 = memref.load %arg6[%c1_60] : memref<3xf32, #tpu.memory_space<smem>>
    %c2_61 = arith.constant 2 : index
    %187 = memref.load %arg6[%c2_61] : memref<3xf32, #tpu.memory_space<smem>>
    %cst = arith.constant 0.000000e+00 : f32
    %188 = vector.broadcast %cst : f32 to vector<2x256xf32>
    %cst_62 = arith.constant 0.000000e+00 : f32
    %189 = vector.broadcast %cst_62 : f32 to vector<2x4x17xf32>
    %190 = vector.extract_strided_slice %0 {offsets = [0, 0, 0], sizes = [2, 4, 239], strides = [1, 1, 1]} : vector<2x4x256xf32> to vector<2x4x239xf32>
    %191 = tpu.concatenate %189, %190 in 2 : vector<2x4x17xf32>, vector<2x4x239xf32> -> vector<2x4x256xf32>
    %c0_63 = arith.constant 0 : index
    %c0_64 = arith.constant 0 : index
    %192 = vector.load %arg2[%c0_63, %c0_64] : memref<9x256xf32, #tpu.memory_space<vmem>>, vector<1x256xf32>
    %193 = vector.shape_cast %192 : vector<1x256xf32> to vector<256xf32>
    %194 = vector.shape_cast %193 : vector<256xf32> to vector<1x1x256xf32>
    %195 = vector.broadcast %194 : vector<1x1x256xf32> to vector<2x4x256xf32>
    %196 = arith.mulf %191, %195 : vector<2x4x256xf32>
    %197 = vector.extract_strided_slice %196 {offsets = [0, 0, 0], sizes = [2, 1, 256], strides = [1, 1, 1]} : vector<2x4x256xf32> to vector<2x1x256xf32>
    %198 = vector.shape_cast %197 : vector<2x1x256xf32> to vector<2x256xf32>
    %199 = vector.extract_strided_slice %196 {offsets = [0, 1, 0], sizes = [2, 1, 256], strides = [1, 1, 1]} : vector<2x4x256xf32> to vector<2x1x256xf32>
    %200 = vector.shape_cast %199 : vector<2x1x256xf32> to vector<2x256xf32>
    %201 = vector.extract_strided_slice %196 {offsets = [0, 2, 0], sizes = [2, 1, 256], strides = [1, 1, 1]} : vector<2x4x256xf32> to vector<2x1x256xf32>
    %202 = vector.shape_cast %201 : vector<2x1x256xf32> to vector<2x256xf32>
    %203 = vector.extract_strided_slice %196 {offsets = [0, 3, 0], sizes = [2, 1, 256], strides = [1, 1, 1]} : vector<2x4x256xf32> to vector<2x1x256xf32>
    %204 = vector.shape_cast %203 : vector<2x1x256xf32> to vector<2x256xf32>
    %205 = vector.broadcast %16 : f32 to vector<2x256xf32>
    %206 = arith.mulf %205, %198 : vector<2x256xf32>
    %207 = arith.addf %188, %206 : vector<2x256xf32>
    %208 = vector.broadcast %48 : f32 to vector<2x256xf32>
    %209 = arith.mulf %208, %200 : vector<2x256xf32>
    %210 = arith.addf %207, %209 : vector<2x256xf32>
    %211 = vector.broadcast %80 : f32 to vector<2x256xf32>
    %212 = arith.mulf %211, %202 : vector<2x256xf32>
    %213 = arith.addf %210, %212 : vector<2x256xf32>
    %214 = vector.broadcast %112 : f32 to vector<2x256xf32>
    %215 = arith.mulf %214, %204 : vector<2x256xf32>
    %216 = arith.addf %213, %215 : vector<2x256xf32>
    %cst_65 = arith.constant 0.000000e+00 : f32
    %217 = vector.broadcast %cst_65 : f32 to vector<2x4x16xf32>
    %218 = vector.extract_strided_slice %0 {offsets = [0, 0, 0], sizes = [2, 4, 240], strides = [1, 1, 1]} : vector<2x4x256xf32> to vector<2x4x240xf32>
    %219 = tpu.concatenate %217, %218 in 2 : vector<2x4x16xf32>, vector<2x4x240xf32> -> vector<2x4x256xf32>
    %c1_66 = arith.constant 1 : index
    %c0_67 = arith.constant 0 : index
    %220 = vector.load %arg2[%c1_66, %c0_67] : memref<9x256xf32, #tpu.memory_space<vmem>>, vector<1x256xf32>
    %221 = vector.shape_cast %220 : vector<1x256xf32> to vector<256xf32>
    %222 = vector.shape_cast %221 : vector<256xf32> to vector<1x1x256xf32>
    %223 = vector.broadcast %222 : vector<1x1x256xf32> to vector<2x4x256xf32>
    %224 = arith.mulf %219, %223 : vector<2x4x256xf32>
    %225 = vector.extract_strided_slice %224 {offsets = [0, 0, 0], sizes = [2, 1, 256], strides = [1, 1, 1]} : vector<2x4x256xf32> to vector<2x1x256xf32>
    %226 = vector.shape_cast %225 : vector<2x1x256xf32> to vector<2x256xf32>
    %227 = vector.extract_strided_slice %224 {offsets = [0, 1, 0], sizes = [2, 1, 256], strides = [1, 1, 1]} : vector<2x4x256xf32> to vector<2x1x256xf32>
    %228 = vector.shape_cast %227 : vector<2x1x256xf32> to vector<2x256xf32>
    %229 = vector.extract_strided_slice %224 {offsets = [0, 2, 0], sizes = [2, 1, 256], strides = [1, 1, 1]} : vector<2x4x256xf32> to vector<2x1x256xf32>
    %230 = vector.shape_cast %229 : vector<2x1x256xf32> to vector<2x256xf32>
    %231 = vector.extract_strided_slice %224 {offsets = [0, 3, 0], sizes = [2, 1, 256], strides = [1, 1, 1]} : vector<2x4x256xf32> to vector<2x1x256xf32>
    %232 = vector.shape_cast %231 : vector<2x1x256xf32> to vector<2x256xf32>
    %233 = vector.broadcast %14 : f32 to vector<2x256xf32>
    %234 = arith.mulf %233, %226 : vector<2x256xf32>
    %235 = arith.addf %216, %234 : vector<2x256xf32>
    %236 = vector.broadcast %46 : f32 to vector<2x256xf32>
    %237 = arith.mulf %236, %228 : vector<2x256xf32>
    %238 = arith.addf %235, %237 : vector<2x256xf32>
    %239 = vector.broadcast %78 : f32 to vector<2x256xf32>
    %240 = arith.mulf %239, %230 : vector<2x256xf32>
    %241 = arith.addf %238, %240 : vector<2x256xf32>
    %242 = vector.broadcast %110 : f32 to vector<2x256xf32>
    %243 = arith.mulf %242, %232 : vector<2x256xf32>
    %244 = arith.addf %241, %243 : vector<2x256xf32>
    %cst_68 = arith.constant 0.000000e+00 : f32
    %245 = vector.broadcast %cst_68 : f32 to vector<2x4x1xf32>
    %246 = vector.extract_strided_slice %0 {offsets = [0, 0, 0], sizes = [2, 4, 255], strides = [1, 1, 1]} : vector<2x4x256xf32> to vector<2x4x255xf32>
    %247 = tpu.concatenate %245, %246 in 2 : vector<2x4x1xf32>, vector<2x4x255xf32> -> vector<2x4x256xf32>
    %c3_69 = arith.constant 3 : index
    %c0_70 = arith.constant 0 : index
    %248 = vector.load %arg2[%c3_69, %c0_70] : memref<9x256xf32, #tpu.memory_space<vmem>>, vector<1x256xf32>
    %249 = vector.shape_cast %248 : vector<1x256xf32> to vector<256xf32>
    %250 = vector.shape_cast %249 : vector<256xf32> to vector<1x1x256xf32>
    %251 = vector.broadcast %250 : vector<1x1x256xf32> to vector<2x4x256xf32>
    %252 = arith.mulf %247, %251 : vector<2x4x256xf32>
    %253 = vector.extract_strided_slice %252 {offsets = [0, 0, 0], sizes = [2, 1, 256], strides = [1, 1, 1]} : vector<2x4x256xf32> to vector<2x1x256xf32>
    %254 = vector.shape_cast %253 : vector<2x1x256xf32> to vector<2x256xf32>
    %255 = vector.extract_strided_slice %252 {offsets = [0, 1, 0], sizes = [2, 1, 256], strides = [1, 1, 1]} : vector<2x4x256xf32> to vector<2x1x256xf32>
    %256 = vector.shape_cast %255 : vector<2x1x256xf32> to vector<2x256xf32>
    %257 = vector.extract_strided_slice %252 {offsets = [0, 2, 0], sizes = [2, 1, 256], strides = [1, 1, 1]} : vector<2x4x256xf32> to vector<2x1x256xf32>
    %258 = vector.shape_cast %257 : vector<2x1x256xf32> to vector<2x256xf32>
    %259 = vector.extract_strided_slice %252 {offsets = [0, 3, 0], sizes = [2, 1, 256], strides = [1, 1, 1]} : vector<2x4x256xf32> to vector<2x1x256xf32>
    %260 = vector.shape_cast %259 : vector<2x1x256xf32> to vector<2x256xf32>
    %261 = vector.broadcast %8 : f32 to vector<2x256xf32>
    %262 = arith.mulf %261, %254 : vector<2x256xf32>
    %263 = arith.addf %244, %262 : vector<2x256xf32>
    %264 = vector.broadcast %40 : f32 to vector<2x256xf32>
    %265 = arith.mulf %264, %256 : vector<2x256xf32>
    %266 = arith.addf %263, %265 : vector<2x256xf32>
    %267 = vector.broadcast %72 : f32 to vector<2x256xf32>
    %268 = arith.mulf %267, %258 : vector<2x256xf32>
    %269 = arith.addf %266, %268 : vector<2x256xf32>
    %270 = vector.broadcast %104 : f32 to vector<2x256xf32>
    %271 = arith.mulf %270, %260 : vector<2x256xf32>
    %272 = arith.addf %269, %271 : vector<2x256xf32>
    %273 = vector.extract_strided_slice %0 {offsets = [0, 0, 0], sizes = [2, 1, 256], strides = [1, 1, 1]} : vector<2x4x256xf32> to vector<2x1x256xf32>
    %274 = vector.shape_cast %273 : vector<2x1x256xf32> to vector<2x256xf32>
    %275 = vector.extract_strided_slice %0 {offsets = [0, 1, 0], sizes = [2, 1, 256], strides = [1, 1, 1]} : vector<2x4x256xf32> to vector<2x1x256xf32>
    %276 = vector.shape_cast %275 : vector<2x1x256xf32> to vector<2x256xf32>
    %277 = vector.extract_strided_slice %0 {offsets = [0, 2, 0], sizes = [2, 1, 256], strides = [1, 1, 1]} : vector<2x4x256xf32> to vector<2x1x256xf32>
    %278 = vector.shape_cast %277 : vector<2x1x256xf32> to vector<2x256xf32>
    %279 = vector.extract_strided_slice %0 {offsets = [0, 3, 0], sizes = [2, 1, 256], strides = [1, 1, 1]} : vector<2x4x256xf32> to vector<2x1x256xf32>
    %280 = vector.shape_cast %279 : vector<2x1x256xf32> to vector<2x256xf32>
    %281 = vector.broadcast %6 : f32 to vector<2x256xf32>
    %282 = arith.mulf %281, %274 : vector<2x256xf32>
    %283 = arith.addf %272, %282 : vector<2x256xf32>
    %284 = vector.broadcast %38 : f32 to vector<2x256xf32>
    %285 = arith.mulf %284, %276 : vector<2x256xf32>
    %286 = arith.addf %283, %285 : vector<2x256xf32>
    %287 = vector.broadcast %70 : f32 to vector<2x256xf32>
    %288 = arith.mulf %287, %278 : vector<2x256xf32>
    %289 = arith.addf %286, %288 : vector<2x256xf32>
    %290 = vector.broadcast %102 : f32 to vector<2x256xf32>
    %291 = arith.mulf %290, %280 : vector<2x256xf32>
    %292 = arith.addf %289, %291 : vector<2x256xf32>
    %293 = vector.broadcast %129 : f32 to vector<2x256xf32>
    %294 = arith.addf %292, %293 : vector<2x256xf32>
    %cst_71 = arith.constant 0.000000e+00 : f32
    %295 = vector.broadcast %cst_71 : f32 to vector<2x256xf32>
    %296 = vector.broadcast %32 : f32 to vector<2x256xf32>
    %297 = arith.mulf %296, %198 : vector<2x256xf32>
    %298 = arith.addf %295, %297 : vector<2x256xf32>
    %299 = vector.broadcast %64 : f32 to vector<2x256xf32>
    %300 = arith.mulf %299, %200 : vector<2x256xf32>
    %301 = arith.addf %298, %300 : vector<2x256xf32>
    %302 = vector.broadcast %96 : f32 to vector<2x256xf32>
    %303 = arith.mulf %302, %202 : vector<2x256xf32>
    %304 = arith.addf %301, %303 : vector<2x256xf32>
    %305 = vector.broadcast %128 : f32 to vector<2x256xf32>
    %306 = arith.mulf %305, %204 : vector<2x256xf32>
    %307 = arith.addf %304, %306 : vector<2x256xf32>
    %308 = vector.broadcast %30 : f32 to vector<2x256xf32>
    %309 = arith.mulf %308, %226 : vector<2x256xf32>
    %310 = arith.addf %307, %309 : vector<2x256xf32>
    %311 = vector.broadcast %62 : f32 to vector<2x256xf32>
    %312 = arith.mulf %311, %228 : vector<2x256xf32>
    %313 = arith.addf %310, %312 : vector<2x256xf32>
    %314 = vector.broadcast %94 : f32 to vector<2x256xf32>
    %315 = arith.mulf %314, %230 : vector<2x256xf32>
    %316 = arith.addf %313, %315 : vector<2x256xf32>
    %317 = vector.broadcast %126 : f32 to vector<2x256xf32>
    %318 = arith.mulf %317, %232 : vector<2x256xf32>
    %319 = arith.addf %316, %318 : vector<2x256xf32>
    %320 = vector.broadcast %24 : f32 to vector<2x256xf32>
    %321 = arith.mulf %320, %254 : vector<2x256xf32>
    %322 = arith.addf %319, %321 : vector<2x256xf32>
    %323 = vector.broadcast %56 : f32 to vector<2x256xf32>
    %324 = arith.mulf %323, %256 : vector<2x256xf32>
    %325 = arith.addf %322, %324 : vector<2x256xf32>
    %326 = vector.broadcast %88 : f32 to vector<2x256xf32>
    %327 = arith.mulf %326, %258 : vector<2x256xf32>
    %328 = arith.addf %325, %327 : vector<2x256xf32>
    %329 = vector.broadcast %120 : f32 to vector<2x256xf32>
    %330 = arith.mulf %329, %260 : vector<2x256xf32>
    %331 = arith.addf %328, %330 : vector<2x256xf32>
    %332 = vector.broadcast %22 : f32 to vector<2x256xf32>
    %333 = arith.mulf %332, %274 : vector<2x256xf32>
    %334 = arith.addf %331, %333 : vector<2x256xf32>
    %335 = vector.broadcast %54 : f32 to vector<2x256xf32>
    %336 = arith.mulf %335, %276 : vector<2x256xf32>
    %337 = arith.addf %334, %336 : vector<2x256xf32>
    %338 = vector.broadcast %86 : f32 to vector<2x256xf32>
    %339 = arith.mulf %338, %278 : vector<2x256xf32>
    %340 = arith.addf %337, %339 : vector<2x256xf32>
    %341 = vector.broadcast %118 : f32 to vector<2x256xf32>
    %342 = arith.mulf %341, %280 : vector<2x256xf32>
    %343 = arith.addf %340, %342 : vector<2x256xf32>
    %344 = vector.broadcast %130 : f32 to vector<2x256xf32>
    %345 = arith.addf %343, %344 : vector<2x256xf32>
    %cst_72 = arith.constant 0.000000e+00 : f32
    %346 = vector.broadcast %cst_72 : f32 to vector<2x256xf32>
    %347 = vector.broadcast %15 : f32 to vector<2x256xf32>
    %348 = arith.mulf %347, %226 : vector<2x256xf32>
    %349 = arith.addf %346, %348 : vector<2x256xf32>
    %350 = vector.broadcast %47 : f32 to vector<2x256xf32>
    %351 = arith.mulf %350, %228 : vector<2x256xf32>
    %352 = arith.addf %349, %351 : vector<2x256xf32>
    %353 = vector.broadcast %79 : f32 to vector<2x256xf32>
    %354 = arith.mulf %353, %230 : vector<2x256xf32>
    %355 = arith.addf %352, %354 : vector<2x256xf32>
    %356 = vector.broadcast %111 : f32 to vector<2x256xf32>
    %357 = arith.mulf %356, %232 : vector<2x256xf32>
    %358 = arith.addf %355, %357 : vector<2x256xf32>
    %cst_73 = arith.constant 0.000000e+00 : f32
    %359 = vector.broadcast %cst_73 : f32 to vector<2x4x15xf32>
    %360 = vector.extract_strided_slice %0 {offsets = [0, 0, 0], sizes = [2, 4, 241], strides = [1, 1, 1]} : vector<2x4x256xf32> to vector<2x4x241xf32>
    %361 = tpu.concatenate %359, %360 in 2 : vector<2x4x15xf32>, vector<2x4x241xf32> -> vector<2x4x256xf32>
    %c2_74 = arith.constant 2 : index
    %c0_75 = arith.constant 0 : index
    %362 = vector.load %arg2[%c2_74, %c0_75] : memref<9x256xf32, #tpu.memory_space<vmem>>, vector<1x256xf32>
    %363 = vector.shape_cast %362 : vector<1x256xf32> to vector<256xf32>
    %364 = vector.shape_cast %363 : vector<256xf32> to vector<1x1x256xf32>
    %365 = vector.broadcast %364 : vector<1x1x256xf32> to vector<2x4x256xf32>
    %366 = arith.mulf %361, %365 : vector<2x4x256xf32>
    %367 = vector.extract_strided_slice %366 {offsets = [0, 0, 0], sizes = [2, 1, 256], strides = [1, 1, 1]} : vector<2x4x256xf32> to vector<2x1x256xf32>
    %368 = vector.shape_cast %367 : vector<2x1x256xf32> to vector<2x256xf32>
    %369 = vector.extract_strided_slice %366 {offsets = [0, 1, 0], sizes = [2, 1, 256], strides = [1, 1, 1]} : vector<2x4x256xf32> to vector<2x1x256xf32>
    %370 = vector.shape_cast %369 : vector<2x1x256xf32> to vector<2x256xf32>
    %371 = vector.extract_strided_slice %366 {offsets = [0, 2, 0], sizes = [2, 1, 256], strides = [1, 1, 1]} : vector<2x4x256xf32> to vector<2x1x256xf32>
    %372 = vector.shape_cast %371 : vector<2x1x256xf32> to vector<2x256xf32>
    %373 = vector.extract_strided_slice %366 {offsets = [0, 3, 0], sizes = [2, 1, 256], strides = [1, 1, 1]} : vector<2x4x256xf32> to vector<2x1x256xf32>
    %374 = vector.shape_cast %373 : vector<2x1x256xf32> to vector<2x256xf32>
    %375 = vector.broadcast %13 : f32 to vector<2x256xf32>
    %376 = arith.mulf %375, %368 : vector<2x256xf32>
    %377 = arith.addf %358, %376 : vector<2x256xf32>
    %378 = vector.broadcast %45 : f32 to vector<2x256xf32>
    %379 = arith.mulf %378, %370 : vector<2x256xf32>
    %380 = arith.addf %377, %379 : vector<2x256xf32>
    %381 = vector.broadcast %77 : f32 to vector<2x256xf32>
    %382 = arith.mulf %381, %372 : vector<2x256xf32>
    %383 = arith.addf %380, %382 : vector<2x256xf32>
    %384 = vector.broadcast %109 : f32 to vector<2x256xf32>
    %385 = arith.mulf %384, %374 : vector<2x256xf32>
    %386 = arith.addf %383, %385 : vector<2x256xf32>
    %387 = vector.broadcast %7 : f32 to vector<2x256xf32>
    %388 = arith.mulf %387, %274 : vector<2x256xf32>
    %389 = arith.addf %386, %388 : vector<2x256xf32>
    %390 = vector.broadcast %39 : f32 to vector<2x256xf32>
    %391 = arith.mulf %390, %276 : vector<2x256xf32>
    %392 = arith.addf %389, %391 : vector<2x256xf32>
    %393 = vector.broadcast %71 : f32 to vector<2x256xf32>
    %394 = arith.mulf %393, %278 : vector<2x256xf32>
    %395 = arith.addf %392, %394 : vector<2x256xf32>
    %396 = vector.broadcast %103 : f32 to vector<2x256xf32>
    %397 = arith.mulf %396, %280 : vector<2x256xf32>
    %398 = arith.addf %395, %397 : vector<2x256xf32>
    %cst_76 = arith.constant 0.000000e+00 : f32
    %399 = vector.broadcast %cst_76 : f32 to vector<2x4x1xf32>
    %400 = vector.extract_strided_slice %0 {offsets = [0, 0, 1], sizes = [2, 4, 255], strides = [1, 1, 1]} : vector<2x4x256xf32> to vector<2x4x255xf32>
    %401 = tpu.concatenate %400, %399 in 2 : vector<2x4x255xf32>, vector<2x4x1xf32> -> vector<2x4x256xf32>
    %c5_77 = arith.constant 5 : index
    %c0_78 = arith.constant 0 : index
    %402 = vector.load %arg2[%c5_77, %c0_78] : memref<9x256xf32, #tpu.memory_space<vmem>>, vector<1x256xf32>
    %403 = vector.shape_cast %402 : vector<1x256xf32> to vector<256xf32>
    %404 = vector.shape_cast %403 : vector<256xf32> to vector<1x1x256xf32>
    %405 = vector.broadcast %404 : vector<1x1x256xf32> to vector<2x4x256xf32>
    %406 = arith.mulf %401, %405 : vector<2x4x256xf32>
    %407 = vector.extract_strided_slice %406 {offsets = [0, 0, 0], sizes = [2, 1, 256], strides = [1, 1, 1]} : vector<2x4x256xf32> to vector<2x1x256xf32>
    %408 = vector.shape_cast %407 : vector<2x1x256xf32> to vector<2x256xf32>
    %409 = vector.extract_strided_slice %406 {offsets = [0, 1, 0], sizes = [2, 1, 256], strides = [1, 1, 1]} : vector<2x4x256xf32> to vector<2x1x256xf32>
    %410 = vector.shape_cast %409 : vector<2x1x256xf32> to vector<2x256xf32>
    %411 = vector.extract_strided_slice %406 {offsets = [0, 2, 0], sizes = [2, 1, 256], strides = [1, 1, 1]} : vector<2x4x256xf32> to vector<2x1x256xf32>
    %412 = vector.shape_cast %411 : vector<2x1x256xf32> to vector<2x256xf32>
    %413 = vector.extract_strided_slice %406 {offsets = [0, 3, 0], sizes = [2, 1, 256], strides = [1, 1, 1]} : vector<2x4x256xf32> to vector<2x1x256xf32>
    %414 = vector.shape_cast %413 : vector<2x1x256xf32> to vector<2x256xf32>
    %415 = vector.broadcast %5 : f32 to vector<2x256xf32>
    %416 = arith.mulf %415, %408 : vector<2x256xf32>
    %417 = arith.addf %398, %416 : vector<2x256xf32>
    %418 = vector.broadcast %37 : f32 to vector<2x256xf32>
    %419 = arith.mulf %418, %410 : vector<2x256xf32>
    %420 = arith.addf %417, %419 : vector<2x256xf32>
    %421 = vector.broadcast %69 : f32 to vector<2x256xf32>
    %422 = arith.mulf %421, %412 : vector<2x256xf32>
    %423 = arith.addf %420, %422 : vector<2x256xf32>
    %424 = vector.broadcast %101 : f32 to vector<2x256xf32>
    %425 = arith.mulf %424, %414 : vector<2x256xf32>
    %426 = arith.addf %423, %425 : vector<2x256xf32>
    %427 = vector.broadcast %129 : f32 to vector<2x256xf32>
    %428 = arith.addf %426, %427 : vector<2x256xf32>
    %cst_79 = arith.constant 0.000000e+00 : f32
    %429 = vector.broadcast %cst_79 : f32 to vector<2x256xf32>
    %430 = vector.broadcast %31 : f32 to vector<2x256xf32>
    %431 = arith.mulf %430, %226 : vector<2x256xf32>
    %432 = arith.addf %429, %431 : vector<2x256xf32>
    %433 = vector.broadcast %63 : f32 to vector<2x256xf32>
    %434 = arith.mulf %433, %228 : vector<2x256xf32>
    %435 = arith.addf %432, %434 : vector<2x256xf32>
    %436 = vector.broadcast %95 : f32 to vector<2x256xf32>
    %437 = arith.mulf %436, %230 : vector<2x256xf32>
    %438 = arith.addf %435, %437 : vector<2x256xf32>
    %439 = vector.broadcast %127 : f32 to vector<2x256xf32>
    %440 = arith.mulf %439, %232 : vector<2x256xf32>
    %441 = arith.addf %438, %440 : vector<2x256xf32>
    %442 = vector.broadcast %29 : f32 to vector<2x256xf32>
    %443 = arith.mulf %442, %368 : vector<2x256xf32>
    %444 = arith.addf %441, %443 : vector<2x256xf32>
    %445 = vector.broadcast %61 : f32 to vector<2x256xf32>
    %446 = arith.mulf %445, %370 : vector<2x256xf32>
    %447 = arith.addf %444, %446 : vector<2x256xf32>
    %448 = vector.broadcast %93 : f32 to vector<2x256xf32>
    %449 = arith.mulf %448, %372 : vector<2x256xf32>
    %450 = arith.addf %447, %449 : vector<2x256xf32>
    %451 = vector.broadcast %125 : f32 to vector<2x256xf32>
    %452 = arith.mulf %451, %374 : vector<2x256xf32>
    %453 = arith.addf %450, %452 : vector<2x256xf32>
    %454 = vector.broadcast %23 : f32 to vector<2x256xf32>
    %455 = arith.mulf %454, %274 : vector<2x256xf32>
    %456 = arith.addf %453, %455 : vector<2x256xf32>
    %457 = vector.broadcast %55 : f32 to vector<2x256xf32>
    %458 = arith.mulf %457, %276 : vector<2x256xf32>
    %459 = arith.addf %456, %458 : vector<2x256xf32>
    %460 = vector.broadcast %87 : f32 to vector<2x256xf32>
    %461 = arith.mulf %460, %278 : vector<2x256xf32>
    %462 = arith.addf %459, %461 : vector<2x256xf32>
    %463 = vector.broadcast %119 : f32 to vector<2x256xf32>
    %464 = arith.mulf %463, %280 : vector<2x256xf32>
    %465 = arith.addf %462, %464 : vector<2x256xf32>
    %466 = vector.broadcast %21 : f32 to vector<2x256xf32>
    %467 = arith.mulf %466, %408 : vector<2x256xf32>
    %468 = arith.addf %465, %467 : vector<2x256xf32>
    %469 = vector.broadcast %53 : f32 to vector<2x256xf32>
    %470 = arith.mulf %469, %410 : vector<2x256xf32>
    %471 = arith.addf %468, %470 : vector<2x256xf32>
    %472 = vector.broadcast %85 : f32 to vector<2x256xf32>
    %473 = arith.mulf %472, %412 : vector<2x256xf32>
    %474 = arith.addf %471, %473 : vector<2x256xf32>
    %475 = vector.broadcast %117 : f32 to vector<2x256xf32>
    %476 = arith.mulf %475, %414 : vector<2x256xf32>
    %477 = arith.addf %474, %476 : vector<2x256xf32>
    %478 = vector.broadcast %130 : f32 to vector<2x256xf32>
    %479 = arith.addf %477, %478 : vector<2x256xf32>
    %cst_80 = arith.constant 0.000000e+00 : f32
    %480 = vector.broadcast %cst_80 : f32 to vector<2x256xf32>
    %481 = vector.broadcast %12 : f32 to vector<2x256xf32>
    %482 = arith.mulf %481, %254 : vector<2x256xf32>
    %483 = arith.addf %480, %482 : vector<2x256xf32>
    %484 = vector.broadcast %44 : f32 to vector<2x256xf32>
    %485 = arith.mulf %484, %256 : vector<2x256xf32>
    %486 = arith.addf %483, %485 : vector<2x256xf32>
    %487 = vector.broadcast %76 : f32 to vector<2x256xf32>
    %488 = arith.mulf %487, %258 : vector<2x256xf32>
    %489 = arith.addf %486, %488 : vector<2x256xf32>
    %490 = vector.broadcast %108 : f32 to vector<2x256xf32>
    %491 = arith.mulf %490, %260 : vector<2x256xf32>
    %492 = arith.addf %489, %491 : vector<2x256xf32>
    %493 = vector.broadcast %10 : f32 to vector<2x256xf32>
    %494 = arith.mulf %493, %274 : vector<2x256xf32>
    %495 = arith.addf %492, %494 : vector<2x256xf32>
    %496 = vector.broadcast %42 : f32 to vector<2x256xf32>
    %497 = arith.mulf %496, %276 : vector<2x256xf32>
    %498 = arith.addf %495, %497 : vector<2x256xf32>
    %499 = vector.broadcast %74 : f32 to vector<2x256xf32>
    %500 = arith.mulf %499, %278 : vector<2x256xf32>
    %501 = arith.addf %498, %500 : vector<2x256xf32>
    %502 = vector.broadcast %106 : f32 to vector<2x256xf32>
    %503 = arith.mulf %502, %280 : vector<2x256xf32>
    %504 = arith.addf %501, %503 : vector<2x256xf32>
    %cst_81 = arith.constant 0.000000e+00 : f32
    %505 = vector.broadcast %cst_81 : f32 to vector<2x4x15xf32>
    %506 = vector.extract_strided_slice %0 {offsets = [0, 0, 15], sizes = [2, 4, 241], strides = [1, 1, 1]} : vector<2x4x256xf32> to vector<2x4x241xf32>
    %507 = tpu.concatenate %506, %505 in 2 : vector<2x4x241xf32>, vector<2x4x15xf32> -> vector<2x4x256xf32>
    %c6_82 = arith.constant 6 : index
    %c0_83 = arith.constant 0 : index
    %508 = vector.load %arg2[%c6_82, %c0_83] : memref<9x256xf32, #tpu.memory_space<vmem>>, vector<1x256xf32>
    %509 = vector.shape_cast %508 : vector<1x256xf32> to vector<256xf32>
    %510 = vector.shape_cast %509 : vector<256xf32> to vector<1x1x256xf32>
    %511 = vector.broadcast %510 : vector<1x1x256xf32> to vector<2x4x256xf32>
    %512 = arith.mulf %507, %511 : vector<2x4x256xf32>
    %513 = vector.extract_strided_slice %512 {offsets = [0, 0, 0], sizes = [2, 1, 256], strides = [1, 1, 1]} : vector<2x4x256xf32> to vector<2x1x256xf32>
    %514 = vector.shape_cast %513 : vector<2x1x256xf32> to vector<2x256xf32>
    %515 = vector.extract_strided_slice %512 {offsets = [0, 1, 0], sizes = [2, 1, 256], strides = [1, 1, 1]} : vector<2x4x256xf32> to vector<2x1x256xf32>
    %516 = vector.shape_cast %515 : vector<2x1x256xf32> to vector<2x256xf32>
    %517 = vector.extract_strided_slice %512 {offsets = [0, 2, 0], sizes = [2, 1, 256], strides = [1, 1, 1]} : vector<2x4x256xf32> to vector<2x1x256xf32>
    %518 = vector.shape_cast %517 : vector<2x1x256xf32> to vector<2x256xf32>
    %519 = vector.extract_strided_slice %512 {offsets = [0, 3, 0], sizes = [2, 1, 256], strides = [1, 1, 1]} : vector<2x4x256xf32> to vector<2x1x256xf32>
    %520 = vector.shape_cast %519 : vector<2x1x256xf32> to vector<2x256xf32>
    %521 = vector.broadcast %4 : f32 to vector<2x256xf32>
    %522 = arith.mulf %521, %514 : vector<2x256xf32>
    %523 = arith.addf %504, %522 : vector<2x256xf32>
    %524 = vector.broadcast %36 : f32 to vector<2x256xf32>
    %525 = arith.mulf %524, %516 : vector<2x256xf32>
    %526 = arith.addf %523, %525 : vector<2x256xf32>
    %527 = vector.broadcast %68 : f32 to vector<2x256xf32>
    %528 = arith.mulf %527, %518 : vector<2x256xf32>
    %529 = arith.addf %526, %528 : vector<2x256xf32>
    %530 = vector.broadcast %100 : f32 to vector<2x256xf32>
    %531 = arith.mulf %530, %520 : vector<2x256xf32>
    %532 = arith.addf %529, %531 : vector<2x256xf32>
    %cst_84 = arith.constant 0.000000e+00 : f32
    %533 = vector.broadcast %cst_84 : f32 to vector<2x4x16xf32>
    %534 = vector.extract_strided_slice %0 {offsets = [0, 0, 16], sizes = [2, 4, 240], strides = [1, 1, 1]} : vector<2x4x256xf32> to vector<2x4x240xf32>
    %535 = tpu.concatenate %534, %533 in 2 : vector<2x4x240xf32>, vector<2x4x16xf32> -> vector<2x4x256xf32>
    %c7_85 = arith.constant 7 : index
    %c0_86 = arith.constant 0 : index
    %536 = vector.load %arg2[%c7_85, %c0_86] : memref<9x256xf32, #tpu.memory_space<vmem>>, vector<1x256xf32>
    %537 = vector.shape_cast %536 : vector<1x256xf32> to vector<256xf32>
    %538 = vector.shape_cast %537 : vector<256xf32> to vector<1x1x256xf32>
    %539 = vector.broadcast %538 : vector<1x1x256xf32> to vector<2x4x256xf32>
    %540 = arith.mulf %535, %539 : vector<2x4x256xf32>
    %541 = vector.extract_strided_slice %540 {offsets = [0, 0, 0], sizes = [2, 1, 256], strides = [1, 1, 1]} : vector<2x4x256xf32> to vector<2x1x256xf32>
    %542 = vector.shape_cast %541 : vector<2x1x256xf32> to vector<2x256xf32>
    %543 = vector.extract_strided_slice %540 {offsets = [0, 1, 0], sizes = [2, 1, 256], strides = [1, 1, 1]} : vector<2x4x256xf32> to vector<2x1x256xf32>
    %544 = vector.shape_cast %543 : vector<2x1x256xf32> to vector<2x256xf32>
    %545 = vector.extract_strided_slice %540 {offsets = [0, 2, 0], sizes = [2, 1, 256], strides = [1, 1, 1]} : vector<2x4x256xf32> to vector<2x1x256xf32>
    %546 = vector.shape_cast %545 : vector<2x1x256xf32> to vector<2x256xf32>
    %547 = vector.extract_strided_slice %540 {offsets = [0, 3, 0], sizes = [2, 1, 256], strides = [1, 1, 1]} : vector<2x4x256xf32> to vector<2x1x256xf32>
    %548 = vector.shape_cast %547 : vector<2x1x256xf32> to vector<2x256xf32>
    %549 = vector.broadcast %2 : f32 to vector<2x256xf32>
    %550 = arith.mulf %549, %542 : vector<2x256xf32>
    %551 = arith.addf %532, %550 : vector<2x256xf32>
    %552 = vector.broadcast %34 : f32 to vector<2x256xf32>
    %553 = arith.mulf %552, %544 : vector<2x256xf32>
    %554 = arith.addf %551, %553 : vector<2x256xf32>
    %555 = vector.broadcast %66 : f32 to vector<2x256xf32>
    %556 = arith.mulf %555, %546 : vector<2x256xf32>
    %557 = arith.addf %554, %556 : vector<2x256xf32>
    %558 = vector.broadcast %98 : f32 to vector<2x256xf32>
    %559 = arith.mulf %558, %548 : vector<2x256xf32>
    %560 = arith.addf %557, %559 : vector<2x256xf32>
    %561 = vector.broadcast %129 : f32 to vector<2x256xf32>
    %562 = arith.addf %560, %561 : vector<2x256xf32>
    %cst_87 = arith.constant 0.000000e+00 : f32
    %563 = vector.broadcast %cst_87 : f32 to vector<2x256xf32>
    %564 = vector.broadcast %28 : f32 to vector<2x256xf32>
    %565 = arith.mulf %564, %254 : vector<2x256xf32>
    %566 = arith.addf %563, %565 : vector<2x256xf32>
    %567 = vector.broadcast %60 : f32 to vector<2x256xf32>
    %568 = arith.mulf %567, %256 : vector<2x256xf32>
    %569 = arith.addf %566, %568 : vector<2x256xf32>
    %570 = vector.broadcast %92 : f32 to vector<2x256xf32>
    %571 = arith.mulf %570, %258 : vector<2x256xf32>
    %572 = arith.addf %569, %571 : vector<2x256xf32>
    %573 = vector.broadcast %124 : f32 to vector<2x256xf32>
    %574 = arith.mulf %573, %260 : vector<2x256xf32>
    %575 = arith.addf %572, %574 : vector<2x256xf32>
    %576 = vector.broadcast %26 : f32 to vector<2x256xf32>
    %577 = arith.mulf %576, %274 : vector<2x256xf32>
    %578 = arith.addf %575, %577 : vector<2x256xf32>
    %579 = vector.broadcast %58 : f32 to vector<2x256xf32>
    %580 = arith.mulf %579, %276 : vector<2x256xf32>
    %581 = arith.addf %578, %580 : vector<2x256xf32>
    %582 = vector.broadcast %90 : f32 to vector<2x256xf32>
    %583 = arith.mulf %582, %278 : vector<2x256xf32>
    %584 = arith.addf %581, %583 : vector<2x256xf32>
    %585 = vector.broadcast %122 : f32 to vector<2x256xf32>
    %586 = arith.mulf %585, %280 : vector<2x256xf32>
    %587 = arith.addf %584, %586 : vector<2x256xf32>
    %588 = vector.broadcast %20 : f32 to vector<2x256xf32>
    %589 = arith.mulf %588, %514 : vector<2x256xf32>
    %590 = arith.addf %587, %589 : vector<2x256xf32>
    %591 = vector.broadcast %52 : f32 to vector<2x256xf32>
    %592 = arith.mulf %591, %516 : vector<2x256xf32>
    %593 = arith.addf %590, %592 : vector<2x256xf32>
    %594 = vector.broadcast %84 : f32 to vector<2x256xf32>
    %595 = arith.mulf %594, %518 : vector<2x256xf32>
    %596 = arith.addf %593, %595 : vector<2x256xf32>
    %597 = vector.broadcast %116 : f32 to vector<2x256xf32>
    %598 = arith.mulf %597, %520 : vector<2x256xf32>
    %599 = arith.addf %596, %598 : vector<2x256xf32>
    %600 = vector.broadcast %18 : f32 to vector<2x256xf32>
    %601 = arith.mulf %600, %542 : vector<2x256xf32>
    %602 = arith.addf %599, %601 : vector<2x256xf32>
    %603 = vector.broadcast %50 : f32 to vector<2x256xf32>
    %604 = arith.mulf %603, %544 : vector<2x256xf32>
    %605 = arith.addf %602, %604 : vector<2x256xf32>
    %606 = vector.broadcast %82 : f32 to vector<2x256xf32>
    %607 = arith.mulf %606, %546 : vector<2x256xf32>
    %608 = arith.addf %605, %607 : vector<2x256xf32>
    %609 = vector.broadcast %114 : f32 to vector<2x256xf32>
    %610 = arith.mulf %609, %548 : vector<2x256xf32>
    %611 = arith.addf %608, %610 : vector<2x256xf32>
    %612 = vector.broadcast %130 : f32 to vector<2x256xf32>
    %613 = arith.addf %611, %612 : vector<2x256xf32>
    %cst_88 = arith.constant 0.000000e+00 : f32
    %614 = vector.broadcast %cst_88 : f32 to vector<2x256xf32>
    %615 = vector.broadcast %11 : f32 to vector<2x256xf32>
    %616 = arith.mulf %615, %274 : vector<2x256xf32>
    %617 = arith.addf %614, %616 : vector<2x256xf32>
    %618 = vector.broadcast %43 : f32 to vector<2x256xf32>
    %619 = arith.mulf %618, %276 : vector<2x256xf32>
    %620 = arith.addf %617, %619 : vector<2x256xf32>
    %621 = vector.broadcast %75 : f32 to vector<2x256xf32>
    %622 = arith.mulf %621, %278 : vector<2x256xf32>
    %623 = arith.addf %620, %622 : vector<2x256xf32>
    %624 = vector.broadcast %107 : f32 to vector<2x256xf32>
    %625 = arith.mulf %624, %280 : vector<2x256xf32>
    %626 = arith.addf %623, %625 : vector<2x256xf32>
    %627 = vector.broadcast %9 : f32 to vector<2x256xf32>
    %628 = arith.mulf %627, %408 : vector<2x256xf32>
    %629 = arith.addf %626, %628 : vector<2x256xf32>
    %630 = vector.broadcast %41 : f32 to vector<2x256xf32>
    %631 = arith.mulf %630, %410 : vector<2x256xf32>
    %632 = arith.addf %629, %631 : vector<2x256xf32>
    %633 = vector.broadcast %73 : f32 to vector<2x256xf32>
    %634 = arith.mulf %633, %412 : vector<2x256xf32>
    %635 = arith.addf %632, %634 : vector<2x256xf32>
    %636 = vector.broadcast %105 : f32 to vector<2x256xf32>
    %637 = arith.mulf %636, %414 : vector<2x256xf32>
    %638 = arith.addf %635, %637 : vector<2x256xf32>
    %639 = vector.broadcast %3 : f32 to vector<2x256xf32>
    %640 = arith.mulf %639, %542 : vector<2x256xf32>
    %641 = arith.addf %638, %640 : vector<2x256xf32>
    %642 = vector.broadcast %35 : f32 to vector<2x256xf32>
    %643 = arith.mulf %642, %544 : vector<2x256xf32>
    %644 = arith.addf %641, %643 : vector<2x256xf32>
    %645 = vector.broadcast %67 : f32 to vector<2x256xf32>
    %646 = arith.mulf %645, %546 : vector<2x256xf32>
    %647 = arith.addf %644, %646 : vector<2x256xf32>
    %648 = vector.broadcast %99 : f32 to vector<2x256xf32>
    %649 = arith.mulf %648, %548 : vector<2x256xf32>
    %650 = arith.addf %647, %649 : vector<2x256xf32>
    %cst_89 = arith.constant 0.000000e+00 : f32
    %651 = vector.broadcast %cst_89 : f32 to vector<2x4x17xf32>
    %652 = vector.extract_strided_slice %0 {offsets = [0, 0, 17], sizes = [2, 4, 239], strides = [1, 1, 1]} : vector<2x4x256xf32> to vector<2x4x239xf32>
    %653 = tpu.concatenate %652, %651 in 2 : vector<2x4x239xf32>, vector<2x4x17xf32> -> vector<2x4x256xf32>
    %c8_90 = arith.constant 8 : index
    %c0_91 = arith.constant 0 : index
    %654 = vector.load %arg2[%c8_90, %c0_91] : memref<9x256xf32, #tpu.memory_space<vmem>>, vector<1x256xf32>
    %655 = vector.shape_cast %654 : vector<1x256xf32> to vector<256xf32>
    %656 = vector.shape_cast %655 : vector<256xf32> to vector<1x1x256xf32>
    %657 = vector.broadcast %656 : vector<1x1x256xf32> to vector<2x4x256xf32>
    %658 = arith.mulf %653, %657 : vector<2x4x256xf32>
    %659 = vector.extract_strided_slice %658 {offsets = [0, 0, 0], sizes = [2, 1, 256], strides = [1, 1, 1]} : vector<2x4x256xf32> to vector<2x1x256xf32>
    %660 = vector.shape_cast %659 : vector<2x1x256xf32> to vector<2x256xf32>
    %661 = vector.extract_strided_slice %658 {offsets = [0, 1, 0], sizes = [2, 1, 256], strides = [1, 1, 1]} : vector<2x4x256xf32> to vector<2x1x256xf32>
    %662 = vector.shape_cast %661 : vector<2x1x256xf32> to vector<2x256xf32>
    %663 = vector.extract_strided_slice %658 {offsets = [0, 2, 0], sizes = [2, 1, 256], strides = [1, 1, 1]} : vector<2x4x256xf32> to vector<2x1x256xf32>
    %664 = vector.shape_cast %663 : vector<2x1x256xf32> to vector<2x256xf32>
    %665 = vector.extract_strided_slice %658 {offsets = [0, 3, 0], sizes = [2, 1, 256], strides = [1, 1, 1]} : vector<2x4x256xf32> to vector<2x1x256xf32>
    %666 = vector.shape_cast %665 : vector<2x1x256xf32> to vector<2x256xf32>
    %667 = vector.broadcast %1 : f32 to vector<2x256xf32>
    %668 = arith.mulf %667, %660 : vector<2x256xf32>
    %669 = arith.addf %650, %668 : vector<2x256xf32>
    %670 = vector.broadcast %33 : f32 to vector<2x256xf32>
    %671 = arith.mulf %670, %662 : vector<2x256xf32>
    %672 = arith.addf %669, %671 : vector<2x256xf32>
    %673 = vector.broadcast %65 : f32 to vector<2x256xf32>
    %674 = arith.mulf %673, %664 : vector<2x256xf32>
    %675 = arith.addf %672, %674 : vector<2x256xf32>
    %676 = vector.broadcast %97 : f32 to vector<2x256xf32>
    %677 = arith.mulf %676, %666 : vector<2x256xf32>
    %678 = arith.addf %675, %677 : vector<2x256xf32>
    %679 = vector.broadcast %129 : f32 to vector<2x256xf32>
    %680 = arith.addf %678, %679 : vector<2x256xf32>
    %cst_92 = arith.constant 0.000000e+00 : f32
    %681 = vector.broadcast %cst_92 : f32 to vector<2x256xf32>
    %682 = vector.broadcast %27 : f32 to vector<2x256xf32>
    %683 = arith.mulf %682, %274 : vector<2x256xf32>
    %684 = arith.addf %681, %683 : vector<2x256xf32>
    %685 = vector.broadcast %59 : f32 to vector<2x256xf32>
    %686 = arith.mulf %685, %276 : vector<2x256xf32>
    %687 = arith.addf %684, %686 : vector<2x256xf32>
    %688 = vector.broadcast %91 : f32 to vector<2x256xf32>
    %689 = arith.mulf %688, %278 : vector<2x256xf32>
    %690 = arith.addf %687, %689 : vector<2x256xf32>
    %691 = vector.broadcast %123 : f32 to vector<2x256xf32>
    %692 = arith.mulf %691, %280 : vector<2x256xf32>
    %693 = arith.addf %690, %692 : vector<2x256xf32>
    %694 = vector.broadcast %25 : f32 to vector<2x256xf32>
    %695 = arith.mulf %694, %408 : vector<2x256xf32>
    %696 = arith.addf %693, %695 : vector<2x256xf32>
    %697 = vector.broadcast %57 : f32 to vector<2x256xf32>
    %698 = arith.mulf %697, %410 : vector<2x256xf32>
    %699 = arith.addf %696, %698 : vector<2x256xf32>
    %700 = vector.broadcast %89 : f32 to vector<2x256xf32>
    %701 = arith.mulf %700, %412 : vector<2x256xf32>
    %702 = arith.addf %699, %701 : vector<2x256xf32>
    %703 = vector.broadcast %121 : f32 to vector<2x256xf32>
    %704 = arith.mulf %703, %414 : vector<2x256xf32>
    %705 = arith.addf %702, %704 : vector<2x256xf32>
    %706 = vector.broadcast %19 : f32 to vector<2x256xf32>
    %707 = arith.mulf %706, %542 : vector<2x256xf32>
    %708 = arith.addf %705, %707 : vector<2x256xf32>
    %709 = vector.broadcast %51 : f32 to vector<2x256xf32>
    %710 = arith.mulf %709, %544 : vector<2x256xf32>
    %711 = arith.addf %708, %710 : vector<2x256xf32>
    %712 = vector.broadcast %83 : f32 to vector<2x256xf32>
    %713 = arith.mulf %712, %546 : vector<2x256xf32>
    %714 = arith.addf %711, %713 : vector<2x256xf32>
    %715 = vector.broadcast %115 : f32 to vector<2x256xf32>
    %716 = arith.mulf %715, %548 : vector<2x256xf32>
    %717 = arith.addf %714, %716 : vector<2x256xf32>
    %718 = vector.broadcast %17 : f32 to vector<2x256xf32>
    %719 = arith.mulf %718, %660 : vector<2x256xf32>
    %720 = arith.addf %717, %719 : vector<2x256xf32>
    %721 = vector.broadcast %49 : f32 to vector<2x256xf32>
    %722 = arith.mulf %721, %662 : vector<2x256xf32>
    %723 = arith.addf %720, %722 : vector<2x256xf32>
    %724 = vector.broadcast %81 : f32 to vector<2x256xf32>
    %725 = arith.mulf %724, %664 : vector<2x256xf32>
    %726 = arith.addf %723, %725 : vector<2x256xf32>
    %727 = vector.broadcast %113 : f32 to vector<2x256xf32>
    %728 = arith.mulf %727, %666 : vector<2x256xf32>
    %729 = arith.addf %726, %728 : vector<2x256xf32>
    %730 = vector.broadcast %130 : f32 to vector<2x256xf32>
    %731 = arith.addf %729, %730 : vector<2x256xf32>
    %cst_93 = arith.constant 0.000000e+00 : f32
    %732 = vector.broadcast %cst_93 : f32 to vector<2x256xf32>
    %cst_94 = arith.constant 0.000000e+00 : f32
    %733 = vector.broadcast %cst_94 : f32 to vector<2x17xf32>
    %734 = vector.extract_strided_slice %680 {offsets = [0, 0], sizes = [2, 239], strides = [1, 1]} : vector<2x256xf32> to vector<2x239xf32>
    %735 = tpu.concatenate %733, %734 in 1 : vector<2x17xf32>, vector<2x239xf32> -> vector<2x256xf32>
    %c0_95 = arith.constant 0 : index
    %c0_96 = arith.constant 0 : index
    %736 = vector.load %arg2[%c0_95, %c0_96] : memref<9x256xf32, #tpu.memory_space<vmem>>, vector<1x256xf32>
    %737 = vector.shape_cast %736 : vector<1x256xf32> to vector<256xf32>
    %738 = vector.shape_cast %737 : vector<256xf32> to vector<1x256xf32>
    %739 = vector.broadcast %738 : vector<1x256xf32> to vector<2x256xf32>
    %740 = arith.mulf %735, %739 : vector<2x256xf32>
    %741 = vector.broadcast %131 : f32 to vector<2x256xf32>
    %742 = arith.mulf %741, %740 : vector<2x256xf32>
    %743 = arith.addf %732, %742 : vector<2x256xf32>
    %cst_97 = arith.constant 0.000000e+00 : f32
    %744 = vector.broadcast %cst_97 : f32 to vector<2x17xf32>
    %745 = vector.extract_strided_slice %731 {offsets = [0, 0], sizes = [2, 239], strides = [1, 1]} : vector<2x256xf32> to vector<2x239xf32>
    %746 = tpu.concatenate %744, %745 in 1 : vector<2x17xf32>, vector<2x239xf32> -> vector<2x256xf32>
    %c0_98 = arith.constant 0 : index
    %c0_99 = arith.constant 0 : index
    %747 = vector.load %arg2[%c0_98, %c0_99] : memref<9x256xf32, #tpu.memory_space<vmem>>, vector<1x256xf32>
    %748 = vector.shape_cast %747 : vector<1x256xf32> to vector<256xf32>
    %749 = vector.shape_cast %748 : vector<256xf32> to vector<1x256xf32>
    %750 = vector.broadcast %749 : vector<1x256xf32> to vector<2x256xf32>
    %751 = arith.mulf %746, %750 : vector<2x256xf32>
    %752 = vector.broadcast %140 : f32 to vector<2x256xf32>
    %753 = arith.mulf %752, %751 : vector<2x256xf32>
    %754 = arith.addf %743, %753 : vector<2x256xf32>
    %cst_100 = arith.constant 0.000000e+00 : f32
    %755 = vector.broadcast %cst_100 : f32 to vector<2x16xf32>
    %756 = vector.extract_strided_slice %562 {offsets = [0, 0], sizes = [2, 240], strides = [1, 1]} : vector<2x256xf32> to vector<2x240xf32>
    %757 = tpu.concatenate %755, %756 in 1 : vector<2x16xf32>, vector<2x240xf32> -> vector<2x256xf32>
    %c1_101 = arith.constant 1 : index
    %c0_102 = arith.constant 0 : index
    %758 = vector.load %arg2[%c1_101, %c0_102] : memref<9x256xf32, #tpu.memory_space<vmem>>, vector<1x256xf32>
    %759 = vector.shape_cast %758 : vector<1x256xf32> to vector<256xf32>
    %760 = vector.shape_cast %759 : vector<256xf32> to vector<1x256xf32>
    %761 = vector.broadcast %760 : vector<1x256xf32> to vector<2x256xf32>
    %762 = arith.mulf %757, %761 : vector<2x256xf32>
    %763 = vector.broadcast %132 : f32 to vector<2x256xf32>
    %764 = arith.mulf %763, %762 : vector<2x256xf32>
    %765 = arith.addf %754, %764 : vector<2x256xf32>
    %cst_103 = arith.constant 0.000000e+00 : f32
    %766 = vector.broadcast %cst_103 : f32 to vector<2x16xf32>
    %767 = vector.extract_strided_slice %613 {offsets = [0, 0], sizes = [2, 240], strides = [1, 1]} : vector<2x256xf32> to vector<2x240xf32>
    %768 = tpu.concatenate %766, %767 in 1 : vector<2x16xf32>, vector<2x240xf32> -> vector<2x256xf32>
    %c1_104 = arith.constant 1 : index
    %c0_105 = arith.constant 0 : index
    %769 = vector.load %arg2[%c1_104, %c0_105] : memref<9x256xf32, #tpu.memory_space<vmem>>, vector<1x256xf32>
    %770 = vector.shape_cast %769 : vector<1x256xf32> to vector<256xf32>
    %771 = vector.shape_cast %770 : vector<256xf32> to vector<1x256xf32>
    %772 = vector.broadcast %771 : vector<1x256xf32> to vector<2x256xf32>
    %773 = arith.mulf %768, %772 : vector<2x256xf32>
    %774 = vector.broadcast %141 : f32 to vector<2x256xf32>
    %775 = arith.mulf %774, %773 : vector<2x256xf32>
    %776 = arith.addf %765, %775 : vector<2x256xf32>
    %cst_106 = arith.constant 0.000000e+00 : f32
    %777 = vector.broadcast %cst_106 : f32 to vector<2x16xf32>
    %778 = vector.extract_strided_slice %680 {offsets = [0, 0], sizes = [2, 240], strides = [1, 1]} : vector<2x256xf32> to vector<2x240xf32>
    %779 = tpu.concatenate %777, %778 in 1 : vector<2x16xf32>, vector<2x240xf32> -> vector<2x256xf32>
    %c1_107 = arith.constant 1 : index
    %c0_108 = arith.constant 0 : index
    %780 = vector.load %arg2[%c1_107, %c0_108] : memref<9x256xf32, #tpu.memory_space<vmem>>, vector<1x256xf32>
    %781 = vector.shape_cast %780 : vector<1x256xf32> to vector<256xf32>
    %782 = vector.shape_cast %781 : vector<256xf32> to vector<1x256xf32>
    %783 = vector.broadcast %782 : vector<1x256xf32> to vector<2x256xf32>
    %784 = arith.mulf %779, %783 : vector<2x256xf32>
    %785 = vector.broadcast %133 : f32 to vector<2x256xf32>
    %786 = arith.mulf %785, %784 : vector<2x256xf32>
    %787 = arith.addf %776, %786 : vector<2x256xf32>
    %cst_109 = arith.constant 0.000000e+00 : f32
    %788 = vector.broadcast %cst_109 : f32 to vector<2x16xf32>
    %789 = vector.extract_strided_slice %731 {offsets = [0, 0], sizes = [2, 240], strides = [1, 1]} : vector<2x256xf32> to vector<2x240xf32>
    %790 = tpu.concatenate %788, %789 in 1 : vector<2x16xf32>, vector<2x240xf32> -> vector<2x256xf32>
    %c1_110 = arith.constant 1 : index
    %c0_111 = arith.constant 0 : index
    %791 = vector.load %arg2[%c1_110, %c0_111] : memref<9x256xf32, #tpu.memory_space<vmem>>, vector<1x256xf32>
    %792 = vector.shape_cast %791 : vector<1x256xf32> to vector<256xf32>
    %793 = vector.shape_cast %792 : vector<256xf32> to vector<1x256xf32>
    %794 = vector.broadcast %793 : vector<1x256xf32> to vector<2x256xf32>
    %795 = arith.mulf %790, %794 : vector<2x256xf32>
    %796 = vector.broadcast %142 : f32 to vector<2x256xf32>
    %797 = arith.mulf %796, %795 : vector<2x256xf32>
    %798 = arith.addf %787, %797 : vector<2x256xf32>
    %cst_112 = arith.constant 0.000000e+00 : f32
    %799 = vector.broadcast %cst_112 : f32 to vector<2x1xf32>
    %800 = vector.extract_strided_slice %428 {offsets = [0, 0], sizes = [2, 255], strides = [1, 1]} : vector<2x256xf32> to vector<2x255xf32>
    %801 = tpu.concatenate %799, %800 in 1 : vector<2x1xf32>, vector<2x255xf32> -> vector<2x256xf32>
    %c3_113 = arith.constant 3 : index
    %c0_114 = arith.constant 0 : index
    %802 = vector.load %arg2[%c3_113, %c0_114] : memref<9x256xf32, #tpu.memory_space<vmem>>, vector<1x256xf32>
    %803 = vector.shape_cast %802 : vector<1x256xf32> to vector<256xf32>
    %804 = vector.shape_cast %803 : vector<256xf32> to vector<1x256xf32>
    %805 = vector.broadcast %804 : vector<1x256xf32> to vector<2x256xf32>
    %806 = arith.mulf %801, %805 : vector<2x256xf32>
    %807 = vector.broadcast %134 : f32 to vector<2x256xf32>
    %808 = arith.mulf %807, %806 : vector<2x256xf32>
    %809 = arith.addf %798, %808 : vector<2x256xf32>
    %cst_115 = arith.constant 0.000000e+00 : f32
    %810 = vector.broadcast %cst_115 : f32 to vector<2x1xf32>
    %811 = vector.extract_strided_slice %479 {offsets = [0, 0], sizes = [2, 255], strides = [1, 1]} : vector<2x256xf32> to vector<2x255xf32>
    %812 = tpu.concatenate %810, %811 in 1 : vector<2x1xf32>, vector<2x255xf32> -> vector<2x256xf32>
    %c3_116 = arith.constant 3 : index
    %c0_117 = arith.constant 0 : index
    %813 = vector.load %arg2[%c3_116, %c0_117] : memref<9x256xf32, #tpu.memory_space<vmem>>, vector<1x256xf32>
    %814 = vector.shape_cast %813 : vector<1x256xf32> to vector<256xf32>
    %815 = vector.shape_cast %814 : vector<256xf32> to vector<1x256xf32>
    %816 = vector.broadcast %815 : vector<1x256xf32> to vector<2x256xf32>
    %817 = arith.mulf %812, %816 : vector<2x256xf32>
    %818 = vector.broadcast %143 : f32 to vector<2x256xf32>
    %819 = arith.mulf %818, %817 : vector<2x256xf32>
    %820 = arith.addf %809, %819 : vector<2x256xf32>
    %821 = vector.broadcast %135 : f32 to vector<2x256xf32>
    %822 = arith.mulf %821, %294 : vector<2x256xf32>
    %823 = arith.addf %820, %822 : vector<2x256xf32>
    %824 = vector.broadcast %144 : f32 to vector<2x256xf32>
    %825 = arith.mulf %824, %345 : vector<2x256xf32>
    %826 = arith.addf %823, %825 : vector<2x256xf32>
    %827 = vector.broadcast %136 : f32 to vector<2x256xf32>
    %828 = arith.mulf %827, %428 : vector<2x256xf32>
    %829 = arith.addf %826, %828 : vector<2x256xf32>
    %830 = vector.broadcast %145 : f32 to vector<2x256xf32>
    %831 = arith.mulf %830, %479 : vector<2x256xf32>
    %832 = arith.addf %829, %831 : vector<2x256xf32>
    %cst_118 = arith.constant 0.000000e+00 : f32
    %833 = vector.broadcast %cst_118 : f32 to vector<2x1xf32>
    %834 = vector.extract_strided_slice %680 {offsets = [0, 0], sizes = [2, 255], strides = [1, 1]} : vector<2x256xf32> to vector<2x255xf32>
    %835 = tpu.concatenate %833, %834 in 1 : vector<2x1xf32>, vector<2x255xf32> -> vector<2x256xf32>
    %c3_119 = arith.constant 3 : index
    %c0_120 = arith.constant 0 : index
    %836 = vector.load %arg2[%c3_119, %c0_120] : memref<9x256xf32, #tpu.memory_space<vmem>>, vector<1x256xf32>
    %837 = vector.shape_cast %836 : vector<1x256xf32> to vector<256xf32>
    %838 = vector.shape_cast %837 : vector<256xf32> to vector<1x256xf32>
    %839 = vector.broadcast %838 : vector<1x256xf32> to vector<2x256xf32>
    %840 = arith.mulf %835, %839 : vector<2x256xf32>
    %841 = vector.broadcast %137 : f32 to vector<2x256xf32>
    %842 = arith.mulf %841, %840 : vector<2x256xf32>
    %843 = arith.addf %832, %842 : vector<2x256xf32>
    %cst_121 = arith.constant 0.000000e+00 : f32
    %844 = vector.broadcast %cst_121 : f32 to vector<2x1xf32>
    %845 = vector.extract_strided_slice %731 {offsets = [0, 0], sizes = [2, 255], strides = [1, 1]} : vector<2x256xf32> to vector<2x255xf32>
    %846 = tpu.concatenate %844, %845 in 1 : vector<2x1xf32>, vector<2x255xf32> -> vector<2x256xf32>
    %c3_122 = arith.constant 3 : index
    %c0_123 = arith.constant 0 : index
    %847 = vector.load %arg2[%c3_122, %c0_123] : memref<9x256xf32, #tpu.memory_space<vmem>>, vector<1x256xf32>
    %848 = vector.shape_cast %847 : vector<1x256xf32> to vector<256xf32>
    %849 = vector.shape_cast %848 : vector<256xf32> to vector<1x256xf32>
    %850 = vector.broadcast %849 : vector<1x256xf32> to vector<2x256xf32>
    %851 = arith.mulf %846, %850 : vector<2x256xf32>
    %852 = vector.broadcast %146 : f32 to vector<2x256xf32>
    %853 = arith.mulf %852, %851 : vector<2x256xf32>
    %854 = arith.addf %843, %853 : vector<2x256xf32>
    %855 = vector.broadcast %138 : f32 to vector<2x256xf32>
    %856 = arith.mulf %855, %562 : vector<2x256xf32>
    %857 = arith.addf %854, %856 : vector<2x256xf32>
    %858 = vector.broadcast %147 : f32 to vector<2x256xf32>
    %859 = arith.mulf %858, %613 : vector<2x256xf32>
    %860 = arith.addf %857, %859 : vector<2x256xf32>
    %861 = vector.broadcast %139 : f32 to vector<2x256xf32>
    %862 = arith.mulf %861, %680 : vector<2x256xf32>
    %863 = arith.addf %860, %862 : vector<2x256xf32>
    %864 = vector.broadcast %148 : f32 to vector<2x256xf32>
    %865 = arith.mulf %864, %731 : vector<2x256xf32>
    %866 = arith.addf %863, %865 : vector<2x256xf32>
    %867 = vector.broadcast %185 : f32 to vector<2x256xf32>
    %868 = arith.addf %866, %867 : vector<2x256xf32>
    %c0_124 = arith.constant 0 : index
    %c0_125 = arith.constant 0 : index
    %c0_126 = arith.constant 0 : index
    %869 = vector.load %arg7[%c0_124, %c0_125, %c0_126] : memref<2x12x256xf32, #tpu.memory_space<vmem>>, vector<2x1x256xf32>
    %870 = vector.shape_cast %869 : vector<2x1x256xf32> to vector<2x256xf32>
    %871 = vector.shape_cast %868 : vector<2x256xf32> to vector<2x1x256xf32>
    tpu.vector_store %arg7[%c0_124, %c0_125, %c0_126], %871 {strides = array<i32>} : memref<2x12x256xf32, #tpu.memory_space<vmem>>, vector<2x1x256xf32>,
    %cst_127 = arith.constant 0.000000e+00 : f32
    %872 = vector.broadcast %cst_127 : f32 to vector<2x256xf32>
    %873 = vector.broadcast %149 : f32 to vector<2x256xf32>
    %874 = arith.mulf %873, %740 : vector<2x256xf32>
    %875 = arith.addf %872, %874 : vector<2x256xf32>
    %876 = vector.broadcast %158 : f32 to vector<2x256xf32>
    %877 = arith.mulf %876, %751 : vector<2x256xf32>
    %878 = arith.addf %875, %877 : vector<2x256xf32>
    %879 = vector.broadcast %150 : f32 to vector<2x256xf32>
    %880 = arith.mulf %879, %762 : vector<2x256xf32>
    %881 = arith.addf %878, %880 : vector<2x256xf32>
    %882 = vector.broadcast %159 : f32 to vector<2x256xf32>
    %883 = arith.mulf %882, %773 : vector<2x256xf32>
    %884 = arith.addf %881, %883 : vector<2x256xf32>
    %885 = vector.broadcast %151 : f32 to vector<2x256xf32>
    %886 = arith.mulf %885, %784 : vector<2x256xf32>
    %887 = arith.addf %884, %886 : vector<2x256xf32>
    %888 = vector.broadcast %160 : f32 to vector<2x256xf32>
    %889 = arith.mulf %888, %795 : vector<2x256xf32>
    %890 = arith.addf %887, %889 : vector<2x256xf32>
    %891 = vector.broadcast %152 : f32 to vector<2x256xf32>
    %892 = arith.mulf %891, %806 : vector<2x256xf32>
    %893 = arith.addf %890, %892 : vector<2x256xf32>
    %894 = vector.broadcast %161 : f32 to vector<2x256xf32>
    %895 = arith.mulf %894, %817 : vector<2x256xf32>
    %896 = arith.addf %893, %895 : vector<2x256xf32>
    %897 = vector.broadcast %153 : f32 to vector<2x256xf32>
    %898 = arith.mulf %897, %294 : vector<2x256xf32>
    %899 = arith.addf %896, %898 : vector<2x256xf32>
    %900 = vector.broadcast %162 : f32 to vector<2x256xf32>
    %901 = arith.mulf %900, %345 : vector<2x256xf32>
    %902 = arith.addf %899, %901 : vector<2x256xf32>
    %903 = vector.broadcast %154 : f32 to vector<2x256xf32>
    %904 = arith.mulf %903, %428 : vector<2x256xf32>
    %905 = arith.addf %902, %904 : vector<2x256xf32>
    %906 = vector.broadcast %163 : f32 to vector<2x256xf32>
    %907 = arith.mulf %906, %479 : vector<2x256xf32>
    %908 = arith.addf %905, %907 : vector<2x256xf32>
    %909 = vector.broadcast %155 : f32 to vector<2x256xf32>
    %910 = arith.mulf %909, %840 : vector<2x256xf32>
    %911 = arith.addf %908, %910 : vector<2x256xf32>
    %912 = vector.broadcast %164 : f32 to vector<2x256xf32>
    %913 = arith.mulf %912, %851 : vector<2x256xf32>
    %914 = arith.addf %911, %913 : vector<2x256xf32>
    %915 = vector.broadcast %156 : f32 to vector<2x256xf32>
    %916 = arith.mulf %915, %562 : vector<2x256xf32>
    %917 = arith.addf %914, %916 : vector<2x256xf32>
    %918 = vector.broadcast %165 : f32 to vector<2x256xf32>
    %919 = arith.mulf %918, %613 : vector<2x256xf32>
    %920 = arith.addf %917, %919 : vector<2x256xf32>
    %921 = vector.broadcast %157 : f32 to vector<2x256xf32>
    %922 = arith.mulf %921, %680 : vector<2x256xf32>
    %923 = arith.addf %920, %922 : vector<2x256xf32>
    %924 = vector.broadcast %166 : f32 to vector<2x256xf32>
    %925 = arith.mulf %924, %731 : vector<2x256xf32>
    %926 = arith.addf %923, %925 : vector<2x256xf32>
    %927 = vector.broadcast %186 : f32 to vector<2x256xf32>
    %928 = arith.addf %926, %927 : vector<2x256xf32>
    %c0_128 = arith.constant 0 : index
    %c1_129 = arith.constant 1 : index
    %c0_130 = arith.constant 0 : index
    %929 = vector.load %arg7[%c0_128, %c1_129, %c0_130] : memref<2x12x256xf32, #tpu.memory_space<vmem>>, vector<2x1x256xf32>
    %930 = vector.shape_cast %929 : vector<2x1x256xf32> to vector<2x256xf32>
    %931 = vector.shape_cast %928 : vector<2x256xf32> to vector<2x1x256xf32>
    tpu.vector_store %arg7[%c0_128, %c1_129, %c0_130], %931 {strides = array<i32>} : memref<2x12x256xf32, #tpu.memory_space<vmem>>, vector<2x1x256xf32>,
    %cst_131 = arith.constant 0.000000e+00 : f32
    %932 = vector.broadcast %cst_131 : f32 to vector<2x256xf32>
    %933 = vector.broadcast %167 : f32 to vector<2x256xf32>
    %934 = arith.mulf %933, %740 : vector<2x256xf32>
    %935 = arith.addf %932, %934 : vector<2x256xf32>
    %936 = vector.broadcast %176 : f32 to vector<2x256xf32>
    %937 = arith.mulf %936, %751 : vector<2x256xf32>
    %938 = arith.addf %935, %937 : vector<2x256xf32>
    %939 = vector.broadcast %168 : f32 to vector<2x256xf32>
    %940 = arith.mulf %939, %762 : vector<2x256xf32>
    %941 = arith.addf %938, %940 : vector<2x256xf32>
    %942 = vector.broadcast %177 : f32 to vector<2x256xf32>
    %943 = arith.mulf %942, %773 : vector<2x256xf32>
    %944 = arith.addf %941, %943 : vector<2x256xf32>
    %945 = vector.broadcast %169 : f32 to vector<2x256xf32>
    %946 = arith.mulf %945, %784 : vector<2x256xf32>
    %947 = arith.addf %944, %946 : vector<2x256xf32>
    %948 = vector.broadcast %178 : f32 to vector<2x256xf32>
    %949 = arith.mulf %948, %795 : vector<2x256xf32>
    %950 = arith.addf %947, %949 : vector<2x256xf32>
    %951 = vector.broadcast %170 : f32 to vector<2x256xf32>
    %952 = arith.mulf %951, %806 : vector<2x256xf32>
    %953 = arith.addf %950, %952 : vector<2x256xf32>
    %954 = vector.broadcast %179 : f32 to vector<2x256xf32>
    %955 = arith.mulf %954, %817 : vector<2x256xf32>
    %956 = arith.addf %953, %955 : vector<2x256xf32>
    %957 = vector.broadcast %171 : f32 to vector<2x256xf32>
    %958 = arith.mulf %957, %294 : vector<2x256xf32>
    %959 = arith.addf %956, %958 : vector<2x256xf32>
    %960 = vector.broadcast %180 : f32 to vector<2x256xf32>
    %961 = arith.mulf %960, %345 : vector<2x256xf32>
    %962 = arith.addf %959, %961 : vector<2x256xf32>
    %963 = vector.broadcast %172 : f32 to vector<2x256xf32>
    %964 = arith.mulf %963, %428 : vector<2x256xf32>
    %965 = arith.addf %962, %964 : vector<2x256xf32>
    %966 = vector.broadcast %181 : f32 to vector<2x256xf32>
    %967 = arith.mulf %966, %479 : vector<2x256xf32>
    %968 = arith.addf %965, %967 : vector<2x256xf32>
    %969 = vector.broadcast %173 : f32 to vector<2x256xf32>
    %970 = arith.mulf %969, %840 : vector<2x256xf32>
    %971 = arith.addf %968, %970 : vector<2x256xf32>
    %972 = vector.broadcast %182 : f32 to vector<2x256xf32>
    %973 = arith.mulf %972, %851 : vector<2x256xf32>
    %974 = arith.addf %971, %973 : vector<2x256xf32>
    %975 = vector.broadcast %174 : f32 to vector<2x256xf32>
    %976 = arith.mulf %975, %562 : vector<2x256xf32>
    %977 = arith.addf %974, %976 : vector<2x256xf32>
    %978 = vector.broadcast %183 : f32 to vector<2x256xf32>
    %979 = arith.mulf %978, %613 : vector<2x256xf32>
    %980 = arith.addf %977, %979 : vector<2x256xf32>
    %981 = vector.broadcast %175 : f32 to vector<2x256xf32>
    %982 = arith.mulf %981, %680 : vector<2x256xf32>
    %983 = arith.addf %980, %982 : vector<2x256xf32>
    %984 = vector.broadcast %184 : f32 to vector<2x256xf32>
    %985 = arith.mulf %984, %731 : vector<2x256xf32>
    %986 = arith.addf %983, %985 : vector<2x256xf32>
    %987 = vector.broadcast %187 : f32 to vector<2x256xf32>
    %988 = arith.addf %986, %987 : vector<2x256xf32>
    %c0_132 = arith.constant 0 : index
    %c2_133 = arith.constant 2 : index
    %c0_134 = arith.constant 0 : index
    %989 = vector.load %arg7[%c0_132, %c2_133, %c0_134] : memref<2x12x256xf32, #tpu.memory_space<vmem>>, vector<2x1x256xf32>
    %990 = vector.shape_cast %989 : vector<2x1x256xf32> to vector<2x256xf32>
    %991 = vector.shape_cast %988 : vector<2x256xf32> to vector<2x1x256xf32>
    tpu.vector_store %arg7[%c0_132, %c2_133, %c0_134], %991 {strides = array<i32>} : memref<2x12x256xf32, #tpu.memory_space<vmem>>, vector<2x1x256xf32>,
    %cst_135 = arith.constant 0.000000e+00 : f32
    %992 = vector.broadcast %cst_135 : f32 to vector<2x256xf32>
    %993 = vector.broadcast %131 : f32 to vector<2x256xf32>
    %994 = arith.mulf %993, %762 : vector<2x256xf32>
    %995 = arith.addf %992, %994 : vector<2x256xf32>
    %996 = vector.broadcast %140 : f32 to vector<2x256xf32>
    %997 = arith.mulf %996, %773 : vector<2x256xf32>
    %998 = arith.addf %995, %997 : vector<2x256xf32>
    %999 = vector.broadcast %132 : f32 to vector<2x256xf32>
    %1000 = arith.mulf %999, %784 : vector<2x256xf32>
    %1001 = arith.addf %998, %1000 : vector<2x256xf32>
    %1002 = vector.broadcast %141 : f32 to vector<2x256xf32>
    %1003 = arith.mulf %1002, %795 : vector<2x256xf32>
    %1004 = arith.addf %1001, %1003 : vector<2x256xf32>
    %cst_136 = arith.constant 0.000000e+00 : f32
    %1005 = vector.broadcast %cst_136 : f32 to vector<2x15xf32>
    %1006 = vector.extract_strided_slice %562 {offsets = [0, 0], sizes = [2, 241], strides = [1, 1]} : vector<2x256xf32> to vector<2x241xf32>
    %1007 = tpu.concatenate %1005, %1006 in 1 : vector<2x15xf32>, vector<2x241xf32> -> vector<2x256xf32>
    %c2_137 = arith.constant 2 : index
    %c0_138 = arith.constant 0 : index
    %1008 = vector.load %arg2[%c2_137, %c0_138] : memref<9x256xf32, #tpu.memory_space<vmem>>, vector<1x256xf32>
    %1009 = vector.shape_cast %1008 : vector<1x256xf32> to vector<256xf32>
    %1010 = vector.shape_cast %1009 : vector<256xf32> to vector<1x256xf32>
    %1011 = vector.broadcast %1010 : vector<1x256xf32> to vector<2x256xf32>
    %1012 = arith.mulf %1007, %1011 : vector<2x256xf32>
    %1013 = vector.broadcast %133 : f32 to vector<2x256xf32>
    %1014 = arith.mulf %1013, %1012 : vector<2x256xf32>
    %1015 = arith.addf %1004, %1014 : vector<2x256xf32>
    %cst_139 = arith.constant 0.000000e+00 : f32
    %1016 = vector.broadcast %cst_139 : f32 to vector<2x15xf32>
    %1017 = vector.extract_strided_slice %613 {offsets = [0, 0], sizes = [2, 241], strides = [1, 1]} : vector<2x256xf32> to vector<2x241xf32>
    %1018 = tpu.concatenate %1016, %1017 in 1 : vector<2x15xf32>, vector<2x241xf32> -> vector<2x256xf32>
    %c2_140 = arith.constant 2 : index
    %c0_141 = arith.constant 0 : index
    %1019 = vector.load %arg2[%c2_140, %c0_141] : memref<9x256xf32, #tpu.memory_space<vmem>>, vector<1x256xf32>
    %1020 = vector.shape_cast %1019 : vector<1x256xf32> to vector<256xf32>
    %1021 = vector.shape_cast %1020 : vector<256xf32> to vector<1x256xf32>
    %1022 = vector.broadcast %1021 : vector<1x256xf32> to vector<2x256xf32>
    %1023 = arith.mulf %1018, %1022 : vector<2x256xf32>
    %1024 = vector.broadcast %142 : f32 to vector<2x256xf32>
    %1025 = arith.mulf %1024, %1023 : vector<2x256xf32>
    %1026 = arith.addf %1015, %1025 : vector<2x256xf32>
    %1027 = vector.broadcast %134 : f32 to vector<2x256xf32>
    %1028 = arith.mulf %1027, %294 : vector<2x256xf32>
    %1029 = arith.addf %1026, %1028 : vector<2x256xf32>
    %1030 = vector.broadcast %143 : f32 to vector<2x256xf32>
    %1031 = arith.mulf %1030, %345 : vector<2x256xf32>
    %1032 = arith.addf %1029, %1031 : vector<2x256xf32>
    %1033 = vector.broadcast %135 : f32 to vector<2x256xf32>
    %1034 = arith.mulf %1033, %428 : vector<2x256xf32>
    %1035 = arith.addf %1032, %1034 : vector<2x256xf32>
    %1036 = vector.broadcast %144 : f32 to vector<2x256xf32>
    %1037 = arith.mulf %1036, %479 : vector<2x256xf32>
    %1038 = arith.addf %1035, %1037 : vector<2x256xf32>
    %cst_142 = arith.constant 0.000000e+00 : f32
    %1039 = vector.broadcast %cst_142 : f32 to vector<2x1xf32>
    %1040 = vector.extract_strided_slice %294 {offsets = [0, 1], sizes = [2, 255], strides = [1, 1]} : vector<2x256xf32> to vector<2x255xf32>
    %1041 = tpu.concatenate %1040, %1039 in 1 : vector<2x255xf32>, vector<2x1xf32> -> vector<2x256xf32>
    %c5_143 = arith.constant 5 : index
    %c0_144 = arith.constant 0 : index
    %1042 = vector.load %arg2[%c5_143, %c0_144] : memref<9x256xf32, #tpu.memory_space<vmem>>, vector<1x256xf32>
    %1043 = vector.shape_cast %1042 : vector<1x256xf32> to vector<256xf32>
    %1044 = vector.shape_cast %1043 : vector<256xf32> to vector<1x256xf32>
    %1045 = vector.broadcast %1044 : vector<1x256xf32> to vector<2x256xf32>
    %1046 = arith.mulf %1041, %1045 : vector<2x256xf32>
    %1047 = vector.broadcast %136 : f32 to vector<2x256xf32>
    %1048 = arith.mulf %1047, %1046 : vector<2x256xf32>
    %1049 = arith.addf %1038, %1048 : vector<2x256xf32>
    %cst_145 = arith.constant 0.000000e+00 : f32
    %1050 = vector.broadcast %cst_145 : f32 to vector<2x1xf32>
    %1051 = vector.extract_strided_slice %345 {offsets = [0, 1], sizes = [2, 255], strides = [1, 1]} : vector<2x256xf32> to vector<2x255xf32>
    %1052 = tpu.concatenate %1051, %1050 in 1 : vector<2x255xf32>, vector<2x1xf32> -> vector<2x256xf32>
    %c5_146 = arith.constant 5 : index
    %c0_147 = arith.constant 0 : index
    %1053 = vector.load %arg2[%c5_146, %c0_147] : memref<9x256xf32, #tpu.memory_space<vmem>>, vector<1x256xf32>
    %1054 = vector.shape_cast %1053 : vector<1x256xf32> to vector<256xf32>
    %1055 = vector.shape_cast %1054 : vector<256xf32> to vector<1x256xf32>
    %1056 = vector.broadcast %1055 : vector<1x256xf32> to vector<2x256xf32>
    %1057 = arith.mulf %1052, %1056 : vector<2x256xf32>
    %1058 = vector.broadcast %145 : f32 to vector<2x256xf32>
    %1059 = arith.mulf %1058, %1057 : vector<2x256xf32>
    %1060 = arith.addf %1049, %1059 : vector<2x256xf32>
    %1061 = vector.broadcast %137 : f32 to vector<2x256xf32>
    %1062 = arith.mulf %1061, %562 : vector<2x256xf32>
    %1063 = arith.addf %1060, %1062 : vector<2x256xf32>
    %1064 = vector.broadcast %146 : f32 to vector<2x256xf32>
    %1065 = arith.mulf %1064, %613 : vector<2x256xf32>
    %1066 = arith.addf %1063, %1065 : vector<2x256xf32>
    %1067 = vector.broadcast %138 : f32 to vector<2x256xf32>
    %1068 = arith.mulf %1067, %680 : vector<2x256xf32>
    %1069 = arith.addf %1066, %1068 : vector<2x256xf32>
    %1070 = vector.broadcast %147 : f32 to vector<2x256xf32>
    %1071 = arith.mulf %1070, %731 : vector<2x256xf32>
    %1072 = arith.addf %1069, %1071 : vector<2x256xf32>
    %cst_148 = arith.constant 0.000000e+00 : f32
    %1073 = vector.broadcast %cst_148 : f32 to vector<2x1xf32>
    %1074 = vector.extract_strided_slice %562 {offsets = [0, 1], sizes = [2, 255], strides = [1, 1]} : vector<2x256xf32> to vector<2x255xf32>
    %1075 = tpu.concatenate %1074, %1073 in 1 : vector<2x255xf32>, vector<2x1xf32> -> vector<2x256xf32>
    %c5_149 = arith.constant 5 : index
    %c0_150 = arith.constant 0 : index
    %1076 = vector.load %arg2[%c5_149, %c0_150] : memref<9x256xf32, #tpu.memory_space<vmem>>, vector<1x256xf32>
    %1077 = vector.shape_cast %1076 : vector<1x256xf32> to vector<256xf32>
    %1078 = vector.shape_cast %1077 : vector<256xf32> to vector<1x256xf32>
    %1079 = vector.broadcast %1078 : vector<1x256xf32> to vector<2x256xf32>
    %1080 = arith.mulf %1075, %1079 : vector<2x256xf32>
    %1081 = vector.broadcast %139 : f32 to vector<2x256xf32>
    %1082 = arith.mulf %1081, %1080 : vector<2x256xf32>
    %1083 = arith.addf %1072, %1082 : vector<2x256xf32>
    %cst_151 = arith.constant 0.000000e+00 : f32
    %1084 = vector.broadcast %cst_151 : f32 to vector<2x1xf32>
    %1085 = vector.extract_strided_slice %613 {offsets = [0, 1], sizes = [2, 255], strides = [1, 1]} : vector<2x256xf32> to vector<2x255xf32>
    %1086 = tpu.concatenate %1085, %1084 in 1 : vector<2x255xf32>, vector<2x1xf32> -> vector<2x256xf32>
    %c5_152 = arith.constant 5 : index
    %c0_153 = arith.constant 0 : index
    %1087 = vector.load %arg2[%c5_152, %c0_153] : memref<9x256xf32, #tpu.memory_space<vmem>>, vector<1x256xf32>
    %1088 = vector.shape_cast %1087 : vector<1x256xf32> to vector<256xf32>
    %1089 = vector.shape_cast %1088 : vector<256xf32> to vector<1x256xf32>
    %1090 = vector.broadcast %1089 : vector<1x256xf32> to vector<2x256xf32>
    %1091 = arith.mulf %1086, %1090 : vector<2x256xf32>
    %1092 = vector.broadcast %148 : f32 to vector<2x256xf32>
    %1093 = arith.mulf %1092, %1091 : vector<2x256xf32>
    %1094 = arith.addf %1083, %1093 : vector<2x256xf32>
    %1095 = vector.broadcast %185 : f32 to vector<2x256xf32>
    %1096 = arith.addf %1094, %1095 : vector<2x256xf32>
    %c0_154 = arith.constant 0 : index
    %c3_155 = arith.constant 3 : index
    %c0_156 = arith.constant 0 : index
    %1097 = vector.load %arg7[%c0_154, %c3_155, %c0_156] : memref<2x12x256xf32, #tpu.memory_space<vmem>>, vector<2x1x256xf32>
    %1098 = vector.shape_cast %1097 : vector<2x1x256xf32> to vector<2x256xf32>
    %1099 = vector.shape_cast %1096 : vector<2x256xf32> to vector<2x1x256xf32>
    tpu.vector_store %arg7[%c0_154, %c3_155, %c0_156], %1099 {strides = array<i32>} : memref<2x12x256xf32, #tpu.memory_space<vmem>>, vector<2x1x256xf32>,
    %cst_157 = arith.constant 0.000000e+00 : f32
    %1100 = vector.broadcast %cst_157 : f32 to vector<2x256xf32>
    %1101 = vector.broadcast %149 : f32 to vector<2x256xf32>
    %1102 = arith.mulf %1101, %762 : vector<2x256xf32>
    %1103 = arith.addf %1100, %1102 : vector<2x256xf32>
    %1104 = vector.broadcast %158 : f32 to vector<2x256xf32>
    %1105 = arith.mulf %1104, %773 : vector<2x256xf32>
    %1106 = arith.addf %1103, %1105 : vector<2x256xf32>
    %1107 = vector.broadcast %150 : f32 to vector<2x256xf32>
    %1108 = arith.mulf %1107, %784 : vector<2x256xf32>
    %1109 = arith.addf %1106, %1108 : vector<2x256xf32>
    %1110 = vector.broadcast %159 : f32 to vector<2x256xf32>
    %1111 = arith.mulf %1110, %795 : vector<2x256xf32>
    %1112 = arith.addf %1109, %1111 : vector<2x256xf32>
    %1113 = vector.broadcast %151 : f32 to vector<2x256xf32>
    %1114 = arith.mulf %1113, %1012 : vector<2x256xf32>
    %1115 = arith.addf %1112, %1114 : vector<2x256xf32>
    %1116 = vector.broadcast %160 : f32 to vector<2x256xf32>
    %1117 = arith.mulf %1116, %1023 : vector<2x256xf32>
    %1118 = arith.addf %1115, %1117 : vector<2x256xf32>
    %1119 = vector.broadcast %152 : f32 to vector<2x256xf32>
    %1120 = arith.mulf %1119, %294 : vector<2x256xf32>
    %1121 = arith.addf %1118, %1120 : vector<2x256xf32>
    %1122 = vector.broadcast %161 : f32 to vector<2x256xf32>
    %1123 = arith.mulf %1122, %345 : vector<2x256xf32>
    %1124 = arith.addf %1121, %1123 : vector<2x256xf32>
    %1125 = vector.broadcast %153 : f32 to vector<2x256xf32>
    %1126 = arith.mulf %1125, %428 : vector<2x256xf32>
    %1127 = arith.addf %1124, %1126 : vector<2x256xf32>
    %1128 = vector.broadcast %162 : f32 to vector<2x256xf32>
    %1129 = arith.mulf %1128, %479 : vector<2x256xf32>
    %1130 = arith.addf %1127, %1129 : vector<2x256xf32>
    %1131 = vector.broadcast %154 : f32 to vector<2x256xf32>
    %1132 = arith.mulf %1131, %1046 : vector<2x256xf32>
    %1133 = arith.addf %1130, %1132 : vector<2x256xf32>
    %1134 = vector.broadcast %163 : f32 to vector<2x256xf32>
    %1135 = arith.mulf %1134, %1057 : vector<2x256xf32>
    %1136 = arith.addf %1133, %1135 : vector<2x256xf32>
    %1137 = vector.broadcast %155 : f32 to vector<2x256xf32>
    %1138 = arith.mulf %1137, %562 : vector<2x256xf32>
    %1139 = arith.addf %1136, %1138 : vector<2x256xf32>
    %1140 = vector.broadcast %164 : f32 to vector<2x256xf32>
    %1141 = arith.mulf %1140, %613 : vector<2x256xf32>
    %1142 = arith.addf %1139, %1141 : vector<2x256xf32>
    %1143 = vector.broadcast %156 : f32 to vector<2x256xf32>
    %1144 = arith.mulf %1143, %680 : vector<2x256xf32>
    %1145 = arith.addf %1142, %1144 : vector<2x256xf32>
    %1146 = vector.broadcast %165 : f32 to vector<2x256xf32>
    %1147 = arith.mulf %1146, %731 : vector<2x256xf32>
    %1148 = arith.addf %1145, %1147 : vector<2x256xf32>
    %1149 = vector.broadcast %157 : f32 to vector<2x256xf32>
    %1150 = arith.mulf %1149, %1080 : vector<2x256xf32>
    %1151 = arith.addf %1148, %1150 : vector<2x256xf32>
    %1152 = vector.broadcast %166 : f32 to vector<2x256xf32>
    %1153 = arith.mulf %1152, %1091 : vector<2x256xf32>
    %1154 = arith.addf %1151, %1153 : vector<2x256xf32>
    %1155 = vector.broadcast %186 : f32 to vector<2x256xf32>
    %1156 = arith.addf %1154, %1155 : vector<2x256xf32>
    %c0_158 = arith.constant 0 : index
    %c4_159 = arith.constant 4 : index
    %c0_160 = arith.constant 0 : index
    %1157 = vector.load %arg7[%c0_158, %c4_159, %c0_160] : memref<2x12x256xf32, #tpu.memory_space<vmem>>, vector<2x1x256xf32>
    %1158 = vector.shape_cast %1157 : vector<2x1x256xf32> to vector<2x256xf32>
    %1159 = vector.shape_cast %1156 : vector<2x256xf32> to vector<2x1x256xf32>
    tpu.vector_store %arg7[%c0_158, %c4_159, %c0_160], %1159 {strides = array<i32>} : memref<2x12x256xf32, #tpu.memory_space<vmem>>, vector<2x1x256xf32>,
    %cst_161 = arith.constant 0.000000e+00 : f32
    %1160 = vector.broadcast %cst_161 : f32 to vector<2x256xf32>
    %1161 = vector.broadcast %167 : f32 to vector<2x256xf32>
    %1162 = arith.mulf %1161, %762 : vector<2x256xf32>
    %1163 = arith.addf %1160, %1162 : vector<2x256xf32>
    %1164 = vector.broadcast %176 : f32 to vector<2x256xf32>
    %1165 = arith.mulf %1164, %773 : vector<2x256xf32>
    %1166 = arith.addf %1163, %1165 : vector<2x256xf32>
    %1167 = vector.broadcast %168 : f32 to vector<2x256xf32>
    %1168 = arith.mulf %1167, %784 : vector<2x256xf32>
    %1169 = arith.addf %1166, %1168 : vector<2x256xf32>
    %1170 = vector.broadcast %177 : f32 to vector<2x256xf32>
    %1171 = arith.mulf %1170, %795 : vector<2x256xf32>
    %1172 = arith.addf %1169, %1171 : vector<2x256xf32>
    %1173 = vector.broadcast %169 : f32 to vector<2x256xf32>
    %1174 = arith.mulf %1173, %1012 : vector<2x256xf32>
    %1175 = arith.addf %1172, %1174 : vector<2x256xf32>
    %1176 = vector.broadcast %178 : f32 to vector<2x256xf32>
    %1177 = arith.mulf %1176, %1023 : vector<2x256xf32>
    %1178 = arith.addf %1175, %1177 : vector<2x256xf32>
    %1179 = vector.broadcast %170 : f32 to vector<2x256xf32>
    %1180 = arith.mulf %1179, %294 : vector<2x256xf32>
    %1181 = arith.addf %1178, %1180 : vector<2x256xf32>
    %1182 = vector.broadcast %179 : f32 to vector<2x256xf32>
    %1183 = arith.mulf %1182, %345 : vector<2x256xf32>
    %1184 = arith.addf %1181, %1183 : vector<2x256xf32>
    %1185 = vector.broadcast %171 : f32 to vector<2x256xf32>
    %1186 = arith.mulf %1185, %428 : vector<2x256xf32>
    %1187 = arith.addf %1184, %1186 : vector<2x256xf32>
    %1188 = vector.broadcast %180 : f32 to vector<2x256xf32>
    %1189 = arith.mulf %1188, %479 : vector<2x256xf32>
    %1190 = arith.addf %1187, %1189 : vector<2x256xf32>
    %1191 = vector.broadcast %172 : f32 to vector<2x256xf32>
    %1192 = arith.mulf %1191, %1046 : vector<2x256xf32>
    %1193 = arith.addf %1190, %1192 : vector<2x256xf32>
    %1194 = vector.broadcast %181 : f32 to vector<2x256xf32>
    %1195 = arith.mulf %1194, %1057 : vector<2x256xf32>
    %1196 = arith.addf %1193, %1195 : vector<2x256xf32>
    %1197 = vector.broadcast %173 : f32 to vector<2x256xf32>
    %1198 = arith.mulf %1197, %562 : vector<2x256xf32>
    %1199 = arith.addf %1196, %1198 : vector<2x256xf32>
    %1200 = vector.broadcast %182 : f32 to vector<2x256xf32>
    %1201 = arith.mulf %1200, %613 : vector<2x256xf32>
    %1202 = arith.addf %1199, %1201 : vector<2x256xf32>
    %1203 = vector.broadcast %174 : f32 to vector<2x256xf32>
    %1204 = arith.mulf %1203, %680 : vector<2x256xf32>
    %1205 = arith.addf %1202, %1204 : vector<2x256xf32>
    %1206 = vector.broadcast %183 : f32 to vector<2x256xf32>
    %1207 = arith.mulf %1206, %731 : vector<2x256xf32>
    %1208 = arith.addf %1205, %1207 : vector<2x256xf32>
    %1209 = vector.broadcast %175 : f32 to vector<2x256xf32>
    %1210 = arith.mulf %1209, %1080 : vector<2x256xf32>
    %1211 = arith.addf %1208, %1210 : vector<2x256xf32>
    %1212 = vector.broadcast %184 : f32 to vector<2x256xf32>
    %1213 = arith.mulf %1212, %1091 : vector<2x256xf32>
    %1214 = arith.addf %1211, %1213 : vector<2x256xf32>
    %1215 = vector.broadcast %187 : f32 to vector<2x256xf32>
    %1216 = arith.addf %1214, %1215 : vector<2x256xf32>
    %c0_162 = arith.constant 0 : index
    %c5_163 = arith.constant 5 : index
    %c0_164 = arith.constant 0 : index
    %1217 = vector.load %arg7[%c0_162, %c5_163, %c0_164] : memref<2x12x256xf32, #tpu.memory_space<vmem>>, vector<2x1x256xf32>
    %1218 = vector.shape_cast %1217 : vector<2x1x256xf32> to vector<2x256xf32>
    %1219 = vector.shape_cast %1216 : vector<2x256xf32> to vector<2x1x256xf32>
    tpu.vector_store %arg7[%c0_162, %c5_163, %c0_164], %1219 {strides = array<i32>} : memref<2x12x256xf32, #tpu.memory_space<vmem>>, vector<2x1x256xf32>,
    %cst_165 = arith.constant 0.000000e+00 : f32
    %1220 = vector.broadcast %cst_165 : f32 to vector<2x256xf32>
    %1221 = vector.broadcast %131 : f32 to vector<2x256xf32>
    %1222 = arith.mulf %1221, %806 : vector<2x256xf32>
    %1223 = arith.addf %1220, %1222 : vector<2x256xf32>
    %1224 = vector.broadcast %140 : f32 to vector<2x256xf32>
    %1225 = arith.mulf %1224, %817 : vector<2x256xf32>
    %1226 = arith.addf %1223, %1225 : vector<2x256xf32>
    %1227 = vector.broadcast %132 : f32 to vector<2x256xf32>
    %1228 = arith.mulf %1227, %294 : vector<2x256xf32>
    %1229 = arith.addf %1226, %1228 : vector<2x256xf32>
    %1230 = vector.broadcast %141 : f32 to vector<2x256xf32>
    %1231 = arith.mulf %1230, %345 : vector<2x256xf32>
    %1232 = arith.addf %1229, %1231 : vector<2x256xf32>
    %1233 = vector.broadcast %133 : f32 to vector<2x256xf32>
    %1234 = arith.mulf %1233, %428 : vector<2x256xf32>
    %1235 = arith.addf %1232, %1234 : vector<2x256xf32>
    %1236 = vector.broadcast %142 : f32 to vector<2x256xf32>
    %1237 = arith.mulf %1236, %479 : vector<2x256xf32>
    %1238 = arith.addf %1235, %1237 : vector<2x256xf32>
    %1239 = vector.broadcast %134 : f32 to vector<2x256xf32>
    %1240 = arith.mulf %1239, %840 : vector<2x256xf32>
    %1241 = arith.addf %1238, %1240 : vector<2x256xf32>
    %1242 = vector.broadcast %143 : f32 to vector<2x256xf32>
    %1243 = arith.mulf %1242, %851 : vector<2x256xf32>
    %1244 = arith.addf %1241, %1243 : vector<2x256xf32>
    %1245 = vector.broadcast %135 : f32 to vector<2x256xf32>
    %1246 = arith.mulf %1245, %562 : vector<2x256xf32>
    %1247 = arith.addf %1244, %1246 : vector<2x256xf32>
    %1248 = vector.broadcast %144 : f32 to vector<2x256xf32>
    %1249 = arith.mulf %1248, %613 : vector<2x256xf32>
    %1250 = arith.addf %1247, %1249 : vector<2x256xf32>
    %1251 = vector.broadcast %136 : f32 to vector<2x256xf32>
    %1252 = arith.mulf %1251, %680 : vector<2x256xf32>
    %1253 = arith.addf %1250, %1252 : vector<2x256xf32>
    %1254 = vector.broadcast %145 : f32 to vector<2x256xf32>
    %1255 = arith.mulf %1254, %731 : vector<2x256xf32>
    %1256 = arith.addf %1253, %1255 : vector<2x256xf32>
    %cst_166 = arith.constant 0.000000e+00 : f32
    %1257 = vector.broadcast %cst_166 : f32 to vector<2x15xf32>
    %1258 = vector.extract_strided_slice %428 {offsets = [0, 15], sizes = [2, 241], strides = [1, 1]} : vector<2x256xf32> to vector<2x241xf32>
    %1259 = tpu.concatenate %1258, %1257 in 1 : vector<2x241xf32>, vector<2x15xf32> -> vector<2x256xf32>
    %c6_167 = arith.constant 6 : index
    %c0_168 = arith.constant 0 : index
    %1260 = vector.load %arg2[%c6_167, %c0_168] : memref<9x256xf32, #tpu.memory_space<vmem>>, vector<1x256xf32>
    %1261 = vector.shape_cast %1260 : vector<1x256xf32> to vector<256xf32>
    %1262 = vector.shape_cast %1261 : vector<256xf32> to vector<1x256xf32>
    %1263 = vector.broadcast %1262 : vector<1x256xf32> to vector<2x256xf32>
    %1264 = arith.mulf %1259, %1263 : vector<2x256xf32>
    %1265 = vector.broadcast %137 : f32 to vector<2x256xf32>
    %1266 = arith.mulf %1265, %1264 : vector<2x256xf32>
    %1267 = arith.addf %1256, %1266 : vector<2x256xf32>
    %cst_169 = arith.constant 0.000000e+00 : f32
    %1268 = vector.broadcast %cst_169 : f32 to vector<2x15xf32>
    %1269 = vector.extract_strided_slice %479 {offsets = [0, 15], sizes = [2, 241], strides = [1, 1]} : vector<2x256xf32> to vector<2x241xf32>
    %1270 = tpu.concatenate %1269, %1268 in 1 : vector<2x241xf32>, vector<2x15xf32> -> vector<2x256xf32>
    %c6_170 = arith.constant 6 : index
    %c0_171 = arith.constant 0 : index
    %1271 = vector.load %arg2[%c6_170, %c0_171] : memref<9x256xf32, #tpu.memory_space<vmem>>, vector<1x256xf32>
    %1272 = vector.shape_cast %1271 : vector<1x256xf32> to vector<256xf32>
    %1273 = vector.shape_cast %1272 : vector<256xf32> to vector<1x256xf32>
    %1274 = vector.broadcast %1273 : vector<1x256xf32> to vector<2x256xf32>
    %1275 = arith.mulf %1270, %1274 : vector<2x256xf32>
    %1276 = vector.broadcast %146 : f32 to vector<2x256xf32>
    %1277 = arith.mulf %1276, %1275 : vector<2x256xf32>
    %1278 = arith.addf %1267, %1277 : vector<2x256xf32>
    %cst_172 = arith.constant 0.000000e+00 : f32
    %1279 = vector.broadcast %cst_172 : f32 to vector<2x16xf32>
    %1280 = vector.extract_strided_slice %294 {offsets = [0, 16], sizes = [2, 240], strides = [1, 1]} : vector<2x256xf32> to vector<2x240xf32>
    %1281 = tpu.concatenate %1280, %1279 in 1 : vector<2x240xf32>, vector<2x16xf32> -> vector<2x256xf32>
    %c7_173 = arith.constant 7 : index
    %c0_174 = arith.constant 0 : index
    %1282 = vector.load %arg2[%c7_173, %c0_174] : memref<9x256xf32, #tpu.memory_space<vmem>>, vector<1x256xf32>
    %1283 = vector.shape_cast %1282 : vector<1x256xf32> to vector<256xf32>
    %1284 = vector.shape_cast %1283 : vector<256xf32> to vector<1x256xf32>
    %1285 = vector.broadcast %1284 : vector<1x256xf32> to vector<2x256xf32>
    %1286 = arith.mulf %1281, %1285 : vector<2x256xf32>
    %1287 = vector.broadcast %138 : f32 to vector<2x256xf32>
    %1288 = arith.mulf %1287, %1286 : vector<2x256xf32>
    %1289 = arith.addf %1278, %1288 : vector<2x256xf32>
    %cst_175 = arith.constant 0.000000e+00 : f32
    %1290 = vector.broadcast %cst_175 : f32 to vector<2x16xf32>
    %1291 = vector.extract_strided_slice %345 {offsets = [0, 16], sizes = [2, 240], strides = [1, 1]} : vector<2x256xf32> to vector<2x240xf32>
    %1292 = tpu.concatenate %1291, %1290 in 1 : vector<2x240xf32>, vector<2x16xf32> -> vector<2x256xf32>
    %c7_176 = arith.constant 7 : index
    %c0_177 = arith.constant 0 : index
    %1293 = vector.load %arg2[%c7_176, %c0_177] : memref<9x256xf32, #tpu.memory_space<vmem>>, vector<1x256xf32>
    %1294 = vector.shape_cast %1293 : vector<1x256xf32> to vector<256xf32>
    %1295 = vector.shape_cast %1294 : vector<256xf32> to vector<1x256xf32>
    %1296 = vector.broadcast %1295 : vector<1x256xf32> to vector<2x256xf32>
    %1297 = arith.mulf %1292, %1296 : vector<2x256xf32>
    %1298 = vector.broadcast %147 : f32 to vector<2x256xf32>
    %1299 = arith.mulf %1298, %1297 : vector<2x256xf32>
    %1300 = arith.addf %1289, %1299 : vector<2x256xf32>
    %cst_178 = arith.constant 0.000000e+00 : f32
    %1301 = vector.broadcast %cst_178 : f32 to vector<2x16xf32>
    %1302 = vector.extract_strided_slice %428 {offsets = [0, 16], sizes = [2, 240], strides = [1, 1]} : vector<2x256xf32> to vector<2x240xf32>
    %1303 = tpu.concatenate %1302, %1301 in 1 : vector<2x240xf32>, vector<2x16xf32> -> vector<2x256xf32>
    %c7_179 = arith.constant 7 : index
    %c0_180 = arith.constant 0 : index
    %1304 = vector.load %arg2[%c7_179, %c0_180] : memref<9x256xf32, #tpu.memory_space<vmem>>, vector<1x256xf32>
    %1305 = vector.shape_cast %1304 : vector<1x256xf32> to vector<256xf32>
    %1306 = vector.shape_cast %1305 : vector<256xf32> to vector<1x256xf32>
    %1307 = vector.broadcast %1306 : vector<1x256xf32> to vector<2x256xf32>
    %1308 = arith.mulf %1303, %1307 : vector<2x256xf32>
    %1309 = vector.broadcast %139 : f32 to vector<2x256xf32>
    %1310 = arith.mulf %1309, %1308 : vector<2x256xf32>
    %1311 = arith.addf %1300, %1310 : vector<2x256xf32>
    %cst_181 = arith.constant 0.000000e+00 : f32
    %1312 = vector.broadcast %cst_181 : f32 to vector<2x16xf32>
    %1313 = vector.extract_strided_slice %479 {offsets = [0, 16], sizes = [2, 240], strides = [1, 1]} : vector<2x256xf32> to vector<2x240xf32>
    %1314 = tpu.concatenate %1313, %1312 in 1 : vector<2x240xf32>, vector<2x16xf32> -> vector<2x256xf32>
    %c7_182 = arith.constant 7 : index
    %c0_183 = arith.constant 0 : index
    %1315 = vector.load %arg2[%c7_182, %c0_183] : memref<9x256xf32, #tpu.memory_space<vmem>>, vector<1x256xf32>
    %1316 = vector.shape_cast %1315 : vector<1x256xf32> to vector<256xf32>
    %1317 = vector.shape_cast %1316 : vector<256xf32> to vector<1x256xf32>
    %1318 = vector.broadcast %1317 : vector<1x256xf32> to vector<2x256xf32>
    %1319 = arith.mulf %1314, %1318 : vector<2x256xf32>
    %1320 = vector.broadcast %148 : f32 to vector<2x256xf32>
    %1321 = arith.mulf %1320, %1319 : vector<2x256xf32>
    %1322 = arith.addf %1311, %1321 : vector<2x256xf32>
    %1323 = vector.broadcast %185 : f32 to vector<2x256xf32>
    %1324 = arith.addf %1322, %1323 : vector<2x256xf32>
    %c0_184 = arith.constant 0 : index
    %c6_185 = arith.constant 6 : index
    %c0_186 = arith.constant 0 : index
    %1325 = vector.load %arg7[%c0_184, %c6_185, %c0_186] : memref<2x12x256xf32, #tpu.memory_space<vmem>>, vector<2x1x256xf32>
    %1326 = vector.shape_cast %1325 : vector<2x1x256xf32> to vector<2x256xf32>
    %1327 = vector.shape_cast %1324 : vector<2x256xf32> to vector<2x1x256xf32>
    tpu.vector_store %arg7[%c0_184, %c6_185, %c0_186], %1327 {strides = array<i32>} : memref<2x12x256xf32, #tpu.memory_space<vmem>>, vector<2x1x256xf32>,
    %cst_187 = arith.constant 0.000000e+00 : f32
    %1328 = vector.broadcast %cst_187 : f32 to vector<2x256xf32>
    %1329 = vector.broadcast %149 : f32 to vector<2x256xf32>
    %1330 = arith.mulf %1329, %806 : vector<2x256xf32>
    %1331 = arith.addf %1328, %1330 : vector<2x256xf32>
    %1332 = vector.broadcast %158 : f32 to vector<2x256xf32>
    %1333 = arith.mulf %1332, %817 : vector<2x256xf32>
    %1334 = arith.addf %1331, %1333 : vector<2x256xf32>
    %1335 = vector.broadcast %150 : f32 to vector<2x256xf32>
    %1336 = arith.mulf %1335, %294 : vector<2x256xf32>
    %1337 = arith.addf %1334, %1336 : vector<2x256xf32>
    %1338 = vector.broadcast %159 : f32 to vector<2x256xf32>
    %1339 = arith.mulf %1338, %345 : vector<2x256xf32>
    %1340 = arith.addf %1337, %1339 : vector<2x256xf32>
    %1341 = vector.broadcast %151 : f32 to vector<2x256xf32>
    %1342 = arith.mulf %1341, %428 : vector<2x256xf32>
    %1343 = arith.addf %1340, %1342 : vector<2x256xf32>
    %1344 = vector.broadcast %160 : f32 to vector<2x256xf32>
    %1345 = arith.mulf %1344, %479 : vector<2x256xf32>
    %1346 = arith.addf %1343, %1345 : vector<2x256xf32>
    %1347 = vector.broadcast %152 : f32 to vector<2x256xf32>
    %1348 = arith.mulf %1347, %840 : vector<2x256xf32>
    %1349 = arith.addf %1346, %1348 : vector<2x256xf32>
    %1350 = vector.broadcast %161 : f32 to vector<2x256xf32>
    %1351 = arith.mulf %1350, %851 : vector<2x256xf32>
    %1352 = arith.addf %1349, %1351 : vector<2x256xf32>
    %1353 = vector.broadcast %153 : f32 to vector<2x256xf32>
    %1354 = arith.mulf %1353, %562 : vector<2x256xf32>
    %1355 = arith.addf %1352, %1354 : vector<2x256xf32>
    %1356 = vector.broadcast %162 : f32 to vector<2x256xf32>
    %1357 = arith.mulf %1356, %613 : vector<2x256xf32>
    %1358 = arith.addf %1355, %1357 : vector<2x256xf32>
    %1359 = vector.broadcast %154 : f32 to vector<2x256xf32>
    %1360 = arith.mulf %1359, %680 : vector<2x256xf32>
    %1361 = arith.addf %1358, %1360 : vector<2x256xf32>
    %1362 = vector.broadcast %163 : f32 to vector<2x256xf32>
    %1363 = arith.mulf %1362, %731 : vector<2x256xf32>
    %1364 = arith.addf %1361, %1363 : vector<2x256xf32>
    %1365 = vector.broadcast %155 : f32 to vector<2x256xf32>
    %1366 = arith.mulf %1365, %1264 : vector<2x256xf32>
    %1367 = arith.addf %1364, %1366 : vector<2x256xf32>
    %1368 = vector.broadcast %164 : f32 to vector<2x256xf32>
    %1369 = arith.mulf %1368, %1275 : vector<2x256xf32>
    %1370 = arith.addf %1367, %1369 : vector<2x256xf32>
    %1371 = vector.broadcast %156 : f32 to vector<2x256xf32>
    %1372 = arith.mulf %1371, %1286 : vector<2x256xf32>
    %1373 = arith.addf %1370, %1372 : vector<2x256xf32>
    %1374 = vector.broadcast %165 : f32 to vector<2x256xf32>
    %1375 = arith.mulf %1374, %1297 : vector<2x256xf32>
    %1376 = arith.addf %1373, %1375 : vector<2x256xf32>
    %1377 = vector.broadcast %157 : f32 to vector<2x256xf32>
    %1378 = arith.mulf %1377, %1308 : vector<2x256xf32>
    %1379 = arith.addf %1376, %1378 : vector<2x256xf32>
    %1380 = vector.broadcast %166 : f32 to vector<2x256xf32>
    %1381 = arith.mulf %1380, %1319 : vector<2x256xf32>
    %1382 = arith.addf %1379, %1381 : vector<2x256xf32>
    %1383 = vector.broadcast %186 : f32 to vector<2x256xf32>
    %1384 = arith.addf %1382, %1383 : vector<2x256xf32>
    %c0_188 = arith.constant 0 : index
    %c7_189 = arith.constant 7 : index
    %c0_190 = arith.constant 0 : index
    %1385 = vector.load %arg7[%c0_188, %c7_189, %c0_190] : memref<2x12x256xf32, #tpu.memory_space<vmem>>, vector<2x1x256xf32>
    %1386 = vector.shape_cast %1385 : vector<2x1x256xf32> to vector<2x256xf32>
    %1387 = vector.shape_cast %1384 : vector<2x256xf32> to vector<2x1x256xf32>
    tpu.vector_store %arg7[%c0_188, %c7_189, %c0_190], %1387 {strides = array<i32>} : memref<2x12x256xf32, #tpu.memory_space<vmem>>, vector<2x1x256xf32>,
    %cst_191 = arith.constant 0.000000e+00 : f32
    %1388 = vector.broadcast %cst_191 : f32 to vector<2x256xf32>
    %1389 = vector.broadcast %167 : f32 to vector<2x256xf32>
    %1390 = arith.mulf %1389, %806 : vector<2x256xf32>
    %1391 = arith.addf %1388, %1390 : vector<2x256xf32>
    %1392 = vector.broadcast %176 : f32 to vector<2x256xf32>
    %1393 = arith.mulf %1392, %817 : vector<2x256xf32>
    %1394 = arith.addf %1391, %1393 : vector<2x256xf32>
    %1395 = vector.broadcast %168 : f32 to vector<2x256xf32>
    %1396 = arith.mulf %1395, %294 : vector<2x256xf32>
    %1397 = arith.addf %1394, %1396 : vector<2x256xf32>
    %1398 = vector.broadcast %177 : f32 to vector<2x256xf32>
    %1399 = arith.mulf %1398, %345 : vector<2x256xf32>
    %1400 = arith.addf %1397, %1399 : vector<2x256xf32>
    %1401 = vector.broadcast %169 : f32 to vector<2x256xf32>
    %1402 = arith.mulf %1401, %428 : vector<2x256xf32>
    %1403 = arith.addf %1400, %1402 : vector<2x256xf32>
    %1404 = vector.broadcast %178 : f32 to vector<2x256xf32>
    %1405 = arith.mulf %1404, %479 : vector<2x256xf32>
    %1406 = arith.addf %1403, %1405 : vector<2x256xf32>
    %1407 = vector.broadcast %170 : f32 to vector<2x256xf32>
    %1408 = arith.mulf %1407, %840 : vector<2x256xf32>
    %1409 = arith.addf %1406, %1408 : vector<2x256xf32>
    %1410 = vector.broadcast %179 : f32 to vector<2x256xf32>
    %1411 = arith.mulf %1410, %851 : vector<2x256xf32>
    %1412 = arith.addf %1409, %1411 : vector<2x256xf32>
    %1413 = vector.broadcast %171 : f32 to vector<2x256xf32>
    %1414 = arith.mulf %1413, %562 : vector<2x256xf32>
    %1415 = arith.addf %1412, %1414 : vector<2x256xf32>
    %1416 = vector.broadcast %180 : f32 to vector<2x256xf32>
    %1417 = arith.mulf %1416, %613 : vector<2x256xf32>
    %1418 = arith.addf %1415, %1417 : vector<2x256xf32>
    %1419 = vector.broadcast %172 : f32 to vector<2x256xf32>
    %1420 = arith.mulf %1419, %680 : vector<2x256xf32>
    %1421 = arith.addf %1418, %1420 : vector<2x256xf32>
    %1422 = vector.broadcast %181 : f32 to vector<2x256xf32>
    %1423 = arith.mulf %1422, %731 : vector<2x256xf32>
    %1424 = arith.addf %1421, %1423 : vector<2x256xf32>
    %1425 = vector.broadcast %173 : f32 to vector<2x256xf32>
    %1426 = arith.mulf %1425, %1264 : vector<2x256xf32>
    %1427 = arith.addf %1424, %1426 : vector<2x256xf32>
    %1428 = vector.broadcast %182 : f32 to vector<2x256xf32>
    %1429 = arith.mulf %1428, %1275 : vector<2x256xf32>
    %1430 = arith.addf %1427, %1429 : vector<2x256xf32>
    %1431 = vector.broadcast %174 : f32 to vector<2x256xf32>
    %1432 = arith.mulf %1431, %1286 : vector<2x256xf32>
    %1433 = arith.addf %1430, %1432 : vector<2x256xf32>
    %1434 = vector.broadcast %183 : f32 to vector<2x256xf32>
    %1435 = arith.mulf %1434, %1297 : vector<2x256xf32>
    %1436 = arith.addf %1433, %1435 : vector<2x256xf32>
    %1437 = vector.broadcast %175 : f32 to vector<2x256xf32>
    %1438 = arith.mulf %1437, %1308 : vector<2x256xf32>
    %1439 = arith.addf %1436, %1438 : vector<2x256xf32>
    %1440 = vector.broadcast %184 : f32 to vector<2x256xf32>
    %1441 = arith.mulf %1440, %1319 : vector<2x256xf32>
    %1442 = arith.addf %1439, %1441 : vector<2x256xf32>
    %1443 = vector.broadcast %187 : f32 to vector<2x256xf32>
    %1444 = arith.addf %1442, %1443 : vector<2x256xf32>
    %c0_192 = arith.constant 0 : index
    %c8_193 = arith.constant 8 : index
    %c0_194 = arith.constant 0 : index
    %1445 = vector.load %arg7[%c0_192, %c8_193, %c0_194] : memref<2x12x256xf32, #tpu.memory_space<vmem>>, vector<2x1x256xf32>
    %1446 = vector.shape_cast %1445 : vector<2x1x256xf32> to vector<2x256xf32>
    %1447 = vector.shape_cast %1444 : vector<2x256xf32> to vector<2x1x256xf32>
    tpu.vector_store %arg7[%c0_192, %c8_193, %c0_194], %1447 {strides = array<i32>} : memref<2x12x256xf32, #tpu.memory_space<vmem>>, vector<2x1x256xf32>,
    %cst_195 = arith.constant 0.000000e+00 : f32
    %1448 = vector.broadcast %cst_195 : f32 to vector<2x256xf32>
    %1449 = vector.broadcast %131 : f32 to vector<2x256xf32>
    %1450 = arith.mulf %1449, %294 : vector<2x256xf32>
    %1451 = arith.addf %1448, %1450 : vector<2x256xf32>
    %1452 = vector.broadcast %140 : f32 to vector<2x256xf32>
    %1453 = arith.mulf %1452, %345 : vector<2x256xf32>
    %1454 = arith.addf %1451, %1453 : vector<2x256xf32>
    %1455 = vector.broadcast %132 : f32 to vector<2x256xf32>
    %1456 = arith.mulf %1455, %428 : vector<2x256xf32>
    %1457 = arith.addf %1454, %1456 : vector<2x256xf32>
    %1458 = vector.broadcast %141 : f32 to vector<2x256xf32>
    %1459 = arith.mulf %1458, %479 : vector<2x256xf32>
    %1460 = arith.addf %1457, %1459 : vector<2x256xf32>
    %1461 = vector.broadcast %133 : f32 to vector<2x256xf32>
    %1462 = arith.mulf %1461, %1046 : vector<2x256xf32>
    %1463 = arith.addf %1460, %1462 : vector<2x256xf32>
    %1464 = vector.broadcast %142 : f32 to vector<2x256xf32>
    %1465 = arith.mulf %1464, %1057 : vector<2x256xf32>
    %1466 = arith.addf %1463, %1465 : vector<2x256xf32>
    %1467 = vector.broadcast %134 : f32 to vector<2x256xf32>
    %1468 = arith.mulf %1467, %562 : vector<2x256xf32>
    %1469 = arith.addf %1466, %1468 : vector<2x256xf32>
    %1470 = vector.broadcast %143 : f32 to vector<2x256xf32>
    %1471 = arith.mulf %1470, %613 : vector<2x256xf32>
    %1472 = arith.addf %1469, %1471 : vector<2x256xf32>
    %1473 = vector.broadcast %135 : f32 to vector<2x256xf32>
    %1474 = arith.mulf %1473, %680 : vector<2x256xf32>
    %1475 = arith.addf %1472, %1474 : vector<2x256xf32>
    %1476 = vector.broadcast %144 : f32 to vector<2x256xf32>
    %1477 = arith.mulf %1476, %731 : vector<2x256xf32>
    %1478 = arith.addf %1475, %1477 : vector<2x256xf32>
    %1479 = vector.broadcast %136 : f32 to vector<2x256xf32>
    %1480 = arith.mulf %1479, %1080 : vector<2x256xf32>
    %1481 = arith.addf %1478, %1480 : vector<2x256xf32>
    %1482 = vector.broadcast %145 : f32 to vector<2x256xf32>
    %1483 = arith.mulf %1482, %1091 : vector<2x256xf32>
    %1484 = arith.addf %1481, %1483 : vector<2x256xf32>
    %1485 = vector.broadcast %137 : f32 to vector<2x256xf32>
    %1486 = arith.mulf %1485, %1286 : vector<2x256xf32>
    %1487 = arith.addf %1484, %1486 : vector<2x256xf32>
    %1488 = vector.broadcast %146 : f32 to vector<2x256xf32>
    %1489 = arith.mulf %1488, %1297 : vector<2x256xf32>
    %1490 = arith.addf %1487, %1489 : vector<2x256xf32>
    %1491 = vector.broadcast %138 : f32 to vector<2x256xf32>
    %1492 = arith.mulf %1491, %1308 : vector<2x256xf32>
    %1493 = arith.addf %1490, %1492 : vector<2x256xf32>
    %1494 = vector.broadcast %147 : f32 to vector<2x256xf32>
    %1495 = arith.mulf %1494, %1319 : vector<2x256xf32>
    %1496 = arith.addf %1493, %1495 : vector<2x256xf32>
    %cst_196 = arith.constant 0.000000e+00 : f32
    %1497 = vector.broadcast %cst_196 : f32 to vector<2x17xf32>
    %1498 = vector.extract_strided_slice %294 {offsets = [0, 17], sizes = [2, 239], strides = [1, 1]} : vector<2x256xf32> to vector<2x239xf32>
    %1499 = tpu.concatenate %1498, %1497 in 1 : vector<2x239xf32>, vector<2x17xf32> -> vector<2x256xf32>
    %c8_197 = arith.constant 8 : index
    %c0_198 = arith.constant 0 : index
    %1500 = vector.load %arg2[%c8_197, %c0_198] : memref<9x256xf32, #tpu.memory_space<vmem>>, vector<1x256xf32>
    %1501 = vector.shape_cast %1500 : vector<1x256xf32> to vector<256xf32>
    %1502 = vector.shape_cast %1501 : vector<256xf32> to vector<1x256xf32>
    %1503 = vector.broadcast %1502 : vector<1x256xf32> to vector<2x256xf32>
    %1504 = arith.mulf %1499, %1503 : vector<2x256xf32>
    %1505 = vector.broadcast %139 : f32 to vector<2x256xf32>
    %1506 = arith.mulf %1505, %1504 : vector<2x256xf32>
    %1507 = arith.addf %1496, %1506 : vector<2x256xf32>
    %cst_199 = arith.constant 0.000000e+00 : f32
    %1508 = vector.broadcast %cst_199 : f32 to vector<2x17xf32>
    %1509 = vector.extract_strided_slice %345 {offsets = [0, 17], sizes = [2, 239], strides = [1, 1]} : vector<2x256xf32> to vector<2x239xf32>
    %1510 = tpu.concatenate %1509, %1508 in 1 : vector<2x239xf32>, vector<2x17xf32> -> vector<2x256xf32>
    %c8_200 = arith.constant 8 : index
    %c0_201 = arith.constant 0 : index
    %1511 = vector.load %arg2[%c8_200, %c0_201] : memref<9x256xf32, #tpu.memory_space<vmem>>, vector<1x256xf32>
    %1512 = vector.shape_cast %1511 : vector<1x256xf32> to vector<256xf32>
    %1513 = vector.shape_cast %1512 : vector<256xf32> to vector<1x256xf32>
    %1514 = vector.broadcast %1513 : vector<1x256xf32> to vector<2x256xf32>
    %1515 = arith.mulf %1510, %1514 : vector<2x256xf32>
    %1516 = vector.broadcast %148 : f32 to vector<2x256xf32>
    %1517 = arith.mulf %1516, %1515 : vector<2x256xf32>
    %1518 = arith.addf %1507, %1517 : vector<2x256xf32>
    %1519 = vector.broadcast %185 : f32 to vector<2x256xf32>
    %1520 = arith.addf %1518, %1519 : vector<2x256xf32>
    %c0_202 = arith.constant 0 : index
    %c9_203 = arith.constant 9 : index
    %c0_204 = arith.constant 0 : index
    %1521 = vector.load %arg7[%c0_202, %c9_203, %c0_204] : memref<2x12x256xf32, #tpu.memory_space<vmem>>, vector<2x1x256xf32>
    %1522 = vector.shape_cast %1521 : vector<2x1x256xf32> to vector<2x256xf32>
    %1523 = vector.shape_cast %1520 : vector<2x256xf32> to vector<2x1x256xf32>
    tpu.vector_store %arg7[%c0_202, %c9_203, %c0_204], %1523 {strides = array<i32>} : memref<2x12x256xf32, #tpu.memory_space<vmem>>, vector<2x1x256xf32>,
    %cst_205 = arith.constant 0.000000e+00 : f32
    %1524 = vector.broadcast %cst_205 : f32 to vector<2x256xf32>
    %1525 = vector.broadcast %149 : f32 to vector<2x256xf32>
    %1526 = arith.mulf %1525, %294 : vector<2x256xf32>
    %1527 = arith.addf %1524, %1526 : vector<2x256xf32>
    %1528 = vector.broadcast %158 : f32 to vector<2x256xf32>
    %1529 = arith.mulf %1528, %345 : vector<2x256xf32>
    %1530 = arith.addf %1527, %1529 : vector<2x256xf32>
    %1531 = vector.broadcast %150 : f32 to vector<2x256xf32>
    %1532 = arith.mulf %1531, %428 : vector<2x256xf32>
    %1533 = arith.addf %1530, %1532 : vector<2x256xf32>
    %1534 = vector.broadcast %159 : f32 to vector<2x256xf32>
    %1535 = arith.mulf %1534, %479 : vector<2x256xf32>
    %1536 = arith.addf %1533, %1535 : vector<2x256xf32>
    %1537 = vector.broadcast %151 : f32 to vector<2x256xf32>
    %1538 = arith.mulf %1537, %1046 : vector<2x256xf32>
    %1539 = arith.addf %1536, %1538 : vector<2x256xf32>
    %1540 = vector.broadcast %160 : f32 to vector<2x256xf32>
    %1541 = arith.mulf %1540, %1057 : vector<2x256xf32>
    %1542 = arith.addf %1539, %1541 : vector<2x256xf32>
    %1543 = vector.broadcast %152 : f32 to vector<2x256xf32>
    %1544 = arith.mulf %1543, %562 : vector<2x256xf32>
    %1545 = arith.addf %1542, %1544 : vector<2x256xf32>
    %1546 = vector.broadcast %161 : f32 to vector<2x256xf32>
    %1547 = arith.mulf %1546, %613 : vector<2x256xf32>
    %1548 = arith.addf %1545, %1547 : vector<2x256xf32>
    %1549 = vector.broadcast %153 : f32 to vector<2x256xf32>
    %1550 = arith.mulf %1549, %680 : vector<2x256xf32>
    %1551 = arith.addf %1548, %1550 : vector<2x256xf32>
    %1552 = vector.broadcast %162 : f32 to vector<2x256xf32>
    %1553 = arith.mulf %1552, %731 : vector<2x256xf32>
    %1554 = arith.addf %1551, %1553 : vector<2x256xf32>
    %1555 = vector.broadcast %154 : f32 to vector<2x256xf32>
    %1556 = arith.mulf %1555, %1080 : vector<2x256xf32>
    %1557 = arith.addf %1554, %1556 : vector<2x256xf32>
    %1558 = vector.broadcast %163 : f32 to vector<2x256xf32>
    %1559 = arith.mulf %1558, %1091 : vector<2x256xf32>
    %1560 = arith.addf %1557, %1559 : vector<2x256xf32>
    %1561 = vector.broadcast %155 : f32 to vector<2x256xf32>
    %1562 = arith.mulf %1561, %1286 : vector<2x256xf32>
    %1563 = arith.addf %1560, %1562 : vector<2x256xf32>
    %1564 = vector.broadcast %164 : f32 to vector<2x256xf32>
    %1565 = arith.mulf %1564, %1297 : vector<2x256xf32>
    %1566 = arith.addf %1563, %1565 : vector<2x256xf32>
    %1567 = vector.broadcast %156 : f32 to vector<2x256xf32>
    %1568 = arith.mulf %1567, %1308 : vector<2x256xf32>
    %1569 = arith.addf %1566, %1568 : vector<2x256xf32>
    %1570 = vector.broadcast %165 : f32 to vector<2x256xf32>
    %1571 = arith.mulf %1570, %1319 : vector<2x256xf32>
    %1572 = arith.addf %1569, %1571 : vector<2x256xf32>
    %1573 = vector.broadcast %157 : f32 to vector<2x256xf32>
    %1574 = arith.mulf %1573, %1504 : vector<2x256xf32>
    %1575 = arith.addf %1572, %1574 : vector<2x256xf32>
    %1576 = vector.broadcast %166 : f32 to vector<2x256xf32>
    %1577 = arith.mulf %1576, %1515 : vector<2x256xf32>
    %1578 = arith.addf %1575, %1577 : vector<2x256xf32>
    %1579 = vector.broadcast %186 : f32 to vector<2x256xf32>
    %1580 = arith.addf %1578, %1579 : vector<2x256xf32>
    %c0_206 = arith.constant 0 : index
    %c10_207 = arith.constant 10 : index
    %c0_208 = arith.constant 0 : index
    %1581 = vector.load %arg7[%c0_206, %c10_207, %c0_208] : memref<2x12x256xf32, #tpu.memory_space<vmem>>, vector<2x1x256xf32>
    %1582 = vector.shape_cast %1581 : vector<2x1x256xf32> to vector<2x256xf32>
    %1583 = vector.shape_cast %1580 : vector<2x256xf32> to vector<2x1x256xf32>
    tpu.vector_store %arg7[%c0_206, %c10_207, %c0_208], %1583 {strides = array<i32>} : memref<2x12x256xf32, #tpu.memory_space<vmem>>, vector<2x1x256xf32>,
    %cst_209 = arith.constant 0.000000e+00 : f32
    %1584 = vector.broadcast %cst_209 : f32 to vector<2x256xf32>
    %1585 = vector.broadcast %167 : f32 to vector<2x256xf32>
    %1586 = arith.mulf %1585, %294 : vector<2x256xf32>
    %1587 = arith.addf %1584, %1586 : vector<2x256xf32>
    %1588 = vector.broadcast %176 : f32 to vector<2x256xf32>
    %1589 = arith.mulf %1588, %345 : vector<2x256xf32>
    %1590 = arith.addf %1587, %1589 : vector<2x256xf32>
    %1591 = vector.broadcast %168 : f32 to vector<2x256xf32>
    %1592 = arith.mulf %1591, %428 : vector<2x256xf32>
    %1593 = arith.addf %1590, %1592 : vector<2x256xf32>
    %1594 = vector.broadcast %177 : f32 to vector<2x256xf32>
    %1595 = arith.mulf %1594, %479 : vector<2x256xf32>
    %1596 = arith.addf %1593, %1595 : vector<2x256xf32>
    %1597 = vector.broadcast %169 : f32 to vector<2x256xf32>
    %1598 = arith.mulf %1597, %1046 : vector<2x256xf32>
    %1599 = arith.addf %1596, %1598 : vector<2x256xf32>
    %1600 = vector.broadcast %178 : f32 to vector<2x256xf32>
    %1601 = arith.mulf %1600, %1057 : vector<2x256xf32>
    %1602 = arith.addf %1599, %1601 : vector<2x256xf32>
    %1603 = vector.broadcast %170 : f32 to vector<2x256xf32>
    %1604 = arith.mulf %1603, %562 : vector<2x256xf32>
    %1605 = arith.addf %1602, %1604 : vector<2x256xf32>
    %1606 = vector.broadcast %179 : f32 to vector<2x256xf32>
    %1607 = arith.mulf %1606, %613 : vector<2x256xf32>
    %1608 = arith.addf %1605, %1607 : vector<2x256xf32>
    %1609 = vector.broadcast %171 : f32 to vector<2x256xf32>
    %1610 = arith.mulf %1609, %680 : vector<2x256xf32>
    %1611 = arith.addf %1608, %1610 : vector<2x256xf32>
    %1612 = vector.broadcast %180 : f32 to vector<2x256xf32>
    %1613 = arith.mulf %1612, %731 : vector<2x256xf32>
    %1614 = arith.addf %1611, %1613 : vector<2x256xf32>
    %1615 = vector.broadcast %172 : f32 to vector<2x256xf32>
    %1616 = arith.mulf %1615, %1080 : vector<2x256xf32>
    %1617 = arith.addf %1614, %1616 : vector<2x256xf32>
    %1618 = vector.broadcast %181 : f32 to vector<2x256xf32>
    %1619 = arith.mulf %1618, %1091 : vector<2x256xf32>
    %1620 = arith.addf %1617, %1619 : vector<2x256xf32>
    %1621 = vector.broadcast %173 : f32 to vector<2x256xf32>
    %1622 = arith.mulf %1621, %1286 : vector<2x256xf32>
    %1623 = arith.addf %1620, %1622 : vector<2x256xf32>
    %1624 = vector.broadcast %182 : f32 to vector<2x256xf32>
    %1625 = arith.mulf %1624, %1297 : vector<2x256xf32>
    %1626 = arith.addf %1623, %1625 : vector<2x256xf32>
    %1627 = vector.broadcast %174 : f32 to vector<2x256xf32>
    %1628 = arith.mulf %1627, %1308 : vector<2x256xf32>
    %1629 = arith.addf %1626, %1628 : vector<2x256xf32>
    %1630 = vector.broadcast %183 : f32 to vector<2x256xf32>
    %1631 = arith.mulf %1630, %1319 : vector<2x256xf32>
    %1632 = arith.addf %1629, %1631 : vector<2x256xf32>
    %1633 = vector.broadcast %175 : f32 to vector<2x256xf32>
    %1634 = arith.mulf %1633, %1504 : vector<2x256xf32>
    %1635 = arith.addf %1632, %1634 : vector<2x256xf32>
    %1636 = vector.broadcast %184 : f32 to vector<2x256xf32>
    %1637 = arith.mulf %1636, %1515 : vector<2x256xf32>
    %1638 = arith.addf %1635, %1637 : vector<2x256xf32>
    %1639 = vector.broadcast %187 : f32 to vector<2x256xf32>
    %1640 = arith.addf %1638, %1639 : vector<2x256xf32>
    %c0_210 = arith.constant 0 : index
    %c11_211 = arith.constant 11 : index
    %c0_212 = arith.constant 0 : index
    %1641 = vector.load %arg7[%c0_210, %c11_211, %c0_212] : memref<2x12x256xf32, #tpu.memory_space<vmem>>, vector<2x1x256xf32>
    %1642 = vector.shape_cast %1641 : vector<2x1x256xf32> to vector<2x256xf32>
    %1643 = vector.shape_cast %1640 : vector<2x256xf32> to vector<2x1x256xf32>
    tpu.vector_store %arg7[%c0_210, %c11_211, %c0_212], %1643 {strides = array<i32>} : memref<2x12x256xf32, #tpu.memory_space<vmem>>, vector<2x1x256xf32>,
    return
  }
  func.func @transform_0(%arg0: i32) -> (i32, i32, i32) {
    %c0_i32 = arith.constant 0 : i32
    %c0_i32_0 = arith.constant 0 : i32
    %c0_i32_1 = arith.constant 0 : i32
    return %arg0, %c0_i32, %c0_i32_0 : i32, i32, i32
  }
  func.func @transform_1(%arg0: i32) -> (i32, i32) {
    %c0_i32 = arith.constant 0 : i32
    %c0_i32_0 = arith.constant 0 : i32
    %c0_i32_1 = arith.constant 0 : i32
    return %c0_i32, %c0_i32_0 : i32, i32
  }
  func.func @transform_2(%arg0: i32) -> i32 {
    %c0_i32 = arith.constant 0 : i32
    %c0_i32_0 = arith.constant 0 : i32
    return %c0_i32 : i32
  }
  func.func @transform_3(%arg0: i32) -> i32 {
    %c0_i32 = arith.constant 0 : i32
    %c0_i32_0 = arith.constant 0 : i32
    return %c0_i32 : i32
  }
  func.func @transform_4(%arg0: i32) -> i32 {
    %c0_i32 = arith.constant 0 : i32
    %c0_i32_0 = arith.constant 0 : i32
    return %c0_i32 : i32
  }
  func.func @transform_5(%arg0: i32) -> i32 {
    %c0_i32 = arith.constant 0 : i32
    %c0_i32_0 = arith.constant 0 : i32
    return %c0_i32 : i32
  }
  func.func @transform_6(%arg0: i32) -> (i32, i32, i32) {
    %c0_i32 = arith.constant 0 : i32
    %c0_i32_0 = arith.constant 0 : i32
    %c0_i32_1 = arith.constant 0 : i32
    return %arg0, %c0_i32, %c0_i32_0 : i32, i32, i32
  }
}

</mosaic_0001>

<llo_original>
// kernel: segmentation_head_forward.1
$region0: #{segmentation_head_forward.1}
  #allocation0 [shape = 'u32[]', space=smem, size = 0x4, offset = 0x4, fixed_abs, tag = 'smem constant byte address 0x4 - core index']
  #allocation1 [shape = 'u32[144,128]{1,0:T(1,128)}', space=vmem, size = 0x12000, scoped, tag = 'internal scratch']
  %s0 = inlined_call_operand.vmem [shape: f32[2,4,256], index: 0, kind: input, shape index: {}]
  %s1 = inlined_call_operand.hbm [shape: f32[9,256], index: 1, kind: input, shape index: {}]
  %s2 = inlined_call_operand.vmem [shape: f32[128], index: 2, kind: input, shape index: {}]
  %s3 = inlined_call_operand.hbm [shape: f32[2], index: 3, kind: input, shape index: {}]
  %s4 = inlined_call_operand.vmem [shape: f32[54], index: 4, kind: input, shape index: {}]
  %s5 = inlined_call_operand.hbm [shape: f32[3], index: 5, kind: input, shape index: {}]
  %s6 = inlined_call_operand.vmem [shape: f32[2,12,256], index: 6, kind: output, shape index: {}]
  %s7 = sld [smem:[#allocation0]]
  $region54: #{segmentation_head_forward.1} parent=0
    _
  %s9 = ssub.s32 1, %s7
  %s10 = scalar_select 0, %s9, %s7
  $region1: #{segmentation_head_forward.1} parent=0
    #allocation2 [shape = 'u8[16384]{0}', space=vmem, size = 0x4000, scoped, tag = 'input window, operand 1, single buffered']
    #allocation3 [shape = 's32[1]{0}', space=sflag, size = 0x4, scoped, tag = 'scoped memory for segmentation_head_forward.1']
    #allocation4 [shape = 's32[1]{0}', space=sflag, size = 0x4, scoped, tag = 'scoped memory for segmentation_head_forward.1']
    #allocation5 [shape = 's32[1]{0}', space=sflag, size = 0x4, scoped, tag = 'scoped memory for segmentation_head_forward.1']
    #allocation6 [shape = 'u8[512]{0}', space=smem, size = 0x200, scoped, tag = 'input window, operand 2, single buffered']
    #allocation7 [shape = 'u8[512]{0}', space=smem, size = 0x200, scoped, tag = 'input window, operand 3, single buffered']
    #allocation8 [shape = 'u8[512]{0}', space=smem, size = 0x200, scoped, tag = 'input window, operand 4, single buffered']
    #allocation9 [shape = 's32[1]{0}', space=sflag, size = 0x4, scoped, tag = 'scoped memory for segmentation_head_forward.1']
    #allocation10 [shape = 'u8[512]{0}', space=smem, size = 0x200, scoped, tag = 'input window, operand 5, single buffered']
    #allocation11 [shape = 's32[1]{0}', space=sflag, size = 0x4, scoped, tag = 'scoped memory for segmentation_head_forward.1']
    %11 = vsyncpa [#allocation3], 0
    %12 = vsyncpa [#allocation5], 0
    %13 = vsyncpa [#allocation4], 0
    %14 = vsyncpa [#allocation9], 0
    %15 = vsyncpa [#allocation11], 0
    // Predicated region
    $region2: #{segmentation_head_forward.1} parent=1 // pred_check
      _
    $region3: #{segmentation_head_forward.1} parent=1 // pred_check_branch
      %17 = sbr.rel (0) target = $region5
    $region4: #{segmentation_head_forward.1} parent=1 // pred_region
      _
    $region5: #{segmentation_head_forward.1} parent=1 // pred_fallthru
      _
    // Predicated region
    $region6: #{segmentation_head_forward.1} parent=1 // pred_check
      _
    $region7: #{segmentation_head_forward.1} parent=1 // pred_check_branch
      %19 = sbr.rel (0) target = $region9
    $region8: #{segmentation_head_forward.1} parent=1 // pred_region
      %s21 = ssub.s32 512, 512
      %22 = vsyncadd [#allocation3], %s21
      %s23 = sshll.u32 [#allocation2], 4
      %s24 = int_to_ptr.vmem [resolvable:$true] %s23
      %29 = dma.hbm_to_vmem [thread:$0]  %s1, 512, %s24, [#allocation3], 256, 256, 16
    $region9: #{segmentation_head_forward.1} parent=1 // pred_fallthru
      _
    // Predicated region
    $region10: #{segmentation_head_forward.1} parent=1 // pred_check
      _
    $region11: #{segmentation_head_forward.1} parent=1 // pred_check_branch
      %31 = sbr.rel (0) target = $region13
    $region12: #{segmentation_head_forward.1} parent=1 // pred_region
      %s33 = ssub.s32 16, 16
      %34 = vsyncadd [#allocation5], %s33
      %s36 = sshll.u32 %s2, 4
      %s37 = int_to_ptr.vmem [resolvable:$true] %s36
      %39 = dma.vmem_to_smem %s37, 16, [#allocation6], [#allocation5]
    $region13: #{segmentation_head_forward.1} parent=1 // pred_fallthru
      _
    // Predicated region
    $region14: #{segmentation_head_forward.1} parent=1 // pred_check
      _
    $region15: #{segmentation_head_forward.1} parent=1 // pred_check_branch
      %41 = sbr.rel (0) target = $region17
    $region16: #{segmentation_head_forward.1} parent=1 // pred_region
      %s43 = ssub.s32 16, 16
      %44 = vsyncadd [#allocation4], %s43
      %47 = dma.hbm_to_smem %s3, 16, [#allocation7], [#allocation4]
    $region17: #{segmentation_head_forward.1} parent=1 // pred_fallthru
      _
    // Predicated region
    $region18: #{segmentation_head_forward.1} parent=1 // pred_check
      _
    $region19: #{segmentation_head_forward.1} parent=1 // pred_check_branch
      %49 = sbr.rel (0) target = $region21
    $region20: #{segmentation_head_forward.1} parent=1 // pred_region
      %s51 = ssub.s32 16, 16
      %52 = vsyncadd [#allocation9], %s51
      %s54 = sshll.u32 %s4, 4
      %s55 = int_to_ptr.vmem [resolvable:$true] %s54
      %57 = dma.vmem_to_smem %s55, 16, [#allocation8], [#allocation9]
    $region21: #{segmentation_head_forward.1} parent=1 // pred_fallthru
      _
    // Predicated region
    $region22: #{segmentation_head_forward.1} parent=1 // pred_check
      _
    $region23: #{segmentation_head_forward.1} parent=1 // pred_check_branch
      %59 = sbr.rel (0) target = $region25
    $region24: #{segmentation_head_forward.1} parent=1 // pred_region
      %s61 = ssub.s32 16, 16
      %62 = vsyncadd [#allocation11], %s61
      %65 = dma.hbm_to_smem %s5, 16, [#allocation10], [#allocation11]
    $region25: #{segmentation_head_forward.1} parent=1 // pred_fallthru
      _
    // Predicated region
    $region26: #{segmentation_head_forward.1} parent=1 // pred_check
      _
    $region27: #{segmentation_head_forward.1} parent=1 // pred_check_branch
      %67 = sbr.rel (0) target = $region29
    $region28: #{segmentation_head_forward.1} parent=1 // pred_region
      %68 = dma.done [#allocation3], 512
    $region29: #{segmentation_head_forward.1} parent=1 // pred_fallthru
      _
    // Predicated region
    $region30: #{segmentation_head_forward.1} parent=1 // pred_check
      _
    $region31: #{segmentation_head_forward.1} parent=1 // pred_check_branch
      %70 = sbr.rel (0) target = $region33
    $region32: #{segmentation_head_forward.1} parent=1 // pred_region
      %71 = dma.done [#allocation5], 16
    $region33: #{segmentation_head_forward.1} parent=1 // pred_fallthru
      _
    // Predicated region
    $region34: #{segmentation_head_forward.1} parent=1 // pred_check
      _
    $region35: #{segmentation_head_forward.1} parent=1 // pred_check_branch
      %73 = sbr.rel (0) target = $region37
    $region36: #{segmentation_head_forward.1} parent=1 // pred_region
      %74 = dma.done [#allocation4], 16
    $region37: #{segmentation_head_forward.1} parent=1 // pred_fallthru
      _
    // Predicated region
    $region38: #{segmentation_head_forward.1} parent=1 // pred_check
      _
    $region39: #{segmentation_head_forward.1} parent=1 // pred_check_branch
      %76 = sbr.rel (0) target = $region41
    $region40: #{segmentation_head_forward.1} parent=1 // pred_region
      %77 = dma.done [#allocation9], 16
    $region41: #{segmentation_head_forward.1} parent=1 // pred_fallthru
      _
    // Predicated region
    $region42: #{segmentation_head_forward.1} parent=1 // pred_check
      _
    $region43: #{segmentation_head_forward.1} parent=1 // pred_check_branch
      %79 = sbr.rel (0) target = $region45
    $region44: #{segmentation_head_forward.1} parent=1 // pred_region
      %80 = dma.done [#allocation11], 16
    $region45: #{segmentation_head_forward.1} parent=1 // pred_fallthru
      _
    %81 = sfence
    %v82 = vld [vmem:[%s0] sm:$0xff]
    %v83 = vld [vmem:[%s0 + $0x8] sm:$0xff]
    %s84 = sld [smem:[#allocation6]]
    %s85 = sld [smem:[#allocation6 + $0x1]]
    %s86 = sld [smem:[#allocation6 + $0x2]]
    %s87 = sld [smem:[#allocation6 + $0x3]]
    %s88 = sld [smem:[#allocation6 + $0x4]]
    %s89 = sld [smem:[#allocation6 + $0x5]]
    %s90 = sld [smem:[#allocation6 + $0x6]]
    %s91 = sld [smem:[#allocation6 + $0x7]]
    %s92 = sld [smem:[#allocation6 + $0x8]]
    %s93 = sld [smem:[#allocation6 + $0x9]]
    %s94 = sld [smem:[#allocation6 + $0xa]]
    %s95 = sld [smem:[#allocation6 + $0xb]]
    %s96 = sld [smem:[#allocation6 + $0xc]]
    %s97 = sld [smem:[#allocation6 + $0xd]]
    %s98 = sld [smem:[#allocation6 + $0xe]]
    %s99 = sld [smem:[#allocation6 + $0xf]]
    %s100 = sld [smem:[#allocation6 + $0x10]]
    %s101 = sld [smem:[#allocation6 + $0x11]]
    %s102 = sld [smem:[#allocation6 + $0x12]]
    %s103 = sld [smem:[#allocation6 + $0x13]]
    %s104 = sld [smem:[#allocation6 + $0x14]]
    %s105 = sld [smem:[#allocation6 + $0x15]]
    %s106 = sld [smem:[#allocation6 + $0x16]]
    %s107 = sld [smem:[#allocation6 + $0x17]]
    %s108 = sld [smem:[#allocation6 + $0x18]]
    %s109 = sld [smem:[#allocation6 + $0x19]]
    %s110 = sld [smem:[#allocation6 + $0x1a]]
    %s111 = sld [smem:[#allocation6 + $0x1b]]
    %s112 = sld [smem:[#allocation6 + $0x1c]]
    %s113 = sld [smem:[#allocation6 + $0x1d]]
    %s114 = sld [smem:[#allocation6 + $0x1e]]
    %s115 = sld [smem:[#allocation6 + $0x1f]]
    %s116 = sld [smem:[#allocation6 + $0x20]]
    %s117 = sld [smem:[#allocation6 + $0x21]]
    %s118 = sld [smem:[#allocation6 + $0x22]]
    %s119 = sld [smem:[#allocation6 + $0x23]]
    %s120 = sld [smem:[#allocation6 + $0x24]]
    %s121 = sld [smem:[#allocation6 + $0x25]]
    %s122 = sld [smem:[#allocation6 + $0x26]]
    %s123 = sld [smem:[#allocation6 + $0x27]]
    %s124 = sld [smem:[#allocation6 + $0x28]]
    %s125 = sld [smem:[#allocation6 + $0x29]]
    %s126 = sld [smem:[#allocation6 + $0x2a]]
    %s127 = sld [smem:[#allocation6 + $0x2b]]
    %s128 = sld [smem:[#allocation6 + $0x2c]]
    %s129 = sld [smem:[#allocation6 + $0x2d]]
    %s130 = sld [smem:[#allocation6 + $0x2e]]
    %s131 = sld [smem:[#allocation6 + $0x2f]]
    %s132 = sld [smem:[#allocation6 + $0x30]]
    %s133 = sld [smem:[#allocation6 + $0x31]]
    %s134 = sld [smem:[#allocation6 + $0x32]]
    %s135 = sld [smem:[#allocation6 + $0x33]]
    %s136 = sld [smem:[#allocation6 + $0x34]]
    %s137 = sld [smem:[#allocation6 + $0x35]]
    %s138 = sld [smem:[#allocation6 + $0x36]]
    %s139 = sld [smem:[#allocation6 + $0x37]]
    %s140 = sld [smem:[#allocation6 + $0x38]]
    %s141 = sld [smem:[#allocation6 + $0x39]]
    %s142 = sld [smem:[#allocation6 + $0x3a]]
    %s143 = sld [smem:[#allocation6 + $0x3b]]
    %s144 = sld [smem:[#allocation6 + $0x3c]]
    %s145 = sld [smem:[#allocation6 + $0x3d]]
    %s146 = sld [smem:[#allocation6 + $0x3e]]
    %s147 = sld [smem:[#allocation6 + $0x3f]]
    %s148 = sld [smem:[#allocation6 + $0x40]]
    %s149 = sld [smem:[#allocation6 + $0x41]]
    %s150 = sld [smem:[#allocation6 + $0x42]]
    %s151 = sld [smem:[#allocation6 + $0x43]]
    %s152 = sld [smem:[#allocation6 + $0x44]]
    %s153 = sld [smem:[#allocation6 + $0x45]]
    %s154 = sld [smem:[#allocation6 + $0x46]]
    %s155 = sld [smem:[#allocation6 + $0x47]]
    %s156 = sld [smem:[#allocation6 + $0x48]]
    %s157 = sld [smem:[#allocation6 + $0x49]]
    %s158 = sld [smem:[#allocation6 + $0x4a]]
    %s159 = sld [smem:[#allocation6 + $0x4b]]
    %s160 = sld [smem:[#allocation6 + $0x4c]]
    %s161 = sld [smem:[#allocation6 + $0x4d]]
    %s162 = sld [smem:[#allocation6 + $0x4e]]
    %s163 = sld [smem:[#allocation6 + $0x4f]]
    %s164 = sld [smem:[#allocation6 + $0x50]]
    %s165 = sld [smem:[#allocation6 + $0x51]]
    %s166 = sld [smem:[#allocation6 + $0x52]]
    %s167 = sld [smem:[#allocation6 + $0x53]]
    %s168 = sld [smem:[#allocation6 + $0x54]]
    %s169 = sld [smem:[#allocation6 + $0x55]]
    %s170 = sld [smem:[#allocation6 + $0x56]]
    %s171 = sld [smem:[#allocation6 + $0x57]]
    %s172 = sld [smem:[#allocation6 + $0x58]]
    %s173 = sld [smem:[#allocation6 + $0x59]]
    %s174 = sld [smem:[#allocation6 + $0x5a]]
    %s175 = sld [smem:[#allocation6 + $0x5b]]
    %s176 = sld [smem:[#allocation6 + $0x5c]]
    %s177 = sld [smem:[#allocation6 + $0x5d]]
    %s178 = sld [smem:[#allocation6 + $0x5e]]
    %s179 = sld [smem:[#allocation6 + $0x5f]]
    %s180 = sld [smem:[#allocation6 + $0x60]]
    %s181 = sld [smem:[#allocation6 + $0x61]]
    %s182 = sld [smem:[#allocation6 + $0x62]]
    %s183 = sld [smem:[#allocation6 + $0x63]]
    %s184 = sld [smem:[#allocation6 + $0x64]]
    %s185 = sld [smem:[#allocation6 + $0x65]]
    %s186 = sld [smem:[#allocation6 + $0x66]]
    %s187 = sld [smem:[#allocation6 + $0x67]]
    %s188 = sld [smem:[#allocation6 + $0x68]]
    %s189 = sld [smem:[#allocation6 + $0x69]]
    %s190 = sld [smem:[#allocation6 + $0x6a]]
    %s191 = sld [smem:[#allocation6 + $0x6b]]
    %s192 = sld [smem:[#allocation6 + $0x6c]]
    %s193 = sld [smem:[#allocation6 + $0x6d]]
    %s194 = sld [smem:[#allocation6 + $0x6e]]
    %s195 = sld [smem:[#allocation6 + $0x6f]]
    %s196 = sld [smem:[#allocation6 + $0x70]]
    %s197 = sld [smem:[#allocation6 + $0x71]]
    %s198 = sld [smem:[#allocation6 + $0x72]]
    %s199 = sld [smem:[#allocation6 + $0x73]]
    %s200 = sld [smem:[#allocation6 + $0x74]]
    %s201 = sld [smem:[#allocation6 + $0x75]]
    %s202 = sld [smem:[#allocation6 + $0x76]]
    %s203 = sld [smem:[#allocation6 + $0x77]]
    %s204 = sld [smem:[#allocation6 + $0x78]]
    %s205 = sld [smem:[#allocation6 + $0x79]]
    %s206 = sld [smem:[#allocation6 + $0x7a]]
    %s207 = sld [smem:[#allocation6 + $0x7b]]
    %s208 = sld [smem:[#allocation6 + $0x7c]]
    %s209 = sld [smem:[#allocation6 + $0x7d]]
    %s210 = sld [smem:[#allocation6 + $0x7e]]
    %s211 = sld [smem:[#allocation6 + $0x7f]]
    %s212 = sld [smem:[#allocation7]]
    %s213 = sld [smem:[#allocation7 + $0x1]]
    %s214 = sld [smem:[#allocation8]]
    %s215 = sld [smem:[#allocation8 + $0x1]]
    %s216 = sld [smem:[#allocation8 + $0x2]]
    %s217 = sld [smem:[#allocation8 + $0x3]]
    %s218 = sld [smem:[#allocation8 + $0x4]]
    %s219 = sld [smem:[#allocation8 + $0x5]]
    %s220 = sld [smem:[#allocation8 + $0x6]]
    %s221 = sld [smem:[#allocation8 + $0x7]]
    %s222 = sld [smem:[#allocation8 + $0x8]]
    %s223 = sld [smem:[#allocation8 + $0x9]]
    %s224 = sld [smem:[#allocation8 + $0xa]]
    %s225 = sld [smem:[#allocation8 + $0xb]]
    %s226 = sld [smem:[#allocation8 + $0xc]]
    %s227 = sld [smem:[#allocation8 + $0xd]]
    %s228 = sld [smem:[#allocation8 + $0xe]]
    %s229 = sld [smem:[#allocation8 + $0xf]]
    %s230 = sld [smem:[#allocation8 + $0x10]]
    %s231 = sld [smem:[#allocation8 + $0x11]]
    %s232 = sld [smem:[#allocation8 + $0x12]]
    %s233 = sld [smem:[#allocation8 + $0x13]]
    %s234 = sld [smem:[#allocation8 + $0x14]]
    %s235 = sld [smem:[#allocation8 + $0x15]]
    %s236 = sld [smem:[#allocation8 + $0x16]]
    %s237 = sld [smem:[#allocation8 + $0x17]]
    %s238 = sld [smem:[#allocation8 + $0x18]]
    %s239 = sld [smem:[#allocation8 + $0x19]]
    %s240 = sld [smem:[#allocation8 + $0x1a]]
    %s241 = sld [smem:[#allocation8 + $0x1b]]
    %s242 = sld [smem:[#allocation8 + $0x1c]]
    %s243 = sld [smem:[#allocation8 + $0x1d]]
    %s244 = sld [smem:[#allocation8 + $0x1e]]
    %s245 = sld [smem:[#allocation8 + $0x1f]]
    %s246 = sld [smem:[#allocation8 + $0x20]]
    %s247 = sld [smem:[#allocation8 + $0x21]]
    %s248 = sld [smem:[#allocation8 + $0x22]]
    %s249 = sld [smem:[#allocation8 + $0x23]]
    %s250 = sld [smem:[#allocation8 + $0x24]]
    %s251 = sld [smem:[#allocation8 + $0x25]]
    %s252 = sld [smem:[#allocation8 + $0x26]]
    %s253 = sld [smem:[#allocation8 + $0x27]]
    %s254 = sld [smem:[#allocation8 + $0x28]]
    %s255 = sld [smem:[#allocation8 + $0x29]]
    %s256 = sld [smem:[#allocation8 + $0x2a]]
    %s257 = sld [smem:[#allocation8 + $0x2b]]
    %s258 = sld [smem:[#allocation8 + $0x2c]]
    %s259 = sld [smem:[#allocation8 + $0x2d]]
    %s260 = sld [smem:[#allocation8 + $0x2e]]
    %s261 = sld [smem:[#allocation8 + $0x2f]]
    %s262 = sld [smem:[#allocation8 + $0x30]]
    %s263 = sld [smem:[#allocation8 + $0x31]]
    %s264 = sld [smem:[#allocation8 + $0x32]]
    %s265 = sld [smem:[#allocation8 + $0x33]]
    %s266 = sld [smem:[#allocation8 + $0x34]]
    %s267 = sld [smem:[#allocation8 + $0x35]]
    %s268 = sld [smem:[#allocation10]]
    %s269 = sld [smem:[#allocation10 + $0x1]]
    %s270 = sld [smem:[#allocation10 + $0x2]]
    %v273 = vcombine.high %v82, %v82
    %v274 = vcombine.high %v83, %v83
    %275 = vrot.lane.b32.xlu0 %v82, 17
    %v276 = vpop.permute.xlu0 %275
    %277 = vrot.lane.b32.xlu0 %v273, 17
    %v278 = vpop.permute.xlu0 %277
    %279 = vrot.lane.b32.xlu0 %v83, 17
    %v280 = vpop.permute.xlu0 %279
    %281 = vrot.lane.b32.xlu0 %v274, 17
    %v282 = vpop.permute.xlu0 %281
    %vm283 = vcmask 138240
    %v284 = vsel %vm283, %v276, %v278
    %v285 = vsel %vm283, %v280, %v282
    %v290 = vsel %vm283, 0.0, %v276
    %v291 = vsel %vm283, 0.0, %v280
    %v292 = vld [vmem:[#allocation2] ss:$8 sm:$0x3]
    %v294 = vlaneseq
    %v295 = vshrl.u32 %v294, 7
    %v296 = vsub.s32 0, %v295
    %v297 = vrot.slane %v292, %v296
    %v298 = vlaneseq
    %v299 = vshrl.u32 %v298, 7
    %v300 = vsub.s32 1, %v299
    %v301 = vrot.slane %v292, %v300
    %v304 = vmul.f32 %v290, %v297
    %v305 = vmul.f32 %v284, %v301
    %v306 = vmul.f32 %v291, %v297
    %v307 = vmul.f32 %v285, %v301
    %v308 = vstv %s99
    %v309 = vmul.f32 %v308, %v304
    %v310 = vmul.f32 %v308, %v305
    %v311 = vmul.f32 %v308, %v306
    %v312 = vmul.f32 %v308, %v307
    %v313 = vadd.f32 %v309, 0.0
    %v314 = vadd.f32 %v310, 0.0
    %v315 = vadd.f32 %v311, 0.0
    %v316 = vadd.f32 %v312, 0.0
    %v317 = vstv %s131
    %v318 = vmul.f32 %v317, %v304
    %v319 = vmul.f32 %v317, %v305
    %v320 = vmul.f32 %v317, %v306
    %v321 = vmul.f32 %v317, %v307
    %v326 = vrot.slane %v318, 1
    %v327 = vrot.slane %v319, 1
    %v328 = vrot.slane %v320, 1
    %v329 = vrot.slane %v321, 1
    %v334 = vadd.f32 %v313, %v326
    %v335 = vadd.f32 %v314, %v327
    %v336 = vadd.f32 %v315, %v328
    %v337 = vadd.f32 %v316, %v329
    %v338 = vstv %s163
    %v339 = vmul.f32 %v338, %v304
    %v340 = vmul.f32 %v338, %v305
    %v341 = vmul.f32 %v338, %v306
    %v342 = vmul.f32 %v338, %v307
    %v347 = vrot.slane %v339, 2
    %v348 = vrot.slane %v340, 2
    %v349 = vrot.slane %v341, 2
    %v350 = vrot.slane %v342, 2
    %v355 = vadd.f32 %v334, %v347
    %v356 = vadd.f32 %v335, %v348
    %v357 = vadd.f32 %v336, %v349
    %v358 = vadd.f32 %v337, %v350
    %v359 = vstv %s195
    %v360 = vmul.f32 %v359, %v304
    %v361 = vmul.f32 %v359, %v305
    %v362 = vmul.f32 %v359, %v306
    %v363 = vmul.f32 %v359, %v307
    %v368 = vrot.slane %v360, 3
    %v369 = vrot.slane %v361, 3
    %v370 = vrot.slane %v362, 3
    %v371 = vrot.slane %v363, 3
    %v376 = vadd.f32 %v355, %v368
    %v377 = vadd.f32 %v356, %v369
    %v378 = vadd.f32 %v357, %v370
    %v379 = vadd.f32 %v358, %v371
    %380 = vrot.lane.b32.xlu0 %v82, 16
    %v381 = vpop.permute.xlu0 %380
    %382 = vrot.lane.b32.xlu0 %v273, 16
    %v383 = vpop.permute.xlu0 %382
    %384 = vrot.lane.b32.xlu0 %v83, 16
    %v385 = vpop.permute.xlu0 %384
    %386 = vrot.lane.b32.xlu0 %v274, 16
    %v387 = vpop.permute.xlu0 %386
    %vm388 = vcmask 130048
    %v389 = vsel %vm388, %v381, %v383
    %v390 = vsel %vm388, %v385, %v387
    %v395 = vsel %vm388, 0.0, %v381
    %v396 = vsel %vm388, 0.0, %v385
    %s397 = scalar_lea.vmem [#allocation2], 1
    %v398 = vld [vmem:[%s397] ss:$8 sm:$0x3]
    %v400 = vlaneseq
    %v401 = vshrl.u32 %v400, 7
    %v402 = vsub.s32 0, %v401
    %v403 = vrot.slane %v398, %v402
    %v404 = vlaneseq
    %v405 = vshrl.u32 %v404, 7
    %v406 = vsub.s32 1, %v405
    %v407 = vrot.slane %v398, %v406
    %v410 = vmul.f32 %v395, %v403
    %v411 = vmul.f32 %v389, %v407
    %v412 = vmul.f32 %v396, %v403
    %v413 = vmul.f32 %v390, %v407
    %v414 = vstv %s97
    %v415 = vmul.f32 %v414, %v410
    %v416 = vmul.f32 %v414, %v411
    %v417 = vmul.f32 %v414, %v412
    %v418 = vmul.f32 %v414, %v413
    %v419 = vadd.f32 %v376, %v415
    %v420 = vadd.f32 %v377, %v416
    %v421 = vadd.f32 %v378, %v417
    %v422 = vadd.f32 %v379, %v418
    %v423 = vstv %s129
    %v424 = vmul.f32 %v423, %v410
    %v425 = vmul.f32 %v423, %v411
    %v426 = vmul.f32 %v423, %v412
    %v427 = vmul.f32 %v423, %v413
    %v432 = vrot.slane %v424, 1
    %v433 = vrot.slane %v425, 1
    %v434 = vrot.slane %v426, 1
    %v435 = vrot.slane %v427, 1
    %v440 = vadd.f32 %v419, %v432
    %v441 = vadd.f32 %v420, %v433
    %v442 = vadd.f32 %v421, %v434
    %v443 = vadd.f32 %v422, %v435
    %v444 = vstv %s161
    %v445 = vmul.f32 %v444, %v410
    %v446 = vmul.f32 %v444, %v411
    %v447 = vmul.f32 %v444, %v412
    %v448 = vmul.f32 %v444, %v413
    %v453 = vrot.slane %v445, 2
    %v454 = vrot.slane %v446, 2
    %v455 = vrot.slane %v447, 2
    %v456 = vrot.slane %v448, 2
    %v461 = vadd.f32 %v440, %v453
    %v462 = vadd.f32 %v441, %v454
    %v463 = vadd.f32 %v442, %v455
    %v464 = vadd.f32 %v443, %v456
    %v465 = vstv %s193
    %v466 = vmul.f32 %v465, %v410
    %v467 = vmul.f32 %v465, %v411
    %v468 = vmul.f32 %v465, %v412
    %v469 = vmul.f32 %v465, %v413
    %v474 = vrot.slane %v466, 3
    %v475 = vrot.slane %v467, 3
    %v476 = vrot.slane %v468, 3
    %v477 = vrot.slane %v469, 3
    %v482 = vadd.f32 %v461, %v474
    %v483 = vadd.f32 %v462, %v475
    %v484 = vadd.f32 %v463, %v476
    %v485 = vadd.f32 %v464, %v477
    %486 = vrot.lane.b32.xlu0 %v82, 1
    %v487 = vpop.permute.xlu0 %486
    %488 = vrot.lane.b32.xlu0 %v273, 1
    %v489 = vpop.permute.xlu0 %488
    %490 = vrot.lane.b32.xlu0 %v83, 1
    %v491 = vpop.permute.xlu0 %490
    %492 = vrot.lane.b32.xlu0 %v274, 1
    %v493 = vpop.permute.xlu0 %492
    %vm494 = vcmask 7168
    %v495 = vsel %vm494, %v487, %v489
    %v496 = vsel %vm494, %v491, %v493
    %v501 = vsel %vm494, 0.0, %v487
    %v502 = vsel %vm494, 0.0, %v491
    %s503 = scalar_lea.vmem [#allocation2], 3
    %v504 = vld [vmem:[%s503] ss:$8 sm:$0x3]
    %v506 = vlaneseq
    %v507 = vshrl.u32 %v506, 7
    %v508 = vsub.s32 0, %v507
    %v509 = vrot.slane %v504, %v508
    %v510 = vlaneseq
    %v511 = vshrl.u32 %v510, 7
    %v512 = vsub.s32 1, %v511
    %v513 = vrot.slane %v504, %v512
    %v516 = vmul.f32 %v501, %v509
    %v517 = vmul.f32 %v495, %v513
    %v518 = vmul.f32 %v502, %v509
    %v519 = vmul.f32 %v496, %v513
    %v520 = vstv %s91
    %v521 = vmul.f32 %v520, %v516
    %v522 = vmul.f32 %v520, %v517
    %v523 = vmul.f32 %v520, %v518
    %v524 = vmul.f32 %v520, %v519
    %v525 = vadd.f32 %v482, %v521
    %v526 = vadd.f32 %v483, %v522
    %v527 = vadd.f32 %v484, %v523
    %v528 = vadd.f32 %v485, %v524
    %v529 = vstv %s123
    %v530 = vmul.f32 %v529, %v516
    %v531 = vmul.f32 %v529, %v517
    %v532 = vmul.f32 %v529, %v518
    %v533 = vmul.f32 %v529, %v519
    %v538 = vrot.slane %v530, 1
    %v539 = vrot.slane %v531, 1
    %v540 = vrot.slane %v532, 1
    %v541 = vrot.slane %v533, 1
    %v546 = vadd.f32 %v525, %v538
    %v547 = vadd.f32 %v526, %v539
    %v548 = vadd.f32 %v527, %v540
    %v549 = vadd.f32 %v528, %v541
    %v550 = vstv %s155
    %v551 = vmul.f32 %v550, %v516
    %v552 = vmul.f32 %v550, %v517
    %v553 = vmul.f32 %v550, %v518
    %v554 = vmul.f32 %v550, %v519
    %v559 = vrot.slane %v551, 2
    %v560 = vrot.slane %v552, 2
    %v561 = vrot.slane %v553, 2
    %v562 = vrot.slane %v554, 2
    %v567 = vadd.f32 %v546, %v559
    %v568 = vadd.f32 %v547, %v560
    %v569 = vadd.f32 %v548, %v561
    %v570 = vadd.f32 %v549, %v562
    %v571 = vstv %s187
    %v572 = vmul.f32 %v571, %v516
    %v573 = vmul.f32 %v571, %v517
    %v574 = vmul.f32 %v571, %v518
    %v575 = vmul.f32 %v571, %v519
    %v580 = vrot.slane %v572, 3
    %v581 = vrot.slane %v573, 3
    %v582 = vrot.slane %v574, 3
    %v583 = vrot.slane %v575, 3
    %v588 = vadd.f32 %v567, %v580
    %v589 = vadd.f32 %v568, %v581
    %v590 = vadd.f32 %v569, %v582
    %v591 = vadd.f32 %v570, %v583
    %v592 = vstv %s89
    %v593 = vmul.f32 %v592, %v82
    %v594 = vmul.f32 %v592, %v83
    %v597 = vlaneseq
    %v598 = vshrl.u32 %v597, 7
    %v599 = vsub.s32 0, %v598
    %v600 = vrot.slane %v593, %v599
    %v601 = vlaneseq
    %v602 = vshrl.u32 %v601, 7
    %v603 = vsub.s32 4, %v602
    %v604 = vrot.slane %v593, %v603
    %v605 = vlaneseq
    %v606 = vshrl.u32 %v605, 7
    %v607 = vsub.s32 0, %v606
    %v608 = vrot.slane %v594, %v607
    %v609 = vlaneseq
    %v610 = vshrl.u32 %v609, 7
    %v611 = vsub.s32 4, %v610
    %v612 = vrot.slane %v594, %v611
    %v617 = vadd.f32 %v588, %v600
    %v618 = vadd.f32 %v589, %v604
    %v619 = vadd.f32 %v590, %v608
    %v620 = vadd.f32 %v591, %v612
    %v621 = vstv %s121
    %v622 = vmul.f32 %v621, %v82
    %v623 = vmul.f32 %v621, %v83
    %v626 = vlaneseq
    %v627 = vshrl.u32 %v626, 7
    %v628 = vsub.s32 1, %v627
    %v629 = vrot.slane %v622, %v628
    %v630 = vlaneseq
    %v631 = vshrl.u32 %v630, 7
    %v632 = vsub.s32 5, %v631
    %v633 = vrot.slane %v622, %v632
    %v634 = vlaneseq
    %v635 = vshrl.u32 %v634, 7
    %v636 = vsub.s32 1, %v635
    %v637 = vrot.slane %v623, %v636
    %v638 = vlaneseq
    %v639 = vshrl.u32 %v638, 7
    %v640 = vsub.s32 5, %v639
    %v641 = vrot.slane %v623, %v640
    %v646 = vadd.f32 %v617, %v629
    %v647 = vadd.f32 %v618, %v633
    %v648 = vadd.f32 %v619, %v637
    %v649 = vadd.f32 %v620, %v641
    %v650 = vstv %s153
    %v651 = vmul.f32 %v650, %v82
    %v652 = vmul.f32 %v650, %v83
    %v655 = vlaneseq
    %v656 = vshrl.u32 %v655, 7
    %v657 = vsub.s32 2, %v656
    %v658 = vrot.slane %v651, %v657
    %v659 = vlaneseq
    %v660 = vshrl.u32 %v659, 7
    %v661 = vsub.s32 6, %v660
    %v662 = vrot.slane %v651, %v661
    %v663 = vlaneseq
    %v664 = vshrl.u32 %v663, 7
    %v665 = vsub.s32 2, %v664
    %v666 = vrot.slane %v652, %v665
    %v667 = vlaneseq
    %v668 = vshrl.u32 %v667, 7
    %v669 = vsub.s32 6, %v668
    %v670 = vrot.slane %v652, %v669
    %v675 = vadd.f32 %v646, %v658
    %v676 = vadd.f32 %v647, %v662
    %v677 = vadd.f32 %v648, %v666
    %v678 = vadd.f32 %v649, %v670
    %v679 = vstv %s185
    %v680 = vmul.f32 %v679, %v82
    %v681 = vmul.f32 %v679, %v83
    %v684 = vlaneseq
    %v685 = vshrl.u32 %v684, 7
    %v686 = vsub.s32 3, %v685
    %v687 = vrot.slane %v680, %v686
    %v688 = vlaneseq
    %v689 = vshrl.u32 %v688, 7
    %v690 = vsub.s32 7, %v689
    %v691 = vrot.slane %v680, %v690
    %v692 = vlaneseq
    %v693 = vshrl.u32 %v692, 7
    %v694 = vsub.s32 3, %v693
    %v695 = vrot.slane %v681, %v694
    %v696 = vlaneseq
    %v697 = vshrl.u32 %v696, 7
    %v698 = vsub.s32 7, %v697
    %v699 = vrot.slane %v681, %v698
    %v704 = vadd.f32 %v675, %v687
    %v705 = vadd.f32 %v676, %v691
    %v706 = vadd.f32 %v677, %v695
    %v707 = vadd.f32 %v678, %v699
    %v708 = vstv %s212
    %v709 = vadd.f32 %v704, %v708
    %v710 = vadd.f32 %v705, %v708
    %v711 = vadd.f32 %v706, %v708
    %v712 = vadd.f32 %v707, %v708
    %v713 = vstv %s115
    %v714 = vmul.f32 %v713, %v304
    %v715 = vmul.f32 %v713, %v305
    %v716 = vmul.f32 %v713, %v306
    %v717 = vmul.f32 %v713, %v307
    %v718 = vadd.f32 %v714, 0.0
    %v719 = vadd.f32 %v715, 0.0
    %v720 = vadd.f32 %v716, 0.0
    %v721 = vadd.f32 %v717, 0.0
    %v722 = vstv %s147
    %v723 = vmul.f32 %v722, %v304
    %v724 = vmul.f32 %v722, %v305
    %v725 = vmul.f32 %v722, %v306
    %v726 = vmul.f32 %v722, %v307
    %v731 = vrot.slane %v723, 1
    %v732 = vrot.slane %v724, 1
    %v733 = vrot.slane %v725, 1
    %v734 = vrot.slane %v726, 1
    %v739 = vadd.f32 %v718, %v731
    %v740 = vadd.f32 %v719, %v732
    %v741 = vadd.f32 %v720, %v733
    %v742 = vadd.f32 %v721, %v734
    %v743 = vstv %s179
    %v744 = vmul.f32 %v743, %v304
    %v745 = vmul.f32 %v743, %v305
    %v746 = vmul.f32 %v743, %v306
    %v747 = vmul.f32 %v743, %v307
    %v752 = vrot.slane %v744, 2
    %v753 = vrot.slane %v745, 2
    %v754 = vrot.slane %v746, 2
    %v755 = vrot.slane %v747, 2
    %v760 = vadd.f32 %v739, %v752
    %v761 = vadd.f32 %v740, %v753
    %v762 = vadd.f32 %v741, %v754
    %v763 = vadd.f32 %v742, %v755
    %v764 = vstv %s211
    %v765 = vmul.f32 %v764, %v304
    %v766 = vmul.f32 %v764, %v305
    %v767 = vmul.f32 %v764, %v306
    %v768 = vmul.f32 %v764, %v307
    %v773 = vrot.slane %v765, 3
    %v774 = vrot.slane %v766, 3
    %v775 = vrot.slane %v767, 3
    %v776 = vrot.slane %v768, 3
    %v781 = vadd.f32 %v760, %v773
    %v782 = vadd.f32 %v761, %v774
    %v783 = vadd.f32 %v762, %v775
    %v784 = vadd.f32 %v763, %v776
    %v785 = vstv %s113
    %v786 = vmul.f32 %v785, %v410
    %v787 = vmul.f32 %v785, %v411
    %v788 = vmul.f32 %v785, %v412
    %v789 = vmul.f32 %v785, %v413
    %v790 = vadd.f32 %v781, %v786
    %v791 = vadd.f32 %v782, %v787
    %v792 = vadd.f32 %v783, %v788
    %v793 = vadd.f32 %v784, %v789
    %v794 = vstv %s145
    %v795 = vmul.f32 %v794, %v410
    %v796 = vmul.f32 %v794, %v411
    %v797 = vmul.f32 %v794, %v412
    %v798 = vmul.f32 %v794, %v413
    %v803 = vrot.slane %v795, 1
    %v804 = vrot.slane %v796, 1
    %v805 = vrot.slane %v797, 1
    %v806 = vrot.slane %v798, 1
    %v811 = vadd.f32 %v790, %v803
    %v812 = vadd.f32 %v791, %v804
    %v813 = vadd.f32 %v792, %v805
    %v814 = vadd.f32 %v793, %v806
    %v815 = vstv %s177
    %v816 = vmul.f32 %v815, %v410
    %v817 = vmul.f32 %v815, %v411
    %v818 = vmul.f32 %v815, %v412
    %v819 = vmul.f32 %v815, %v413
    %v824 = vrot.slane %v816, 2
    %v825 = vrot.slane %v817, 2
    %v826 = vrot.slane %v818, 2
    %v827 = vrot.slane %v819, 2
    %v832 = vadd.f32 %v811, %v824
    %v833 = vadd.f32 %v812, %v825
    %v834 = vadd.f32 %v813, %v826
    %v835 = vadd.f32 %v814, %v827
    %v836 = vstv %s209
    %v837 = vmul.f32 %v836, %v410
    %v838 = vmul.f32 %v836, %v411
    %v839 = vmul.f32 %v836, %v412
    %v840 = vmul.f32 %v836, %v413
    %v845 = vrot.slane %v837, 3
    %v846 = vrot.slane %v838, 3
    %v847 = vrot.slane %v839, 3
    %v848 = vrot.slane %v840, 3
    %v853 = vadd.f32 %v832, %v845
    %v854 = vadd.f32 %v833, %v846
    %v855 = vadd.f32 %v834, %v847
    %v856 = vadd.f32 %v835, %v848
    %v857 = vstv %s107
    %v858 = vmul.f32 %v857, %v516
    %v859 = vmul.f32 %v857, %v517
    %v860 = vmul.f32 %v857, %v518
    %v861 = vmul.f32 %v857, %v519
    %v862 = vadd.f32 %v853, %v858
    %v863 = vadd.f32 %v854, %v859
    %v864 = vadd.f32 %v855, %v860
    %v865 = vadd.f32 %v856, %v861
    %v866 = vstv %s139
    %v867 = vmul.f32 %v866, %v516
    %v868 = vmul.f32 %v866, %v517
    %v869 = vmul.f32 %v866, %v518
    %v870 = vmul.f32 %v866, %v519
    %v875 = vrot.slane %v867, 1
    %v876 = vrot.slane %v868, 1
    %v877 = vrot.slane %v869, 1
    %v878 = vrot.slane %v870, 1
    %v883 = vadd.f32 %v862, %v875
    %v884 = vadd.f32 %v863, %v876
    %v885 = vadd.f32 %v864, %v877
    %v886 = vadd.f32 %v865, %v878
    %v887 = vstv %s171
    %v888 = vmul.f32 %v887, %v516
    %v889 = vmul.f32 %v887, %v517
    %v890 = vmul.f32 %v887, %v518
    %v891 = vmul.f32 %v887, %v519
    %v896 = vrot.slane %v888, 2
    %v897 = vrot.slane %v889, 2
    %v898 = vrot.slane %v890, 2
    %v899 = vrot.slane %v891, 2
    %v904 = vadd.f32 %v883, %v896
    %v905 = vadd.f32 %v884, %v897
    %v906 = vadd.f32 %v885, %v898
    %v907 = vadd.f32 %v886, %v899
    %v908 = vstv %s203
    %v909 = vmul.f32 %v908, %v516
    %v910 = vmul.f32 %v908, %v517
    %v911 = vmul.f32 %v908, %v518
    %v912 = vmul.f32 %v908, %v519
    %v917 = vrot.slane %v909, 3
    %v918 = vrot.slane %v910, 3
    %v919 = vrot.slane %v911, 3
    %v920 = vrot.slane %v912, 3
    %v925 = vadd.f32 %v904, %v917
    %v926 = vadd.f32 %v905, %v918
    %v927 = vadd.f32 %v906, %v919
    %v928 = vadd.f32 %v907, %v920
    %v929 = vstv %s105
    %v930 = vmul.f32 %v929, %v82
    %v931 = vmul.f32 %v929, %v83
    %v934 = vlaneseq
    %v935 = vshrl.u32 %v934, 7
    %v936 = vsub.s32 0, %v935
    %v937 = vrot.slane %v930, %v936
    %v938 = vlaneseq
    %v939 = vshrl.u32 %v938, 7
    %v940 = vsub.s32 4, %v939
    %v941 = vrot.slane %v930, %v940
    %v942 = vlaneseq
    %v943 = vshrl.u32 %v942, 7
    %v944 = vsub.s32 0, %v943
    %v945 = vrot.slane %v931, %v944
    %v946 = vlaneseq
    %v947 = vshrl.u32 %v946, 7
    %v948 = vsub.s32 4, %v947
    %v949 = vrot.slane %v931, %v948
    %v954 = vadd.f32 %v925, %v937
    %v955 = vadd.f32 %v926, %v941
    %v956 = vadd.f32 %v927, %v945
    %v957 = vadd.f32 %v928, %v949
    %v958 = vstv %s137
    %v959 = vmul.f32 %v958, %v82
    %v960 = vmul.f32 %v958, %v83
    %v963 = vlaneseq
    %v964 = vshrl.u32 %v963, 7
    %v965 = vsub.s32 1, %v964
    %v966 = vrot.slane %v959, %v965
    %v967 = vlaneseq
    %v968 = vshrl.u32 %v967, 7
    %v969 = vsub.s32 5, %v968
    %v970 = vrot.slane %v959, %v969
    %v971 = vlaneseq
    %v972 = vshrl.u32 %v971, 7
    %v973 = vsub.s32 1, %v972
    %v974 = vrot.slane %v960, %v973
    %v975 = vlaneseq
    %v976 = vshrl.u32 %v975, 7
    %v977 = vsub.s32 5, %v976
    %v978 = vrot.slane %v960, %v977
    %v983 = vadd.f32 %v954, %v966
    %v984 = vadd.f32 %v955, %v970
    %v985 = vadd.f32 %v956, %v974
    %v986 = vadd.f32 %v957, %v978
    %v987 = vstv %s169
    %v988 = vmul.f32 %v987, %v82
    %v989 = vmul.f32 %v987, %v83
    %v992 = vlaneseq
    %v993 = vshrl.u32 %v992, 7
    %v994 = vsub.s32 2, %v993
    %v995 = vrot.slane %v988, %v994
    %v996 = vlaneseq
    %v997 = vshrl.u32 %v996, 7
    %v998 = vsub.s32 6, %v997
    %v999 = vrot.slane %v988, %v998
    %v1000 = vlaneseq
    %v1001 = vshrl.u32 %v1000, 7
    %v1002 = vsub.s32 2, %v1001
    %v1003 = vrot.slane %v989, %v1002
    %v1004 = vlaneseq
    %v1005 = vshrl.u32 %v1004, 7
    %v1006 = vsub.s32 6, %v1005
    %v1007 = vrot.slane %v989, %v1006
    %v1012 = vadd.f32 %v983, %v995
    %v1013 = vadd.f32 %v984, %v999
    %v1014 = vadd.f32 %v985, %v1003
    %v1015 = vadd.f32 %v986, %v1007
    %v1016 = vstv %s201
    %v1017 = vmul.f32 %v1016, %v82
    %v1018 = vmul.f32 %v1016, %v83
    %v1021 = vlaneseq
    %v1022 = vshrl.u32 %v1021, 7
    %v1023 = vsub.s32 3, %v1022
    %v1024 = vrot.slane %v1017, %v1023
    %v1025 = vlaneseq
    %v1026 = vshrl.u32 %v1025, 7
    %v1027 = vsub.s32 7, %v1026
    %v1028 = vrot.slane %v1017, %v1027
    %v1029 = vlaneseq
    %v1030 = vshrl.u32 %v1029, 7
    %v1031 = vsub.s32 3, %v1030
    %v1032 = vrot.slane %v1018, %v1031
    %v1033 = vlaneseq
    %v1034 = vshrl.u32 %v1033, 7
    %v1035 = vsub.s32 7, %v1034
    %v1036 = vrot.slane %v1018, %v1035
    %v1041 = vadd.f32 %v1012, %v1024
    %v1042 = vadd.f32 %v1013, %v1028
    %v1043 = vadd.f32 %v1014, %v1032
    %v1044 = vadd.f32 %v1015, %v1036
    %v1045 = vstv %s213
    %v1046 = vadd.f32 %v1041, %v1045
    %v1047 = vadd.f32 %v1042, %v1045
    %v1048 = vadd.f32 %v1043, %v1045
    %v1049 = vadd.f32 %v1044, %v1045
    %v1050 = vstv %s98
    %v1051 = vmul.f32 %v1050, %v410
    %v1052 = vmul.f32 %v1050, %v411
    %v1053 = vmul.f32 %v1050, %v412
    %v1054 = vmul.f32 %v1050, %v413
    %v1055 = vadd.f32 %v1051, 0.0
    %v1056 = vadd.f32 %v1052, 0.0
    %v1057 = vadd.f32 %v1053, 0.0
    %v1058 = vadd.f32 %v1054, 0.0
    %v1059 = vstv %s130
    %v1060 = vmul.f32 %v1059, %v410
    %v1061 = vmul.f32 %v1059, %v411
    %v1062 = vmul.f32 %v1059, %v412
    %v1063 = vmul.f32 %v1059, %v413
    %v1068 = vrot.slane %v1060, 1
    %v1069 = vrot.slane %v1061, 1
    %v1070 = vrot.slane %v1062, 1
    %v1071 = vrot.slane %v1063, 1
    %v1076 = vadd.f32 %v1055, %v1068
    %v1077 = vadd.f32 %v1056, %v1069
    %v1078 = vadd.f32 %v1057, %v1070
    %v1079 = vadd.f32 %v1058, %v1071
    %v1080 = vstv %s162
    %v1081 = vmul.f32 %v1080, %v410
    %v1082 = vmul.f32 %v1080, %v411
    %v1083 = vmul.f32 %v1080, %v412
    %v1084 = vmul.f32 %v1080, %v413
    %v1089 = vrot.slane %v1081, 2
    %v1090 = vrot.slane %v1082, 2
    %v1091 = vrot.slane %v1083, 2
    %v1092 = vrot.slane %v1084, 2
    %v1097 = vadd.f32 %v1076, %v1089
    %v1098 = vadd.f32 %v1077, %v1090
    %v1099 = vadd.f32 %v1078, %v1091
    %v1100 = vadd.f32 %v1079, %v1092
    %v1101 = vstv %s194
    %v1102 = vmul.f32 %v1101, %v410
    %v1103 = vmul.f32 %v1101, %v411
    %v1104 = vmul.f32 %v1101, %v412
    %v1105 = vmul.f32 %v1101, %v413
    %v1110 = vrot.slane %v1102, 3
    %v1111 = vrot.slane %v1103, 3
    %v1112 = vrot.slane %v1104, 3
    %v1113 = vrot.slane %v1105, 3
    %v1118 = vadd.f32 %v1097, %v1110
    %v1119 = vadd.f32 %v1098, %v1111
    %v1120 = vadd.f32 %v1099, %v1112
    %v1121 = vadd.f32 %v1100, %v1113
    %1122 = vrot.lane.b32.xlu0 %v82, 15
    %v1123 = vpop.permute.xlu0 %1122
    %1124 = vrot.lane.b32.xlu0 %v273, 15
    %v1125 = vpop.permute.xlu0 %1124
    %1126 = vrot.lane.b32.xlu0 %v83, 15
    %v1127 = vpop.permute.xlu0 %1126
    %1128 = vrot.lane.b32.xlu0 %v274, 15
    %v1129 = vpop.permute.xlu0 %1128
    %vm1130 = vcmask 121856
    %v1131 = vsel %vm1130, %v1123, %v1125
    %v1132 = vsel %vm1130, %v1127, %v1129
    %v1137 = vsel %vm1130, 0.0, %v1123
    %v1138 = vsel %vm1130, 0.0, %v1127
    %s1139 = scalar_lea.vmem [#allocation2], 2
    %v1140 = vld [vmem:[%s1139] ss:$8 sm:$0x3]
    %v1142 = vlaneseq
    %v1143 = vshrl.u32 %v1142, 7
    %v1144 = vsub.s32 0, %v1143
    %v1145 = vrot.slane %v1140, %v1144
    %v1146 = vlaneseq
    %v1147 = vshrl.u32 %v1146, 7
    %v1148 = vsub.s32 1, %v1147
    %v1149 = vrot.slane %v1140, %v1148
    %v1152 = vmul.f32 %v1137, %v1145
    %v1153 = vmul.f32 %v1131, %v1149
    %v1154 = vmul.f32 %v1138, %v1145
    %v1155 = vmul.f32 %v1132, %v1149
    %v1156 = vstv %s96
    %v1157 = vmul.f32 %v1156, %v1152
    %v1158 = vmul.f32 %v1156, %v1153
    %v1159 = vmul.f32 %v1156, %v1154
    %v1160 = vmul.f32 %v1156, %v1155
    %v1161 = vadd.f32 %v1118, %v1157
    %v1162 = vadd.f32 %v1119, %v1158
    %v1163 = vadd.f32 %v1120, %v1159
    %v1164 = vadd.f32 %v1121, %v1160
    %v1165 = vstv %s128
    %v1166 = vmul.f32 %v1165, %v1152
    %v1167 = vmul.f32 %v1165, %v1153
    %v1168 = vmul.f32 %v1165, %v1154
    %v1169 = vmul.f32 %v1165, %v1155
    %v1174 = vrot.slane %v1166, 1
    %v1175 = vrot.slane %v1167, 1
    %v1176 = vrot.slane %v1168, 1
    %v1177 = vrot.slane %v1169, 1
    %v1182 = vadd.f32 %v1161, %v1174
    %v1183 = vadd.f32 %v1162, %v1175
    %v1184 = vadd.f32 %v1163, %v1176
    %v1185 = vadd.f32 %v1164, %v1177
    %v1186 = vstv %s160
    %v1187 = vmul.f32 %v1186, %v1152
    %v1188 = vmul.f32 %v1186, %v1153
    %v1189 = vmul.f32 %v1186, %v1154
    %v1190 = vmul.f32 %v1186, %v1155
    %v1195 = vrot.slane %v1187, 2
    %v1196 = vrot.slane %v1188, 2
    %v1197 = vrot.slane %v1189, 2
    %v1198 = vrot.slane %v1190, 2
    %v1203 = vadd.f32 %v1182, %v1195
    %v1204 = vadd.f32 %v1183, %v1196
    %v1205 = vadd.f32 %v1184, %v1197
    %v1206 = vadd.f32 %v1185, %v1198
    %v1207 = vstv %s192
    %v1208 = vmul.f32 %v1207, %v1152
    %v1209 = vmul.f32 %v1207, %v1153
    %v1210 = vmul.f32 %v1207, %v1154
    %v1211 = vmul.f32 %v1207, %v1155
    %v1216 = vrot.slane %v1208, 3
    %v1217 = vrot.slane %v1209, 3
    %v1218 = vrot.slane %v1210, 3
    %v1219 = vrot.slane %v1211, 3
    %v1224 = vadd.f32 %v1203, %v1216
    %v1225 = vadd.f32 %v1204, %v1217
    %v1226 = vadd.f32 %v1205, %v1218
    %v1227 = vadd.f32 %v1206, %v1219
    %v1228 = vstv %s90
    %v1229 = vmul.f32 %v1228, %v82
    %v1230 = vmul.f32 %v1228, %v83
    %v1233 = vlaneseq
    %v1234 = vshrl.u32 %v1233, 7
    %v1235 = vsub.s32 0, %v1234
    %v1236 = vrot.slane %v1229, %v1235
    %v1237 = vlaneseq
    %v1238 = vshrl.u32 %v1237, 7
    %v1239 = vsub.s32 4, %v1238
    %v1240 = vrot.slane %v1229, %v1239
    %v1241 = vlaneseq
    %v1242 = vshrl.u32 %v1241, 7
    %v1243 = vsub.s32 0, %v1242
    %v1244 = vrot.slane %v1230, %v1243
    %v1245 = vlaneseq
    %v1246 = vshrl.u32 %v1245, 7
    %v1247 = vsub.s32 4, %v1246
    %v1248 = vrot.slane %v1230, %v1247
    %v1253 = vadd.f32 %v1224, %v1236
    %v1254 = vadd.f32 %v1225, %v1240
    %v1255 = vadd.f32 %v1226, %v1244
    %v1256 = vadd.f32 %v1227, %v1248
    %v1257 = vstv %s122
    %v1258 = vmul.f32 %v1257, %v82
    %v1259 = vmul.f32 %v1257, %v83
    %v1262 = vlaneseq
    %v1263 = vshrl.u32 %v1262, 7
    %v1264 = vsub.s32 1, %v1263
    %v1265 = vrot.slane %v1258, %v1264
    %v1266 = vlaneseq
    %v1267 = vshrl.u32 %v1266, 7
    %v1268 = vsub.s32 5, %v1267
    %v1269 = vrot.slane %v1258, %v1268
    %v1270 = vlaneseq
    %v1271 = vshrl.u32 %v1270, 7
    %v1272 = vsub.s32 1, %v1271
    %v1273 = vrot.slane %v1259, %v1272
    %v1274 = vlaneseq
    %v1275 = vshrl.u32 %v1274, 7
    %v1276 = vsub.s32 5, %v1275
    %v1277 = vrot.slane %v1259, %v1276
    %v1282 = vadd.f32 %v1253, %v1265
    %v1283 = vadd.f32 %v1254, %v1269
    %v1284 = vadd.f32 %v1255, %v1273
    %v1285 = vadd.f32 %v1256, %v1277
    %v1286 = vstv %s154
    %v1287 = vmul.f32 %v1286, %v82
    %v1288 = vmul.f32 %v1286, %v83
    %v1291 = vlaneseq
    %v1292 = vshrl.u32 %v1291, 7
    %v1293 = vsub.s32 2, %v1292
    %v1294 = vrot.slane %v1287, %v1293
    %v1295 = vlaneseq
    %v1296 = vshrl.u32 %v1295, 7
    %v1297 = vsub.s32 6, %v1296
    %v1298 = vrot.slane %v1287, %v1297
    %v1299 = vlaneseq
    %v1300 = vshrl.u32 %v1299, 7
    %v1301 = vsub.s32 2, %v1300
    %v1302 = vrot.slane %v1288, %v1301
    %v1303 = vlaneseq
    %v1304 = vshrl.u32 %v1303, 7
    %v1305 = vsub.s32 6, %v1304
    %v1306 = vrot.slane %v1288, %v1305
    %v1311 = vadd.f32 %v1282, %v1294
    %v1312 = vadd.f32 %v1283, %v1298
    %v1313 = vadd.f32 %v1284, %v1302
    %v1314 = vadd.f32 %v1285, %v1306
    %v1315 = vstv %s186
    %v1316 = vmul.f32 %v1315, %v82
    %v1317 = vmul.f32 %v1315, %v83
    %v1320 = vlaneseq
    %v1321 = vshrl.u32 %v1320, 7
    %v1322 = vsub.s32 3, %v1321
    %v1323 = vrot.slane %v1316, %v1322
    %v1324 = vlaneseq
    %v1325 = vshrl.u32 %v1324, 7
    %v1326 = vsub.s32 7, %v1325
    %v1327 = vrot.slane %v1316, %v1326
    %v1328 = vlaneseq
    %v1329 = vshrl.u32 %v1328, 7
    %v1330 = vsub.s32 3, %v1329
    %v1331 = vrot.slane %v1317, %v1330
    %v1332 = vlaneseq
    %v1333 = vshrl.u32 %v1332, 7
    %v1334 = vsub.s32 7, %v1333
    %v1335 = vrot.slane %v1317, %v1334
    %v1340 = vadd.f32 %v1311, %v1323
    %v1341 = vadd.f32 %v1312, %v1327
    %v1342 = vadd.f32 %v1313, %v1331
    %v1343 = vadd.f32 %v1314, %v1335
    %1344 = vrot.lane.b32.xlu0 %v82, 127
    %v1345 = vpop.permute.xlu0 %1344
    %1346 = vrot.lane.b32.xlu0 %v273, 127
    %v1347 = vpop.permute.xlu0 %1346
    %1348 = vrot.lane.b32.xlu0 %v83, 127
    %v1349 = vpop.permute.xlu0 %1348
    %1350 = vrot.lane.b32.xlu0 %v274, 127
    %v1351 = vpop.permute.xlu0 %1350
    %vm1352 = vcmask 1039360
    %v1353 = vsel %vm1352, %v1345, %v1347
    %v1354 = vsel %vm1352, %v1349, %v1351
    %v1359 = vsel %vm1352, %v1347, 0.0
    %v1360 = vsel %vm1352, %v1351, 0.0
    %s1361 = scalar_lea.vmem [#allocation2], 5
    %v1362 = vld [vmem:[%s1361] ss:$8 sm:$0x3]
    %v1364 = vlaneseq
    %v1365 = vshrl.u32 %v1364, 7
    %v1366 = vsub.s32 0, %v1365
    %v1367 = vrot.slane %v1362, %v1366
    %v1368 = vlaneseq
    %v1369 = vshrl.u32 %v1368, 7
    %v1370 = vsub.s32 1, %v1369
    %v1371 = vrot.slane %v1362, %v1370
    %v1374 = vmul.f32 %v1353, %v1367
    %v1375 = vmul.f32 %v1359, %v1371
    %v1376 = vmul.f32 %v1354, %v1367
    %v1377 = vmul.f32 %v1360, %v1371
    %v1378 = vstv %s88
    %v1379 = vmul.f32 %v1378, %v1374
    %v1380 = vmul.f32 %v1378, %v1375
    %v1381 = vmul.f32 %v1378, %v1376
    %v1382 = vmul.f32 %v1378, %v1377
    %v1383 = vadd.f32 %v1340, %v1379
    %v1384 = vadd.f32 %v1341, %v1380
    %v1385 = vadd.f32 %v1342, %v1381
    %v1386 = vadd.f32 %v1343, %v1382
    %v1387 = vstv %s120
    %v1388 = vmul.f32 %v1387, %v1374
    %v1389 = vmul.f32 %v1387, %v1375
    %v1390 = vmul.f32 %v1387, %v1376
    %v1391 = vmul.f32 %v1387, %v1377
    %v1396 = vrot.slane %v1388, 1
    %v1397 = vrot.slane %v1389, 1
    %v1398 = vrot.slane %v1390, 1
    %v1399 = vrot.slane %v1391, 1
    %v1404 = vadd.f32 %v1383, %v1396
    %v1405 = vadd.f32 %v1384, %v1397
    %v1406 = vadd.f32 %v1385, %v1398
    %v1407 = vadd.f32 %v1386, %v1399
    %v1408 = vstv %s152
    %v1409 = vmul.f32 %v1408, %v1374
    %v1410 = vmul.f32 %v1408, %v1375
    %v1411 = vmul.f32 %v1408, %v1376
    %v1412 = vmul.f32 %v1408, %v1377
    %v1417 = vrot.slane %v1409, 2
    %v1418 = vrot.slane %v1410, 2
    %v1419 = vrot.slane %v1411, 2
    %v1420 = vrot.slane %v1412, 2
    %v1425 = vadd.f32 %v1404, %v1417
    %v1426 = vadd.f32 %v1405, %v1418
    %v1427 = vadd.f32 %v1406, %v1419
    %v1428 = vadd.f32 %v1407, %v1420
    %v1429 = vstv %s184
    %v1430 = vmul.f32 %v1429, %v1374
    %v1431 = vmul.f32 %v1429, %v1375
    %v1432 = vmul.f32 %v1429, %v1376
    %v1433 = vmul.f32 %v1429, %v1377
    %v1438 = vrot.slane %v1430, 3
    %v1439 = vrot.slane %v1431, 3
    %v1440 = vrot.slane %v1432, 3
    %v1441 = vrot.slane %v1433, 3
    %v1446 = vadd.f32 %v1425, %v1438
    %v1447 = vadd.f32 %v1426, %v1439
    %v1448 = vadd.f32 %v1427, %v1440
    %v1449 = vadd.f32 %v1428, %v1441
    %v1450 = vadd.f32 %v1446, %v708
    %v1451 = vadd.f32 %v1447, %v708
    %v1452 = vadd.f32 %v1448, %v708
    %v1453 = vadd.f32 %v1449, %v708
    %v1454 = vstv %s114
    %v1455 = vmul.f32 %v1454, %v410
    %v1456 = vmul.f32 %v1454, %v411
    %v1457 = vmul.f32 %v1454, %v412
    %v1458 = vmul.f32 %v1454, %v413
    %v1459 = vadd.f32 %v1455, 0.0
    %v1460 = vadd.f32 %v1456, 0.0
    %v1461 = vadd.f32 %v1457, 0.0
    %v1462 = vadd.f32 %v1458, 0.0
    %v1463 = vstv %s146
    %v1464 = vmul.f32 %v1463, %v410
    %v1465 = vmul.f32 %v1463, %v411
    %v1466 = vmul.f32 %v1463, %v412
    %v1467 = vmul.f32 %v1463, %v413
    %v1472 = vrot.slane %v1464, 1
    %v1473 = vrot.slane %v1465, 1
    %v1474 = vrot.slane %v1466, 1
    %v1475 = vrot.slane %v1467, 1
    %v1480 = vadd.f32 %v1459, %v1472
    %v1481 = vadd.f32 %v1460, %v1473
    %v1482 = vadd.f32 %v1461, %v1474
    %v1483 = vadd.f32 %v1462, %v1475
    %v1484 = vstv %s178
    %v1485 = vmul.f32 %v1484, %v410
    %v1486 = vmul.f32 %v1484, %v411
    %v1487 = vmul.f32 %v1484, %v412
    %v1488 = vmul.f32 %v1484, %v413
    %v1493 = vrot.slane %v1485, 2
    %v1494 = vrot.slane %v1486, 2
    %v1495 = vrot.slane %v1487, 2
    %v1496 = vrot.slane %v1488, 2
    %v1501 = vadd.f32 %v1480, %v1493
    %v1502 = vadd.f32 %v1481, %v1494
    %v1503 = vadd.f32 %v1482, %v1495
    %v1504 = vadd.f32 %v1483, %v1496
    %v1505 = vstv %s210
    %v1506 = vmul.f32 %v1505, %v410
    %v1507 = vmul.f32 %v1505, %v411
    %v1508 = vmul.f32 %v1505, %v412
    %v1509 = vmul.f32 %v1505, %v413
    %v1514 = vrot.slane %v1506, 3
    %v1515 = vrot.slane %v1507, 3
    %v1516 = vrot.slane %v1508, 3
    %v1517 = vrot.slane %v1509, 3
    %v1522 = vadd.f32 %v1501, %v1514
    %v1523 = vadd.f32 %v1502, %v1515
    %v1524 = vadd.f32 %v1503, %v1516
    %v1525 = vadd.f32 %v1504, %v1517
    %v1526 = vstv %s112
    %v1527 = vmul.f32 %v1526, %v1152
    %v1528 = vmul.f32 %v1526, %v1153
    %v1529 = vmul.f32 %v1526, %v1154
    %v1530 = vmul.f32 %v1526, %v1155
    %v1531 = vadd.f32 %v1522, %v1527
    %v1532 = vadd.f32 %v1523, %v1528
    %v1533 = vadd.f32 %v1524, %v1529
    %v1534 = vadd.f32 %v1525, %v1530
    %v1535 = vstv %s144
    %v1536 = vmul.f32 %v1535, %v1152
    %v1537 = vmul.f32 %v1535, %v1153
    %v1538 = vmul.f32 %v1535, %v1154
    %v1539 = vmul.f32 %v1535, %v1155
    %v1544 = vrot.slane %v1536, 1
    %v1545 = vrot.slane %v1537, 1
    %v1546 = vrot.slane %v1538, 1
    %v1547 = vrot.slane %v1539, 1
    %v1552 = vadd.f32 %v1531, %v1544
    %v1553 = vadd.f32 %v1532, %v1545
    %v1554 = vadd.f32 %v1533, %v1546
    %v1555 = vadd.f32 %v1534, %v1547
    %v1556 = vstv %s176
    %v1557 = vmul.f32 %v1556, %v1152
    %v1558 = vmul.f32 %v1556, %v1153
    %v1559 = vmul.f32 %v1556, %v1154
    %v1560 = vmul.f32 %v1556, %v1155
    %v1565 = vrot.slane %v1557, 2
    %v1566 = vrot.slane %v1558, 2
    %v1567 = vrot.slane %v1559, 2
    %v1568 = vrot.slane %v1560, 2
    %v1573 = vadd.f32 %v1552, %v1565
    %v1574 = vadd.f32 %v1553, %v1566
    %v1575 = vadd.f32 %v1554, %v1567
    %v1576 = vadd.f32 %v1555, %v1568
    %v1577 = vstv %s208
    %v1578 = vmul.f32 %v1577, %v1152
    %v1579 = vmul.f32 %v1577, %v1153
    %v1580 = vmul.f32 %v1577, %v1154
    %v1581 = vmul.f32 %v1577, %v1155
    %v1586 = vrot.slane %v1578, 3
    %v1587 = vrot.slane %v1579, 3
    %v1588 = vrot.slane %v1580, 3
    %v1589 = vrot.slane %v1581, 3
    %v1594 = vadd.f32 %v1573, %v1586
    %v1595 = vadd.f32 %v1574, %v1587
    %v1596 = vadd.f32 %v1575, %v1588
    %v1597 = vadd.f32 %v1576, %v1589
    %v1598 = vstv %s106
    %v1599 = vmul.f32 %v1598, %v82
    %v1600 = vmul.f32 %v1598, %v83
    %v1603 = vlaneseq
    %v1604 = vshrl.u32 %v1603, 7
    %v1605 = vsub.s32 0, %v1604
    %v1606 = vrot.slane %v1599, %v1605
    %v1607 = vlaneseq
    %v1608 = vshrl.u32 %v1607, 7
    %v1609 = vsub.s32 4, %v1608
    %v1610 = vrot.slane %v1599, %v1609
    %v1611 = vlaneseq
    %v1612 = vshrl.u32 %v1611, 7
    %v1613 = vsub.s32 0, %v1612
    %v1614 = vrot.slane %v1600, %v1613
    %v1615 = vlaneseq
    %v1616 = vshrl.u32 %v1615, 7
    %v1617 = vsub.s32 4, %v1616
    %v1618 = vrot.slane %v1600, %v1617
    %v1623 = vadd.f32 %v1594, %v1606
    %v1624 = vadd.f32 %v1595, %v1610
    %v1625 = vadd.f32 %v1596, %v1614
    %v1626 = vadd.f32 %v1597, %v1618
    %v1627 = vstv %s138
    %v1628 = vmul.f32 %v1627, %v82
    %v1629 = vmul.f32 %v1627, %v83
    %v1632 = vlaneseq
    %v1633 = vshrl.u32 %v1632, 7
    %v1634 = vsub.s32 1, %v1633
    %v1635 = vrot.slane %v1628, %v1634
    %v1636 = vlaneseq
    %v1637 = vshrl.u32 %v1636, 7
    %v1638 = vsub.s32 5, %v1637
    %v1639 = vrot.slane %v1628, %v1638
    %v1640 = vlaneseq
    %v1641 = vshrl.u32 %v1640, 7
    %v1642 = vsub.s32 1, %v1641
    %v1643 = vrot.slane %v1629, %v1642
    %v1644 = vlaneseq
    %v1645 = vshrl.u32 %v1644, 7
    %v1646 = vsub.s32 5, %v1645
    %v1647 = vrot.slane %v1629, %v1646
    %v1652 = vadd.f32 %v1623, %v1635
    %v1653 = vadd.f32 %v1624, %v1639
    %v1654 = vadd.f32 %v1625, %v1643
    %v1655 = vadd.f32 %v1626, %v1647
    %v1656 = vstv %s170
    %v1657 = vmul.f32 %v1656, %v82
    %v1658 = vmul.f32 %v1656, %v83
    %v1661 = vlaneseq
    %v1662 = vshrl.u32 %v1661, 7
    %v1663 = vsub.s32 2, %v1662
    %v1664 = vrot.slane %v1657, %v1663
    %v1665 = vlaneseq
    %v1666 = vshrl.u32 %v1665, 7
    %v1667 = vsub.s32 6, %v1666
    %v1668 = vrot.slane %v1657, %v1667
    %v1669 = vlaneseq
    %v1670 = vshrl.u32 %v1669, 7
    %v1671 = vsub.s32 2, %v1670
    %v1672 = vrot.slane %v1658, %v1671
    %v1673 = vlaneseq
    %v1674 = vshrl.u32 %v1673, 7
    %v1675 = vsub.s32 6, %v1674
    %v1676 = vrot.slane %v1658, %v1675
    %v1681 = vadd.f32 %v1652, %v1664
    %v1682 = vadd.f32 %v1653, %v1668
    %v1683 = vadd.f32 %v1654, %v1672
    %v1684 = vadd.f32 %v1655, %v1676
    %v1685 = vstv %s202
    %v1686 = vmul.f32 %v1685, %v82
    %v1687 = vmul.f32 %v1685, %v83
    %v1690 = vlaneseq
    %v1691 = vshrl.u32 %v1690, 7
    %v1692 = vsub.s32 3, %v1691
    %v1693 = vrot.slane %v1686, %v1692
    %v1694 = vlaneseq
    %v1695 = vshrl.u32 %v1694, 7
    %v1696 = vsub.s32 7, %v1695
    %v1697 = vrot.slane %v1686, %v1696
    %v1698 = vlaneseq
    %v1699 = vshrl.u32 %v1698, 7
    %v1700 = vsub.s32 3, %v1699
    %v1701 = vrot.slane %v1687, %v1700
    %v1702 = vlaneseq
    %v1703 = vshrl.u32 %v1702, 7
    %v1704 = vsub.s32 7, %v1703
    %v1705 = vrot.slane %v1687, %v1704
    %v1710 = vadd.f32 %v1681, %v1693
    %v1711 = vadd.f32 %v1682, %v1697
    %v1712 = vadd.f32 %v1683, %v1701
    %v1713 = vadd.f32 %v1684, %v1705
    %v1714 = vstv %s104
    %v1715 = vmul.f32 %v1714, %v1374
    %v1716 = vmul.f32 %v1714, %v1375
    %v1717 = vmul.f32 %v1714, %v1376
    %v1718 = vmul.f32 %v1714, %v1377
    %v1719 = vadd.f32 %v1710, %v1715
    %v1720 = vadd.f32 %v1711, %v1716
    %v1721 = vadd.f32 %v1712, %v1717
    %v1722 = vadd.f32 %v1713, %v1718
    %v1723 = vstv %s136
    %v1724 = vmul.f32 %v1723, %v1374
    %v1725 = vmul.f32 %v1723, %v1375
    %v1726 = vmul.f32 %v1723, %v1376
    %v1727 = vmul.f32 %v1723, %v1377
    %v1732 = vrot.slane %v1724, 1
    %v1733 = vrot.slane %v1725, 1
    %v1734 = vrot.slane %v1726, 1
    %v1735 = vrot.slane %v1727, 1
    %v1740 = vadd.f32 %v1719, %v1732
    %v1741 = vadd.f32 %v1720, %v1733
    %v1742 = vadd.f32 %v1721, %v1734
    %v1743 = vadd.f32 %v1722, %v1735
    %v1744 = vstv %s168
    %v1745 = vmul.f32 %v1744, %v1374
    %v1746 = vmul.f32 %v1744, %v1375
    %v1747 = vmul.f32 %v1744, %v1376
    %v1748 = vmul.f32 %v1744, %v1377
    %v1753 = vrot.slane %v1745, 2
    %v1754 = vrot.slane %v1746, 2
    %v1755 = vrot.slane %v1747, 2
    %v1756 = vrot.slane %v1748, 2
    %v1761 = vadd.f32 %v1740, %v1753
    %v1762 = vadd.f32 %v1741, %v1754
    %v1763 = vadd.f32 %v1742, %v1755
    %v1764 = vadd.f32 %v1743, %v1756
    %v1765 = vstv %s200
    %v1766 = vmul.f32 %v1765, %v1374
    %v1767 = vmul.f32 %v1765, %v1375
    %v1768 = vmul.f32 %v1765, %v1376
    %v1769 = vmul.f32 %v1765, %v1377
    %v1774 = vrot.slane %v1766, 3
    %v1775 = vrot.slane %v1767, 3
    %v1776 = vrot.slane %v1768, 3
    %v1777 = vrot.slane %v1769, 3
    %v1782 = vadd.f32 %v1761, %v1774
    %v1783 = vadd.f32 %v1762, %v1775
    %v1784 = vadd.f32 %v1763, %v1776
    %v1785 = vadd.f32 %v1764, %v1777
    %v1786 = vadd.f32 %v1782, %v1045
    %v1787 = vadd.f32 %v1783, %v1045
    %v1788 = vadd.f32 %v1784, %v1045
    %v1789 = vadd.f32 %v1785, %v1045
    %v1790 = vstv %s95
    %v1791 = vmul.f32 %v1790, %v516
    %v1792 = vmul.f32 %v1790, %v517
    %v1793 = vmul.f32 %v1790, %v518
    %v1794 = vmul.f32 %v1790, %v519
    %v1795 = vadd.f32 %v1791, 0.0
    %v1796 = vadd.f32 %v1792, 0.0
    %v1797 = vadd.f32 %v1793, 0.0
    %v1798 = vadd.f32 %v1794, 0.0
    %v1799 = vstv %s127
    %v1800 = vmul.f32 %v1799, %v516
    %v1801 = vmul.f32 %v1799, %v517
    %v1802 = vmul.f32 %v1799, %v518
    %v1803 = vmul.f32 %v1799, %v519
    %v1808 = vrot.slane %v1800, 1
    %v1809 = vrot.slane %v1801, 1
    %v1810 = vrot.slane %v1802, 1
    %v1811 = vrot.slane %v1803, 1
    %v1816 = vadd.f32 %v1795, %v1808
    %v1817 = vadd.f32 %v1796, %v1809
    %v1818 = vadd.f32 %v1797, %v1810
    %v1819 = vadd.f32 %v1798, %v1811
    %v1820 = vstv %s159
    %v1821 = vmul.f32 %v1820, %v516
    %v1822 = vmul.f32 %v1820, %v517
    %v1823 = vmul.f32 %v1820, %v518
    %v1824 = vmul.f32 %v1820, %v519
    %v1829 = vrot.slane %v1821, 2
    %v1830 = vrot.slane %v1822, 2
    %v1831 = vrot.slane %v1823, 2
    %v1832 = vrot.slane %v1824, 2
    %v1837 = vadd.f32 %v1816, %v1829
    %v1838 = vadd.f32 %v1817, %v1830
    %v1839 = vadd.f32 %v1818, %v1831
    %v1840 = vadd.f32 %v1819, %v1832
    %v1841 = vstv %s191
    %v1842 = vmul.f32 %v1841, %v516
    %v1843 = vmul.f32 %v1841, %v517
    %v1844 = vmul.f32 %v1841, %v518
    %v1845 = vmul.f32 %v1841, %v519
    %v1850 = vrot.slane %v1842, 3
    %v1851 = vrot.slane %v1843, 3
    %v1852 = vrot.slane %v1844, 3
    %v1853 = vrot.slane %v1845, 3
    %v1858 = vadd.f32 %v1837, %v1850
    %v1859 = vadd.f32 %v1838, %v1851
    %v1860 = vadd.f32 %v1839, %v1852
    %v1861 = vadd.f32 %v1840, %v1853
    %v1862 = vstv %s93
    %v1863 = vmul.f32 %v1862, %v82
    %v1864 = vmul.f32 %v1862, %v83
    %v1867 = vlaneseq
    %v1868 = vshrl.u32 %v1867, 7
    %v1869 = vsub.s32 0, %v1868
    %v1870 = vrot.slane %v1863, %v1869
    %v1871 = vlaneseq
    %v1872 = vshrl.u32 %v1871, 7
    %v1873 = vsub.s32 4, %v1872
    %v1874 = vrot.slane %v1863, %v1873
    %v1875 = vlaneseq
    %v1876 = vshrl.u32 %v1875, 7
    %v1877 = vsub.s32 0, %v1876
    %v1878 = vrot.slane %v1864, %v1877
    %v1879 = vlaneseq
    %v1880 = vshrl.u32 %v1879, 7
    %v1881 = vsub.s32 4, %v1880
    %v1882 = vrot.slane %v1864, %v1881
    %v1887 = vadd.f32 %v1858, %v1870
    %v1888 = vadd.f32 %v1859, %v1874
    %v1889 = vadd.f32 %v1860, %v1878
    %v1890 = vadd.f32 %v1861, %v1882
    %v1891 = vstv %s125
    %v1892 = vmul.f32 %v1891, %v82
    %v1893 = vmul.f32 %v1891, %v83
    %v1896 = vlaneseq
    %v1897 = vshrl.u32 %v1896, 7
    %v1898 = vsub.s32 1, %v1897
    %v1899 = vrot.slane %v1892, %v1898
    %v1900 = vlaneseq
    %v1901 = vshrl.u32 %v1900, 7
    %v1902 = vsub.s32 5, %v1901
    %v1903 = vrot.slane %v1892, %v1902
    %v1904 = vlaneseq
    %v1905 = vshrl.u32 %v1904, 7
    %v1906 = vsub.s32 1, %v1905
    %v1907 = vrot.slane %v1893, %v1906
    %v1908 = vlaneseq
    %v1909 = vshrl.u32 %v1908, 7
    %v1910 = vsub.s32 5, %v1909
    %v1911 = vrot.slane %v1893, %v1910
    %v1916 = vadd.f32 %v1887, %v1899
    %v1917 = vadd.f32 %v1888, %v1903
    %v1918 = vadd.f32 %v1889, %v1907
    %v1919 = vadd.f32 %v1890, %v1911
    %v1920 = vstv %s157
    %v1921 = vmul.f32 %v1920, %v82
    %v1922 = vmul.f32 %v1920, %v83
    %v1925 = vlaneseq
    %v1926 = vshrl.u32 %v1925, 7
    %v1927 = vsub.s32 2, %v1926
    %v1928 = vrot.slane %v1921, %v1927
    %v1929 = vlaneseq
    %v1930 = vshrl.u32 %v1929, 7
    %v1931 = vsub.s32 6, %v1930
    %v1932 = vrot.slane %v1921, %v1931
    %v1933 = vlaneseq
    %v1934 = vshrl.u32 %v1933, 7
    %v1935 = vsub.s32 2, %v1934
    %v1936 = vrot.slane %v1922, %v1935
    %v1937 = vlaneseq
    %v1938 = vshrl.u32 %v1937, 7
    %v1939 = vsub.s32 6, %v1938
    %v1940 = vrot.slane %v1922, %v1939
    %v1945 = vadd.f32 %v1916, %v1928
    %v1946 = vadd.f32 %v1917, %v1932
    %v1947 = vadd.f32 %v1918, %v1936
    %v1948 = vadd.f32 %v1919, %v1940
    %v1949 = vstv %s189
    %v1950 = vmul.f32 %v1949, %v82
    %v1951 = vmul.f32 %v1949, %v83
    %v1954 = vlaneseq
    %v1955 = vshrl.u32 %v1954, 7
    %v1956 = vsub.s32 3, %v1955
    %v1957 = vrot.slane %v1950, %v1956
    %v1958 = vlaneseq
    %v1959 = vshrl.u32 %v1958, 7
    %v1960 = vsub.s32 7, %v1959
    %v1961 = vrot.slane %v1950, %v1960
    %v1962 = vlaneseq
    %v1963 = vshrl.u32 %v1962, 7
    %v1964 = vsub.s32 3, %v1963
    %v1965 = vrot.slane %v1951, %v1964
    %v1966 = vlaneseq
    %v1967 = vshrl.u32 %v1966, 7
    %v1968 = vsub.s32 7, %v1967
    %v1969 = vrot.slane %v1951, %v1968
    %v1974 = vadd.f32 %v1945, %v1957
    %v1975 = vadd.f32 %v1946, %v1961
    %v1976 = vadd.f32 %v1947, %v1965
    %v1977 = vadd.f32 %v1948, %v1969
    %1978 = vrot.lane.b32.xlu0 %v82, 113
    %v1979 = vpop.permute.xlu0 %1978
    %1980 = vrot.lane.b32.xlu0 %v273, 113
    %v1981 = vpop.permute.xlu0 %1980
    %1982 = vrot.lane.b32.xlu0 %v83, 113
    %v1983 = vpop.permute.xlu0 %1982
    %1984 = vrot.lane.b32.xlu0 %v274, 113
    %v1985 = vpop.permute.xlu0 %1984
    %vm1986 = vcmask 924672
    %v1987 = vsel %vm1986, %v1979, %v1981
    %v1988 = vsel %vm1986, %v1983, %v1985
    %v1993 = vsel %vm1986, %v1981, 0.0
    %v1994 = vsel %vm1986, %v1985, 0.0
    %s1995 = scalar_lea.vmem [#allocation2], 6
    %v1996 = vld [vmem:[%s1995] ss:$8 sm:$0x3]
    %v1998 = vlaneseq
    %v1999 = vshrl.u32 %v1998, 7
    %v2000 = vsub.s32 0, %v1999
    %v2001 = vrot.slane %v1996, %v2000
    %v2002 = vlaneseq
    %v2003 = vshrl.u32 %v2002, 7
    %v2004 = vsub.s32 1, %v2003
    %v2005 = vrot.slane %v1996, %v2004
    %v2008 = vmul.f32 %v1987, %v2001
    %v2009 = vmul.f32 %v1993, %v2005
    %v2010 = vmul.f32 %v1988, %v2001
    %v2011 = vmul.f32 %v1994, %v2005
    %v2012 = vstv %s87
    %v2013 = vmul.f32 %v2012, %v2008
    %v2014 = vmul.f32 %v2012, %v2009
    %v2015 = vmul.f32 %v2012, %v2010
    %v2016 = vmul.f32 %v2012, %v2011
    %v2017 = vadd.f32 %v1974, %v2013
    %v2018 = vadd.f32 %v1975, %v2014
    %v2019 = vadd.f32 %v1976, %v2015
    %v2020 = vadd.f32 %v1977, %v2016
    %v2021 = vstv %s119
    %v2022 = vmul.f32 %v2021, %v2008
    %v2023 = vmul.f32 %v2021, %v2009
    %v2024 = vmul.f32 %v2021, %v2010
    %v2025 = vmul.f32 %v2021, %v2011
    %v2030 = vrot.slane %v2022, 1
    %v2031 = vrot.slane %v2023, 1
    %v2032 = vrot.slane %v2024, 1
    %v2033 = vrot.slane %v2025, 1
    %v2038 = vadd.f32 %v2017, %v2030
    %v2039 = vadd.f32 %v2018, %v2031
    %v2040 = vadd.f32 %v2019, %v2032
    %v2041 = vadd.f32 %v2020, %v2033
    %v2042 = vstv %s151
    %v2043 = vmul.f32 %v2042, %v2008
    %v2044 = vmul.f32 %v2042, %v2009
    %v2045 = vmul.f32 %v2042, %v2010
    %v2046 = vmul.f32 %v2042, %v2011
    %v2051 = vrot.slane %v2043, 2
    %v2052 = vrot.slane %v2044, 2
    %v2053 = vrot.slane %v2045, 2
    %v2054 = vrot.slane %v2046, 2
    %v2059 = vadd.f32 %v2038, %v2051
    %v2060 = vadd.f32 %v2039, %v2052
    %v2061 = vadd.f32 %v2040, %v2053
    %v2062 = vadd.f32 %v2041, %v2054
    %v2063 = vstv %s183
    %v2064 = vmul.f32 %v2063, %v2008
    %v2065 = vmul.f32 %v2063, %v2009
    %v2066 = vmul.f32 %v2063, %v2010
    %v2067 = vmul.f32 %v2063, %v2011
    %v2072 = vrot.slane %v2064, 3
    %v2073 = vrot.slane %v2065, 3
    %v2074 = vrot.slane %v2066, 3
    %v2075 = vrot.slane %v2067, 3
    %v2080 = vadd.f32 %v2059, %v2072
    %v2081 = vadd.f32 %v2060, %v2073
    %v2082 = vadd.f32 %v2061, %v2074
    %v2083 = vadd.f32 %v2062, %v2075
    %2084 = vrot.lane.b32.xlu0 %v82, 112
    %v2085 = vpop.permute.xlu0 %2084
    %2086 = vrot.lane.b32.xlu0 %v273, 112
    %v2087 = vpop.permute.xlu0 %2086
    %2088 = vrot.lane.b32.xlu0 %v83, 112
    %v2089 = vpop.permute.xlu0 %2088
    %2090 = vrot.lane.b32.xlu0 %v274, 112
    %v2091 = vpop.permute.xlu0 %2090
    %vm2092 = vcmask 916480
    %v2093 = vsel %vm2092, %v2085, %v2087
    %v2094 = vsel %vm2092, %v2089, %v2091
    %v2099 = vsel %vm2092, %v2087, 0.0
    %v2100 = vsel %vm2092, %v2091, 0.0
    %s2101 = scalar_lea.vmem [#allocation2], 7
    %v2102 = vld [vmem:[%s2101] ss:$8 sm:$0x3]
    %v2104 = vlaneseq
    %v2105 = vshrl.u32 %v2104, 7
    %v2106 = vsub.s32 0, %v2105
    %v2107 = vrot.slane %v2102, %v2106
    %v2108 = vlaneseq
    %v2109 = vshrl.u32 %v2108, 7
    %v2110 = vsub.s32 1, %v2109
    %v2111 = vrot.slane %v2102, %v2110
    %v2114 = vmul.f32 %v2093, %v2107
    %v2115 = vmul.f32 %v2099, %v2111
    %v2116 = vmul.f32 %v2094, %v2107
    %v2117 = vmul.f32 %v2100, %v2111
    %v2118 = vstv %s85
    %v2119 = vmul.f32 %v2118, %v2114
    %v2120 = vmul.f32 %v2118, %v2115
    %v2121 = vmul.f32 %v2118, %v2116
    %v2122 = vmul.f32 %v2118, %v2117
    %v2123 = vadd.f32 %v2080, %v2119
    %v2124 = vadd.f32 %v2081, %v2120
    %v2125 = vadd.f32 %v2082, %v2121
    %v2126 = vadd.f32 %v2083, %v2122
    %v2127 = vstv %s117
    %v2128 = vmul.f32 %v2127, %v2114
    %v2129 = vmul.f32 %v2127, %v2115
    %v2130 = vmul.f32 %v2127, %v2116
    %v2131 = vmul.f32 %v2127, %v2117
    %v2136 = vrot.slane %v2128, 1
    %v2137 = vrot.slane %v2129, 1
    %v2138 = vrot.slane %v2130, 1
    %v2139 = vrot.slane %v2131, 1
    %v2144 = vadd.f32 %v2123, %v2136
    %v2145 = vadd.f32 %v2124, %v2137
    %v2146 = vadd.f32 %v2125, %v2138
    %v2147 = vadd.f32 %v2126, %v2139
    %v2148 = vstv %s149
    %v2149 = vmul.f32 %v2148, %v2114
    %v2150 = vmul.f32 %v2148, %v2115
    %v2151 = vmul.f32 %v2148, %v2116
    %v2152 = vmul.f32 %v2148, %v2117
    %v2157 = vrot.slane %v2149, 2
    %v2158 = vrot.slane %v2150, 2
    %v2159 = vrot.slane %v2151, 2
    %v2160 = vrot.slane %v2152, 2
    %v2165 = vadd.f32 %v2144, %v2157
    %v2166 = vadd.f32 %v2145, %v2158
    %v2167 = vadd.f32 %v2146, %v2159
    %v2168 = vadd.f32 %v2147, %v2160
    %v2169 = vstv %s181
    %v2170 = vmul.f32 %v2169, %v2114
    %v2171 = vmul.f32 %v2169, %v2115
    %v2172 = vmul.f32 %v2169, %v2116
    %v2173 = vmul.f32 %v2169, %v2117
    %v2178 = vrot.slane %v2170, 3
    %v2179 = vrot.slane %v2171, 3
    %v2180 = vrot.slane %v2172, 3
    %v2181 = vrot.slane %v2173, 3
    %v2186 = vadd.f32 %v2165, %v2178
    %v2187 = vadd.f32 %v2166, %v2179
    %v2188 = vadd.f32 %v2167, %v2180
    %v2189 = vadd.f32 %v2168, %v2181
    %v2190 = vadd.f32 %v2186, %v708
    %v2191 = vadd.f32 %v2187, %v708
    %v2192 = vadd.f32 %v2188, %v708
    %v2193 = vadd.f32 %v2189, %v708
    %v2194 = vstv %s111
    %v2195 = vmul.f32 %v2194, %v516
    %v2196 = vmul.f32 %v2194, %v517
    %v2197 = vmul.f32 %v2194, %v518
    %v2198 = vmul.f32 %v2194, %v519
    %v2199 = vadd.f32 %v2195, 0.0
    %v2200 = vadd.f32 %v2196, 0.0
    %v2201 = vadd.f32 %v2197, 0.0
    %v2202 = vadd.f32 %v2198, 0.0
    %v2203 = vstv %s143
    %v2204 = vmul.f32 %v2203, %v516
    %v2205 = vmul.f32 %v2203, %v517
    %v2206 = vmul.f32 %v2203, %v518
    %v2207 = vmul.f32 %v2203, %v519
    %v2212 = vrot.slane %v2204, 1
    %v2213 = vrot.slane %v2205, 1
    %v2214 = vrot.slane %v2206, 1
    %v2215 = vrot.slane %v2207, 1
    %v2220 = vadd.f32 %v2199, %v2212
    %v2221 = vadd.f32 %v2200, %v2213
    %v2222 = vadd.f32 %v2201, %v2214
    %v2223 = vadd.f32 %v2202, %v2215
    %v2224 = vstv %s175
    %v2225 = vmul.f32 %v2224, %v516
    %v2226 = vmul.f32 %v2224, %v517
    %v2227 = vmul.f32 %v2224, %v518
    %v2228 = vmul.f32 %v2224, %v519
    %v2233 = vrot.slane %v2225, 2
    %v2234 = vrot.slane %v2226, 2
    %v2235 = vrot.slane %v2227, 2
    %v2236 = vrot.slane %v2228, 2
    %v2241 = vadd.f32 %v2220, %v2233
    %v2242 = vadd.f32 %v2221, %v2234
    %v2243 = vadd.f32 %v2222, %v2235
    %v2244 = vadd.f32 %v2223, %v2236
    %v2245 = vstv %s207
    %v2246 = vmul.f32 %v2245, %v516
    %v2247 = vmul.f32 %v2245, %v517
    %v2248 = vmul.f32 %v2245, %v518
    %v2249 = vmul.f32 %v2245, %v519
    %v2254 = vrot.slane %v2246, 3
    %v2255 = vrot.slane %v2247, 3
    %v2256 = vrot.slane %v2248, 3
    %v2257 = vrot.slane %v2249, 3
    %v2262 = vadd.f32 %v2241, %v2254
    %v2263 = vadd.f32 %v2242, %v2255
    %v2264 = vadd.f32 %v2243, %v2256
    %v2265 = vadd.f32 %v2244, %v2257
    %v2266 = vstv %s109
    %v2267 = vmul.f32 %v2266, %v82
    %v2268 = vmul.f32 %v2266, %v83
    %v2271 = vlaneseq
    %v2272 = vshrl.u32 %v2271, 7
    %v2273 = vsub.s32 0, %v2272
    %v2274 = vrot.slane %v2267, %v2273
    %v2275 = vlaneseq
    %v2276 = vshrl.u32 %v2275, 7
    %v2277 = vsub.s32 4, %v2276
    %v2278 = vrot.slane %v2267, %v2277
    %v2279 = vlaneseq
    %v2280 = vshrl.u32 %v2279, 7
    %v2281 = vsub.s32 0, %v2280
    %v2282 = vrot.slane %v2268, %v2281
    %v2283 = vlaneseq
    %v2284 = vshrl.u32 %v2283, 7
    %v2285 = vsub.s32 4, %v2284
    %v2286 = vrot.slane %v2268, %v2285
    %v2291 = vadd.f32 %v2262, %v2274
    %v2292 = vadd.f32 %v2263, %v2278
    %v2293 = vadd.f32 %v2264, %v2282
    %v2294 = vadd.f32 %v2265, %v2286
    %v2295 = vstv %s141
    %v2296 = vmul.f32 %v2295, %v82
    %v2297 = vmul.f32 %v2295, %v83
    %v2300 = vlaneseq
    %v2301 = vshrl.u32 %v2300, 7
    %v2302 = vsub.s32 1, %v2301
    %v2303 = vrot.slane %v2296, %v2302
    %v2304 = vlaneseq
    %v2305 = vshrl.u32 %v2304, 7
    %v2306 = vsub.s32 5, %v2305
    %v2307 = vrot.slane %v2296, %v2306
    %v2308 = vlaneseq
    %v2309 = vshrl.u32 %v2308, 7
    %v2310 = vsub.s32 1, %v2309
    %v2311 = vrot.slane %v2297, %v2310
    %v2312 = vlaneseq
    %v2313 = vshrl.u32 %v2312, 7
    %v2314 = vsub.s32 5, %v2313
    %v2315 = vrot.slane %v2297, %v2314
    %v2320 = vadd.f32 %v2291, %v2303
    %v2321 = vadd.f32 %v2292, %v2307
    %v2322 = vadd.f32 %v2293, %v2311
    %v2323 = vadd.f32 %v2294, %v2315
    %v2324 = vstv %s173
    %v2325 = vmul.f32 %v2324, %v82
    %v2326 = vmul.f32 %v2324, %v83
    %v2329 = vlaneseq
    %v2330 = vshrl.u32 %v2329, 7
    %v2331 = vsub.s32 2, %v2330
    %v2332 = vrot.slane %v2325, %v2331
    %v2333 = vlaneseq
    %v2334 = vshrl.u32 %v2333, 7
    %v2335 = vsub.s32 6, %v2334
    %v2336 = vrot.slane %v2325, %v2335
    %v2337 = vlaneseq
    %v2338 = vshrl.u32 %v2337, 7
    %v2339 = vsub.s32 2, %v2338
    %v2340 = vrot.slane %v2326, %v2339
    %v2341 = vlaneseq
    %v2342 = vshrl.u32 %v2341, 7
    %v2343 = vsub.s32 6, %v2342
    %v2344 = vrot.slane %v2326, %v2343
    %v2349 = vadd.f32 %v2320, %v2332
    %v2350 = vadd.f32 %v2321, %v2336
    %v2351 = vadd.f32 %v2322, %v2340
    %v2352 = vadd.f32 %v2323, %v2344
    %v2353 = vstv %s205
    %v2354 = vmul.f32 %v2353, %v82
    %v2355 = vmul.f32 %v2353, %v83
    %v2358 = vlaneseq
    %v2359 = vshrl.u32 %v2358, 7
    %v2360 = vsub.s32 3, %v2359
    %v2361 = vrot.slane %v2354, %v2360
    %v2362 = vlaneseq
    %v2363 = vshrl.u32 %v2362, 7
    %v2364 = vsub.s32 7, %v2363
    %v2365 = vrot.slane %v2354, %v2364
    %v2366 = vlaneseq
    %v2367 = vshrl.u32 %v2366, 7
    %v2368 = vsub.s32 3, %v2367
    %v2369 = vrot.slane %v2355, %v2368
    %v2370 = vlaneseq
    %v2371 = vshrl.u32 %v2370, 7
    %v2372 = vsub.s32 7, %v2371
    %v2373 = vrot.slane %v2355, %v2372
    %v2378 = vadd.f32 %v2349, %v2361
    %v2379 = vadd.f32 %v2350, %v2365
    %v2380 = vadd.f32 %v2351, %v2369
    %v2381 = vadd.f32 %v2352, %v2373
    %v2382 = vstv %s103
    %v2383 = vmul.f32 %v2382, %v2008
    %v2384 = vmul.f32 %v2382, %v2009
    %v2385 = vmul.f32 %v2382, %v2010
    %v2386 = vmul.f32 %v2382, %v2011
    %v2387 = vadd.f32 %v2378, %v2383
    %v2388 = vadd.f32 %v2379, %v2384
    %v2389 = vadd.f32 %v2380, %v2385
    %v2390 = vadd.f32 %v2381, %v2386
    %v2391 = vstv %s135
    %v2392 = vmul.f32 %v2391, %v2008
    %v2393 = vmul.f32 %v2391, %v2009
    %v2394 = vmul.f32 %v2391, %v2010
    %v2395 = vmul.f32 %v2391, %v2011
    %v2400 = vrot.slane %v2392, 1
    %v2401 = vrot.slane %v2393, 1
    %v2402 = vrot.slane %v2394, 1
    %v2403 = vrot.slane %v2395, 1
    %v2408 = vadd.f32 %v2387, %v2400
    %v2409 = vadd.f32 %v2388, %v2401
    %v2410 = vadd.f32 %v2389, %v2402
    %v2411 = vadd.f32 %v2390, %v2403
    %v2412 = vstv %s167
    %v2413 = vmul.f32 %v2412, %v2008
    %v2414 = vmul.f32 %v2412, %v2009
    %v2415 = vmul.f32 %v2412, %v2010
    %v2416 = vmul.f32 %v2412, %v2011
    %v2421 = vrot.slane %v2413, 2
    %v2422 = vrot.slane %v2414, 2
    %v2423 = vrot.slane %v2415, 2
    %v2424 = vrot.slane %v2416, 2
    %v2429 = vadd.f32 %v2408, %v2421
    %v2430 = vadd.f32 %v2409, %v2422
    %v2431 = vadd.f32 %v2410, %v2423
    %v2432 = vadd.f32 %v2411, %v2424
    %v2433 = vstv %s199
    %v2434 = vmul.f32 %v2433, %v2008
    %v2435 = vmul.f32 %v2433, %v2009
    %v2436 = vmul.f32 %v2433, %v2010
    %v2437 = vmul.f32 %v2433, %v2011
    %v2442 = vrot.slane %v2434, 3
    %v2443 = vrot.slane %v2435, 3
    %v2444 = vrot.slane %v2436, 3
    %v2445 = vrot.slane %v2437, 3
    %v2450 = vadd.f32 %v2429, %v2442
    %v2451 = vadd.f32 %v2430, %v2443
    %v2452 = vadd.f32 %v2431, %v2444
    %v2453 = vadd.f32 %v2432, %v2445
    %v2454 = vstv %s101
    %v2455 = vmul.f32 %v2454, %v2114
    %v2456 = vmul.f32 %v2454, %v2115
    %v2457 = vmul.f32 %v2454, %v2116
    %v2458 = vmul.f32 %v2454, %v2117
    %v2459 = vadd.f32 %v2450, %v2455
    %v2460 = vadd.f32 %v2451, %v2456
    %v2461 = vadd.f32 %v2452, %v2457
    %v2462 = vadd.f32 %v2453, %v2458
    %v2463 = vstv %s133
    %v2464 = vmul.f32 %v2463, %v2114
    %v2465 = vmul.f32 %v2463, %v2115
    %v2466 = vmul.f32 %v2463, %v2116
    %v2467 = vmul.f32 %v2463, %v2117
    %v2472 = vrot.slane %v2464, 1
    %v2473 = vrot.slane %v2465, 1
    %v2474 = vrot.slane %v2466, 1
    %v2475 = vrot.slane %v2467, 1
    %v2480 = vadd.f32 %v2459, %v2472
    %v2481 = vadd.f32 %v2460, %v2473
    %v2482 = vadd.f32 %v2461, %v2474
    %v2483 = vadd.f32 %v2462, %v2475
    %v2484 = vstv %s165
    %v2485 = vmul.f32 %v2484, %v2114
    %v2486 = vmul.f32 %v2484, %v2115
    %v2487 = vmul.f32 %v2484, %v2116
    %v2488 = vmul.f32 %v2484, %v2117
    %v2493 = vrot.slane %v2485, 2
    %v2494 = vrot.slane %v2486, 2
    %v2495 = vrot.slane %v2487, 2
    %v2496 = vrot.slane %v2488, 2
    %v2501 = vadd.f32 %v2480, %v2493
    %v2502 = vadd.f32 %v2481, %v2494
    %v2503 = vadd.f32 %v2482, %v2495
    %v2504 = vadd.f32 %v2483, %v2496
    %v2505 = vstv %s197
    %v2506 = vmul.f32 %v2505, %v2114
    %v2507 = vmul.f32 %v2505, %v2115
    %v2508 = vmul.f32 %v2505, %v2116
    %v2509 = vmul.f32 %v2505, %v2117
    %v2514 = vrot.slane %v2506, 3
    %v2515 = vrot.slane %v2507, 3
    %v2516 = vrot.slane %v2508, 3
    %v2517 = vrot.slane %v2509, 3
    %v2522 = vadd.f32 %v2501, %v2514
    %v2523 = vadd.f32 %v2502, %v2515
    %v2524 = vadd.f32 %v2503, %v2516
    %v2525 = vadd.f32 %v2504, %v2517
    %v2526 = vadd.f32 %v2522, %v1045
    %v2527 = vadd.f32 %v2523, %v1045
    %v2528 = vadd.f32 %v2524, %v1045
    %v2529 = vadd.f32 %v2525, %v1045
    %v2530 = vstv %s94
    %v2531 = vmul.f32 %v2530, %v82
    %v2532 = vmul.f32 %v2530, %v83
    %v2533 = vadd.f32 %v2531, 0.0
    %v2534 = vadd.f32 %v2532, 0.0
    %v2535 = vstv %s126
    %v2536 = vmul.f32 %v2535, %v82
    %v2537 = vmul.f32 %v2535, %v83
    %v2540 = vrot.slane %v2536, 5
    %v2541 = vrot.slane %v2540, 4
    %v2542 = vrot.slane %v2537, 5
    %v2543 = vrot.slane %v2542, 4
    %v2546 = vadd.f32 %v2533, %v2541
    %v2547 = vadd.f32 %v2534, %v2543
    %v2548 = vstv %s158
    %v2549 = vmul.f32 %v2548, %v82
    %v2550 = vmul.f32 %v2548, %v83
    %v2553 = vrot.slane %v2549, 6
    %v2554 = vrot.slane %v2553, 4
    %v2555 = vrot.slane %v2550, 6
    %v2556 = vrot.slane %v2555, 4
    %v2559 = vadd.f32 %v2546, %v2554
    %v2560 = vadd.f32 %v2547, %v2556
    %v2561 = vstv %s190
    %v2562 = vmul.f32 %v2561, %v82
    %v2563 = vmul.f32 %v2561, %v83
    %v2566 = vrot.slane %v2562, 7
    %v2567 = vrot.slane %v2566, 4
    %v2568 = vrot.slane %v2563, 7
    %v2569 = vrot.slane %v2568, 4
    %v2572 = vadd.f32 %v2559, %v2567
    %v2573 = vadd.f32 %v2560, %v2569
    %v2574 = vstv %s92
    %v2575 = vmul.f32 %v2574, %v1374
    %v2576 = vmul.f32 %v2574, %v1375
    %v2577 = vmul.f32 %v2574, %v1376
    %v2578 = vmul.f32 %v2574, %v1377
    %v2583 = vcombine.low %v2575, %v2576
    %v2584 = vcombine.low %v2577, %v2578
    %v2587 = vadd.f32 %v2572, %v2583
    %v2588 = vadd.f32 %v2573, %v2584
    %v2589 = vstv %s124
    %v2590 = vmul.f32 %v2589, %v1374
    %v2591 = vmul.f32 %v2589, %v1375
    %v2592 = vmul.f32 %v2589, %v1376
    %v2593 = vmul.f32 %v2589, %v1377
    %v2598 = vcombine.low %v2590, %v2591
    %v2599 = vcombine.low %v2592, %v2593
    %v2600 = vrot.slane %v2598, 5
    %v2601 = vrot.slane %v2600, 4
    %v2602 = vrot.slane %v2599, 5
    %v2603 = vrot.slane %v2602, 4
    %v2606 = vadd.f32 %v2587, %v2601
    %v2607 = vadd.f32 %v2588, %v2603
    %v2608 = vstv %s156
    %v2609 = vmul.f32 %v2608, %v1374
    %v2610 = vmul.f32 %v2608, %v1375
    %v2611 = vmul.f32 %v2608, %v1376
    %v2612 = vmul.f32 %v2608, %v1377
    %v2617 = vcombine.low %v2609, %v2610
    %v2618 = vcombine.low %v2611, %v2612
    %v2619 = vrot.slane %v2617, 6
    %v2620 = vrot.slane %v2619, 4
    %v2621 = vrot.slane %v2618, 6
    %v2622 = vrot.slane %v2621, 4
    %v2625 = vadd.f32 %v2606, %v2620
    %v2626 = vadd.f32 %v2607, %v2622
    %v2627 = vstv %s188
    %v2628 = vmul.f32 %v2627, %v1374
    %v2629 = vmul.f32 %v2627, %v1375
    %v2630 = vmul.f32 %v2627, %v1376
    %v2631 = vmul.f32 %v2627, %v1377
    %v2636 = vcombine.low %v2628, %v2629
    %v2637 = vcombine.low %v2630, %v2631
    %v2638 = vrot.slane %v2636, 7
    %v2639 = vrot.slane %v2638, 4
    %v2640 = vrot.slane %v2637, 7
    %v2641 = vrot.slane %v2640, 4
    %v2644 = vadd.f32 %v2625, %v2639
    %v2645 = vadd.f32 %v2626, %v2641
    %v2646 = vstv %s86
    %v2647 = vmul.f32 %v2646, %v2114
    %v2648 = vmul.f32 %v2646, %v2115
    %v2649 = vmul.f32 %v2646, %v2116
    %v2650 = vmul.f32 %v2646, %v2117
    %v2655 = vcombine.low %v2647, %v2648
    %v2656 = vcombine.low %v2649, %v2650
    %v2659 = vadd.f32 %v2644, %v2655
    %v2660 = vadd.f32 %v2645, %v2656
    %v2661 = vstv %s118
    %v2662 = vmul.f32 %v2661, %v2114
    %v2663 = vmul.f32 %v2661, %v2115
    %v2664 = vmul.f32 %v2661, %v2116
    %v2665 = vmul.f32 %v2661, %v2117
    %v2670 = vcombine.low %v2662, %v2663
    %v2671 = vcombine.low %v2664, %v2665
    %v2672 = vrot.slane %v2670, 5
    %v2673 = vrot.slane %v2672, 4
    %v2674 = vrot.slane %v2671, 5
    %v2675 = vrot.slane %v2674, 4
    %v2678 = vadd.f32 %v2659, %v2673
    %v2679 = vadd.f32 %v2660, %v2675
    %v2680 = vstv %s150
    %v2681 = vmul.f32 %v2680, %v2114
    %v2682 = vmul.f32 %v2680, %v2115
    %v2683 = vmul.f32 %v2680, %v2116
    %v2684 = vmul.f32 %v2680, %v2117
    %v2689 = vcombine.low %v2681, %v2682
    %v2690 = vcombine.low %v2683, %v2684
    %v2691 = vrot.slane %v2689, 6
    %v2692 = vrot.slane %v2691, 4
    %v2693 = vrot.slane %v2690, 6
    %v2694 = vrot.slane %v2693, 4
    %v2697 = vadd.f32 %v2678, %v2692
    %v2698 = vadd.f32 %v2679, %v2694
    %v2699 = vstv %s182
    %v2700 = vmul.f32 %v2699, %v2114
    %v2701 = vmul.f32 %v2699, %v2115
    %v2702 = vmul.f32 %v2699, %v2116
    %v2703 = vmul.f32 %v2699, %v2117
    %v2708 = vcombine.low %v2700, %v2701
    %v2709 = vcombine.low %v2702, %v2703
    %v2710 = vrot.slane %v2708, 7
    %v2711 = vrot.slane %v2710, 4
    %v2712 = vrot.slane %v2709, 7
    %v2713 = vrot.slane %v2712, 4
    %v2716 = vadd.f32 %v2697, %v2711
    %v2717 = vadd.f32 %v2698, %v2713
    %2718 = vrot.lane.b32.xlu0 %v82, 111
    %v2719 = vpop.permute.xlu0 %2718
    %2720 = vrot.lane.b32.xlu0 %v273, 111
    %v2721 = vpop.permute.xlu0 %2720
    %2722 = vrot.lane.b32.xlu0 %v83, 111
    %v2723 = vpop.permute.xlu0 %2722
    %2724 = vrot.lane.b32.xlu0 %v274, 111
    %v2725 = vpop.permute.xlu0 %2724
    %vm2726 = vcmask 908288
    %v2727 = vsel %vm2726, %v2719, %v2721
    %v2728 = vsel %vm2726, %v2723, %v2725
    %v2733 = vsel %vm2726, %v2721, 0.0
    %v2734 = vsel %vm2726, %v2725, 0.0
    %s2735 = scalar_lea.vmem [#allocation2], 16
    %v2736 = vld [vmem:[%s2735] ss:$8 sm:$0x3]
    %v2738 = vlaneseq
    %v2739 = vshrl.u32 %v2738, 7
    %v2740 = vsub.s32 0, %v2739
    %v2741 = vrot.slane %v2736, %v2740
    %v2742 = vlaneseq
    %v2743 = vshrl.u32 %v2742, 7
    %v2744 = vsub.s32 1, %v2743
    %v2745 = vrot.slane %v2736, %v2744
    %v2748 = vmul.f32 %v2727, %v2741
    %v2749 = vmul.f32 %v2733, %v2745
    %v2750 = vmul.f32 %v2728, %v2741
    %v2751 = vmul.f32 %v2734, %v2745
    %v2752 = vstv %s84
    %v2753 = vmul.f32 %v2752, %v2748
    %v2754 = vmul.f32 %v2752, %v2749
    %v2755 = vmul.f32 %v2752, %v2750
    %v2756 = vmul.f32 %v2752, %v2751
    %v2761 = vcombine.low %v2753, %v2754
    %v2762 = vcombine.low %v2755, %v2756
    %v2765 = vadd.f32 %v2716, %v2761
    %v2766 = vadd.f32 %v2717, %v2762
    %v2767 = vstv %s116
    %v2768 = vmul.f32 %v2767, %v2748
    %v2769 = vmul.f32 %v2767, %v2749
    %v2770 = vmul.f32 %v2767, %v2750
    %v2771 = vmul.f32 %v2767, %v2751
    %v2776 = vcombine.low %v2768, %v2769
    %v2777 = vcombine.low %v2770, %v2771
    %v2778 = vrot.slane %v2776, 5
    %v2779 = vrot.slane %v2778, 4
    %v2780 = vrot.slane %v2777, 5
    %v2781 = vrot.slane %v2780, 4
    %v2784 = vadd.f32 %v2765, %v2779
    %v2785 = vadd.f32 %v2766, %v2781
    %v2786 = vstv %s148
    %v2787 = vmul.f32 %v2786, %v2748
    %v2788 = vmul.f32 %v2786, %v2749
    %v2789 = vmul.f32 %v2786, %v2750
    %v2790 = vmul.f32 %v2786, %v2751
    %v2795 = vcombine.low %v2787, %v2788
    %v2796 = vcombine.low %v2789, %v2790
    %v2797 = vrot.slane %v2795, 6
    %v2798 = vrot.slane %v2797, 4
    %v2799 = vrot.slane %v2796, 6
    %v2800 = vrot.slane %v2799, 4
    %v2803 = vadd.f32 %v2784, %v2798
    %v2804 = vadd.f32 %v2785, %v2800
    %v2805 = vstv %s180
    %v2806 = vmul.f32 %v2805, %v2748
    %v2807 = vmul.f32 %v2805, %v2749
    %v2808 = vmul.f32 %v2805, %v2750
    %v2809 = vmul.f32 %v2805, %v2751
    %v2814 = vcombine.low %v2806, %v2807
    %v2815 = vcombine.low %v2808, %v2809
    %v2816 = vrot.slane %v2814, 7
    %v2817 = vrot.slane %v2816, 4
    %v2818 = vrot.slane %v2815, 7
    %v2819 = vrot.slane %v2818, 4
    %v2822 = vadd.f32 %v2803, %v2817
    %v2823 = vadd.f32 %v2804, %v2819
    %v2824 = vadd.f32 %v2822, %v708
    %v2825 = vadd.f32 %v2823, %v708
    %v2826 = vstv %s110
    %v2827 = vmul.f32 %v2826, %v82
    %v2828 = vmul.f32 %v2826, %v83
    %v2829 = vadd.f32 %v2827, 0.0
    %v2830 = vadd.f32 %v2828, 0.0
    %v2831 = vstv %s142
    %v2832 = vmul.f32 %v2831, %v82
    %v2833 = vmul.f32 %v2831, %v83
    %v2836 = vrot.slane %v2832, 5
    %v2837 = vrot.slane %v2836, 4
    %v2838 = vrot.slane %v2833, 5
    %v2839 = vrot.slane %v2838, 4
    %v2842 = vadd.f32 %v2829, %v2837
    %v2843 = vadd.f32 %v2830, %v2839
    %v2844 = vstv %s174
    %v2845 = vmul.f32 %v2844, %v82
    %v2846 = vmul.f32 %v2844, %v83
    %v2849 = vrot.slane %v2845, 6
    %v2850 = vrot.slane %v2849, 4
    %v2851 = vrot.slane %v2846, 6
    %v2852 = vrot.slane %v2851, 4
    %v2855 = vadd.f32 %v2842, %v2850
    %v2856 = vadd.f32 %v2843, %v2852
    %v2857 = vstv %s206
    %v2858 = vmul.f32 %v2857, %v82
    %v2859 = vmul.f32 %v2857, %v83
    %v2862 = vrot.slane %v2858, 7
    %v2863 = vrot.slane %v2862, 4
    %v2864 = vrot.slane %v2859, 7
    %v2865 = vrot.slane %v2864, 4
    %v2868 = vadd.f32 %v2855, %v2863
    %v2869 = vadd.f32 %v2856, %v2865
    %v2870 = vstv %s108
    %v2871 = vmul.f32 %v2870, %v1374
    %v2872 = vmul.f32 %v2870, %v1375
    %v2873 = vmul.f32 %v2870, %v1376
    %v2874 = vmul.f32 %v2870, %v1377
    %v2879 = vcombine.low %v2871, %v2872
    %v2880 = vcombine.low %v2873, %v2874
    %v2883 = vadd.f32 %v2868, %v2879
    %v2884 = vadd.f32 %v2869, %v2880
    %v2885 = vstv %s140
    %v2886 = vmul.f32 %v2885, %v1374
    %v2887 = vmul.f32 %v2885, %v1375
    %v2888 = vmul.f32 %v2885, %v1376
    %v2889 = vmul.f32 %v2885, %v1377
    %v2894 = vcombine.low %v2886, %v2887
    %v2895 = vcombine.low %v2888, %v2889
    %v2896 = vrot.slane %v2894, 5
    %v2897 = vrot.slane %v2896, 4
    %v2898 = vrot.slane %v2895, 5
    %v2899 = vrot.slane %v2898, 4
    %v2902 = vadd.f32 %v2883, %v2897
    %v2903 = vadd.f32 %v2884, %v2899
    %v2904 = vstv %s172
    %v2905 = vmul.f32 %v2904, %v1374
    %v2906 = vmul.f32 %v2904, %v1375
    %v2907 = vmul.f32 %v2904, %v1376
    %v2908 = vmul.f32 %v2904, %v1377
    %v2913 = vcombine.low %v2905, %v2906
    %v2914 = vcombine.low %v2907, %v2908
    %v2915 = vrot.slane %v2913, 6
    %v2916 = vrot.slane %v2915, 4
    %v2917 = vrot.slane %v2914, 6
    %v2918 = vrot.slane %v2917, 4
    %v2921 = vadd.f32 %v2902, %v2916
    %v2922 = vadd.f32 %v2903, %v2918
    %v2923 = vstv %s204
    %v2924 = vmul.f32 %v2923, %v1374
    %v2925 = vmul.f32 %v2923, %v1375
    %v2926 = vmul.f32 %v2923, %v1376
    %v2927 = vmul.f32 %v2923, %v1377
    %v2932 = vcombine.low %v2924, %v2925
    %v2933 = vcombine.low %v2926, %v2927
    %v2934 = vrot.slane %v2932, 7
    %v2935 = vrot.slane %v2934, 4
    %v2936 = vrot.slane %v2933, 7
    %v2937 = vrot.slane %v2936, 4
    %v2940 = vadd.f32 %v2921, %v2935
    %v2941 = vadd.f32 %v2922, %v2937
    %v2942 = vstv %s102
    %v2943 = vmul.f32 %v2942, %v2114
    %v2944 = vmul.f32 %v2942, %v2115
    %v2945 = vmul.f32 %v2942, %v2116
    %v2946 = vmul.f32 %v2942, %v2117
    %v2951 = vcombine.low %v2943, %v2944
    %v2952 = vcombine.low %v2945, %v2946
    %v2955 = vadd.f32 %v2940, %v2951
    %v2956 = vadd.f32 %v2941, %v2952
    %v2957 = vstv %s134
    %v2958 = vmul.f32 %v2957, %v2114
    %v2959 = vmul.f32 %v2957, %v2115
    %v2960 = vmul.f32 %v2957, %v2116
    %v2961 = vmul.f32 %v2957, %v2117
    %v2966 = vcombine.low %v2958, %v2959
    %v2967 = vcombine.low %v2960, %v2961
    %v2968 = vrot.slane %v2966, 5
    %v2969 = vrot.slane %v2968, 4
    %v2970 = vrot.slane %v2967, 5
    %v2971 = vrot.slane %v2970, 4
    %v2974 = vadd.f32 %v2955, %v2969
    %v2975 = vadd.f32 %v2956, %v2971
    %v2976 = vstv %s166
    %v2977 = vmul.f32 %v2976, %v2114
    %v2978 = vmul.f32 %v2976, %v2115
    %v2979 = vmul.f32 %v2976, %v2116
    %v2980 = vmul.f32 %v2976, %v2117
    %v2985 = vcombine.low %v2977, %v2978
    %v2986 = vcombine.low %v2979, %v2980
    %v2987 = vrot.slane %v2985, 6
    %v2988 = vrot.slane %v2987, 4
    %v2989 = vrot.slane %v2986, 6
    %v2990 = vrot.slane %v2989, 4
    %v2993 = vadd.f32 %v2974, %v2988
    %v2994 = vadd.f32 %v2975, %v2990
    %v2995 = vstv %s198
    %v2996 = vmul.f32 %v2995, %v2114
    %v2997 = vmul.f32 %v2995, %v2115
    %v2998 = vmul.f32 %v2995, %v2116
    %v2999 = vmul.f32 %v2995, %v2117
    %v3004 = vcombine.low %v2996, %v2997
    %v3005 = vcombine.low %v2998, %v2999
    %v3006 = vrot.slane %v3004, 7
    %v3007 = vrot.slane %v3006, 4
    %v3008 = vrot.slane %v3005, 7
    %v3009 = vrot.slane %v3008, 4
    %v3012 = vadd.f32 %v2993, %v3007
    %v3013 = vadd.f32 %v2994, %v3009
    %v3014 = vstv %s100
    %v3015 = vmul.f32 %v3014, %v2748
    %v3016 = vmul.f32 %v3014, %v2749
    %v3017 = vmul.f32 %v3014, %v2750
    %v3018 = vmul.f32 %v3014, %v2751
    %v3023 = vcombine.low %v3015, %v3016
    %v3024 = vcombine.low %v3017, %v3018
    %v3027 = vadd.f32 %v3012, %v3023
    %v3028 = vadd.f32 %v3013, %v3024
    %v3029 = vstv %s132
    %v3030 = vmul.f32 %v3029, %v2748
    %v3031 = vmul.f32 %v3029, %v2749
    %v3032 = vmul.f32 %v3029, %v2750
    %v3033 = vmul.f32 %v3029, %v2751
    %v3038 = vcombine.low %v3030, %v3031
    %v3039 = vcombine.low %v3032, %v3033
    %v3040 = vrot.slane %v3038, 5
    %v3041 = vrot.slane %v3040, 4
    %v3042 = vrot.slane %v3039, 5
    %v3043 = vrot.slane %v3042, 4
    %v3046 = vadd.f32 %v3027, %v3041
    %v3047 = vadd.f32 %v3028, %v3043
    %v3048 = vstv %s164
    %v3049 = vmul.f32 %v3048, %v2748
    %v3050 = vmul.f32 %v3048, %v2749
    %v3051 = vmul.f32 %v3048, %v2750
    %v3052 = vmul.f32 %v3048, %v2751
    %v3057 = vcombine.low %v3049, %v3050
    %v3058 = vcombine.low %v3051, %v3052
    %v3059 = vrot.slane %v3057, 6
    %v3060 = vrot.slane %v3059, 4
    %v3061 = vrot.slane %v3058, 6
    %v3062 = vrot.slane %v3061, 4
    %v3065 = vadd.f32 %v3046, %v3060
    %v3066 = vadd.f32 %v3047, %v3062
    %v3067 = vstv %s196
    %v3068 = vmul.f32 %v3067, %v2748
    %v3069 = vmul.f32 %v3067, %v2749
    %v3070 = vmul.f32 %v3067, %v2750
    %v3071 = vmul.f32 %v3067, %v2751
    %v3076 = vcombine.low %v3068, %v3069
    %v3077 = vcombine.low %v3070, %v3071
    %v3078 = vrot.slane %v3076, 7
    %v3079 = vrot.slane %v3078, 4
    %v3080 = vrot.slane %v3077, 7
    %v3081 = vrot.slane %v3080, 4
    %v3084 = vadd.f32 %v3065, %v3079
    %v3085 = vadd.f32 %v3066, %v3081
    %v3086 = vadd.f32 %v3084, %v1045
    %v3087 = vadd.f32 %v3085, %v1045
    %v3090 = vlaneseq
    %v3091 = vshrl.u32 %v3090, 7
    %v3092 = vsub.s32 0, %v3091
    %v3093 = vrot.slane %v2824, %v3092
    %v3094 = vlaneseq
    %v3095 = vshrl.u32 %v3094, 7
    %v3096 = vsub.s32 4, %v3095
    %v3097 = vrot.slane %v2824, %v3096
    %v3098 = vlaneseq
    %v3099 = vshrl.u32 %v3098, 7
    %v3100 = vsub.s32 0, %v3099
    %v3101 = vrot.slane %v2825, %v3100
    %v3102 = vlaneseq
    %v3103 = vshrl.u32 %v3102, 7
    %v3104 = vsub.s32 4, %v3103
    %v3105 = vrot.slane %v2825, %v3104
    %vm3106 = vcmask 1041409
    %v3107 = vsel %vm3106, %v3101, %v3093
    %v3108 = vsel %vm3106, %v3105, %v3097
    %3109 = vrot.lane.b32.xlu0 %v3107, 17
    %v3110 = vpop.permute.xlu0 %3109
    %3111 = vrot.lane.b32.xlu0 %v3108, 17
    %v3112 = vpop.permute.xlu0 %3111
    %v3113 = vsel %vm283, %v3110, %v3112
    %v3116 = vsel %vm283, 0.0, %v3110
    %v3117 = vmul.f32 %v3116, %v297
    %v3118 = vmul.f32 %v3113, %v301
    %v3119 = vstv %s214
    %v3120 = vmul.f32 %v3119, %v3117
    %v3121 = vmul.f32 %v3119, %v3118
    %v3122 = vadd.f32 %v3120, 0.0
    %v3123 = vadd.f32 %v3121, 0.0
    %v3126 = vlaneseq
    %v3127 = vshrl.u32 %v3126, 7
    %v3128 = vsub.s32 0, %v3127
    %v3129 = vrot.slane %v3086, %v3128
    %v3130 = vlaneseq
    %v3131 = vshrl.u32 %v3130, 7
    %v3132 = vsub.s32 4, %v3131
    %v3133 = vrot.slane %v3086, %v3132
    %v3134 = vlaneseq
    %v3135 = vshrl.u32 %v3134, 7
    %v3136 = vsub.s32 0, %v3135
    %v3137 = vrot.slane %v3087, %v3136
    %v3138 = vlaneseq
    %v3139 = vshrl.u32 %v3138, 7
    %v3140 = vsub.s32 4, %v3139
    %v3141 = vrot.slane %v3087, %v3140
    %v3142 = vsel %vm3106, %v3137, %v3129
    %v3143 = vsel %vm3106, %v3141, %v3133
    %3144 = vrot.lane.b32.xlu0 %v3142, 17
    %v3145 = vpop.permute.xlu0 %3144
    %3146 = vrot.lane.b32.xlu0 %v3143, 17
    %v3147 = vpop.permute.xlu0 %3146
    %v3148 = vsel %vm283, %v3145, %v3147
    %v3151 = vsel %vm283, 0.0, %v3145
    %v3152 = vmul.f32 %v3151, %v297
    %v3153 = vmul.f32 %v3148, %v301
    %v3154 = vstv %s223
    %v3155 = vmul.f32 %v3154, %v3152
    %v3156 = vmul.f32 %v3154, %v3153
    %v3157 = vadd.f32 %v3122, %v3155
    %v3158 = vadd.f32 %v3123, %v3156
    %v3163 = vrot.slane %v2192, 7
    %v3164 = vsel %vm3106, %v3163, %v2190
    %v3165 = vrot.slane %v2193, 7
    %v3166 = vsel %vm3106, %v3165, %v2191
    %3167 = vrot.lane.b32.xlu0 %v3164, 16
    %v3168 = vpop.permute.xlu0 %3167
    %3169 = vrot.lane.b32.xlu0 %v3166, 16
    %v3170 = vpop.permute.xlu0 %3169
    %v3171 = vsel %vm388, %v3168, %v3170
    %v3174 = vsel %vm388, 0.0, %v3168
    %v3175 = vmul.f32 %v3174, %v403
    %v3176 = vmul.f32 %v3171, %v407
    %v3177 = vstv %s215
    %v3178 = vmul.f32 %v3177, %v3175
    %v3179 = vmul.f32 %v3177, %v3176
    %v3180 = vadd.f32 %v3157, %v3178
    %v3181 = vadd.f32 %v3158, %v3179
    %v3186 = vrot.slane %v2528, 7
    %v3187 = vsel %vm3106, %v3186, %v2526
    %v3188 = vrot.slane %v2529, 7
    %v3189 = vsel %vm3106, %v3188, %v2527
    %3190 = vrot.lane.b32.xlu0 %v3187, 16
    %v3191 = vpop.permute.xlu0 %3190
    %3192 = vrot.lane.b32.xlu0 %v3189, 16
    %v3193 = vpop.permute.xlu0 %3192
    %v3194 = vsel %vm388, %v3191, %v3193
    %v3197 = vsel %vm388, 0.0, %v3191
    %v3198 = vmul.f32 %v3197, %v403
    %v3199 = vmul.f32 %v3194, %v407
    %v3200 = vstv %s224
    %v3201 = vmul.f32 %v3200, %v3198
    %v3202 = vmul.f32 %v3200, %v3199
    %v3203 = vadd.f32 %v3180, %v3201
    %v3204 = vadd.f32 %v3181, %v3202
    %3205 = vrot.lane.b32.xlu0 %v3107, 16
    %v3206 = vpop.permute.xlu0 %3205
    %3207 = vrot.lane.b32.xlu0 %v3108, 16
    %v3208 = vpop.permute.xlu0 %3207
    %v3209 = vsel %vm388, %v3206, %v3208
    %v3212 = vsel %vm388, 0.0, %v3206
    %v3213 = vmul.f32 %v3212, %v403
    %v3214 = vmul.f32 %v3209, %v407
    %v3215 = vstv %s216
    %v3216 = vmul.f32 %v3215, %v3213
    %v3217 = vmul.f32 %v3215, %v3214
    %v3218 = vadd.f32 %v3203, %v3216
    %v3219 = vadd.f32 %v3204, %v3217
    %3220 = vrot.lane.b32.xlu0 %v3142, 16
    %v3221 = vpop.permute.xlu0 %3220
    %3222 = vrot.lane.b32.xlu0 %v3143, 16
    %v3223 = vpop.permute.xlu0 %3222
    %v3224 = vsel %vm388, %v3221, %v3223
    %v3227 = vsel %vm388, 0.0, %v3221
    %v3228 = vmul.f32 %v3227, %v403
    %v3229 = vmul.f32 %v3224, %v407
    %v3230 = vstv %s225
    %v3231 = vmul.f32 %v3230, %v3228
    %v3232 = vmul.f32 %v3230, %v3229
    %v3233 = vadd.f32 %v3218, %v3231
    %v3234 = vadd.f32 %v3219, %v3232
    %v3239 = vrot.slane %v1452, 7
    %v3240 = vsel %vm3106, %v3239, %v1450
    %v3241 = vrot.slane %v1453, 7
    %v3242 = vsel %vm3106, %v3241, %v1451
    %3243 = vrot.lane.b32.xlu0 %v3240, 1
    %v3244 = vpop.permute.xlu0 %3243
    %3245 = vrot.lane.b32.xlu0 %v3242, 1
    %v3246 = vpop.permute.xlu0 %3245
    %v3247 = vsel %vm494, %v3244, %v3246
    %v3250 = vsel %vm494, 0.0, %v3244
    %v3251 = vmul.f32 %v3250, %v509
    %v3252 = vmul.f32 %v3247, %v513
    %v3253 = vstv %s217
    %v3254 = vmul.f32 %v3253, %v3251
    %v3255 = vmul.f32 %v3253, %v3252
    %v3256 = vadd.f32 %v3233, %v3254
    %v3257 = vadd.f32 %v3234, %v3255
    %v3262 = vrot.slane %v1788, 7
    %v3263 = vsel %vm3106, %v3262, %v1786
    %v3264 = vrot.slane %v1789, 7
    %v3265 = vsel %vm3106, %v3264, %v1787
    %3266 = vrot.lane.b32.xlu0 %v3263, 1
    %v3267 = vpop.permute.xlu0 %3266
    %3268 = vrot.lane.b32.xlu0 %v3265, 1
    %v3269 = vpop.permute.xlu0 %3268
    %v3270 = vsel %vm494, %v3267, %v3269
    %v3273 = vsel %vm494, 0.0, %v3267
    %v3274 = vmul.f32 %v3273, %v509
    %v3275 = vmul.f32 %v3270, %v513
    %v3276 = vstv %s226
    %v3277 = vmul.f32 %v3276, %v3274
    %v3278 = vmul.f32 %v3276, %v3275
    %v3279 = vadd.f32 %v3256, %v3277
    %v3280 = vadd.f32 %v3257, %v3278
    %v3281 = vstv %s218
    %v3282 = vmul.f32 %v3281, %v709
    %v3283 = vmul.f32 %v3281, %v710
    %v3284 = vmul.f32 %v3281, %v711
    %v3285 = vmul.f32 %v3281, %v712
    %v3290 = vrot.slane %v3284, 7
    %v3291 = vsel %vm3106, %v3290, %v3282
    %v3292 = vrot.slane %v3285, 7
    %v3293 = vsel %vm3106, %v3292, %v3283
    %v3296 = vadd.f32 %v3279, %v3291
    %v3297 = vadd.f32 %v3280, %v3293
    %v3298 = vstv %s227
    %v3299 = vmul.f32 %v3298, %v1046
    %v3300 = vmul.f32 %v3298, %v1047
    %v3301 = vmul.f32 %v3298, %v1048
    %v3302 = vmul.f32 %v3298, %v1049
    %v3307 = vrot.slane %v3301, 7
    %v3308 = vsel %vm3106, %v3307, %v3299
    %v3309 = vrot.slane %v3302, 7
    %v3310 = vsel %vm3106, %v3309, %v3300
    %v3313 = vadd.f32 %v3296, %v3308
    %v3314 = vadd.f32 %v3297, %v3310
    %v3315 = vstv %s219
    %v3316 = vmul.f32 %v3315, %v1450
    %v3317 = vmul.f32 %v3315, %v1451
    %v3318 = vmul.f32 %v3315, %v1452
    %v3319 = vmul.f32 %v3315, %v1453
    %v3324 = vrot.slane %v3318, 7
    %v3325 = vsel %vm3106, %v3324, %v3316
    %v3326 = vrot.slane %v3319, 7
    %v3327 = vsel %vm3106, %v3326, %v3317
    %v3330 = vadd.f32 %v3313, %v3325
    %v3331 = vadd.f32 %v3314, %v3327
    %v3332 = vstv %s228
    %v3333 = vmul.f32 %v3332, %v1786
    %v3334 = vmul.f32 %v3332, %v1787
    %v3335 = vmul.f32 %v3332, %v1788
    %v3336 = vmul.f32 %v3332, %v1789
    %v3341 = vrot.slane %v3335, 7
    %v3342 = vsel %vm3106, %v3341, %v3333
    %v3343 = vrot.slane %v3336, 7
    %v3344 = vsel %vm3106, %v3343, %v3334
    %v3347 = vadd.f32 %v3330, %v3342
    %v3348 = vadd.f32 %v3331, %v3344
    %3349 = vrot.lane.b32.xlu0 %v3107, 1
    %v3350 = vpop.permute.xlu0 %3349
    %3351 = vrot.lane.b32.xlu0 %v3108, 1
    %v3352 = vpop.permute.xlu0 %3351
    %v3353 = vsel %vm494, %v3350, %v3352
    %v3356 = vsel %vm494, 0.0, %v3350
    %v3357 = vmul.f32 %v3356, %v509
    %v3358 = vmul.f32 %v3353, %v513
    %v3359 = vstv %s220
    %v3360 = vmul.f32 %v3359, %v3357
    %v3361 = vmul.f32 %v3359, %v3358
    %v3362 = vadd.f32 %v3347, %v3360
    %v3363 = vadd.f32 %v3348, %v3361
    %3364 = vrot.lane.b32.xlu0 %v3142, 1
    %v3365 = vpop.permute.xlu0 %3364
    %3366 = vrot.lane.b32.xlu0 %v3143, 1
    %v3367 = vpop.permute.xlu0 %3366
    %v3368 = vsel %vm494, %v3365, %v3367
    %v3371 = vsel %vm494, 0.0, %v3365
    %v3372 = vmul.f32 %v3371, %v509
    %v3373 = vmul.f32 %v3368, %v513
    %v3374 = vstv %s229
    %v3375 = vmul.f32 %v3374, %v3372
    %v3376 = vmul.f32 %v3374, %v3373
    %v3377 = vadd.f32 %v3362, %v3375
    %v3378 = vadd.f32 %v3363, %v3376
    %v3379 = vstv %s221
    %v3380 = vmul.f32 %v3379, %v2190
    %v3381 = vmul.f32 %v3379, %v2191
    %v3382 = vmul.f32 %v3379, %v2192
    %v3383 = vmul.f32 %v3379, %v2193
    %v3388 = vrot.slane %v3382, 7
    %v3389 = vsel %vm3106, %v3388, %v3380
    %v3390 = vrot.slane %v3383, 7
    %v3391 = vsel %vm3106, %v3390, %v3381
    %v3394 = vadd.f32 %v3377, %v3389
    %v3395 = vadd.f32 %v3378, %v3391
    %v3396 = vstv %s230
    %v3397 = vmul.f32 %v3396, %v2526
    %v3398 = vmul.f32 %v3396, %v2527
    %v3399 = vmul.f32 %v3396, %v2528
    %v3400 = vmul.f32 %v3396, %v2529
    %v3405 = vrot.slane %v3399, 7
    %v3406 = vsel %vm3106, %v3405, %v3397
    %v3407 = vrot.slane %v3400, 7
    %v3408 = vsel %vm3106, %v3407, %v3398
    %v3411 = vadd.f32 %v3394, %v3406
    %v3412 = vadd.f32 %v3395, %v3408
    %v3413 = vstv %s222
    %v3414 = vmul.f32 %v3413, %v2824
    %v3415 = vmul.f32 %v3413, %v2825
    %v3418 = vlaneseq
    %v3419 = vshrl.u32 %v3418, 7
    %v3420 = vsub.s32 0, %v3419
    %v3421 = vrot.slane %v3414, %v3420
    %v3422 = vlaneseq
    %v3423 = vshrl.u32 %v3422, 7
    %v3424 = vsub.s32 4, %v3423
    %v3425 = vrot.slane %v3414, %v3424
    %v3426 = vlaneseq
    %v3427 = vshrl.u32 %v3426, 7
    %v3428 = vsub.s32 0, %v3427
    %v3429 = vrot.slane %v3415, %v3428
    %v3430 = vlaneseq
    %v3431 = vshrl.u32 %v3430, 7
    %v3432 = vsub.s32 4, %v3431
    %v3433 = vrot.slane %v3415, %v3432
    %v3434 = vsel %vm3106, %v3429, %v3421
    %v3435 = vsel %vm3106, %v3433, %v3425
    %v3438 = vadd.f32 %v3411, %v3434
    %v3439 = vadd.f32 %v3412, %v3435
    %v3440 = vstv %s231
    %v3441 = vmul.f32 %v3440, %v3086
    %v3442 = vmul.f32 %v3440, %v3087
    %v3445 = vlaneseq
    %v3446 = vshrl.u32 %v3445, 7
    %v3447 = vsub.s32 0, %v3446
    %v3448 = vrot.slane %v3441, %v3447
    %v3449 = vlaneseq
    %v3450 = vshrl.u32 %v3449, 7
    %v3451 = vsub.s32 4, %v3450
    %v3452 = vrot.slane %v3441, %v3451
    %v3453 = vlaneseq
    %v3454 = vshrl.u32 %v3453, 7
    %v3455 = vsub.s32 0, %v3454
    %v3456 = vrot.slane %v3442, %v3455
    %v3457 = vlaneseq
    %v3458 = vshrl.u32 %v3457, 7
    %v3459 = vsub.s32 4, %v3458
    %v3460 = vrot.slane %v3442, %v3459
    %v3461 = vsel %vm3106, %v3456, %v3448
    %v3462 = vsel %vm3106, %v3460, %v3452
    %v3465 = vadd.f32 %v3438, %v3461
    %v3466 = vadd.f32 %v3439, %v3462
    %v3467 = vstv %s268
    %v3468 = vadd.f32 %v3465, %v3467
    %v3469 = vadd.f32 %v3466, %v3467
    %v3472 = vcombine.low %v3468, %v3469
    %v3474 = vunpack.c.l.s4 1966171168
    %v3475 = vunpack.c.0.s8 %v3474
    %v3476 = vlaneseq
    %v3477 = vshrl.u32 %v3476, 7
    %v3478 = vsub.s32 %v3475, %v3477
    %v3479 = vrot.slane %v3472, %v3478
    %v3480 = vcombine.high %v3479, %v3479
    %v3482 = vunpack.c.l.s4 1966171168
    %v3483 = vunpack.c.0.s8 %v3482
    %v3484 = vlaneseq
    %v3485 = vshrl.u32 %v3484, 7
    %v3486 = vsub.s32 %v3483, %v3485
    %v3487 = vrot.slane %v3479, %v3486
    %v3489 = vunpack.c.l.s4 1966171168
    %v3490 = vunpack.c.0.s8 %v3489
    %v3491 = vlaneseq
    %v3492 = vshrl.u32 %v3491, 7
    %v3493 = vsub.s32 %v3490, %v3492
    %v3494 = vrot.slane %v3480, %v3493
    %v3497 = vlaneseq
    %vm3498 = vcmp.ge.s32.totalorder %v3497, 0
    %vm3499 = vcmp.lt.s32.totalorder %v3497, 256
    %vm3500 = vmand %vm3498, %vm3499
    %3501 = vst.msk [vmem:[%s6] ss:$8 sm:$0x3] %vm3500, %v3487
    %3502 = vst.msk [vmem:[%s6] ss:$8 sm:$0x0] %vm3500, %v3487
    %s3503 = scalar_lea.vmem %s6, 32
    %3504 = vst.msk [vmem:[%s3503] ss:$8 sm:$0x3] %vm3500, %v3494
    %3505 = vst.msk [vmem:[%s3503] ss:$8 sm:$0x0] %vm3500, %v3494
    %v3506 = vstv %s232
    %v3507 = vmul.f32 %v3506, %v3117
    %v3508 = vmul.f32 %v3506, %v3118
    %v3509 = vadd.f32 %v3507, 0.0
    %v3510 = vadd.f32 %v3508, 0.0
    %v3511 = vstv %s241
    %v3512 = vmul.f32 %v3511, %v3152
    %v3513 = vmul.f32 %v3511, %v3153
    %v3514 = vadd.f32 %v3509, %v3512
    %v3515 = vadd.f32 %v3510, %v3513
    %v3516 = vstv %s233
    %v3517 = vmul.f32 %v3516, %v3175
    %v3518 = vmul.f32 %v3516, %v3176
    %v3519 = vadd.f32 %v3514, %v3517
    %v3520 = vadd.f32 %v3515, %v3518
    %v3521 = vstv %s242
    %v3522 = vmul.f32 %v3521, %v3198
    %v3523 = vmul.f32 %v3521, %v3199
    %v3524 = vadd.f32 %v3519, %v3522
    %v3525 = vadd.f32 %v3520, %v3523
    %v3526 = vstv %s234
    %v3527 = vmul.f32 %v3526, %v3213
    %v3528 = vmul.f32 %v3526, %v3214
    %v3529 = vadd.f32 %v3524, %v3527
    %v3530 = vadd.f32 %v3525, %v3528
    %v3531 = vstv %s243
    %v3532 = vmul.f32 %v3531, %v3228
    %v3533 = vmul.f32 %v3531, %v3229
    %v3534 = vadd.f32 %v3529, %v3532
    %v3535 = vadd.f32 %v3530, %v3533
    %v3536 = vstv %s235
    %v3537 = vmul.f32 %v3536, %v3251
    %v3538 = vmul.f32 %v3536, %v3252
    %v3539 = vadd.f32 %v3534, %v3537
    %v3540 = vadd.f32 %v3535, %v3538
    %v3541 = vstv %s244
    %v3542 = vmul.f32 %v3541, %v3274
    %v3543 = vmul.f32 %v3541, %v3275
    %v3544 = vadd.f32 %v3539, %v3542
    %v3545 = vadd.f32 %v3540, %v3543
    %v3546 = vstv %s236
    %v3547 = vmul.f32 %v3546, %v709
    %v3548 = vmul.f32 %v3546, %v710
    %v3549 = vmul.f32 %v3546, %v711
    %v3550 = vmul.f32 %v3546, %v712
    %v3555 = vrot.slane %v3549, 7
    %v3556 = vsel %vm3106, %v3555, %v3547
    %v3557 = vrot.slane %v3550, 7
    %v3558 = vsel %vm3106, %v3557, %v3548
    %v3561 = vadd.f32 %v3544, %v3556
    %v3562 = vadd.f32 %v3545, %v3558
    %v3563 = vstv %s245
    %v3564 = vmul.f32 %v3563, %v1046
    %v3565 = vmul.f32 %v3563, %v1047
    %v3566 = vmul.f32 %v3563, %v1048
    %v3567 = vmul.f32 %v3563, %v1049
    %v3572 = vrot.slane %v3566, 7
    %v3573 = vsel %vm3106, %v3572, %v3564
    %v3574 = vrot.slane %v3567, 7
    %v3575 = vsel %vm3106, %v3574, %v3565
    %v3578 = vadd.f32 %v3561, %v3573
    %v3579 = vadd.f32 %v3562, %v3575
    %v3580 = vstv %s237
    %v3581 = vmul.f32 %v3580, %v1450
    %v3582 = vmul.f32 %v3580, %v1451
    %v3583 = vmul.f32 %v3580, %v1452
    %v3584 = vmul.f32 %v3580, %v1453
    %v3589 = vrot.slane %v3583, 7
    %v3590 = vsel %vm3106, %v3589, %v3581
    %v3591 = vrot.slane %v3584, 7
    %v3592 = vsel %vm3106, %v3591, %v3582
    %v3595 = vadd.f32 %v3578, %v3590
    %v3596 = vadd.f32 %v3579, %v3592
    %v3597 = vstv %s246
    %v3598 = vmul.f32 %v3597, %v1786
    %v3599 = vmul.f32 %v3597, %v1787
    %v3600 = vmul.f32 %v3597, %v1788
    %v3601 = vmul.f32 %v3597, %v1789
    %v3606 = vrot.slane %v3600, 7
    %v3607 = vsel %vm3106, %v3606, %v3598
    %v3608 = vrot.slane %v3601, 7
    %v3609 = vsel %vm3106, %v3608, %v3599
    %v3612 = vadd.f32 %v3595, %v3607
    %v3613 = vadd.f32 %v3596, %v3609
    %v3614 = vstv %s238
    %v3615 = vmul.f32 %v3614, %v3357
    %v3616 = vmul.f32 %v3614, %v3358
    %v3617 = vadd.f32 %v3612, %v3615
    %v3618 = vadd.f32 %v3613, %v3616
    %v3619 = vstv %s247
    %v3620 = vmul.f32 %v3619, %v3372
    %v3621 = vmul.f32 %v3619, %v3373
    %v3622 = vadd.f32 %v3617, %v3620
    %v3623 = vadd.f32 %v3618, %v3621
    %v3624 = vstv %s239
    %v3625 = vmul.f32 %v3624, %v2190
    %v3626 = vmul.f32 %v3624, %v2191
    %v3627 = vmul.f32 %v3624, %v2192
    %v3628 = vmul.f32 %v3624, %v2193
    %v3633 = vrot.slane %v3627, 7
    %v3634 = vsel %vm3106, %v3633, %v3625
    %v3635 = vrot.slane %v3628, 7
    %v3636 = vsel %vm3106, %v3635, %v3626
    %v3639 = vadd.f32 %v3622, %v3634
    %v3640 = vadd.f32 %v3623, %v3636
    %v3641 = vstv %s248
    %v3642 = vmul.f32 %v3641, %v2526
    %v3643 = vmul.f32 %v3641, %v2527
    %v3644 = vmul.f32 %v3641, %v2528
    %v3645 = vmul.f32 %v3641, %v2529
    %v3650 = vrot.slane %v3644, 7
    %v3651 = vsel %vm3106, %v3650, %v3642
    %v3652 = vrot.slane %v3645, 7
    %v3653 = vsel %vm3106, %v3652, %v3643
    %v3656 = vadd.f32 %v3639, %v3651
    %v3657 = vadd.f32 %v3640, %v3653
    %v3658 = vstv %s240
    %v3659 = vmul.f32 %v3658, %v2824
    %v3660 = vmul.f32 %v3658, %v2825
    %v3663 = vlaneseq
    %v3664 = vshrl.u32 %v3663, 7
    %v3665 = vsub.s32 0, %v3664
    %v3666 = vrot.slane %v3659, %v3665
    %v3667 = vlaneseq
    %v3668 = vshrl.u32 %v3667, 7
    %v3669 = vsub.s32 4, %v3668
    %v3670 = vrot.slane %v3659, %v3669
    %v3671 = vlaneseq
    %v3672 = vshrl.u32 %v3671, 7
    %v3673 = vsub.s32 0, %v3672
    %v3674 = vrot.slane %v3660, %v3673
    %v3675 = vlaneseq
    %v3676 = vshrl.u32 %v3675, 7
    %v3677 = vsub.s32 4, %v3676
    %v3678 = vrot.slane %v3660, %v3677
    %v3679 = vsel %vm3106, %v3674, %v3666
    %v3680 = vsel %vm3106, %v3678, %v3670
    %v3683 = vadd.f32 %v3656, %v3679
    %v3684 = vadd.f32 %v3657, %v3680
    %v3685 = vstv %s249
    %v3686 = vmul.f32 %v3685, %v3086
    %v3687 = vmul.f32 %v3685, %v3087
    %v3690 = vlaneseq
    %v3691 = vshrl.u32 %v3690, 7
    %v3692 = vsub.s32 0, %v3691
    %v3693 = vrot.slane %v3686, %v3692
    %v3694 = vlaneseq
    %v3695 = vshrl.u32 %v3694, 7
    %v3696 = vsub.s32 4, %v3695
    %v3697 = vrot.slane %v3686, %v3696
    %v3698 = vlaneseq
    %v3699 = vshrl.u32 %v3698, 7
    %v3700 = vsub.s32 0, %v3699
    %v3701 = vrot.slane %v3687, %v3700
    %v3702 = vlaneseq
    %v3703 = vshrl.u32 %v3702, 7
    %v3704 = vsub.s32 4, %v3703
    %v3705 = vrot.slane %v3687, %v3704
    %v3706 = vsel %vm3106, %v3701, %v3693
    %v3707 = vsel %vm3106, %v3705, %v3697
    %v3710 = vadd.f32 %v3683, %v3706
    %v3711 = vadd.f32 %v3684, %v3707
    %v3712 = vstv %s269
    %v3713 = vadd.f32 %v3710, %v3712
    %v3714 = vadd.f32 %v3711, %v3712
    %v3717 = vcombine.low %v3713, %v3714
    %v3719 = vunpack.c.l.s4 1966171168
    %v3720 = vunpack.c.0.s8 %v3719
    %v3721 = vlaneseq
    %v3722 = vshrl.u32 %v3721, 7
    %v3723 = vsub.s32 %v3720, %v3722
    %v3724 = vrot.slane %v3717, %v3723
    %v3725 = vcombine.high %v3724, %v3724
    %v3727 = vunpack.c.l.s4 1966171168
    %v3728 = vunpack.c.0.s8 %v3727
    %v3729 = vlaneseq
    %v3730 = vshrl.u32 %v3729, 7
    %v3731 = vsub.s32 %v3728, %v3730
    %v3732 = vrot.slane %v3724, %v3731
    %v3734 = vunpack.c.l.s4 1966171168
    %v3735 = vunpack.c.0.s8 %v3734
    %v3736 = vlaneseq
    %v3737 = vshrl.u32 %v3736, 7
    %v3738 = vsub.s32 %v3735, %v3737
    %v3739 = vrot.slane %v3725, %v3738
    %s3742 = scalar_lea.vmem %s6, 1
    %3743 = vst.msk [vmem:[%s3742] ss:$8 sm:$0x3] %vm3500, %v3732
    %3744 = vst.msk [vmem:[%s3742] ss:$8 sm:$0x0] %vm3500, %v3732
    %s3745 = scalar_lea.vmem %s6, 33
    %3746 = vst.msk [vmem:[%s3745] ss:$8 sm:$0x3] %vm3500, %v3739
    %3747 = vst.msk [vmem:[%s3745] ss:$8 sm:$0x0] %vm3500, %v3739
    %v3748 = vstv %s250
    %v3749 = vmul.f32 %v3748, %v3117
    %v3750 = vmul.f32 %v3748, %v3118
    %v3751 = vadd.f32 %v3749, 0.0
    %v3752 = vadd.f32 %v3750, 0.0
    %v3753 = vstv %s259
    %v3754 = vmul.f32 %v3753, %v3152
    %v3755 = vmul.f32 %v3753, %v3153
    %v3756 = vadd.f32 %v3751, %v3754
    %v3757 = vadd.f32 %v3752, %v3755
    %v3758 = vstv %s251
    %v3759 = vmul.f32 %v3758, %v3175
    %v3760 = vmul.f32 %v3758, %v3176
    %v3761 = vadd.f32 %v3756, %v3759
    %v3762 = vadd.f32 %v3757, %v3760
    %v3763 = vstv %s260
    %v3764 = vmul.f32 %v3763, %v3198
    %v3765 = vmul.f32 %v3763, %v3199
    %v3766 = vadd.f32 %v3761, %v3764
    %v3767 = vadd.f32 %v3762, %v3765
    %v3768 = vstv %s252
    %v3769 = vmul.f32 %v3768, %v3213
    %v3770 = vmul.f32 %v3768, %v3214
    %v3771 = vadd.f32 %v3766, %v3769
    %v3772 = vadd.f32 %v3767, %v3770
    %v3773 = vstv %s261
    %v3774 = vmul.f32 %v3773, %v3228
    %v3775 = vmul.f32 %v3773, %v3229
    %v3776 = vadd.f32 %v3771, %v3774
    %v3777 = vadd.f32 %v3772, %v3775
    %v3778 = vstv %s253
    %v3779 = vmul.f32 %v3778, %v3251
    %v3780 = vmul.f32 %v3778, %v3252
    %v3781 = vadd.f32 %v3776, %v3779
    %v3782 = vadd.f32 %v3777, %v3780
    %v3783 = vstv %s262
    %v3784 = vmul.f32 %v3783, %v3274
    %v3785 = vmul.f32 %v3783, %v3275
    %v3786 = vadd.f32 %v3781, %v3784
    %v3787 = vadd.f32 %v3782, %v3785
    %v3788 = vstv %s254
    %v3789 = vmul.f32 %v3788, %v709
    %v3790 = vmul.f32 %v3788, %v710
    %v3791 = vmul.f32 %v3788, %v711
    %v3792 = vmul.f32 %v3788, %v712
    %v3797 = vrot.slane %v3791, 7
    %v3798 = vsel %vm3106, %v3797, %v3789
    %v3799 = vrot.slane %v3792, 7
    %v3800 = vsel %vm3106, %v3799, %v3790
    %v3803 = vadd.f32 %v3786, %v3798
    %v3804 = vadd.f32 %v3787, %v3800
    %v3805 = vstv %s263
    %v3806 = vmul.f32 %v3805, %v1046
    %v3807 = vmul.f32 %v3805, %v1047
    %v3808 = vmul.f32 %v3805, %v1048
    %v3809 = vmul.f32 %v3805, %v1049
    %v3814 = vrot.slane %v3808, 7
    %v3815 = vsel %vm3106, %v3814, %v3806
    %v3816 = vrot.slane %v3809, 7
    %v3817 = vsel %vm3106, %v3816, %v3807
    %v3820 = vadd.f32 %v3803, %v3815
    %v3821 = vadd.f32 %v3804, %v3817
    %v3822 = vstv %s255
    %v3823 = vmul.f32 %v3822, %v1450
    %v3824 = vmul.f32 %v3822, %v1451
    %v3825 = vmul.f32 %v3822, %v1452
    %v3826 = vmul.f32 %v3822, %v1453
    %v3831 = vrot.slane %v3825, 7
    %v3832 = vsel %vm3106, %v3831, %v3823
    %v3833 = vrot.slane %v3826, 7
    %v3834 = vsel %vm3106, %v3833, %v3824
    %v3837 = vadd.f32 %v3820, %v3832
    %v3838 = vadd.f32 %v3821, %v3834
    %v3839 = vstv %s264
    %v3840 = vmul.f32 %v3839, %v1786
    %v3841 = vmul.f32 %v3839, %v1787
    %v3842 = vmul.f32 %v3839, %v1788
    %v3843 = vmul.f32 %v3839, %v1789
    %v3848 = vrot.slane %v3842, 7
    %v3849 = vsel %vm3106, %v3848, %v3840
    %v3850 = vrot.slane %v3843, 7
    %v3851 = vsel %vm3106, %v3850, %v3841
    %v3854 = vadd.f32 %v3837, %v3849
    %v3855 = vadd.f32 %v3838, %v3851
    %v3856 = vstv %s256
    %v3857 = vmul.f32 %v3856, %v3357
    %v3858 = vmul.f32 %v3856, %v3358
    %v3859 = vadd.f32 %v3854, %v3857
    %v3860 = vadd.f32 %v3855, %v3858
    %v3861 = vstv %s265
    %v3862 = vmul.f32 %v3861, %v3372
    %v3863 = vmul.f32 %v3861, %v3373
    %v3864 = vadd.f32 %v3859, %v3862
    %v3865 = vadd.f32 %v3860, %v3863
    %v3866 = vstv %s257
    %v3867 = vmul.f32 %v3866, %v2190
    %v3868 = vmul.f32 %v3866, %v2191
    %v3869 = vmul.f32 %v3866, %v2192
    %v3870 = vmul.f32 %v3866, %v2193
    %v3875 = vrot.slane %v3869, 7
    %v3876 = vsel %vm3106, %v3875, %v3867
    %v3877 = vrot.slane %v3870, 7
    %v3878 = vsel %vm3106, %v3877, %v3868
    %v3881 = vadd.f32 %v3864, %v3876
    %v3882 = vadd.f32 %v3865, %v3878
    %v3883 = vstv %s266
    %v3884 = vmul.f32 %v3883, %v2526
    %v3885 = vmul.f32 %v3883, %v2527
    %v3886 = vmul.f32 %v3883, %v2528
    %v3887 = vmul.f32 %v3883, %v2529
    %v3892 = vrot.slane %v3886, 7
    %v3893 = vsel %vm3106, %v3892, %v3884
    %v3894 = vrot.slane %v3887, 7
    %v3895 = vsel %vm3106, %v3894, %v3885
    %v3898 = vadd.f32 %v3881, %v3893
    %v3899 = vadd.f32 %v3882, %v3895
    %v3900 = vstv %s258
    %v3901 = vmul.f32 %v3900, %v2824
    %v3902 = vmul.f32 %v3900, %v2825
    %v3905 = vlaneseq
    %v3906 = vshrl.u32 %v3905, 7
    %v3907 = vsub.s32 0, %v3906
    %v3908 = vrot.slane %v3901, %v3907
    %v3909 = vlaneseq
    %v3910 = vshrl.u32 %v3909, 7
    %v3911 = vsub.s32 4, %v3910
    %v3912 = vrot.slane %v3901, %v3911
    %v3913 = vlaneseq
    %v3914 = vshrl.u32 %v3913, 7
    %v3915 = vsub.s32 0, %v3914
    %v3916 = vrot.slane %v3902, %v3915
    %v3917 = vlaneseq
    %v3918 = vshrl.u32 %v3917, 7
    %v3919 = vsub.s32 4, %v3918
    %v3920 = vrot.slane %v3902, %v3919
    %v3921 = vsel %vm3106, %v3916, %v3908
    %v3922 = vsel %vm3106, %v3920, %v3912
    %v3925 = vadd.f32 %v3898, %v3921
    %v3926 = vadd.f32 %v3899, %v3922
    %v3927 = vstv %s267
    %v3928 = vmul.f32 %v3927, %v3086
    %v3929 = vmul.f32 %v3927, %v3087
    %v3932 = vlaneseq
    %v3933 = vshrl.u32 %v3932, 7
    %v3934 = vsub.s32 0, %v3933
    %v3935 = vrot.slane %v3928, %v3934
    %v3936 = vlaneseq
    %v3937 = vshrl.u32 %v3936, 7
    %v3938 = vsub.s32 4, %v3937
    %v3939 = vrot.slane %v3928, %v3938
    %v3940 = vlaneseq
    %v3941 = vshrl.u32 %v3940, 7
    %v3942 = vsub.s32 0, %v3941
    %v3943 = vrot.slane %v3929, %v3942
    %v3944 = vlaneseq
    %v3945 = vshrl.u32 %v3944, 7
    %v3946 = vsub.s32 4, %v3945
    %v3947 = vrot.slane %v3929, %v3946
    %v3948 = vsel %vm3106, %v3943, %v3935
    %v3949 = vsel %vm3106, %v3947, %v3939
    %v3952 = vadd.f32 %v3925, %v3948
    %v3953 = vadd.f32 %v3926, %v3949
    %v3954 = vstv %s270
    %v3955 = vadd.f32 %v3952, %v3954
    %v3956 = vadd.f32 %v3953, %v3954
    %v3959 = vcombine.low %v3955, %v3956
    %v3961 = vunpack.c.l.s4 1966171168
    %v3962 = vunpack.c.0.s8 %v3961
    %v3963 = vlaneseq
    %v3964 = vshrl.u32 %v3963, 7
    %v3965 = vsub.s32 %v3962, %v3964
    %v3966 = vrot.slane %v3959, %v3965
    %v3967 = vcombine.high %v3966, %v3966
    %v3969 = vunpack.c.l.s4 1966171168
    %v3970 = vunpack.c.0.s8 %v3969
    %v3971 = vlaneseq
    %v3972 = vshrl.u32 %v3971, 7
    %v3973 = vsub.s32 %v3970, %v3972
    %v3974 = vrot.slane %v3966, %v3973
    %v3976 = vunpack.c.l.s4 1966171168
    %v3977 = vunpack.c.0.s8 %v3976
    %v3978 = vlaneseq
    %v3979 = vshrl.u32 %v3978, 7
    %v3980 = vsub.s32 %v3977, %v3979
    %v3981 = vrot.slane %v3967, %v3980
    %s3984 = scalar_lea.vmem %s6, 2
    %3985 = vst.msk [vmem:[%s3984] ss:$8 sm:$0x3] %vm3500, %v3974
    %3986 = vst.msk [vmem:[%s3984] ss:$8 sm:$0x0] %vm3500, %v3974
    %s3987 = scalar_lea.vmem %s6, 34
    %3988 = vst.msk [vmem:[%s3987] ss:$8 sm:$0x3] %vm3500, %v3981
    %3989 = vst.msk [vmem:[%s3987] ss:$8 sm:$0x0] %vm3500, %v3981
    %v3990 = vmul.f32 %v3119, %v3175
    %v3991 = vmul.f32 %v3119, %v3176
    %v3992 = vadd.f32 %v3990, 0.0
    %v3993 = vadd.f32 %v3991, 0.0
    %v3994 = vmul.f32 %v3154, %v3198
    %v3995 = vmul.f32 %v3154, %v3199
    %v3996 = vadd.f32 %v3992, %v3994
    %v3997 = vadd.f32 %v3993, %v3995
    %v3998 = vmul.f32 %v3177, %v3213
    %v3999 = vmul.f32 %v3177, %v3214
    %v4000 = vadd.f32 %v3996, %v3998
    %v4001 = vadd.f32 %v3997, %v3999
    %v4002 = vmul.f32 %v3200, %v3228
    %v4003 = vmul.f32 %v3200, %v3229
    %v4004 = vadd.f32 %v4000, %v4002
    %v4005 = vadd.f32 %v4001, %v4003
    %4006 = vrot.lane.b32.xlu0 %v3164, 15
    %v4007 = vpop.permute.xlu0 %4006
    %4008 = vrot.lane.b32.xlu0 %v3166, 15
    %v4009 = vpop.permute.xlu0 %4008
    %v4010 = vsel %vm1130, %v4007, %v4009
    %v4013 = vsel %vm1130, 0.0, %v4007
    %v4014 = vld [vmem:[%s1139] ss:$8 sm:$0x3]
    %v4016 = vlaneseq
    %v4017 = vshrl.u32 %v4016, 7
    %v4018 = vsub.s32 0, %v4017
    %v4019 = vrot.slane %v4014, %v4018
    %v4020 = vlaneseq
    %v4021 = vshrl.u32 %v4020, 7
    %v4022 = vsub.s32 1, %v4021
    %v4023 = vrot.slane %v4014, %v4022
    %v4026 = vmul.f32 %v4013, %v4019
    %v4027 = vmul.f32 %v4010, %v4023
    %v4028 = vmul.f32 %v3215, %v4026
    %v4029 = vmul.f32 %v3215, %v4027
    %v4030 = vadd.f32 %v4004, %v4028
    %v4031 = vadd.f32 %v4005, %v4029
    %4032 = vrot.lane.b32.xlu0 %v3187, 15
    %v4033 = vpop.permute.xlu0 %4032
    %4034 = vrot.lane.b32.xlu0 %v3189, 15
    %v4035 = vpop.permute.xlu0 %4034
    %v4036 = vsel %vm1130, %v4033, %v4035
    %v4039 = vsel %vm1130, 0.0, %v4033
    %v4040 = vmul.f32 %v4039, %v4019
    %v4041 = vmul.f32 %v4036, %v4023
    %v4042 = vmul.f32 %v3230, %v4040
    %v4043 = vmul.f32 %v3230, %v4041
    %v4044 = vadd.f32 %v4030, %v4042
    %v4045 = vadd.f32 %v4031, %v4043
    %v4046 = vmul.f32 %v3253, %v709
    %v4047 = vmul.f32 %v3253, %v710
    %v4048 = vmul.f32 %v3253, %v711
    %v4049 = vmul.f32 %v3253, %v712
    %v4054 = vrot.slane %v4048, 7
    %v4055 = vsel %vm3106, %v4054, %v4046
    %v4056 = vrot.slane %v4049, 7
    %v4057 = vsel %vm3106, %v4056, %v4047
    %v4060 = vadd.f32 %v4044, %v4055
    %v4061 = vadd.f32 %v4045, %v4057
    %v4062 = vmul.f32 %v3276, %v1046
    %v4063 = vmul.f32 %v3276, %v1047
    %v4064 = vmul.f32 %v3276, %v1048
    %v4065 = vmul.f32 %v3276, %v1049
    %v4070 = vrot.slane %v4064, 7
    %v4071 = vsel %vm3106, %v4070, %v4062
    %v4072 = vrot.slane %v4065, 7
    %v4073 = vsel %vm3106, %v4072, %v4063
    %v4076 = vadd.f32 %v4060, %v4071
    %v4077 = vadd.f32 %v4061, %v4073
    %v4078 = vmul.f32 %v3281, %v1450
    %v4079 = vmul.f32 %v3281, %v1451
    %v4080 = vmul.f32 %v3281, %v1452
    %v4081 = vmul.f32 %v3281, %v1453
    %v4086 = vrot.slane %v4080, 7
    %v4087 = vsel %vm3106, %v4086, %v4078
    %v4088 = vrot.slane %v4081, 7
    %v4089 = vsel %vm3106, %v4088, %v4079
    %v4092 = vadd.f32 %v4076, %v4087
    %v4093 = vadd.f32 %v4077, %v4089
    %v4094 = vmul.f32 %v3298, %v1786
    %v4095 = vmul.f32 %v3298, %v1787
    %v4096 = vmul.f32 %v3298, %v1788
    %v4097 = vmul.f32 %v3298, %v1789
    %v4102 = vrot.slane %v4096, 7
    %v4103 = vsel %vm3106, %v4102, %v4094
    %v4104 = vrot.slane %v4097, 7
    %v4105 = vsel %vm3106, %v4104, %v4095
    %v4108 = vadd.f32 %v4092, %v4103
    %v4109 = vadd.f32 %v4093, %v4105
    %v4114 = vrot.slane %v711, 7
    %v4115 = vsel %vm3106, %v4114, %v709
    %v4116 = vrot.slane %v712, 7
    %v4117 = vsel %vm3106, %v4116, %v710
    %4118 = vrot.lane.b32.xlu0 %v4115, 127
    %v4119 = vpop.permute.xlu0 %4118
    %4120 = vrot.lane.b32.xlu0 %v4117, 127
    %v4121 = vpop.permute.xlu0 %4120
    %v4122 = vsel %vm1352, %v4119, %v4121
    %v4125 = vsel %vm1352, %v4121, 0.0
    %v4126 = vld [vmem:[%s1361] ss:$8 sm:$0x3]
    %v4128 = vlaneseq
    %v4129 = vshrl.u32 %v4128, 7
    %v4130 = vsub.s32 0, %v4129
    %v4131 = vrot.slane %v4126, %v4130
    %v4132 = vlaneseq
    %v4133 = vshrl.u32 %v4132, 7
    %v4134 = vsub.s32 1, %v4133
    %v4135 = vrot.slane %v4126, %v4134
    %v4138 = vmul.f32 %v4122, %v4131
    %v4139 = vmul.f32 %v4125, %v4135
    %v4140 = vmul.f32 %v3315, %v4138
    %v4141 = vmul.f32 %v3315, %v4139
    %v4142 = vadd.f32 %v4108, %v4140
    %v4143 = vadd.f32 %v4109, %v4141
    %v4148 = vrot.slane %v1048, 7
    %v4149 = vsel %vm3106, %v4148, %v1046
    %v4150 = vrot.slane %v1049, 7
    %v4151 = vsel %vm3106, %v4150, %v1047
    %4152 = vrot.lane.b32.xlu0 %v4149, 127
    %v4153 = vpop.permute.xlu0 %4152
    %4154 = vrot.lane.b32.xlu0 %v4151, 127
    %v4155 = vpop.permute.xlu0 %4154
    %v4156 = vsel %vm1352, %v4153, %v4155
    %v4159 = vsel %vm1352, %v4155, 0.0
    %v4160 = vmul.f32 %v4156, %v4131
    %v4161 = vmul.f32 %v4159, %v4135
    %v4162 = vmul.f32 %v3332, %v4160
    %v4163 = vmul.f32 %v3332, %v4161
    %v4164 = vadd.f32 %v4142, %v4162
    %v4165 = vadd.f32 %v4143, %v4163
    %v4166 = vmul.f32 %v3359, %v2190
    %v4167 = vmul.f32 %v3359, %v2191
    %v4168 = vmul.f32 %v3359, %v2192
    %v4169 = vmul.f32 %v3359, %v2193
    %v4174 = vrot.slane %v4168, 7
    %v4175 = vsel %vm3106, %v4174, %v4166
    %v4176 = vrot.slane %v4169, 7
    %v4177 = vsel %vm3106, %v4176, %v4167
    %v4180 = vadd.f32 %v4164, %v4175
    %v4181 = vadd.f32 %v4165, %v4177
    %v4182 = vmul.f32 %v3374, %v2526
    %v4183 = vmul.f32 %v3374, %v2527
    %v4184 = vmul.f32 %v3374, %v2528
    %v4185 = vmul.f32 %v3374, %v2529
    %v4190 = vrot.slane %v4184, 7
    %v4191 = vsel %vm3106, %v4190, %v4182
    %v4192 = vrot.slane %v4185, 7
    %v4193 = vsel %vm3106, %v4192, %v4183
    %v4196 = vadd.f32 %v4180, %v4191
    %v4197 = vadd.f32 %v4181, %v4193
    %v4198 = vmul.f32 %v3379, %v2824
    %v4199 = vmul.f32 %v3379, %v2825
    %v4202 = vlaneseq
    %v4203 = vshrl.u32 %v4202, 7
    %v4204 = vsub.s32 0, %v4203
    %v4205 = vrot.slane %v4198, %v4204
    %v4206 = vlaneseq
    %v4207 = vshrl.u32 %v4206, 7
    %v4208 = vsub.s32 4, %v4207
    %v4209 = vrot.slane %v4198, %v4208
    %v4210 = vlaneseq
    %v4211 = vshrl.u32 %v4210, 7
    %v4212 = vsub.s32 0, %v4211
    %v4213 = vrot.slane %v4199, %v4212
    %v4214 = vlaneseq
    %v4215 = vshrl.u32 %v4214, 7
    %v4216 = vsub.s32 4, %v4215
    %v4217 = vrot.slane %v4199, %v4216
    %v4218 = vsel %vm3106, %v4213, %v4205
    %v4219 = vsel %vm3106, %v4217, %v4209
    %v4222 = vadd.f32 %v4196, %v4218
    %v4223 = vadd.f32 %v4197, %v4219
    %v4224 = vmul.f32 %v3396, %v3086
    %v4225 = vmul.f32 %v3396, %v3087
    %v4228 = vlaneseq
    %v4229 = vshrl.u32 %v4228, 7
    %v4230 = vsub.s32 0, %v4229
    %v4231 = vrot.slane %v4224, %v4230
    %v4232 = vlaneseq
    %v4233 = vshrl.u32 %v4232, 7
    %v4234 = vsub.s32 4, %v4233
    %v4235 = vrot.slane %v4224, %v4234
    %v4236 = vlaneseq
    %v4237 = vshrl.u32 %v4236, 7
    %v4238 = vsub.s32 0, %v4237
    %v4239 = vrot.slane %v4225, %v4238
    %v4240 = vlaneseq
    %v4241 = vshrl.u32 %v4240, 7
    %v4242 = vsub.s32 4, %v4241
    %v4243 = vrot.slane %v4225, %v4242
    %v4244 = vsel %vm3106, %v4239, %v4231
    %v4245 = vsel %vm3106, %v4243, %v4235
    %v4248 = vadd.f32 %v4222, %v4244
    %v4249 = vadd.f32 %v4223, %v4245
    %4250 = vrot.lane.b32.xlu0 %v3164, 127
    %v4251 = vpop.permute.xlu0 %4250
    %4252 = vrot.lane.b32.xlu0 %v3166, 127
    %v4253 = vpop.permute.xlu0 %4252
    %v4254 = vsel %vm1352, %v4251, %v4253
    %v4257 = vsel %vm1352, %v4253, 0.0
    %v4258 = vmul.f32 %v4254, %v4131
    %v4259 = vmul.f32 %v4257, %v4135
    %v4260 = vmul.f32 %v3413, %v4258
    %v4261 = vmul.f32 %v3413, %v4259
    %v4262 = vadd.f32 %v4248, %v4260
    %v4263 = vadd.f32 %v4249, %v4261
    %4264 = vrot.lane.b32.xlu0 %v3187, 127
    %v4265 = vpop.permute.xlu0 %4264
    %4266 = vrot.lane.b32.xlu0 %v3189, 127
    %v4267 = vpop.permute.xlu0 %4266
    %v4268 = vsel %vm1352, %v4265, %v4267
    %v4271 = vsel %vm1352, %v4267, 0.0
    %v4272 = vmul.f32 %v4268, %v4131
    %v4273 = vmul.f32 %v4271, %v4135
    %v4274 = vmul.f32 %v3440, %v4272
    %v4275 = vmul.f32 %v3440, %v4273
    %v4276 = vadd.f32 %v4262, %v4274
    %v4277 = vadd.f32 %v4263, %v4275
    %v4278 = vadd.f32 %v4276, %v3467
    %v4279 = vadd.f32 %v4277, %v3467
    %v4282 = vcombine.low %v4278, %v4279
    %v4284 = vunpack.c.l.s4 1966171168
    %v4285 = vunpack.c.0.s8 %v4284
    %v4286 = vlaneseq
    %v4287 = vshrl.u32 %v4286, 7
    %v4288 = vsub.s32 %v4285, %v4287
    %v4289 = vrot.slane %v4282, %v4288
    %v4290 = vcombine.high %v4289, %v4289
    %v4292 = vunpack.c.l.s4 1966171168
    %v4293 = vunpack.c.0.s8 %v4292
    %v4294 = vlaneseq
    %v4295 = vshrl.u32 %v4294, 7
    %v4296 = vsub.s32 %v4293, %v4295
    %v4297 = vrot.slane %v4289, %v4296
    %v4299 = vunpack.c.l.s4 1966171168
    %v4300 = vunpack.c.0.s8 %v4299
    %v4301 = vlaneseq
    %v4302 = vshrl.u32 %v4301, 7
    %v4303 = vsub.s32 %v4300, %v4302
    %v4304 = vrot.slane %v4290, %v4303
    %s4307 = scalar_lea.vmem %s6, 3
    %4308 = vst.msk [vmem:[%s4307] ss:$8 sm:$0x3] %vm3500, %v4297
    %4309 = vst.msk [vmem:[%s4307] ss:$8 sm:$0x0] %vm3500, %v4297
    %s4310 = scalar_lea.vmem %s6, 35
    %4311 = vst.msk [vmem:[%s4310] ss:$8 sm:$0x3] %vm3500, %v4304
    %4312 = vst.msk [vmem:[%s4310] ss:$8 sm:$0x0] %vm3500, %v4304
    %v4313 = vmul.f32 %v3506, %v3175
    %v4314 = vmul.f32 %v3506, %v3176
    %v4315 = vadd.f32 %v4313, 0.0
    %v4316 = vadd.f32 %v4314, 0.0
    %v4317 = vmul.f32 %v3511, %v3198
    %v4318 = vmul.f32 %v3511, %v3199
    %v4319 = vadd.f32 %v4315, %v4317
    %v4320 = vadd.f32 %v4316, %v4318
    %v4321 = vmul.f32 %v3516, %v3213
    %v4322 = vmul.f32 %v3516, %v3214
    %v4323 = vadd.f32 %v4319, %v4321
    %v4324 = vadd.f32 %v4320, %v4322
    %v4325 = vmul.f32 %v3521, %v3228
    %v4326 = vmul.f32 %v3521, %v3229
    %v4327 = vadd.f32 %v4323, %v4325
    %v4328 = vadd.f32 %v4324, %v4326
    %v4329 = vmul.f32 %v3526, %v4026
    %v4330 = vmul.f32 %v3526, %v4027
    %v4331 = vadd.f32 %v4327, %v4329
    %v4332 = vadd.f32 %v4328, %v4330
    %v4333 = vmul.f32 %v3531, %v4040
    %v4334 = vmul.f32 %v3531, %v4041
    %v4335 = vadd.f32 %v4331, %v4333
    %v4336 = vadd.f32 %v4332, %v4334
    %v4337 = vmul.f32 %v3536, %v709
    %v4338 = vmul.f32 %v3536, %v710
    %v4339 = vmul.f32 %v3536, %v711
    %v4340 = vmul.f32 %v3536, %v712
    %v4345 = vrot.slane %v4339, 7
    %v4346 = vsel %vm3106, %v4345, %v4337
    %v4347 = vrot.slane %v4340, 7
    %v4348 = vsel %vm3106, %v4347, %v4338
    %v4351 = vadd.f32 %v4335, %v4346
    %v4352 = vadd.f32 %v4336, %v4348
    %v4353 = vmul.f32 %v3541, %v1046
    %v4354 = vmul.f32 %v3541, %v1047
    %v4355 = vmul.f32 %v3541, %v1048
    %v4356 = vmul.f32 %v3541, %v1049
    %v4361 = vrot.slane %v4355, 7
    %v4362 = vsel %vm3106, %v4361, %v4353
    %v4363 = vrot.slane %v4356, 7
    %v4364 = vsel %vm3106, %v4363, %v4354
    %v4367 = vadd.f32 %v4351, %v4362
    %v4368 = vadd.f32 %v4352, %v4364
    %v4369 = vmul.f32 %v3546, %v1450
    %v4370 = vmul.f32 %v3546, %v1451
    %v4371 = vmul.f32 %v3546, %v1452
    %v4372 = vmul.f32 %v3546, %v1453
    %v4377 = vrot.slane %v4371, 7
    %v4378 = vsel %vm3106, %v4377, %v4369
    %v4379 = vrot.slane %v4372, 7
    %v4380 = vsel %vm3106, %v4379, %v4370
    %v4383 = vadd.f32 %v4367, %v4378
    %v4384 = vadd.f32 %v4368, %v4380
    %v4385 = vmul.f32 %v3563, %v1786
    %v4386 = vmul.f32 %v3563, %v1787
    %v4387 = vmul.f32 %v3563, %v1788
    %v4388 = vmul.f32 %v3563, %v1789
    %v4393 = vrot.slane %v4387, 7
    %v4394 = vsel %vm3106, %v4393, %v4385
    %v4395 = vrot.slane %v4388, 7
    %v4396 = vsel %vm3106, %v4395, %v4386
    %v4399 = vadd.f32 %v4383, %v4394
    %v4400 = vadd.f32 %v4384, %v4396
    %v4401 = vmul.f32 %v3580, %v4138
    %v4402 = vmul.f32 %v3580, %v4139
    %v4403 = vadd.f32 %v4399, %v4401
    %v4404 = vadd.f32 %v4400, %v4402
    %v4405 = vmul.f32 %v3597, %v4160
    %v4406 = vmul.f32 %v3597, %v4161
    %v4407 = vadd.f32 %v4403, %v4405
    %v4408 = vadd.f32 %v4404, %v4406
    %v4409 = vmul.f32 %v3614, %v2190
    %v4410 = vmul.f32 %v3614, %v2191
    %v4411 = vmul.f32 %v3614, %v2192
    %v4412 = vmul.f32 %v3614, %v2193
    %v4417 = vrot.slane %v4411, 7
    %v4418 = vsel %vm3106, %v4417, %v4409
    %v4419 = vrot.slane %v4412, 7
    %v4420 = vsel %vm3106, %v4419, %v4410
    %v4423 = vadd.f32 %v4407, %v4418
    %v4424 = vadd.f32 %v4408, %v4420
    %v4425 = vmul.f32 %v3619, %v2526
    %v4426 = vmul.f32 %v3619, %v2527
    %v4427 = vmul.f32 %v3619, %v2528
    %v4428 = vmul.f32 %v3619, %v2529
    %v4433 = vrot.slane %v4427, 7
    %v4434 = vsel %vm3106, %v4433, %v4425
    %v4435 = vrot.slane %v4428, 7
    %v4436 = vsel %vm3106, %v4435, %v4426
    %v4439 = vadd.f32 %v4423, %v4434
    %v4440 = vadd.f32 %v4424, %v4436
    %v4441 = vmul.f32 %v3624, %v2824
    %v4442 = vmul.f32 %v3624, %v2825
    %v4445 = vlaneseq
    %v4446 = vshrl.u32 %v4445, 7
    %v4447 = vsub.s32 0, %v4446
    %v4448 = vrot.slane %v4441, %v4447
    %v4449 = vlaneseq
    %v4450 = vshrl.u32 %v4449, 7
    %v4451 = vsub.s32 4, %v4450
    %v4452 = vrot.slane %v4441, %v4451
    %v4453 = vlaneseq
    %v4454 = vshrl.u32 %v4453, 7
    %v4455 = vsub.s32 0, %v4454
    %v4456 = vrot.slane %v4442, %v4455
    %v4457 = vlaneseq
    %v4458 = vshrl.u32 %v4457, 7
    %v4459 = vsub.s32 4, %v4458
    %v4460 = vrot.slane %v4442, %v4459
    %v4461 = vsel %vm3106, %v4456, %v4448
    %v4462 = vsel %vm3106, %v4460, %v4452
    %v4465 = vadd.f32 %v4439, %v4461
    %v4466 = vadd.f32 %v4440, %v4462
    %v4467 = vmul.f32 %v3641, %v3086
    %v4468 = vmul.f32 %v3641, %v3087
    %v4471 = vlaneseq
    %v4472 = vshrl.u32 %v4471, 7
    %v4473 = vsub.s32 0, %v4472
    %v4474 = vrot.slane %v4467, %v4473
    %v4475 = vlaneseq
    %v4476 = vshrl.u32 %v4475, 7
    %v4477 = vsub.s32 4, %v4476
    %v4478 = vrot.slane %v4467, %v4477
    %v4479 = vlaneseq
    %v4480 = vshrl.u32 %v4479, 7
    %v4481 = vsub.s32 0, %v4480
    %v4482 = vrot.slane %v4468, %v4481
    %v4483 = vlaneseq
    %v4484 = vshrl.u32 %v4483, 7
    %v4485 = vsub.s32 4, %v4484
    %v4486 = vrot.slane %v4468, %v4485
    %v4487 = vsel %vm3106, %v4482, %v4474
    %v4488 = vsel %vm3106, %v4486, %v4478
    %v4491 = vadd.f32 %v4465, %v4487
    %v4492 = vadd.f32 %v4466, %v4488
    %v4493 = vmul.f32 %v3658, %v4258
    %v4494 = vmul.f32 %v3658, %v4259
    %v4495 = vadd.f32 %v4491, %v4493
    %v4496 = vadd.f32 %v4492, %v4494
    %v4497 = vmul.f32 %v3685, %v4272
    %v4498 = vmul.f32 %v3685, %v4273
    %v4499 = vadd.f32 %v4495, %v4497
    %v4500 = vadd.f32 %v4496, %v4498
    %v4501 = vadd.f32 %v4499, %v3712
    %v4502 = vadd.f32 %v4500, %v3712
    %v4505 = vcombine.low %v4501, %v4502
    %v4507 = vunpack.c.l.s4 1966171168
    %v4508 = vunpack.c.0.s8 %v4507
    %v4509 = vlaneseq
    %v4510 = vshrl.u32 %v4509, 7
    %v4511 = vsub.s32 %v4508, %v4510
    %v4512 = vrot.slane %v4505, %v4511
    %v4513 = vcombine.high %v4512, %v4512
    %v4515 = vunpack.c.l.s4 1966171168
    %v4516 = vunpack.c.0.s8 %v4515
    %v4517 = vlaneseq
    %v4518 = vshrl.u32 %v4517, 7
    %v4519 = vsub.s32 %v4516, %v4518
    %v4520 = vrot.slane %v4512, %v4519
    %v4522 = vunpack.c.l.s4 1966171168
    %v4523 = vunpack.c.0.s8 %v4522
    %v4524 = vlaneseq
    %v4525 = vshrl.u32 %v4524, 7
    %v4526 = vsub.s32 %v4523, %v4525
    %v4527 = vrot.slane %v4513, %v4526
    %s4530 = scalar_lea.vmem %s6, 4
    %4531 = vst.msk [vmem:[%s4530] ss:$8 sm:$0x3] %vm3500, %v4520
    %4532 = vst.msk [vmem:[%s4530] ss:$8 sm:$0x0] %vm3500, %v4520
    %s4533 = scalar_lea.vmem %s6, 36
    %4534 = vst.msk [vmem:[%s4533] ss:$8 sm:$0x3] %vm3500, %v4527
    %4535 = vst.msk [vmem:[%s4533] ss:$8 sm:$0x0] %vm3500, %v4527
    %v4536 = vmul.f32 %v3748, %v3175
    %v4537 = vmul.f32 %v3748, %v3176
    %v4538 = vadd.f32 %v4536, 0.0
    %v4539 = vadd.f32 %v4537, 0.0
    %v4540 = vmul.f32 %v3753, %v3198
    %v4541 = vmul.f32 %v3753, %v3199
    %v4542 = vadd.f32 %v4538, %v4540
    %v4543 = vadd.f32 %v4539, %v4541
    %v4544 = vmul.f32 %v3758, %v3213
    %v4545 = vmul.f32 %v3758, %v3214
    %v4546 = vadd.f32 %v4542, %v4544
    %v4547 = vadd.f32 %v4543, %v4545
    %v4548 = vmul.f32 %v3763, %v3228
    %v4549 = vmul.f32 %v3763, %v3229
    %v4550 = vadd.f32 %v4546, %v4548
    %v4551 = vadd.f32 %v4547, %v4549
    %v4552 = vmul.f32 %v3768, %v4026
    %v4553 = vmul.f32 %v3768, %v4027
    %v4554 = vadd.f32 %v4550, %v4552
    %v4555 = vadd.f32 %v4551, %v4553
    %v4556 = vmul.f32 %v3773, %v4040
    %v4557 = vmul.f32 %v3773, %v4041
    %v4558 = vadd.f32 %v4554, %v4556
    %v4559 = vadd.f32 %v4555, %v4557
    %v4560 = vmul.f32 %v3778, %v709
    %v4561 = vmul.f32 %v3778, %v710
    %v4562 = vmul.f32 %v3778, %v711
    %v4563 = vmul.f32 %v3778, %v712
    %v4568 = vrot.slane %v4562, 7
    %v4569 = vsel %vm3106, %v4568, %v4560
    %v4570 = vrot.slane %v4563, 7
    %v4571 = vsel %vm3106, %v4570, %v4561
    %v4574 = vadd.f32 %v4558, %v4569
    %v4575 = vadd.f32 %v4559, %v4571
    %v4576 = vmul.f32 %v3783, %v1046
    %v4577 = vmul.f32 %v3783, %v1047
    %v4578 = vmul.f32 %v3783, %v1048
    %v4579 = vmul.f32 %v3783, %v1049
    %v4584 = vrot.slane %v4578, 7
    %v4585 = vsel %vm3106, %v4584, %v4576
    %v4586 = vrot.slane %v4579, 7
    %v4587 = vsel %vm3106, %v4586, %v4577
    %v4590 = vadd.f32 %v4574, %v4585
    %v4591 = vadd.f32 %v4575, %v4587
    %v4592 = vmul.f32 %v3788, %v1450
    %v4593 = vmul.f32 %v3788, %v1451
    %v4594 = vmul.f32 %v3788, %v1452
    %v4595 = vmul.f32 %v3788, %v1453
    %v4600 = vrot.slane %v4594, 7
    %v4601 = vsel %vm3106, %v4600, %v4592
    %v4602 = vrot.slane %v4595, 7
    %v4603 = vsel %vm3106, %v4602, %v4593
    %v4606 = vadd.f32 %v4590, %v4601
    %v4607 = vadd.f32 %v4591, %v4603
    %v4608 = vmul.f32 %v3805, %v1786
    %v4609 = vmul.f32 %v3805, %v1787
    %v4610 = vmul.f32 %v3805, %v1788
    %v4611 = vmul.f32 %v3805, %v1789
    %v4616 = vrot.slane %v4610, 7
    %v4617 = vsel %vm3106, %v4616, %v4608
    %v4618 = vrot.slane %v4611, 7
    %v4619 = vsel %vm3106, %v4618, %v4609
    %v4622 = vadd.f32 %v4606, %v4617
    %v4623 = vadd.f32 %v4607, %v4619
    %v4624 = vmul.f32 %v3822, %v4138
    %v4625 = vmul.f32 %v3822, %v4139
    %v4626 = vadd.f32 %v4622, %v4624
    %v4627 = vadd.f32 %v4623, %v4625
    %v4628 = vmul.f32 %v3839, %v4160
    %v4629 = vmul.f32 %v3839, %v4161
    %v4630 = vadd.f32 %v4626, %v4628
    %v4631 = vadd.f32 %v4627, %v4629
    %v4632 = vmul.f32 %v3856, %v2190
    %v4633 = vmul.f32 %v3856, %v2191
    %v4634 = vmul.f32 %v3856, %v2192
    %v4635 = vmul.f32 %v3856, %v2193
    %v4640 = vrot.slane %v4634, 7
    %v4641 = vsel %vm3106, %v4640, %v4632
    %v4642 = vrot.slane %v4635, 7
    %v4643 = vsel %vm3106, %v4642, %v4633
    %v4646 = vadd.f32 %v4630, %v4641
    %v4647 = vadd.f32 %v4631, %v4643
    %v4648 = vmul.f32 %v3861, %v2526
    %v4649 = vmul.f32 %v3861, %v2527
    %v4650 = vmul.f32 %v3861, %v2528
    %v4651 = vmul.f32 %v3861, %v2529
    %v4656 = vrot.slane %v4650, 7
    %v4657 = vsel %vm3106, %v4656, %v4648
    %v4658 = vrot.slane %v4651, 7
    %v4659 = vsel %vm3106, %v4658, %v4649
    %v4662 = vadd.f32 %v4646, %v4657
    %v4663 = vadd.f32 %v4647, %v4659
    %v4664 = vmul.f32 %v3866, %v2824
    %v4665 = vmul.f32 %v3866, %v2825
    %v4668 = vlaneseq
    %v4669 = vshrl.u32 %v4668, 7
    %v4670 = vsub.s32 0, %v4669
    %v4671 = vrot.slane %v4664, %v4670
    %v4672 = vlaneseq
    %v4673 = vshrl.u32 %v4672, 7
    %v4674 = vsub.s32 4, %v4673
    %v4675 = vrot.slane %v4664, %v4674
    %v4676 = vlaneseq
    %v4677 = vshrl.u32 %v4676, 7
    %v4678 = vsub.s32 0, %v4677
    %v4679 = vrot.slane %v4665, %v4678
    %v4680 = vlaneseq
    %v4681 = vshrl.u32 %v4680, 7
    %v4682 = vsub.s32 4, %v4681
    %v4683 = vrot.slane %v4665, %v4682
    %v4684 = vsel %vm3106, %v4679, %v4671
    %v4685 = vsel %vm3106, %v4683, %v4675
    %v4688 = vadd.f32 %v4662, %v4684
    %v4689 = vadd.f32 %v4663, %v4685
    %v4690 = vmul.f32 %v3883, %v3086
    %v4691 = vmul.f32 %v3883, %v3087
    %v4694 = vlaneseq
    %v4695 = vshrl.u32 %v4694, 7
    %v4696 = vsub.s32 0, %v4695
    %v4697 = vrot.slane %v4690, %v4696
    %v4698 = vlaneseq
    %v4699 = vshrl.u32 %v4698, 7
    %v4700 = vsub.s32 4, %v4699
    %v4701 = vrot.slane %v4690, %v4700
    %v4702 = vlaneseq
    %v4703 = vshrl.u32 %v4702, 7
    %v4704 = vsub.s32 0, %v4703
    %v4705 = vrot.slane %v4691, %v4704
    %v4706 = vlaneseq
    %v4707 = vshrl.u32 %v4706, 7
    %v4708 = vsub.s32 4, %v4707
    %v4709 = vrot.slane %v4691, %v4708
    %v4710 = vsel %vm3106, %v4705, %v4697
    %v4711 = vsel %vm3106, %v4709, %v4701
    %v4714 = vadd.f32 %v4688, %v4710
    %v4715 = vadd.f32 %v4689, %v4711
    %v4716 = vmul.f32 %v3900, %v4258
    %v4717 = vmul.f32 %v3900, %v4259
    %v4718 = vadd.f32 %v4714, %v4716
    %v4719 = vadd.f32 %v4715, %v4717
    %v4720 = vmul.f32 %v3927, %v4272
    %v4721 = vmul.f32 %v3927, %v4273
    %v4722 = vadd.f32 %v4718, %v4720
    %v4723 = vadd.f32 %v4719, %v4721
    %v4724 = vadd.f32 %v4722, %v3954
    %v4725 = vadd.f32 %v4723, %v3954
    %v4728 = vcombine.low %v4724, %v4725
    %v4730 = vunpack.c.l.s4 1966171168
    %v4731 = vunpack.c.0.s8 %v4730
    %v4732 = vlaneseq
    %v4733 = vshrl.u32 %v4732, 7
    %v4734 = vsub.s32 %v4731, %v4733
    %v4735 = vrot.slane %v4728, %v4734
    %v4736 = vcombine.high %v4735, %v4735
    %v4738 = vunpack.c.l.s4 1966171168
    %v4739 = vunpack.c.0.s8 %v4738
    %v4740 = vlaneseq
    %v4741 = vshrl.u32 %v4740, 7
    %v4742 = vsub.s32 %v4739, %v4741
    %v4743 = vrot.slane %v4735, %v4742
    %v4745 = vunpack.c.l.s4 1966171168
    %v4746 = vunpack.c.0.s8 %v4745
    %v4747 = vlaneseq
    %v4748 = vshrl.u32 %v4747, 7
    %v4749 = vsub.s32 %v4746, %v4748
    %v4750 = vrot.slane %v4736, %v4749
    %s4753 = scalar_lea.vmem %s6, 5
    %4754 = vst.msk [vmem:[%s4753] ss:$8 sm:$0x3] %vm3500, %v4743
    %4755 = vst.msk [vmem:[%s4753] ss:$8 sm:$0x0] %vm3500, %v4743
    %s4756 = scalar_lea.vmem %s6, 37
    %4757 = vst.msk [vmem:[%s4756] ss:$8 sm:$0x3] %vm3500, %v4750
    %4758 = vst.msk [vmem:[%s4756] ss:$8 sm:$0x0] %vm3500, %v4750
    %v4759 = vmul.f32 %v3119, %v3251
    %v4760 = vmul.f32 %v3119, %v3252
    %v4761 = vadd.f32 %v4759, 0.0
    %v4762 = vadd.f32 %v4760, 0.0
    %v4763 = vmul.f32 %v3154, %v3274
    %v4764 = vmul.f32 %v3154, %v3275
    %v4765 = vadd.f32 %v4761, %v4763
    %v4766 = vadd.f32 %v4762, %v4764
    %v4767 = vmul.f32 %v3177, %v709
    %v4768 = vmul.f32 %v3177, %v710
    %v4769 = vmul.f32 %v3177, %v711
    %v4770 = vmul.f32 %v3177, %v712
    %v4775 = vrot.slane %v4769, 7
    %v4776 = vsel %vm3106, %v4775, %v4767
    %v4777 = vrot.slane %v4770, 7
    %v4778 = vsel %vm3106, %v4777, %v4768
    %v4781 = vadd.f32 %v4765, %v4776
    %v4782 = vadd.f32 %v4766, %v4778
    %v4783 = vmul.f32 %v3200, %v1046
    %v4784 = vmul.f32 %v3200, %v1047
    %v4785 = vmul.f32 %v3200, %v1048
    %v4786 = vmul.f32 %v3200, %v1049
    %v4791 = vrot.slane %v4785, 7
    %v4792 = vsel %vm3106, %v4791, %v4783
    %v4793 = vrot.slane %v4786, 7
    %v4794 = vsel %vm3106, %v4793, %v4784
    %v4797 = vadd.f32 %v4781, %v4792
    %v4798 = vadd.f32 %v4782, %v4794
    %v4799 = vmul.f32 %v3215, %v1450
    %v4800 = vmul.f32 %v3215, %v1451
    %v4801 = vmul.f32 %v3215, %v1452
    %v4802 = vmul.f32 %v3215, %v1453
    %v4807 = vrot.slane %v4801, 7
    %v4808 = vsel %vm3106, %v4807, %v4799
    %v4809 = vrot.slane %v4802, 7
    %v4810 = vsel %vm3106, %v4809, %v4800
    %v4813 = vadd.f32 %v4797, %v4808
    %v4814 = vadd.f32 %v4798, %v4810
    %v4815 = vmul.f32 %v3230, %v1786
    %v4816 = vmul.f32 %v3230, %v1787
    %v4817 = vmul.f32 %v3230, %v1788
    %v4818 = vmul.f32 %v3230, %v1789
    %v4823 = vrot.slane %v4817, 7
    %v4824 = vsel %vm3106, %v4823, %v4815
    %v4825 = vrot.slane %v4818, 7
    %v4826 = vsel %vm3106, %v4825, %v4816
    %v4829 = vadd.f32 %v4813, %v4824
    %v4830 = vadd.f32 %v4814, %v4826
    %v4831 = vmul.f32 %v3253, %v3357
    %v4832 = vmul.f32 %v3253, %v3358
    %v4833 = vadd.f32 %v4829, %v4831
    %v4834 = vadd.f32 %v4830, %v4832
    %v4835 = vmul.f32 %v3276, %v3372
    %v4836 = vmul.f32 %v3276, %v3373
    %v4837 = vadd.f32 %v4833, %v4835
    %v4838 = vadd.f32 %v4834, %v4836
    %v4839 = vmul.f32 %v3281, %v2190
    %v4840 = vmul.f32 %v3281, %v2191
    %v4841 = vmul.f32 %v3281, %v2192
    %v4842 = vmul.f32 %v3281, %v2193
    %v4847 = vrot.slane %v4841, 7
    %v4848 = vsel %vm3106, %v4847, %v4839
    %v4849 = vrot.slane %v4842, 7
    %v4850 = vsel %vm3106, %v4849, %v4840
    %v4853 = vadd.f32 %v4837, %v4848
    %v4854 = vadd.f32 %v4838, %v4850
    %v4855 = vmul.f32 %v3298, %v2526
    %v4856 = vmul.f32 %v3298, %v2527
    %v4857 = vmul.f32 %v3298, %v2528
    %v4858 = vmul.f32 %v3298, %v2529
    %v4863 = vrot.slane %v4857, 7
    %v4864 = vsel %vm3106, %v4863, %v4855
    %v4865 = vrot.slane %v4858, 7
    %v4866 = vsel %vm3106, %v4865, %v4856
    %v4869 = vadd.f32 %v4853, %v4864
    %v4870 = vadd.f32 %v4854, %v4866
    %v4871 = vmul.f32 %v3315, %v2824
    %v4872 = vmul.f32 %v3315, %v2825
    %v4875 = vlaneseq
    %v4876 = vshrl.u32 %v4875, 7
    %v4877 = vsub.s32 0, %v4876
    %v4878 = vrot.slane %v4871, %v4877
    %v4879 = vlaneseq
    %v4880 = vshrl.u32 %v4879, 7
    %v4881 = vsub.s32 4, %v4880
    %v4882 = vrot.slane %v4871, %v4881
    %v4883 = vlaneseq
    %v4884 = vshrl.u32 %v4883, 7
    %v4885 = vsub.s32 0, %v4884
    %v4886 = vrot.slane %v4872, %v4885
    %v4887 = vlaneseq
    %v4888 = vshrl.u32 %v4887, 7
    %v4889 = vsub.s32 4, %v4888
    %v4890 = vrot.slane %v4872, %v4889
    %v4891 = vsel %vm3106, %v4886, %v4878
    %v4892 = vsel %vm3106, %v4890, %v4882
    %v4895 = vadd.f32 %v4869, %v4891
    %v4896 = vadd.f32 %v4870, %v4892
    %v4897 = vmul.f32 %v3332, %v3086
    %v4898 = vmul.f32 %v3332, %v3087
    %v4901 = vlaneseq
    %v4902 = vshrl.u32 %v4901, 7
    %v4903 = vsub.s32 0, %v4902
    %v4904 = vrot.slane %v4897, %v4903
    %v4905 = vlaneseq
    %v4906 = vshrl.u32 %v4905, 7
    %v4907 = vsub.s32 4, %v4906
    %v4908 = vrot.slane %v4897, %v4907
    %v4909 = vlaneseq
    %v4910 = vshrl.u32 %v4909, 7
    %v4911 = vsub.s32 0, %v4910
    %v4912 = vrot.slane %v4898, %v4911
    %v4913 = vlaneseq
    %v4914 = vshrl.u32 %v4913, 7
    %v4915 = vsub.s32 4, %v4914
    %v4916 = vrot.slane %v4898, %v4915
    %v4917 = vsel %vm3106, %v4912, %v4904
    %v4918 = vsel %vm3106, %v4916, %v4908
    %v4921 = vadd.f32 %v4895, %v4917
    %v4922 = vadd.f32 %v4896, %v4918
    %4923 = vrot.lane.b32.xlu0 %v3240, 113
    %v4924 = vpop.permute.xlu0 %4923
    %4925 = vrot.lane.b32.xlu0 %v3242, 113
    %v4926 = vpop.permute.xlu0 %4925
    %v4927 = vsel %vm1986, %v4924, %v4926
    %v4930 = vsel %vm1986, %v4926, 0.0
    %v4931 = vld [vmem:[%s1995] ss:$8 sm:$0x3]
    %v4933 = vlaneseq
    %v4934 = vshrl.u32 %v4933, 7
    %v4935 = vsub.s32 0, %v4934
    %v4936 = vrot.slane %v4931, %v4935
    %v4937 = vlaneseq
    %v4938 = vshrl.u32 %v4937, 7
    %v4939 = vsub.s32 1, %v4938
    %v4940 = vrot.slane %v4931, %v4939
    %v4943 = vmul.f32 %v4927, %v4936
    %v4944 = vmul.f32 %v4930, %v4940
    %v4945 = vmul.f32 %v3359, %v4943
    %v4946 = vmul.f32 %v3359, %v4944
    %v4947 = vadd.f32 %v4921, %v4945
    %v4948 = vadd.f32 %v4922, %v4946
    %4949 = vrot.lane.b32.xlu0 %v3263, 113
    %v4950 = vpop.permute.xlu0 %4949
    %4951 = vrot.lane.b32.xlu0 %v3265, 113
    %v4952 = vpop.permute.xlu0 %4951
    %v4953 = vsel %vm1986, %v4950, %v4952
    %v4956 = vsel %vm1986, %v4952, 0.0
    %v4957 = vmul.f32 %v4953, %v4936
    %v4958 = vmul.f32 %v4956, %v4940
    %v4959 = vmul.f32 %v3374, %v4957
    %v4960 = vmul.f32 %v3374, %v4958
    %v4961 = vadd.f32 %v4947, %v4959
    %v4962 = vadd.f32 %v4948, %v4960
    %4963 = vrot.lane.b32.xlu0 %v4115, 112
    %v4964 = vpop.permute.xlu0 %4963
    %4965 = vrot.lane.b32.xlu0 %v4117, 112
    %v4966 = vpop.permute.xlu0 %4965
    %v4967 = vsel %vm2092, %v4964, %v4966
    %v4970 = vsel %vm2092, %v4966, 0.0
    %v4971 = vld [vmem:[%s2101] ss:$8 sm:$0x3]
    %v4973 = vlaneseq
    %v4974 = vshrl.u32 %v4973, 7
    %v4975 = vsub.s32 0, %v4974
    %v4976 = vrot.slane %v4971, %v4975
    %v4977 = vlaneseq
    %v4978 = vshrl.u32 %v4977, 7
    %v4979 = vsub.s32 1, %v4978
    %v4980 = vrot.slane %v4971, %v4979
    %v4983 = vmul.f32 %v4967, %v4976
    %v4984 = vmul.f32 %v4970, %v4980
    %v4985 = vmul.f32 %v3379, %v4983
    %v4986 = vmul.f32 %v3379, %v4984
    %v4987 = vadd.f32 %v4961, %v4985
    %v4988 = vadd.f32 %v4962, %v4986
    %4989 = vrot.lane.b32.xlu0 %v4149, 112
    %v4990 = vpop.permute.xlu0 %4989
    %4991 = vrot.lane.b32.xlu0 %v4151, 112
    %v4992 = vpop.permute.xlu0 %4991
    %v4993 = vsel %vm2092, %v4990, %v4992
    %v4996 = vsel %vm2092, %v4992, 0.0
    %v4997 = vmul.f32 %v4993, %v4976
    %v4998 = vmul.f32 %v4996, %v4980
    %v4999 = vmul.f32 %v3396, %v4997
    %v5000 = vmul.f32 %v3396, %v4998
    %v5001 = vadd.f32 %v4987, %v4999
    %v5002 = vadd.f32 %v4988, %v5000
    %5003 = vrot.lane.b32.xlu0 %v3240, 112
    %v5004 = vpop.permute.xlu0 %5003
    %5005 = vrot.lane.b32.xlu0 %v3242, 112
    %v5006 = vpop.permute.xlu0 %5005
    %v5007 = vsel %vm2092, %v5004, %v5006
    %v5010 = vsel %vm2092, %v5006, 0.0
    %v5011 = vmul.f32 %v5007, %v4976
    %v5012 = vmul.f32 %v5010, %v4980
    %v5013 = vmul.f32 %v3413, %v5011
    %v5014 = vmul.f32 %v3413, %v5012
    %v5015 = vadd.f32 %v5001, %v5013
    %v5016 = vadd.f32 %v5002, %v5014
    %5017 = vrot.lane.b32.xlu0 %v3263, 112
    %v5018 = vpop.permute.xlu0 %5017
    %5019 = vrot.lane.b32.xlu0 %v3265, 112
    %v5020 = vpop.permute.xlu0 %5019
    %v5021 = vsel %vm2092, %v5018, %v5020
    %v5024 = vsel %vm2092, %v5020, 0.0
    %v5025 = vmul.f32 %v5021, %v4976
    %v5026 = vmul.f32 %v5024, %v4980
    %v5027 = vmul.f32 %v3440, %v5025
    %v5028 = vmul.f32 %v3440, %v5026
    %v5029 = vadd.f32 %v5015, %v5027
    %v5030 = vadd.f32 %v5016, %v5028
    %v5031 = vadd.f32 %v5029, %v3467
    %v5032 = vadd.f32 %v5030, %v3467
    %v5035 = vcombine.low %v5031, %v5032
    %v5037 = vunpack.c.l.s4 1966171168
    %v5038 = vunpack.c.0.s8 %v5037
    %v5039 = vlaneseq
    %v5040 = vshrl.u32 %v5039, 7
    %v5041 = vsub.s32 %v5038, %v5040
    %v5042 = vrot.slane %v5035, %v5041
    %v5043 = vcombine.high %v5042, %v5042
    %v5045 = vunpack.c.l.s4 1966171168
    %v5046 = vunpack.c.0.s8 %v5045
    %v5047 = vlaneseq
    %v5048 = vshrl.u32 %v5047, 7
    %v5049 = vsub.s32 %v5046, %v5048
    %v5050 = vrot.slane %v5042, %v5049
    %v5052 = vunpack.c.l.s4 1966171168
    %v5053 = vunpack.c.0.s8 %v5052
    %v5054 = vlaneseq
    %v5055 = vshrl.u32 %v5054, 7
    %v5056 = vsub.s32 %v5053, %v5055
    %v5057 = vrot.slane %v5043, %v5056
    %s5060 = scalar_lea.vmem %s6, 6
    %5061 = vst.msk [vmem:[%s5060] ss:$8 sm:$0x3] %vm3500, %v5050
    %5062 = vst.msk [vmem:[%s5060] ss:$8 sm:$0x0] %vm3500, %v5050
    %s5063 = scalar_lea.vmem %s6, 38
    %5064 = vst.msk [vmem:[%s5063] ss:$8 sm:$0x3] %vm3500, %v5057
    %5065 = vst.msk [vmem:[%s5063] ss:$8 sm:$0x0] %vm3500, %v5057
    %v5066 = vmul.f32 %v3506, %v3251
    %v5067 = vmul.f32 %v3506, %v3252
    %v5068 = vadd.f32 %v5066, 0.0
    %v5069 = vadd.f32 %v5067, 0.0
    %v5070 = vmul.f32 %v3511, %v3274
    %v5071 = vmul.f32 %v3511, %v3275
    %v5072 = vadd.f32 %v5068, %v5070
    %v5073 = vadd.f32 %v5069, %v5071
    %v5074 = vmul.f32 %v3516, %v709
    %v5075 = vmul.f32 %v3516, %v710
    %v5076 = vmul.f32 %v3516, %v711
    %v5077 = vmul.f32 %v3516, %v712
    %v5082 = vrot.slane %v5076, 7
    %v5083 = vsel %vm3106, %v5082, %v5074
    %v5084 = vrot.slane %v5077, 7
    %v5085 = vsel %vm3106, %v5084, %v5075
    %v5088 = vadd.f32 %v5072, %v5083
    %v5089 = vadd.f32 %v5073, %v5085
    %v5090 = vmul.f32 %v3521, %v1046
    %v5091 = vmul.f32 %v3521, %v1047
    %v5092 = vmul.f32 %v3521, %v1048
    %v5093 = vmul.f32 %v3521, %v1049
    %v5098 = vrot.slane %v5092, 7
    %v5099 = vsel %vm3106, %v5098, %v5090
    %v5100 = vrot.slane %v5093, 7
    %v5101 = vsel %vm3106, %v5100, %v5091
    %v5104 = vadd.f32 %v5088, %v5099
    %v5105 = vadd.f32 %v5089, %v5101
    %v5106 = vmul.f32 %v3526, %v1450
    %v5107 = vmul.f32 %v3526, %v1451
    %v5108 = vmul.f32 %v3526, %v1452
    %v5109 = vmul.f32 %v3526, %v1453
    %v5114 = vrot.slane %v5108, 7
    %v5115 = vsel %vm3106, %v5114, %v5106
    %v5116 = vrot.slane %v5109, 7
    %v5117 = vsel %vm3106, %v5116, %v5107
    %v5120 = vadd.f32 %v5104, %v5115
    %v5121 = vadd.f32 %v5105, %v5117
    %v5122 = vmul.f32 %v3531, %v1786
    %v5123 = vmul.f32 %v3531, %v1787
    %v5124 = vmul.f32 %v3531, %v1788
    %v5125 = vmul.f32 %v3531, %v1789
    %v5130 = vrot.slane %v5124, 7
    %v5131 = vsel %vm3106, %v5130, %v5122
    %v5132 = vrot.slane %v5125, 7
    %v5133 = vsel %vm3106, %v5132, %v5123
    %v5136 = vadd.f32 %v5120, %v5131
    %v5137 = vadd.f32 %v5121, %v5133
    %v5138 = vmul.f32 %v3536, %v3357
    %v5139 = vmul.f32 %v3536, %v3358
    %v5140 = vadd.f32 %v5136, %v5138
    %v5141 = vadd.f32 %v5137, %v5139
    %v5142 = vmul.f32 %v3541, %v3372
    %v5143 = vmul.f32 %v3541, %v3373
    %v5144 = vadd.f32 %v5140, %v5142
    %v5145 = vadd.f32 %v5141, %v5143
    %v5146 = vmul.f32 %v3546, %v2190
    %v5147 = vmul.f32 %v3546, %v2191
    %v5148 = vmul.f32 %v3546, %v2192
    %v5149 = vmul.f32 %v3546, %v2193
    %v5154 = vrot.slane %v5148, 7
    %v5155 = vsel %vm3106, %v5154, %v5146
    %v5156 = vrot.slane %v5149, 7
    %v5157 = vsel %vm3106, %v5156, %v5147
    %v5160 = vadd.f32 %v5144, %v5155
    %v5161 = vadd.f32 %v5145, %v5157
    %v5162 = vmul.f32 %v3563, %v2526
    %v5163 = vmul.f32 %v3563, %v2527
    %v5164 = vmul.f32 %v3563, %v2528
    %v5165 = vmul.f32 %v3563, %v2529
    %v5170 = vrot.slane %v5164, 7
    %v5171 = vsel %vm3106, %v5170, %v5162
    %v5172 = vrot.slane %v5165, 7
    %v5173 = vsel %vm3106, %v5172, %v5163
    %v5176 = vadd.f32 %v5160, %v5171
    %v5177 = vadd.f32 %v5161, %v5173
    %v5178 = vmul.f32 %v3580, %v2824
    %v5179 = vmul.f32 %v3580, %v2825
    %v5182 = vlaneseq
    %v5183 = vshrl.u32 %v5182, 7
    %v5184 = vsub.s32 0, %v5183
    %v5185 = vrot.slane %v5178, %v5184
    %v5186 = vlaneseq
    %v5187 = vshrl.u32 %v5186, 7
    %v5188 = vsub.s32 4, %v5187
    %v5189 = vrot.slane %v5178, %v5188
    %v5190 = vlaneseq
    %v5191 = vshrl.u32 %v5190, 7
    %v5192 = vsub.s32 0, %v5191
    %v5193 = vrot.slane %v5179, %v5192
    %v5194 = vlaneseq
    %v5195 = vshrl.u32 %v5194, 7
    %v5196 = vsub.s32 4, %v5195
    %v5197 = vrot.slane %v5179, %v5196
    %v5198 = vsel %vm3106, %v5193, %v5185
    %v5199 = vsel %vm3106, %v5197, %v5189
    %v5202 = vadd.f32 %v5176, %v5198
    %v5203 = vadd.f32 %v5177, %v5199
    %v5204 = vmul.f32 %v3597, %v3086
    %v5205 = vmul.f32 %v3597, %v3087
    %v5208 = vlaneseq
    %v5209 = vshrl.u32 %v5208, 7
    %v5210 = vsub.s32 0, %v5209
    %v5211 = vrot.slane %v5204, %v5210
    %v5212 = vlaneseq
    %v5213 = vshrl.u32 %v5212, 7
    %v5214 = vsub.s32 4, %v5213
    %v5215 = vrot.slane %v5204, %v5214
    %v5216 = vlaneseq
    %v5217 = vshrl.u32 %v5216, 7
    %v5218 = vsub.s32 0, %v5217
    %v5219 = vrot.slane %v5205, %v5218
    %v5220 = vlaneseq
    %v5221 = vshrl.u32 %v5220, 7
    %v5222 = vsub.s32 4, %v5221
    %v5223 = vrot.slane %v5205, %v5222
    %v5224 = vsel %vm3106, %v5219, %v5211
    %v5225 = vsel %vm3106, %v5223, %v5215
    %v5228 = vadd.f32 %v5202, %v5224
    %v5229 = vadd.f32 %v5203, %v5225
    %v5230 = vmul.f32 %v3614, %v4943
    %v5231 = vmul.f32 %v3614, %v4944
    %v5232 = vadd.f32 %v5228, %v5230
    %v5233 = vadd.f32 %v5229, %v5231
    %v5234 = vmul.f32 %v3619, %v4957
    %v5235 = vmul.f32 %v3619, %v4958
    %v5236 = vadd.f32 %v5232, %v5234
    %v5237 = vadd.f32 %v5233, %v5235
    %v5238 = vmul.f32 %v3624, %v4983
    %v5239 = vmul.f32 %v3624, %v4984
    %v5240 = vadd.f32 %v5236, %v5238
    %v5241 = vadd.f32 %v5237, %v5239
    %v5242 = vmul.f32 %v3641, %v4997
    %v5243 = vmul.f32 %v3641, %v4998
    %v5244 = vadd.f32 %v5240, %v5242
    %v5245 = vadd.f32 %v5241, %v5243
    %v5246 = vmul.f32 %v3658, %v5011
    %v5247 = vmul.f32 %v3658, %v5012
    %v5248 = vadd.f32 %v5244, %v5246
    %v5249 = vadd.f32 %v5245, %v5247
    %v5250 = vmul.f32 %v3685, %v5025
    %v5251 = vmul.f32 %v3685, %v5026
    %v5252 = vadd.f32 %v5248, %v5250
    %v5253 = vadd.f32 %v5249, %v5251
    %v5254 = vadd.f32 %v5252, %v3712
    %v5255 = vadd.f32 %v5253, %v3712
    %v5258 = vcombine.low %v5254, %v5255
    %v5260 = vunpack.c.l.s4 1966171168
    %v5261 = vunpack.c.0.s8 %v5260
    %v5262 = vlaneseq
    %v5263 = vshrl.u32 %v5262, 7
    %v5264 = vsub.s32 %v5261, %v5263
    %v5265 = vrot.slane %v5258, %v5264
    %v5266 = vcombine.high %v5265, %v5265
    %v5268 = vunpack.c.l.s4 1966171168
    %v5269 = vunpack.c.0.s8 %v5268
    %v5270 = vlaneseq
    %v5271 = vshrl.u32 %v5270, 7
    %v5272 = vsub.s32 %v5269, %v5271
    %v5273 = vrot.slane %v5265, %v5272
    %v5275 = vunpack.c.l.s4 1966171168
    %v5276 = vunpack.c.0.s8 %v5275
    %v5277 = vlaneseq
    %v5278 = vshrl.u32 %v5277, 7
    %v5279 = vsub.s32 %v5276, %v5278
    %v5280 = vrot.slane %v5266, %v5279
    %s5283 = scalar_lea.vmem %s6, 7
    %5284 = vst.msk [vmem:[%s5283] ss:$8 sm:$0x3] %vm3500, %v5273
    %5285 = vst.msk [vmem:[%s5283] ss:$8 sm:$0x0] %vm3500, %v5273
    %s5286 = scalar_lea.vmem %s6, 39
    %5287 = vst.msk [vmem:[%s5286] ss:$8 sm:$0x3] %vm3500, %v5280
    %5288 = vst.msk [vmem:[%s5286] ss:$8 sm:$0x0] %vm3500, %v5280
    %v5289 = vmul.f32 %v3748, %v3251
    %v5290 = vmul.f32 %v3748, %v3252
    %v5291 = vadd.f32 %v5289, 0.0
    %v5292 = vadd.f32 %v5290, 0.0
    %v5293 = vmul.f32 %v3753, %v3274
    %v5294 = vmul.f32 %v3753, %v3275
    %v5295 = vadd.f32 %v5291, %v5293
    %v5296 = vadd.f32 %v5292, %v5294
    %v5297 = vmul.f32 %v3758, %v709
    %v5298 = vmul.f32 %v3758, %v710
    %v5299 = vmul.f32 %v3758, %v711
    %v5300 = vmul.f32 %v3758, %v712
    %v5305 = vrot.slane %v5299, 7
    %v5306 = vsel %vm3106, %v5305, %v5297
    %v5307 = vrot.slane %v5300, 7
    %v5308 = vsel %vm3106, %v5307, %v5298
    %v5311 = vadd.f32 %v5295, %v5306
    %v5312 = vadd.f32 %v5296, %v5308
    %v5313 = vmul.f32 %v3763, %v1046
    %v5314 = vmul.f32 %v3763, %v1047
    %v5315 = vmul.f32 %v3763, %v1048
    %v5316 = vmul.f32 %v3763, %v1049
    %v5321 = vrot.slane %v5315, 7
    %v5322 = vsel %vm3106, %v5321, %v5313
    %v5323 = vrot.slane %v5316, 7
    %v5324 = vsel %vm3106, %v5323, %v5314
    %v5327 = vadd.f32 %v5311, %v5322
    %v5328 = vadd.f32 %v5312, %v5324
    %v5329 = vmul.f32 %v3768, %v1450
    %v5330 = vmul.f32 %v3768, %v1451
    %v5331 = vmul.f32 %v3768, %v1452
    %v5332 = vmul.f32 %v3768, %v1453
    %v5337 = vrot.slane %v5331, 7
    %v5338 = vsel %vm3106, %v5337, %v5329
    %v5339 = vrot.slane %v5332, 7
    %v5340 = vsel %vm3106, %v5339, %v5330
    %v5343 = vadd.f32 %v5327, %v5338
    %v5344 = vadd.f32 %v5328, %v5340
    %v5345 = vmul.f32 %v3773, %v1786
    %v5346 = vmul.f32 %v3773, %v1787
    %v5347 = vmul.f32 %v3773, %v1788
    %v5348 = vmul.f32 %v3773, %v1789
    %v5353 = vrot.slane %v5347, 7
    %v5354 = vsel %vm3106, %v5353, %v5345
    %v5355 = vrot.slane %v5348, 7
    %v5356 = vsel %vm3106, %v5355, %v5346
    %v5359 = vadd.f32 %v5343, %v5354
    %v5360 = vadd.f32 %v5344, %v5356
    %v5361 = vmul.f32 %v3778, %v3357
    %v5362 = vmul.f32 %v3778, %v3358
    %v5363 = vadd.f32 %v5359, %v5361
    %v5364 = vadd.f32 %v5360, %v5362
    %v5365 = vmul.f32 %v3783, %v3372
    %v5366 = vmul.f32 %v3783, %v3373
    %v5367 = vadd.f32 %v5363, %v5365
    %v5368 = vadd.f32 %v5364, %v5366
    %v5369 = vmul.f32 %v3788, %v2190
    %v5370 = vmul.f32 %v3788, %v2191
    %v5371 = vmul.f32 %v3788, %v2192
    %v5372 = vmul.f32 %v3788, %v2193
    %v5377 = vrot.slane %v5371, 7
    %v5378 = vsel %vm3106, %v5377, %v5369
    %v5379 = vrot.slane %v5372, 7
    %v5380 = vsel %vm3106, %v5379, %v5370
    %v5383 = vadd.f32 %v5367, %v5378
    %v5384 = vadd.f32 %v5368, %v5380
    %v5385 = vmul.f32 %v3805, %v2526
    %v5386 = vmul.f32 %v3805, %v2527
    %v5387 = vmul.f32 %v3805, %v2528
    %v5388 = vmul.f32 %v3805, %v2529
    %v5393 = vrot.slane %v5387, 7
    %v5394 = vsel %vm3106, %v5393, %v5385
    %v5395 = vrot.slane %v5388, 7
    %v5396 = vsel %vm3106, %v5395, %v5386
    %v5399 = vadd.f32 %v5383, %v5394
    %v5400 = vadd.f32 %v5384, %v5396
    %v5401 = vmul.f32 %v3822, %v2824
    %v5402 = vmul.f32 %v3822, %v2825
    %v5405 = vlaneseq
    %v5406 = vshrl.u32 %v5405, 7
    %v5407 = vsub.s32 0, %v5406
    %v5408 = vrot.slane %v5401, %v5407
    %v5409 = vlaneseq
    %v5410 = vshrl.u32 %v5409, 7
    %v5411 = vsub.s32 4, %v5410
    %v5412 = vrot.slane %v5401, %v5411
    %v5413 = vlaneseq
    %v5414 = vshrl.u32 %v5413, 7
    %v5415 = vsub.s32 0, %v5414
    %v5416 = vrot.slane %v5402, %v5415
    %v5417 = vlaneseq
    %v5418 = vshrl.u32 %v5417, 7
    %v5419 = vsub.s32 4, %v5418
    %v5420 = vrot.slane %v5402, %v5419
    %v5421 = vsel %vm3106, %v5416, %v5408
    %v5422 = vsel %vm3106, %v5420, %v5412
    %v5425 = vadd.f32 %v5399, %v5421
    %v5426 = vadd.f32 %v5400, %v5422
    %v5427 = vmul.f32 %v3839, %v3086
    %v5428 = vmul.f32 %v3839, %v3087
    %v5431 = vlaneseq
    %v5432 = vshrl.u32 %v5431, 7
    %v5433 = vsub.s32 0, %v5432
    %v5434 = vrot.slane %v5427, %v5433
    %v5435 = vlaneseq
    %v5436 = vshrl.u32 %v5435, 7
    %v5437 = vsub.s32 4, %v5436
    %v5438 = vrot.slane %v5427, %v5437
    %v5439 = vlaneseq
    %v5440 = vshrl.u32 %v5439, 7
    %v5441 = vsub.s32 0, %v5440
    %v5442 = vrot.slane %v5428, %v5441
    %v5443 = vlaneseq
    %v5444 = vshrl.u32 %v5443, 7
    %v5445 = vsub.s32 4, %v5444
    %v5446 = vrot.slane %v5428, %v5445
    %v5447 = vsel %vm3106, %v5442, %v5434
    %v5448 = vsel %vm3106, %v5446, %v5438
    %v5451 = vadd.f32 %v5425, %v5447
    %v5452 = vadd.f32 %v5426, %v5448
    %v5453 = vmul.f32 %v3856, %v4943
    %v5454 = vmul.f32 %v3856, %v4944
    %v5455 = vadd.f32 %v5451, %v5453
    %v5456 = vadd.f32 %v5452, %v5454
    %v5457 = vmul.f32 %v3861, %v4957
    %v5458 = vmul.f32 %v3861, %v4958
    %v5459 = vadd.f32 %v5455, %v5457
    %v5460 = vadd.f32 %v5456, %v5458
    %v5461 = vmul.f32 %v3866, %v4983
    %v5462 = vmul.f32 %v3866, %v4984
    %v5463 = vadd.f32 %v5459, %v5461
    %v5464 = vadd.f32 %v5460, %v5462
    %v5465 = vmul.f32 %v3883, %v4997
    %v5466 = vmul.f32 %v3883, %v4998
    %v5467 = vadd.f32 %v5463, %v5465
    %v5468 = vadd.f32 %v5464, %v5466
    %v5469 = vmul.f32 %v3900, %v5011
    %v5470 = vmul.f32 %v3900, %v5012
    %v5471 = vadd.f32 %v5467, %v5469
    %v5472 = vadd.f32 %v5468, %v5470
    %v5473 = vmul.f32 %v3927, %v5025
    %v5474 = vmul.f32 %v3927, %v5026
    %v5475 = vadd.f32 %v5471, %v5473
    %v5476 = vadd.f32 %v5472, %v5474
    %v5477 = vadd.f32 %v5475, %v3954
    %v5478 = vadd.f32 %v5476, %v3954
    %v5481 = vcombine.low %v5477, %v5478
    %v5483 = vunpack.c.l.s4 1966171168
    %v5484 = vunpack.c.0.s8 %v5483
    %v5485 = vlaneseq
    %v5486 = vshrl.u32 %v5485, 7
    %v5487 = vsub.s32 %v5484, %v5486
    %v5488 = vrot.slane %v5481, %v5487
    %v5489 = vcombine.high %v5488, %v5488
    %v5491 = vunpack.c.l.s4 1966171168
    %v5492 = vunpack.c.0.s8 %v5491
    %v5493 = vlaneseq
    %v5494 = vshrl.u32 %v5493, 7
    %v5495 = vsub.s32 %v5492, %v5494
    %v5496 = vrot.slane %v5488, %v5495
    %v5498 = vunpack.c.l.s4 1966171168
    %v5499 = vunpack.c.0.s8 %v5498
    %v5500 = vlaneseq
    %v5501 = vshrl.u32 %v5500, 7
    %v5502 = vsub.s32 %v5499, %v5501
    %v5503 = vrot.slane %v5489, %v5502
    %s5506 = scalar_lea.vmem %s6, 16
    %5507 = vst.msk [vmem:[%s5506] ss:$8 sm:$0x3] %vm3500, %v5496
    %5508 = vst.msk [vmem:[%s5506] ss:$8 sm:$0x0] %vm3500, %v5496
    %s5509 = scalar_lea.vmem %s6, 48
    %5510 = vst.msk [vmem:[%s5509] ss:$8 sm:$0x3] %vm3500, %v5503
    %5511 = vst.msk [vmem:[%s5509] ss:$8 sm:$0x0] %vm3500, %v5503
    %v5512 = vmul.f32 %v3119, %v709
    %v5513 = vmul.f32 %v3119, %v710
    %v5514 = vmul.f32 %v3119, %v711
    %v5515 = vmul.f32 %v3119, %v712
    %v5516 = vadd.f32 %v5512, 0.0
    %v5517 = vadd.f32 %v5513, 0.0
    %v5518 = vadd.f32 %v5514, 0.0
    %v5519 = vadd.f32 %v5515, 0.0
    %v5520 = vmul.f32 %v3154, %v1046
    %v5521 = vmul.f32 %v3154, %v1047
    %v5522 = vmul.f32 %v3154, %v1048
    %v5523 = vmul.f32 %v3154, %v1049
    %v5524 = vadd.f32 %v5516, %v5520
    %v5525 = vadd.f32 %v5517, %v5521
    %v5526 = vadd.f32 %v5518, %v5522
    %v5527 = vadd.f32 %v5519, %v5523
    %v5528 = vmul.f32 %v3177, %v1450
    %v5529 = vmul.f32 %v3177, %v1451
    %v5530 = vmul.f32 %v3177, %v1452
    %v5531 = vmul.f32 %v3177, %v1453
    %v5532 = vadd.f32 %v5524, %v5528
    %v5533 = vadd.f32 %v5525, %v5529
    %v5534 = vadd.f32 %v5526, %v5530
    %v5535 = vadd.f32 %v5527, %v5531
    %v5536 = vmul.f32 %v3200, %v1786
    %v5537 = vmul.f32 %v3200, %v1787
    %v5538 = vmul.f32 %v3200, %v1788
    %v5539 = vmul.f32 %v3200, %v1789
    %v5540 = vadd.f32 %v5532, %v5536
    %v5541 = vadd.f32 %v5533, %v5537
    %v5542 = vadd.f32 %v5534, %v5538
    %v5543 = vadd.f32 %v5535, %v5539
    %v5544 = vmul.f32 %v3215, %v4138
    %v5545 = vmul.f32 %v3215, %v4139
    %v5548 = vrot.slane %v5544, 1
    %v5549 = vrot.slane %v5545, 1
    %v5554 = vadd.f32 %v5540, %v5544
    %v5555 = vadd.f32 %v5541, %v5545
    %v5556 = vadd.f32 %v5542, %v5548
    %v5557 = vadd.f32 %v5543, %v5549
    %v5558 = vmul.f32 %v3230, %v4160
    %v5559 = vmul.f32 %v3230, %v4161
    %v5562 = vrot.slane %v5558, 1
    %v5563 = vrot.slane %v5559, 1
    %v5568 = vadd.f32 %v5554, %v5558
    %v5569 = vadd.f32 %v5555, %v5559
    %v5570 = vadd.f32 %v5556, %v5562
    %v5571 = vadd.f32 %v5557, %v5563
    %v5572 = vmul.f32 %v3253, %v2190
    %v5573 = vmul.f32 %v3253, %v2191
    %v5574 = vmul.f32 %v3253, %v2192
    %v5575 = vmul.f32 %v3253, %v2193
    %v5576 = vadd.f32 %v5568, %v5572
    %v5577 = vadd.f32 %v5569, %v5573
    %v5578 = vadd.f32 %v5570, %v5574
    %v5579 = vadd.f32 %v5571, %v5575
    %v5580 = vmul.f32 %v3276, %v2526
    %v5581 = vmul.f32 %v3276, %v2527
    %v5582 = vmul.f32 %v3276, %v2528
    %v5583 = vmul.f32 %v3276, %v2529
    %v5584 = vadd.f32 %v5576, %v5580
    %v5585 = vadd.f32 %v5577, %v5581
    %v5586 = vadd.f32 %v5578, %v5582
    %v5587 = vadd.f32 %v5579, %v5583
    %v5588 = vmul.f32 %v3281, %v2824
    %v5589 = vmul.f32 %v3281, %v2825
    %v5592 = vlaneseq
    %v5593 = vshrl.u32 %v5592, 7
    %v5594 = vsub.s32 0, %v5593
    %v5595 = vrot.slane %v5588, %v5594
    %v5596 = vlaneseq
    %v5597 = vshrl.u32 %v5596, 7
    %v5598 = vsub.s32 4, %v5597
    %v5599 = vrot.slane %v5588, %v5598
    %v5600 = vlaneseq
    %v5601 = vshrl.u32 %v5600, 7
    %v5602 = vsub.s32 0, %v5601
    %v5603 = vrot.slane %v5589, %v5602
    %v5604 = vlaneseq
    %v5605 = vshrl.u32 %v5604, 7
    %v5606 = vsub.s32 4, %v5605
    %v5607 = vrot.slane %v5589, %v5606
    %v5612 = vadd.f32 %v5584, %v5595
    %v5613 = vadd.f32 %v5585, %v5599
    %v5614 = vadd.f32 %v5586, %v5603
    %v5615 = vadd.f32 %v5587, %v5607
    %v5616 = vmul.f32 %v3298, %v3086
    %v5617 = vmul.f32 %v3298, %v3087
    %v5620 = vlaneseq
    %v5621 = vshrl.u32 %v5620, 7
    %v5622 = vsub.s32 0, %v5621
    %v5623 = vrot.slane %v5616, %v5622
    %v5624 = vlaneseq
    %v5625 = vshrl.u32 %v5624, 7
    %v5626 = vsub.s32 4, %v5625
    %v5627 = vrot.slane %v5616, %v5626
    %v5628 = vlaneseq
    %v5629 = vshrl.u32 %v5628, 7
    %v5630 = vsub.s32 0, %v5629
    %v5631 = vrot.slane %v5617, %v5630
    %v5632 = vlaneseq
    %v5633 = vshrl.u32 %v5632, 7
    %v5634 = vsub.s32 4, %v5633
    %v5635 = vrot.slane %v5617, %v5634
    %v5640 = vadd.f32 %v5612, %v5623
    %v5641 = vadd.f32 %v5613, %v5627
    %v5642 = vadd.f32 %v5614, %v5631
    %v5643 = vadd.f32 %v5615, %v5635
    %v5644 = vmul.f32 %v3315, %v4258
    %v5645 = vmul.f32 %v3315, %v4259
    %v5648 = vrot.slane %v5644, 1
    %v5649 = vrot.slane %v5645, 1
    %v5654 = vadd.f32 %v5640, %v5644
    %v5655 = vadd.f32 %v5641, %v5645
    %v5656 = vadd.f32 %v5642, %v5648
    %v5657 = vadd.f32 %v5643, %v5649
    %v5658 = vmul.f32 %v3332, %v4272
    %v5659 = vmul.f32 %v3332, %v4273
    %v5662 = vrot.slane %v5658, 1
    %v5663 = vrot.slane %v5659, 1
    %v5668 = vadd.f32 %v5654, %v5658
    %v5669 = vadd.f32 %v5655, %v5659
    %v5670 = vadd.f32 %v5656, %v5662
    %v5671 = vadd.f32 %v5657, %v5663
    %v5672 = vmul.f32 %v3359, %v4983
    %v5673 = vmul.f32 %v3359, %v4984
    %v5676 = vrot.slane %v5672, 1
    %v5677 = vrot.slane %v5673, 1
    %v5682 = vadd.f32 %v5668, %v5672
    %v5683 = vadd.f32 %v5669, %v5673
    %v5684 = vadd.f32 %v5670, %v5676
    %v5685 = vadd.f32 %v5671, %v5677
    %v5686 = vmul.f32 %v3374, %v4997
    %v5687 = vmul.f32 %v3374, %v4998
    %v5690 = vrot.slane %v5686, 1
    %v5691 = vrot.slane %v5687, 1
    %v5696 = vadd.f32 %v5682, %v5686
    %v5697 = vadd.f32 %v5683, %v5687
    %v5698 = vadd.f32 %v5684, %v5690
    %v5699 = vadd.f32 %v5685, %v5691
    %v5700 = vmul.f32 %v3379, %v5011
    %v5701 = vmul.f32 %v3379, %v5012
    %v5704 = vrot.slane %v5700, 1
    %v5705 = vrot.slane %v5701, 1
    %v5710 = vadd.f32 %v5696, %v5700
    %v5711 = vadd.f32 %v5697, %v5701
    %v5712 = vadd.f32 %v5698, %v5704
    %v5713 = vadd.f32 %v5699, %v5705
    %v5714 = vmul.f32 %v3396, %v5025
    %v5715 = vmul.f32 %v3396, %v5026
    %v5718 = vrot.slane %v5714, 1
    %v5719 = vrot.slane %v5715, 1
    %v5724 = vadd.f32 %v5710, %v5714
    %v5725 = vadd.f32 %v5711, %v5715
    %v5726 = vadd.f32 %v5712, %v5718
    %v5727 = vadd.f32 %v5713, %v5719
    %5728 = vrot.lane.b32.xlu0 %v4115, 111
    %v5729 = vpop.permute.xlu0 %5728
    %5730 = vrot.lane.b32.xlu0 %v4117, 111
    %v5731 = vpop.permute.xlu0 %5730
    %v5732 = vsel %vm2726, %v5729, %v5731
    %v5735 = vsel %vm2726, %v5731, 0.0
    %v5736 = vld [vmem:[%s2735] ss:$8 sm:$0x3]
    %v5738 = vlaneseq
    %v5739 = vshrl.u32 %v5738, 7
    %v5740 = vsub.s32 0, %v5739
    %v5741 = vrot.slane %v5736, %v5740
    %v5742 = vlaneseq
    %v5743 = vshrl.u32 %v5742, 7
    %v5744 = vsub.s32 1, %v5743
    %v5745 = vrot.slane %v5736, %v5744
    %v5748 = vmul.f32 %v5732, %v5741
    %v5749 = vmul.f32 %v5735, %v5745
    %v5750 = vmul.f32 %v3413, %v5748
    %v5751 = vmul.f32 %v3413, %v5749
    %v5754 = vrot.slane %v5750, 1
    %v5755 = vrot.slane %v5751, 1
    %v5760 = vadd.f32 %v5724, %v5750
    %v5761 = vadd.f32 %v5725, %v5751
    %v5762 = vadd.f32 %v5726, %v5754
    %v5763 = vadd.f32 %v5727, %v5755
    %5764 = vrot.lane.b32.xlu0 %v4149, 111
    %v5765 = vpop.permute.xlu0 %5764
    %5766 = vrot.lane.b32.xlu0 %v4151, 111
    %v5767 = vpop.permute.xlu0 %5766
    %v5768 = vsel %vm2726, %v5765, %v5767
    %v5771 = vsel %vm2726, %v5767, 0.0
    %v5772 = vmul.f32 %v5768, %v5741
    %v5773 = vmul.f32 %v5771, %v5745
    %v5774 = vmul.f32 %v3440, %v5772
    %v5775 = vmul.f32 %v3440, %v5773
    %v5778 = vrot.slane %v5774, 1
    %v5779 = vrot.slane %v5775, 1
    %v5784 = vadd.f32 %v5760, %v5774
    %v5785 = vadd.f32 %v5761, %v5775
    %v5786 = vadd.f32 %v5762, %v5778
    %v5787 = vadd.f32 %v5763, %v5779
    %v5788 = vadd.f32 %v5784, %v3467
    %v5789 = vadd.f32 %v5785, %v3467
    %v5790 = vadd.f32 %v5786, %v3467
    %v5791 = vadd.f32 %v5787, %v3467
    %v5796 = vcombine.low %v5788, %v5789
    %v5798 = vunpack.c.l.s4 1966171168
    %v5799 = vunpack.c.0.s8 %v5798
    %v5800 = vlaneseq
    %v5801 = vshrl.u32 %v5800, 7
    %v5802 = vsub.s32 %v5799, %v5801
    %v5803 = vrot.slane %v5796, %v5802
    %v5805 = vunpack.c.l.s4 1966171168
    %v5806 = vunpack.c.0.s8 %v5805
    %v5807 = vlaneseq
    %v5808 = vshrl.u32 %v5807, 7
    %v5809 = vsub.s32 %v5806, %v5808
    %v5810 = vrot.slane %v5803, %v5809
    %v5811 = vcombine.low %v5790, %v5791
    %v5813 = vunpack.c.l.s4 1966171168
    %v5814 = vunpack.c.0.s8 %v5813
    %v5815 = vlaneseq
    %v5816 = vshrl.u32 %v5815, 7
    %v5817 = vsub.s32 %v5814, %v5816
    %v5818 = vrot.slane %v5811, %v5817
    %v5820 = vunpack.c.l.s4 1966171168
    %v5821 = vunpack.c.0.s8 %v5820
    %v5822 = vlaneseq
    %v5823 = vshrl.u32 %v5822, 7
    %v5824 = vsub.s32 %v5821, %v5823
    %v5825 = vrot.slane %v5818, %v5824
    %s5828 = scalar_lea.vmem %s6, 17
    %5829 = vst.msk [vmem:[%s5828] ss:$8 sm:$0x3] %vm3500, %v5810
    %5830 = vst.msk [vmem:[%s5828] ss:$8 sm:$0x0] %vm3500, %v5810
    %s5831 = scalar_lea.vmem %s6, 49
    %5832 = vst.msk [vmem:[%s5831] ss:$8 sm:$0x3] %vm3500, %v5825
    %5833 = vst.msk [vmem:[%s5831] ss:$8 sm:$0x0] %vm3500, %v5825
    %v5834 = vmul.f32 %v3506, %v709
    %v5835 = vmul.f32 %v3506, %v710
    %v5836 = vmul.f32 %v3506, %v711
    %v5837 = vmul.f32 %v3506, %v712
    %v5838 = vadd.f32 %v5834, 0.0
    %v5839 = vadd.f32 %v5835, 0.0
    %v5840 = vadd.f32 %v5836, 0.0
    %v5841 = vadd.f32 %v5837, 0.0
    %v5842 = vmul.f32 %v3511, %v1046
    %v5843 = vmul.f32 %v3511, %v1047
    %v5844 = vmul.f32 %v3511, %v1048
    %v5845 = vmul.f32 %v3511, %v1049
    %v5846 = vadd.f32 %v5838, %v5842
    %v5847 = vadd.f32 %v5839, %v5843
    %v5848 = vadd.f32 %v5840, %v5844
    %v5849 = vadd.f32 %v5841, %v5845
    %v5850 = vmul.f32 %v3516, %v1450
    %v5851 = vmul.f32 %v3516, %v1451
    %v5852 = vmul.f32 %v3516, %v1452
    %v5853 = vmul.f32 %v3516, %v1453
    %v5854 = vadd.f32 %v5846, %v5850
    %v5855 = vadd.f32 %v5847, %v5851
    %v5856 = vadd.f32 %v5848, %v5852
    %v5857 = vadd.f32 %v5849, %v5853
    %v5858 = vmul.f32 %v3521, %v1786
    %v5859 = vmul.f32 %v3521, %v1787
    %v5860 = vmul.f32 %v3521, %v1788
    %v5861 = vmul.f32 %v3521, %v1789
    %v5862 = vadd.f32 %v5854, %v5858
    %v5863 = vadd.f32 %v5855, %v5859
    %v5864 = vadd.f32 %v5856, %v5860
    %v5865 = vadd.f32 %v5857, %v5861
    %v5866 = vmul.f32 %v3526, %v4138
    %v5867 = vmul.f32 %v3526, %v4139
    %v5870 = vrot.slane %v5866, 1
    %v5871 = vrot.slane %v5867, 1
    %v5876 = vadd.f32 %v5862, %v5866
    %v5877 = vadd.f32 %v5863, %v5867
    %v5878 = vadd.f32 %v5864, %v5870
    %v5879 = vadd.f32 %v5865, %v5871
    %v5880 = vmul.f32 %v3531, %v4160
    %v5881 = vmul.f32 %v3531, %v4161
    %v5884 = vrot.slane %v5880, 1
    %v5885 = vrot.slane %v5881, 1
    %v5890 = vadd.f32 %v5876, %v5880
    %v5891 = vadd.f32 %v5877, %v5881
    %v5892 = vadd.f32 %v5878, %v5884
    %v5893 = vadd.f32 %v5879, %v5885
    %v5894 = vmul.f32 %v3536, %v2190
    %v5895 = vmul.f32 %v3536, %v2191
    %v5896 = vmul.f32 %v3536, %v2192
    %v5897 = vmul.f32 %v3536, %v2193
    %v5898 = vadd.f32 %v5890, %v5894
    %v5899 = vadd.f32 %v5891, %v5895
    %v5900 = vadd.f32 %v5892, %v5896
    %v5901 = vadd.f32 %v5893, %v5897
    %v5902 = vmul.f32 %v3541, %v2526
    %v5903 = vmul.f32 %v3541, %v2527
    %v5904 = vmul.f32 %v3541, %v2528
    %v5905 = vmul.f32 %v3541, %v2529
    %v5906 = vadd.f32 %v5898, %v5902
    %v5907 = vadd.f32 %v5899, %v5903
    %v5908 = vadd.f32 %v5900, %v5904
    %v5909 = vadd.f32 %v5901, %v5905
    %v5910 = vmul.f32 %v3546, %v2824
    %v5911 = vmul.f32 %v3546, %v2825
    %v5914 = vlaneseq
    %v5915 = vshrl.u32 %v5914, 7
    %v5916 = vsub.s32 0, %v5915
    %v5917 = vrot.slane %v5910, %v5916
    %v5918 = vlaneseq
    %v5919 = vshrl.u32 %v5918, 7
    %v5920 = vsub.s32 4, %v5919
    %v5921 = vrot.slane %v5910, %v5920
    %v5922 = vlaneseq
    %v5923 = vshrl.u32 %v5922, 7
    %v5924 = vsub.s32 0, %v5923
    %v5925 = vrot.slane %v5911, %v5924
    %v5926 = vlaneseq
    %v5927 = vshrl.u32 %v5926, 7
    %v5928 = vsub.s32 4, %v5927
    %v5929 = vrot.slane %v5911, %v5928
    %v5934 = vadd.f32 %v5906, %v5917
    %v5935 = vadd.f32 %v5907, %v5921
    %v5936 = vadd.f32 %v5908, %v5925
    %v5937 = vadd.f32 %v5909, %v5929
    %v5938 = vmul.f32 %v3563, %v3086
    %v5939 = vmul.f32 %v3563, %v3087
    %v5942 = vlaneseq
    %v5943 = vshrl.u32 %v5942, 7
    %v5944 = vsub.s32 0, %v5943
    %v5945 = vrot.slane %v5938, %v5944
    %v5946 = vlaneseq
    %v5947 = vshrl.u32 %v5946, 7
    %v5948 = vsub.s32 4, %v5947
    %v5949 = vrot.slane %v5938, %v5948
    %v5950 = vlaneseq
    %v5951 = vshrl.u32 %v5950, 7
    %v5952 = vsub.s32 0, %v5951
    %v5953 = vrot.slane %v5939, %v5952
    %v5954 = vlaneseq
    %v5955 = vshrl.u32 %v5954, 7
    %v5956 = vsub.s32 4, %v5955
    %v5957 = vrot.slane %v5939, %v5956
    %v5962 = vadd.f32 %v5934, %v5945
    %v5963 = vadd.f32 %v5935, %v5949
    %v5964 = vadd.f32 %v5936, %v5953
    %v5965 = vadd.f32 %v5937, %v5957
    %v5966 = vmul.f32 %v3580, %v4258
    %v5967 = vmul.f32 %v3580, %v4259
    %v5970 = vrot.slane %v5966, 1
    %v5971 = vrot.slane %v5967, 1
    %v5976 = vadd.f32 %v5962, %v5966
    %v5977 = vadd.f32 %v5963, %v5967
    %v5978 = vadd.f32 %v5964, %v5970
    %v5979 = vadd.f32 %v5965, %v5971
    %v5980 = vmul.f32 %v3597, %v4272
    %v5981 = vmul.f32 %v3597, %v4273
    %v5984 = vrot.slane %v5980, 1
    %v5985 = vrot.slane %v5981, 1
    %v5990 = vadd.f32 %v5976, %v5980
    %v5991 = vadd.f32 %v5977, %v5981
    %v5992 = vadd.f32 %v5978, %v5984
    %v5993 = vadd.f32 %v5979, %v5985
    %v5994 = vmul.f32 %v3614, %v4983
    %v5995 = vmul.f32 %v3614, %v4984
    %v5998 = vrot.slane %v5994, 1
    %v5999 = vrot.slane %v5995, 1
    %v6004 = vadd.f32 %v5990, %v5994
    %v6005 = vadd.f32 %v5991, %v5995
    %v6006 = vadd.f32 %v5992, %v5998
    %v6007 = vadd.f32 %v5993, %v5999
    %v6008 = vmul.f32 %v3619, %v4997
    %v6009 = vmul.f32 %v3619, %v4998
    %v6012 = vrot.slane %v6008, 1
    %v6013 = vrot.slane %v6009, 1
    %v6018 = vadd.f32 %v6004, %v6008
    %v6019 = vadd.f32 %v6005, %v6009
    %v6020 = vadd.f32 %v6006, %v6012
    %v6021 = vadd.f32 %v6007, %v6013
    %v6022 = vmul.f32 %v3624, %v5011
    %v6023 = vmul.f32 %v3624, %v5012
    %v6026 = vrot.slane %v6022, 1
    %v6027 = vrot.slane %v6023, 1
    %v6032 = vadd.f32 %v6018, %v6022
    %v6033 = vadd.f32 %v6019, %v6023
    %v6034 = vadd.f32 %v6020, %v6026
    %v6035 = vadd.f32 %v6021, %v6027
    %v6036 = vmul.f32 %v3641, %v5025
    %v6037 = vmul.f32 %v3641, %v5026
    %v6040 = vrot.slane %v6036, 1
    %v6041 = vrot.slane %v6037, 1
    %v6046 = vadd.f32 %v6032, %v6036
    %v6047 = vadd.f32 %v6033, %v6037
    %v6048 = vadd.f32 %v6034, %v6040
    %v6049 = vadd.f32 %v6035, %v6041
    %v6050 = vmul.f32 %v3658, %v5748
    %v6051 = vmul.f32 %v3658, %v5749
    %v6054 = vrot.slane %v6050, 1
    %v6055 = vrot.slane %v6051, 1
    %v6060 = vadd.f32 %v6046, %v6050
    %v6061 = vadd.f32 %v6047, %v6051
    %v6062 = vadd.f32 %v6048, %v6054
    %v6063 = vadd.f32 %v6049, %v6055
    %v6064 = vmul.f32 %v3685, %v5772
    %v6065 = vmul.f32 %v3685, %v5773
    %v6068 = vrot.slane %v6064, 1
    %v6069 = vrot.slane %v6065, 1
    %v6074 = vadd.f32 %v6060, %v6064
    %v6075 = vadd.f32 %v6061, %v6065
    %v6076 = vadd.f32 %v6062, %v6068
    %v6077 = vadd.f32 %v6063, %v6069
    %v6078 = vadd.f32 %v6074, %v3712
    %v6079 = vadd.f32 %v6075, %v3712
    %v6080 = vadd.f32 %v6076, %v3712
    %v6081 = vadd.f32 %v6077, %v3712
    %v6086 = vcombine.low %v6078, %v6079
    %v6088 = vunpack.c.l.s4 1966171168
    %v6089 = vunpack.c.0.s8 %v6088
    %v6090 = vlaneseq
    %v6091 = vshrl.u32 %v6090, 7
    %v6092 = vsub.s32 %v6089, %v6091
    %v6093 = vrot.slane %v6086, %v6092
    %v6095 = vunpack.c.l.s4 1966171168
    %v6096 = vunpack.c.0.s8 %v6095
    %v6097 = vlaneseq
    %v6098 = vshrl.u32 %v6097, 7
    %v6099 = vsub.s32 %v6096, %v6098
    %v6100 = vrot.slane %v6093, %v6099
    %v6101 = vcombine.low %v6080, %v6081
    %v6103 = vunpack.c.l.s4 1966171168
    %v6104 = vunpack.c.0.s8 %v6103
    %v6105 = vlaneseq
    %v6106 = vshrl.u32 %v6105, 7
    %v6107 = vsub.s32 %v6104, %v6106
    %v6108 = vrot.slane %v6101, %v6107
    %v6110 = vunpack.c.l.s4 1966171168
    %v6111 = vunpack.c.0.s8 %v6110
    %v6112 = vlaneseq
    %v6113 = vshrl.u32 %v6112, 7
    %v6114 = vsub.s32 %v6111, %v6113
    %v6115 = vrot.slane %v6108, %v6114
    %s6118 = scalar_lea.vmem %s6, 18
    %6119 = vst.msk [vmem:[%s6118] ss:$8 sm:$0x3] %vm3500, %v6100
    %6120 = vst.msk [vmem:[%s6118] ss:$8 sm:$0x0] %vm3500, %v6100
    %s6121 = scalar_lea.vmem %s6, 50
    %6122 = vst.msk [vmem:[%s6121] ss:$8 sm:$0x3] %vm3500, %v6115
    %6123 = vst.msk [vmem:[%s6121] ss:$8 sm:$0x0] %vm3500, %v6115
    %v6124 = vmul.f32 %v3748, %v709
    %v6125 = vmul.f32 %v3748, %v710
    %v6126 = vmul.f32 %v3748, %v711
    %v6127 = vmul.f32 %v3748, %v712
    %v6128 = vadd.f32 %v6124, 0.0
    %v6129 = vadd.f32 %v6125, 0.0
    %v6130 = vadd.f32 %v6126, 0.0
    %v6131 = vadd.f32 %v6127, 0.0
    %v6132 = vmul.f32 %v3753, %v1046
    %v6133 = vmul.f32 %v3753, %v1047
    %v6134 = vmul.f32 %v3753, %v1048
    %v6135 = vmul.f32 %v3753, %v1049
    %v6136 = vadd.f32 %v6128, %v6132
    %v6137 = vadd.f32 %v6129, %v6133
    %v6138 = vadd.f32 %v6130, %v6134
    %v6139 = vadd.f32 %v6131, %v6135
    %v6140 = vmul.f32 %v3758, %v1450
    %v6141 = vmul.f32 %v3758, %v1451
    %v6142 = vmul.f32 %v3758, %v1452
    %v6143 = vmul.f32 %v3758, %v1453
    %v6144 = vadd.f32 %v6136, %v6140
    %v6145 = vadd.f32 %v6137, %v6141
    %v6146 = vadd.f32 %v6138, %v6142
    %v6147 = vadd.f32 %v6139, %v6143
    %v6148 = vmul.f32 %v3763, %v1786
    %v6149 = vmul.f32 %v3763, %v1787
    %v6150 = vmul.f32 %v3763, %v1788
    %v6151 = vmul.f32 %v3763, %v1789
    %v6152 = vadd.f32 %v6144, %v6148
    %v6153 = vadd.f32 %v6145, %v6149
    %v6154 = vadd.f32 %v6146, %v6150
    %v6155 = vadd.f32 %v6147, %v6151
    %v6156 = vmul.f32 %v3768, %v4138
    %v6157 = vmul.f32 %v3768, %v4139
    %v6160 = vrot.slane %v6156, 1
    %v6161 = vrot.slane %v6157, 1
    %v6166 = vadd.f32 %v6152, %v6156
    %v6167 = vadd.f32 %v6153, %v6157
    %v6168 = vadd.f32 %v6154, %v6160
    %v6169 = vadd.f32 %v6155, %v6161
    %v6170 = vmul.f32 %v3773, %v4160
    %v6171 = vmul.f32 %v3773, %v4161
    %v6174 = vrot.slane %v6170, 1
    %v6175 = vrot.slane %v6171, 1
    %v6180 = vadd.f32 %v6166, %v6170
    %v6181 = vadd.f32 %v6167, %v6171
    %v6182 = vadd.f32 %v6168, %v6174
    %v6183 = vadd.f32 %v6169, %v6175
    %v6184 = vmul.f32 %v3778, %v2190
    %v6185 = vmul.f32 %v3778, %v2191
    %v6186 = vmul.f32 %v3778, %v2192
    %v6187 = vmul.f32 %v3778, %v2193
    %v6188 = vadd.f32 %v6180, %v6184
    %v6189 = vadd.f32 %v6181, %v6185
    %v6190 = vadd.f32 %v6182, %v6186
    %v6191 = vadd.f32 %v6183, %v6187
    %v6192 = vmul.f32 %v3783, %v2526
    %v6193 = vmul.f32 %v3783, %v2527
    %v6194 = vmul.f32 %v3783, %v2528
    %v6195 = vmul.f32 %v3783, %v2529
    %v6196 = vadd.f32 %v6188, %v6192
    %v6197 = vadd.f32 %v6189, %v6193
    %v6198 = vadd.f32 %v6190, %v6194
    %v6199 = vadd.f32 %v6191, %v6195
    %v6200 = vmul.f32 %v3788, %v2824
    %v6201 = vmul.f32 %v3788, %v2825
    %v6204 = vlaneseq
    %v6205 = vshrl.u32 %v6204, 7
    %v6206 = vsub.s32 0, %v6205
    %v6207 = vrot.slane %v6200, %v6206
    %v6208 = vlaneseq
    %v6209 = vshrl.u32 %v6208, 7
    %v6210 = vsub.s32 4, %v6209
    %v6211 = vrot.slane %v6200, %v6210
    %v6212 = vlaneseq
    %v6213 = vshrl.u32 %v6212, 7
    %v6214 = vsub.s32 0, %v6213
    %v6215 = vrot.slane %v6201, %v6214
    %v6216 = vlaneseq
    %v6217 = vshrl.u32 %v6216, 7
    %v6218 = vsub.s32 4, %v6217
    %v6219 = vrot.slane %v6201, %v6218
    %v6224 = vadd.f32 %v6196, %v6207
    %v6225 = vadd.f32 %v6197, %v6211
    %v6226 = vadd.f32 %v6198, %v6215
    %v6227 = vadd.f32 %v6199, %v6219
    %v6228 = vmul.f32 %v3805, %v3086
    %v6229 = vmul.f32 %v3805, %v3087
    %v6232 = vlaneseq
    %v6233 = vshrl.u32 %v6232, 7
    %v6234 = vsub.s32 0, %v6233
    %v6235 = vrot.slane %v6228, %v6234
    %v6236 = vlaneseq
    %v6237 = vshrl.u32 %v6236, 7
    %v6238 = vsub.s32 4, %v6237
    %v6239 = vrot.slane %v6228, %v6238
    %v6240 = vlaneseq
    %v6241 = vshrl.u32 %v6240, 7
    %v6242 = vsub.s32 0, %v6241
    %v6243 = vrot.slane %v6229, %v6242
    %v6244 = vlaneseq
    %v6245 = vshrl.u32 %v6244, 7
    %v6246 = vsub.s32 4, %v6245
    %v6247 = vrot.slane %v6229, %v6246
    %v6252 = vadd.f32 %v6224, %v6235
    %v6253 = vadd.f32 %v6225, %v6239
    %v6254 = vadd.f32 %v6226, %v6243
    %v6255 = vadd.f32 %v6227, %v6247
    %v6256 = vmul.f32 %v3822, %v4258
    %v6257 = vmul.f32 %v3822, %v4259
    %v6260 = vrot.slane %v6256, 1
    %v6261 = vrot.slane %v6257, 1
    %v6266 = vadd.f32 %v6252, %v6256
    %v6267 = vadd.f32 %v6253, %v6257
    %v6268 = vadd.f32 %v6254, %v6260
    %v6269 = vadd.f32 %v6255, %v6261
    %v6270 = vmul.f32 %v3839, %v4272
    %v6271 = vmul.f32 %v3839, %v4273
    %v6274 = vrot.slane %v6270, 1
    %v6275 = vrot.slane %v6271, 1
    %v6280 = vadd.f32 %v6266, %v6270
    %v6281 = vadd.f32 %v6267, %v6271
    %v6282 = vadd.f32 %v6268, %v6274
    %v6283 = vadd.f32 %v6269, %v6275
    %v6284 = vmul.f32 %v3856, %v4983
    %v6285 = vmul.f32 %v3856, %v4984
    %v6288 = vrot.slane %v6284, 1
    %v6289 = vrot.slane %v6285, 1
    %v6294 = vadd.f32 %v6280, %v6284
    %v6295 = vadd.f32 %v6281, %v6285
    %v6296 = vadd.f32 %v6282, %v6288
    %v6297 = vadd.f32 %v6283, %v6289
    %v6298 = vmul.f32 %v3861, %v4997
    %v6299 = vmul.f32 %v3861, %v4998
    %v6302 = vrot.slane %v6298, 1
    %v6303 = vrot.slane %v6299, 1
    %v6308 = vadd.f32 %v6294, %v6298
    %v6309 = vadd.f32 %v6295, %v6299
    %v6310 = vadd.f32 %v6296, %v6302
    %v6311 = vadd.f32 %v6297, %v6303
    %v6312 = vmul.f32 %v3866, %v5011
    %v6313 = vmul.f32 %v3866, %v5012
    %v6316 = vrot.slane %v6312, 1
    %v6317 = vrot.slane %v6313, 1
    %v6322 = vadd.f32 %v6308, %v6312
    %v6323 = vadd.f32 %v6309, %v6313
    %v6324 = vadd.f32 %v6310, %v6316
    %v6325 = vadd.f32 %v6311, %v6317
    %v6326 = vmul.f32 %v3883, %v5025
    %v6327 = vmul.f32 %v3883, %v5026
    %v6330 = vrot.slane %v6326, 1
    %v6331 = vrot.slane %v6327, 1
    %v6336 = vadd.f32 %v6322, %v6326
    %v6337 = vadd.f32 %v6323, %v6327
    %v6338 = vadd.f32 %v6324, %v6330
    %v6339 = vadd.f32 %v6325, %v6331
    %v6340 = vmul.f32 %v3900, %v5748
    %v6341 = vmul.f32 %v3900, %v5749
    %v6344 = vrot.slane %v6340, 1
    %v6345 = vrot.slane %v6341, 1
    %v6350 = vadd.f32 %v6336, %v6340
    %v6351 = vadd.f32 %v6337, %v6341
    %v6352 = vadd.f32 %v6338, %v6344
    %v6353 = vadd.f32 %v6339, %v6345
    %v6354 = vmul.f32 %v3927, %v5772
    %v6355 = vmul.f32 %v3927, %v5773
    %v6358 = vrot.slane %v6354, 1
    %v6359 = vrot.slane %v6355, 1
    %v6364 = vadd.f32 %v6350, %v6354
    %v6365 = vadd.f32 %v6351, %v6355
    %v6366 = vadd.f32 %v6352, %v6358
    %v6367 = vadd.f32 %v6353, %v6359
    %v6368 = vadd.f32 %v6364, %v3954
    %v6369 = vadd.f32 %v6365, %v3954
    %v6370 = vadd.f32 %v6366, %v3954
    %v6371 = vadd.f32 %v6367, %v3954
    %v6376 = vcombine.low %v6368, %v6369
    %v6378 = vunpack.c.l.s4 1966171168
    %v6379 = vunpack.c.0.s8 %v6378
    %v6380 = vlaneseq
    %v6381 = vshrl.u32 %v6380, 7
    %v6382 = vsub.s32 %v6379, %v6381
    %v6383 = vrot.slane %v6376, %v6382
    %v6385 = vunpack.c.l.s4 1966171168
    %v6386 = vunpack.c.0.s8 %v6385
    %v6387 = vlaneseq
    %v6388 = vshrl.u32 %v6387, 7
    %v6389 = vsub.s32 %v6386, %v6388
    %v6390 = vrot.slane %v6383, %v6389
    %v6391 = vcombine.low %v6370, %v6371
    %v6393 = vunpack.c.l.s4 1966171168
    %v6394 = vunpack.c.0.s8 %v6393
    %v6395 = vlaneseq
    %v6396 = vshrl.u32 %v6395, 7
    %v6397 = vsub.s32 %v6394, %v6396
    %v6398 = vrot.slane %v6391, %v6397
    %v6400 = vunpack.c.l.s4 1966171168
    %v6401 = vunpack.c.0.s8 %v6400
    %v6402 = vlaneseq
    %v6403 = vshrl.u32 %v6402, 7
    %v6404 = vsub.s32 %v6401, %v6403
    %v6405 = vrot.slane %v6398, %v6404
    %s6408 = scalar_lea.vmem %s6, 19
    %6409 = vst.msk [vmem:[%s6408] ss:$8 sm:$0x3] %vm3500, %v6390
    %6410 = vst.msk [vmem:[%s6408] ss:$8 sm:$0x0] %vm3500, %v6390
    %s6411 = scalar_lea.vmem %s6, 51
    %6412 = vst.msk [vmem:[%s6411] ss:$8 sm:$0x3] %vm3500, %v6405
    %6413 = vst.msk [vmem:[%s6411] ss:$8 sm:$0x0] %vm3500, %v6405
    // Predicated region
    $region46: #{segmentation_head_forward.1} parent=1 // pred_check
      _
    $region47: #{segmentation_head_forward.1} parent=1 // pred_check_branch
      %6415 = sbr.rel (0) target = $region49
    $region48: #{segmentation_head_forward.1} parent=1 // pred_region
      _
    $region49: #{segmentation_head_forward.1} parent=1 // pred_fallthru
      _
    // Predicated region
    $region50: #{segmentation_head_forward.1} parent=1 // pred_check
      _
    $region51: #{segmentation_head_forward.1} parent=1 // pred_check_branch
      %6417 = sbr.rel (0) target = $region53
    $region52: #{segmentation_head_forward.1} parent=1 // pred_region
      _
    $region53: #{segmentation_head_forward.1} parent=1 // pred_fallthru
      _
    %6418 = vsyncpa [#allocation3], 1
    %6419 = vsyncpa [#allocation4], 1
    %6420 = vsyncpa [#allocation11], 1
    %6421 = vsyncpa [#allocation5], 1
    %6422 = vsyncpa [#allocation9], 1

</llo_original>
